<compile_context>
chip_gen: v5e
topology: v5e:2x2
jax: 0.10.0
libtpu: 0.0.40
codegen_flags: <defaults>
</compile_context>

<pallas_src>
import functools

import jax
import jax.numpy as jnp
from jax.experimental import pallas as pl
from jax.experimental.pallas import tpu as pltpu

NEG_SLOPE = 0.01          # nn.LeakyReLU default negative_slope
_PALLAS_MIN_M = 128       # below this M, one XLA dot beats pallas_call overhead


def _round_up(x, m):
    return ((x + m - 1) // m) * m


def _cdiv(a, b):
    return (a + b - 1) // b


def _tile(dim, cap, gran):
    """Pick (tile, padded_dim): tile <= cap, multiple of `gran`, divides padded_dim,
    with minimal zero padding of `dim`."""
    d = _round_up(dim, gran)
    if d <= cap:
        return d, d
    n = _cdiv(d, cap)
    t = _round_up(_cdiv(d, n), gran)
    return t, t * n


@functools.lru_cache(maxsize=None)
def _vmem_limit_bytes():
    """Per-generation VMEM budget: ~100 MiB on v5e/v6e (128 MiB physical),
    48 MiB on v7x (64 MiB physical) or whenever the query is unavailable."""
    try:
        cap = int(pltpu.get_tpu_info().vmem_capacity_bytes)
    except Exception:  # conservative default is safe on every generation
        return 48 * 1024 * 1024
    if cap >= 120 * 1024 * 1024:        # v5e / v6e
        return 100 * 1024 * 1024
    return 48 * 1024 * 1024             # v7x


# ---------------------------------------------------------------------------
# Pallas kernels: tiled matmul + bias (+ residual) (+ LeakyReLU).
# Grid = (M_tiles, N_tiles, K_tiles); f32 accumulator scratch in VMEM.
# Epilogue is done in f32 (v5e VPU has no bf16 ALUs); store casts to o_ref.dtype.
# ---------------------------------------------------------------------------
def _mm_kernel(act, p_ref, w_ref, b_ref, o_ref, acc_ref):
    @pl.when(pl.program_id(2) == 0)
    def _():
        acc_ref[...] = jnp.zeros_like(acc_ref)

    acc_ref[...] += jnp.dot(p_ref[...], w_ref[...],
                            preferred_element_type=jnp.float32)

    @pl.when(pl.program_id(2) == pl.num_programs(2) - 1)
    def _():
        out = acc_ref[...] + b_ref[...]
        if act:
            out = jnp.where(out > 0, out, NEG_SLOPE * out)
        o_ref[...] = out.astype(o_ref.dtype)


def _mm_res_kernel(act, p_ref, w_ref, b_ref, r_ref, o_ref, acc_ref):
    @pl.when(pl.program_id(2) == 0)
    def _():
        acc_ref[...] = jnp.zeros_like(acc_ref)

    acc_ref[...] += jnp.dot(p_ref[...], w_ref[...],
                            preferred_element_type=jnp.float32)

    @pl.when(pl.program_id(2) == pl.num_programs(2) - 1)
    def _():
        out = acc_ref[...] + b_ref[...] + r_ref[...].astype(jnp.float32)
        if act:
            out = jnp.where(out > 0, out, NEG_SLOPE * out)
        o_ref[...] = out.astype(o_ref.dtype)


def _matmul_bias(patches, w2, b2, residual=None, act=False,
                 out_dtype=jnp.bfloat16):
    """out[M, Cout] = act(patches @ w2 + b2 (+ residual)), tiled on the MXU."""
    M, K = patches.shape
    Cout = w2.shape[1]
    b2 = b2.astype(jnp.float32)

    # Tiny-M layers: pallas_call / grid-step overhead dominates a skinny matmul
    # that uses <6% of a 256x256 MXU -> let XLA handle it (review feedback).
    if M < _PALLAS_MIN_M:
        out = jnp.dot(patches.astype(jnp.bfloat16), w2.astype(jnp.bfloat16),
                      preferred_element_type=jnp.float32) + b2
        if residual is not None:
            out = out + residual.astype(jnp.float32)
        if act:
            out = jnp.where(out > 0, out, NEG_SLOPE * out)
        return out.astype(out_dtype)

    # Tile selection: bf16 sublane granularity 16 for M (never tm=8), lane
    # granularity 128 for N/K; caps 256/512/2048 keep the double-buffered
    # working set <= ~8 MiB, well under every generation's VMEM budget.
    tm, Mp = _tile(M, 256, 16)
    tn, Np = _tile(Cout, 512, 128)
    tk, Kp = _tile(K, 2048, 128)

    # Give the v7x megacore at least two parallel (i, j) blocks when cheap.
    if (Mp // tm) * (Np // tn) < 2 and tn % 256 == 0:
        tn //= 2

    # bf16 MXU operands, f32 accumulation inside the kernel.
    p = patches.astype(jnp.bfloat16)
    w = w2.astype(jnp.bfloat16)
    if (Mp, Kp) != (M, K):
        p = jnp.pad(p, ((0, Mp - M), (0, Kp - K)))
    if (Kp, Np) != (K, Cout):
        w = jnp.pad(w, ((0, Kp - K), (0, Np - Cout)))
    b = b2 if Np == Cout else jnp.pad(b2, ((0, 0), (0, Np - Cout)))

    grid = (Mp // tm, Np // tn, Kp // tk)

    in_specs = [
        pl.BlockSpec((tm, tk), lambda i, j, k: (i, k)),
        pl.BlockSpec((tk, tn), lambda i, j, k: (k, j)),
        pl.BlockSpec((1, tn), lambda i, j, k: (0, j)),
    ]
    args = [p, w, b]
    if residual is not None:
        r = residual.astype(jnp.bfloat16)
        if (Mp, Np) != (M, Cout):
            r = jnp.pad(r, ((0, Mp - M), (0, Np - Cout)))
        in_specs.append(pl.BlockSpec((tm, tn), lambda i, j, k: (i, j)))
        args.append(r)
        kernel = functools.partial(_mm_res_kernel, act)
    else:
        kernel = functools.partial(_mm_kernel, act)

    out = pl.pallas_call(
        kernel,
        out_shape=jax.ShapeDtypeStruct((Mp, Np), out_dtype),
        grid=grid,
        in_specs=in_specs,
        out_specs=pl.BlockSpec((tm, tn), lambda i, j, k: (i, j)),
        scratch_shapes=[pltpu.VMEM((tm, tn), jnp.float32)],
        compiler_params=pltpu.CompilerParams(
            dimension_semantics=("parallel", "parallel", "arbitrary"),
            vmem_limit_bytes=_vmem_limit_bytes(),
        ),
    )(*args)

    if (Mp, Np) != (M, Cout):
        # Slice off padding here; keeping activations 128-padded across layers
        # would inflate K up to 2x for this net's 63/64/146/274/530-ch layers.
        out = out[:M, :Cout]
    return out


# ---------------------------------------------------------------------------
# conv2d = im2col (JAX glue, bf16) + Pallas matmul kernel.
# x is NHWC, w is (KH, KW, Cin, Cout).
# TODO(synk): in-kernel tap accumulation to avoid the 9x im2col materialization.
# ---------------------------------------------------------------------------
def conv2d(x, w, b, stride=1, padding=0, dilation=1, act=False, residual=None,
           out_dtype=jnp.bfloat16):
    x = x.astype(jnp.bfloat16)   # bf16 activations: halves im2col / HBM traffic
    N, H, W, Cin = x.shape
    KH, KW, _, Cout = w.shape
    if padding > 0:
        x = jnp.pad(x, ((0, 0), (padding, padding), (padding, padding), (0, 0)))
    OH = (H + 2 * padding - dilation * (KH - 1) - 1) // stride + 1
    OW = (W + 2 * padding - dilation * (KW - 1) - 1) // stride + 1
    cols = []
    for kh in range(KH):
        for kw in range(KW):
            h0 = kh * dilation
            w0 = kw * dilation
            sl = x[:, h0:h0 + (OH - 1) * stride + 1:stride,
                   w0:w0 + (OW - 1) * stride + 1:stride, :]
            cols.append(sl)
    patches = jnp.concatenate(cols, axis=-1).reshape(N * OH * OW, KH * KW * Cin)
    w2 = w.reshape(KH * KW * Cin, Cout)
    b2 = b.reshape(1, Cout)
    r2 = None if residual is None else residual.reshape(N * OH * OW, Cout)
    out = _matmul_bias(patches, w2, b2, residual=r2, act=act, out_dtype=out_dtype)
    return out.reshape(N, OH, OW, Cout)


def upsample2(x):  # nearest, scale_factor=2, NHWC
    return jnp.repeat(jnp.repeat(x, 2, axis=1), 2, axis=2)


# ---------------------------------------------------------------------------
# Parameter init (deterministic, fan-in scaled normal)
# ---------------------------------------------------------------------------
def _init_conv(key, kh, kw, cin, cout):
    kw_key, kb_key = jax.random.split(key)
    std = 1.0 / jnp.sqrt(float(kh * kw * cin))
    w = jax.random.normal(kw_key, (kh, kw, cin, cout), jnp.float32) * std
    b = jax.random.normal(kb_key, (cout,), jnp.float32) * 0.01
    return w, b


def _init_basic_block(key, cin, cout, down):
    k1, k2, k3 = jax.random.split(key, 3)
    p = {"down": down}
    p["w1"], p["b1"] = _init_conv(k1, 3, 3, cin, cout)
    p["w2"], p["b2"] = _init_conv(k2, 3, 3, cout, cout)
    if cout != cin or down:
        p["w3"], p["b3"] = _init_conv(k3, 1, 1, cin, cout)
    else:
        p["w3"] = None
    return p


def init_segnet(key, in_channel=3):
    num_joints = 17
    keys = iter(jax.random.split(key, 32))
    params = {
        "conv0_0": _init_conv(next(keys), 3, 3, in_channel, 21),
        "conv0_1": _init_conv(next(keys), 3, 3, in_channel, 21),
        "conv0_2": _init_conv(next(keys), 3, 3, in_channel, 21),
        "block1": [_init_basic_block(next(keys), 63, 128, True),
                   _init_basic_block(next(keys), 128, 128, False)],
        "block2": [_init_basic_block(next(keys), 128, 256, True),
                   _init_basic_block(next(keys), 256, 256, False)],
        "block3": [_init_basic_block(next(keys), 256, 512, True),
                   _init_basic_block(next(keys), 512, 512, False)],
        "block4": [_init_basic_block(next(keys), 512, 256, False),
                   _init_basic_block(next(keys), 256, 64, False)],
        "block5": [_init_basic_block(next(keys), 512 + num_joints + 1, 256, False),
                   _init_basic_block(next(keys), 256, 64, False)],
        "block6": [_init_basic_block(next(keys), 256 + num_joints + 1, 256, False),
                   _init_basic_block(next(keys), 256, 64, False)],
        "block7": [_init_basic_block(next(keys), 128 + num_joints + 1, 128, False),
                   _init_basic_block(next(keys), 128, 64, False)],
        "conv": _init_conv(next(keys), 1, 1, 64, 1),
    }
    return params


# ---------------------------------------------------------------------------
# Forward pass (bf16 activations between layers, f32 mask outputs)
# ---------------------------------------------------------------------------
def run_basic_block(x, p):
    stride = 2 if p["down"] else 1
    out = conv2d(x, p["w1"], p["b1"], stride=stride, padding=1, act=True)
    if p["w3"] is not None:
        identity = conv2d(x, p["w3"], p["b3"], stride=stride, padding=0)
    else:
        identity = x
    # conv2 fused with residual add + LeakyReLU inside the Pallas kernel
    return conv2d(out, p["w2"], p["b2"], stride=1, padding=1, act=True,
                  residual=identity)


def run_seq(x, block_list):
    for p in block_list:
        x = run_basic_block(x, p)
    return x


def segnet_forward(params, x_nchw, fullheat_nchw):
    bf16 = jnp.bfloat16
    # NCHW -> NHWC; bf16 for everything feeding convolutions
    x = jnp.transpose(x_nchw, (0, 2, 3, 1)).astype(bf16)
    fh = [jnp.transpose(f, (0, 2, 3, 1)).astype(bf16) for f in fullheat_nchw]

    # header = lrelu(cat([conv0_0(x), conv0_1(x), conv0_2(x)]))
    # (LeakyReLU is elementwise so it is fused into each conv kernel)
    h0 = conv2d(x, *params["conv0_0"], stride=2, padding=1, dilation=1, act=True)
    h1 = conv2d(x, *params["conv0_1"], stride=2, padding=2, dilation=2, act=True)
    h2 = conv2d(x, *params["conv0_2"], stride=2, padding=5, dilation=5, act=True)
    header = jnp.concatenate([h0, h1, h2], axis=-1)

    block1 = run_seq(header, params["block1"])
    block2 = run_seq(block1, params["block2"])
    block3 = run_seq(block2, params["block3"])

    w_c, b_c = params["conv"]

    # PyTorch applies self.lrelu to every mask logit -> act=True on the heads.
    # Mask heads keep f32 outputs (returned to the caller).
    mask_0 = conv2d(run_seq(block3, params["block4"]), w_c, b_c, act=True,
                    out_dtype=jnp.float32)

    stage0 = jnp.concatenate([mask_0.astype(bf16), fh[1], block3], axis=-1)
    mask_1 = conv2d(run_seq(stage0, params["block5"]), w_c, b_c, act=True,
                    out_dtype=jnp.float32)

    stage1 = jnp.concatenate([upsample2(mask_1.astype(bf16)), fh[2], block2],
                             axis=-1)
    mask_2 = conv2d(run_seq(stage1, params["block6"]), w_c, b_c, act=True,
                    out_dtype=jnp.float32)

    stage2 = jnp.concatenate([upsample2(mask_2.astype(bf16)), fh[3], block1],
                             axis=-1)
    mask_3 = conv2d(run_seq(stage2, params["block7"]), w_c, b_c, act=True,
                    out_dtype=jnp.float32)

    mask_out = upsample2(upsample2(mask_3))

    to_nchw = lambda t: jnp.transpose(t, (0, 3, 1, 2))
    return [to_nchw(m) for m in (mask_0, mask_1, mask_2, mask_3, mask_out)]


# ---------------------------------------------------------------------------
if __name__ == "__main__":
    key = jax.random.PRNGKey(0)
    k_param, k_x, k_f1, k_f2, k_f3 = jax.random.split(key, 5)

    # 32x32 input: header 16x16, block1 8x8, block2 4x4, block3 2x2 — the
    # header / block1 convs take the Pallas path (M >= 128), the tiny decoder
    # matmuls use the XLA fallback as recommended by the perf review.
    B, C_IN, H, W = 2, 3, 32, 32
    NUM_JOINTS = 17

    params = init_segnet(k_param, in_channel=C_IN)

    x = jax.random.normal(k_x, (B, C_IN, H, W), jnp.float32)
    # fullheat: index 0 unused by forward; 1/2/3 at block3/block2/block1 resolutions
    fullheat = [
        jnp.zeros((B, NUM_JOINTS, H // 2, W // 2), jnp.float32),
        jax.random.normal(k_f1, (B, NUM_JOINTS, H // 16, W // 16), jnp.float32),
        jax.random.normal(k_f2, (B, NUM_JOINTS, H // 8, W // 8), jnp.float32),
        jax.random.normal(k_f3, (B, NUM_JOINTS, H // 4, W // 4), jnp.float32),
    ]

    # Close over params so Python bools ("down") / None entries stay static.
    fwd = jax.jit(lambda xx, ff: segnet_forward(params, xx, ff))

    outs = fwd(x, fullheat)
    outs = [jax.block_until_ready(o) for o in outs]

    # sanity: shapes must match PyTorch NCHW semantics
    assert outs[0].shape == (B, 1, H // 16, W // 16)
    assert outs[1].shape == (B, 1, H // 16, W // 16)
    assert outs[2].shape == (B, 1, H // 8, W // 8)
    assert outs[3].shape == (B, 1, H // 4, W // 4)
    assert outs[4].shape == (B, 1, H, W)
    assert all(bool(jnp.all(jnp.isfinite(o))) for o in outs)

    print("KERNEL_OK")
</pallas_src>

<mosaic_0001>
module attributes {stable_mosaic.version = 11 : i64} {
  func.func @_mm_kernel(%arg0: i32, %arg1: i32, %arg2: i32, %arg3: memref<256x128xbf16, #tpu.memory_space<vmem>>, %arg4: memref<128x128xbf16, #tpu.memory_space<vmem>>, %arg5: memref<1x128xf32, #tpu.memory_space<vmem>>, %arg6: memref<256x128xbf16, #tpu.memory_space<vmem>>, %arg7: memref<256x128xf32, #tpu.memory_space<vmem>>) attributes {dimension_semantics = [#tpu.dimension_semantics<parallel>, #tpu.dimension_semantics<parallel>, #tpu.dimension_semantics<arbitrary>], iteration_bounds = array<i64: 2, 1, 1>, scalar_prefetch = 0 : i64, scratch_operands = 1 : i64, tpu.core_type = #tpu.core_type<tc>, window_params = [{transform_indices = @transform_0, window_bounds = array<i64: 256, 128>}, {transform_indices = @transform_1, window_bounds = array<i64: 128, 128>}, {transform_indices = @transform_2, window_bounds = array<i64: 1, 128>}, {transform_indices = @transform_3, window_bounds = array<i64: 256, 128>}]} {
    %c0_i32 = arith.constant 0 : i32
    %0 = arith.cmpi eq, %arg2, %c0_i32 : i32
    %1 = arith.extui %0 : i1 to i32
    %c0_i32_0 = arith.constant 0 : i32
    %2 = arith.cmpi ne, %1, %c0_i32_0 : i32
    scf.if %2 {
      %cst_10 = arith.constant 0.000000e+00 : f32
      %12 = vector.broadcast %cst_10 : f32 to vector<256x128xf32>
      %c0_11 = arith.constant 0 : index
      %c0_12 = arith.constant 0 : index
      %13 = vector.load %arg7[%c0_11, %c0_12] : memref<256x128xf32, #tpu.memory_space<vmem>>, vector<256x128xf32>
      tpu.vector_store %arg7[%c0_11, %c0_12], %12 {strides = array<i32>} : memref<256x128xf32, #tpu.memory_space<vmem>>, vector<256x128xf32>,
    } else {
    }
    %c0 = arith.constant 0 : index
    %c0_1 = arith.constant 0 : index
    %3 = vector.load %arg7[%c0, %c0_1] : memref<256x128xf32, #tpu.memory_space<vmem>>, vector<256x128xf32>
    %c0_2 = arith.constant 0 : index
    %c0_3 = arith.constant 0 : index
    %4 = vector.load %arg3[%c0_2, %c0_3] : memref<256x128xbf16, #tpu.memory_space<vmem>>, vector<256x128xbf16>
    %c0_4 = arith.constant 0 : index
    %c0_5 = arith.constant 0 : index
    %5 = vector.load %arg4[%c0_4, %c0_5] : memref<128x128xbf16, #tpu.memory_space<vmem>>, vector<128x128xbf16>
    %cst = arith.constant dense<0.000000e+00> : vector<256x128xf32>
    %6 = tpu.matmul %4, %5, %cst {dimension_numbers = #tpu.dot_dimension_numbers<[1], [0], [0], [1], [0, 0, 1, 1], [], []>} : vector<256x128xbf16>, vector<128x128xbf16>, vector<256x128xf32> -> vector<256x128xf32>
    %7 = arith.addf %3, %6 : vector<256x128xf32>
    %c0_6 = arith.constant 0 : index
    %c0_7 = arith.constant 0 : index
    %8 = vector.load %arg7[%c0_6, %c0_7] : memref<256x128xf32, #tpu.memory_space<vmem>>, vector<256x128xf32>
    tpu.vector_store %arg7[%c0_6, %c0_7], %7 {strides = array<i32>} : memref<256x128xf32, #tpu.memory_space<vmem>>, vector<256x128xf32>,
    %c0_i32_8 = arith.constant 0 : i32
    %9 = arith.cmpi eq, %arg2, %c0_i32_8 : i32
    %10 = arith.extui %9 : i1 to i32
    %c0_i32_9 = arith.constant 0 : i32
    %11 = arith.cmpi ne, %10, %c0_i32_9 : i32
    scf.if %11 {
      %c0_10 = arith.constant 0 : index
      %c0_11 = arith.constant 0 : index
      %12 = vector.load %arg7[%c0_10, %c0_11] : memref<256x128xf32, #tpu.memory_space<vmem>>, vector<256x128xf32>
      %c0_12 = arith.constant 0 : index
      %c0_13 = arith.constant 0 : index
      %13 = vector.load %arg5[%c0_12, %c0_13] : memref<1x128xf32, #tpu.memory_space<vmem>>, vector<1x128xf32>
      %14 = vector.broadcast %13 : vector<1x128xf32> to vector<256x128xf32>
      %15 = arith.addf %12, %14 : vector<256x128xf32>
      %cst_14 = arith.constant 0.000000e+00 : f32
      %16 = vector.broadcast %cst_14 : f32 to vector<256x128xf32>
      %17 = arith.cmpf ogt, %15, %16 : vector<256x128xf32>
      %cst_15 = arith.constant 0.00999999977 : f32
      %18 = vector.broadcast %cst_15 : f32 to vector<256x128xf32>
      %19 = arith.mulf %18, %15 : vector<256x128xf32>
      %20 = arith.select %17, %15, %19 : vector<256x128xi1>, vector<256x128xf32>
      %21 = arith.truncf %20 : vector<256x128xf32> to vector<256x128xbf16>
      %c0_16 = arith.constant 0 : index
      %c0_17 = arith.constant 0 : index
      %22 = vector.load %arg6[%c0_16, %c0_17] : memref<256x128xbf16, #tpu.memory_space<vmem>>, vector<256x128xbf16>
      tpu.vector_store %arg6[%c0_16, %c0_17], %21 {strides = array<i32>} : memref<256x128xbf16, #tpu.memory_space<vmem>>, vector<256x128xbf16>,
    } else {
    }
    return
  }
  func.func @transform_0(%arg0: i32, %arg1: i32, %arg2: i32) -> (i32, i32) {
    %c0_i32 = arith.constant 0 : i32
    return %arg0, %arg2 : i32, i32
  }
  func.func @transform_1(%arg0: i32, %arg1: i32, %arg2: i32) -> (i32, i32) {
    %c0_i32 = arith.constant 0 : i32
    return %arg2, %arg1 : i32, i32
  }
  func.func @transform_2(%arg0: i32, %arg1: i32, %arg2: i32) -> (i32, i32) {
    %c0_i32 = arith.constant 0 : i32
    %c0_i32_0 = arith.constant 0 : i32
    return %c0_i32, %arg1 : i32, i32
  }
  func.func @transform_3(%arg0: i32, %arg1: i32, %arg2: i32) -> (i32, i32) {
    %c0_i32 = arith.constant 0 : i32
    return %arg0, %arg1 : i32, i32
  }
}

module attributes {stable_mosaic.version = 11 : i64} {
  func.func @_mm_kernel(%arg0: i32, %arg1: i32, %arg2: i32, %arg3: memref<256x128xbf16, #tpu.memory_space<vmem>>, %arg4: memref<128x128xbf16, #tpu.memory_space<vmem>>, %arg5: memref<1x128xf32, #tpu.memory_space<vmem>>, %arg6: memref<256x128xbf16, #tpu.memory_space<vmem>>, %arg7: memref<256x128xf32, #tpu.memory_space<vmem>>) attributes {dimension_semantics = [#tpu.dimension_semantics<parallel>, #tpu.dimension_semantics<parallel>, #tpu.dimension_semantics<arbitrary>], iteration_bounds = array<i64: 2, 1, 1>, scalar_prefetch = 0 : i64, scratch_operands = 1 : i64, tpu.core_type = #tpu.core_type<tc>, window_params = [{transform_indices = @transform_0, window_bounds = array<i64: 256, 128>}, {transform_indices = @transform_1, window_bounds = array<i64: 128, 128>}, {transform_indices = @transform_2, window_bounds = array<i64: 1, 128>}, {transform_indices = @transform_3, window_bounds = array<i64: 256, 128>}]} {
    %c0_i32 = arith.constant 0 : i32
    %0 = arith.cmpi eq, %arg2, %c0_i32 : i32
    %1 = arith.extui %0 : i1 to i32
    %c0_i32_0 = arith.constant 0 : i32
    %2 = arith.cmpi ne, %1, %c0_i32_0 : i32
    scf.if %2 {
      %cst_10 = arith.constant 0.000000e+00 : f32
      %12 = vector.broadcast %cst_10 : f32 to vector<256x128xf32>
      %c0_11 = arith.constant 0 : index
      %c0_12 = arith.constant 0 : index
      %13 = vector.load %arg7[%c0_11, %c0_12] : memref<256x128xf32, #tpu.memory_space<vmem>>, vector<256x128xf32>
      tpu.vector_store %arg7[%c0_11, %c0_12], %12 {strides = array<i32>} : memref<256x128xf32, #tpu.memory_space<vmem>>, vector<256x128xf32>,
    } else {
    }
    %c0 = arith.constant 0 : index
    %c0_1 = arith.constant 0 : index
    %3 = vector.load %arg7[%c0, %c0_1] : memref<256x128xf32, #tpu.memory_space<vmem>>, vector<256x128xf32>
    %c0_2 = arith.constant 0 : index
    %c0_3 = arith.constant 0 : index
    %4 = vector.load %arg3[%c0_2, %c0_3] : memref<256x128xbf16, #tpu.memory_space<vmem>>, vector<256x128xbf16>
    %c0_4 = arith.constant 0 : index
    %c0_5 = arith.constant 0 : index
    %5 = vector.load %arg4[%c0_4, %c0_5] : memref<128x128xbf16, #tpu.memory_space<vmem>>, vector<128x128xbf16>
    %cst = arith.constant dense<0.000000e+00> : vector<256x128xf32>
    %6 = tpu.matmul %4, %5, %cst {dimension_numbers = #tpu.dot_dimension_numbers<[1], [0], [0], [1], [0, 0, 1, 1], [], []>} : vector<256x128xbf16>, vector<128x128xbf16>, vector<256x128xf32> -> vector<256x128xf32>
    %7 = arith.addf %3, %6 : vector<256x128xf32>
    %c0_6 = arith.constant 0 : index
    %c0_7 = arith.constant 0 : index
    %8 = vector.load %arg7[%c0_6, %c0_7] : memref<256x128xf32, #tpu.memory_space<vmem>>, vector<256x128xf32>
    tpu.vector_store %arg7[%c0_6, %c0_7], %7 {strides = array<i32>} : memref<256x128xf32, #tpu.memory_space<vmem>>, vector<256x128xf32>,
    %c0_i32_8 = arith.constant 0 : i32
    %9 = arith.cmpi eq, %arg2, %c0_i32_8 : i32
    %10 = arith.extui %9 : i1 to i32
    %c0_i32_9 = arith.constant 0 : i32
    %11 = arith.cmpi ne, %10, %c0_i32_9 : i32
    scf.if %11 {
      %c0_10 = arith.constant 0 : index
      %c0_11 = arith.constant 0 : index
      %12 = vector.load %arg7[%c0_10, %c0_11] : memref<256x128xf32, #tpu.memory_space<vmem>>, vector<256x128xf32>
      %c0_12 = arith.constant 0 : index
      %c0_13 = arith.constant 0 : index
      %13 = vector.load %arg5[%c0_12, %c0_13] : memref<1x128xf32, #tpu.memory_space<vmem>>, vector<1x128xf32>
      %14 = vector.broadcast %13 : vector<1x128xf32> to vector<256x128xf32>
      %15 = arith.addf %12, %14 : vector<256x128xf32>
      %cst_14 = arith.constant 0.000000e+00 : f32
      %16 = vector.broadcast %cst_14 : f32 to vector<256x128xf32>
      %17 = arith.cmpf ogt, %15, %16 : vector<256x128xf32>
      %cst_15 = arith.constant 0.00999999977 : f32
      %18 = vector.broadcast %cst_15 : f32 to vector<256x128xf32>
      %19 = arith.mulf %18, %15 : vector<256x128xf32>
      %20 = arith.select %17, %15, %19 : vector<256x128xi1>, vector<256x128xf32>
      %21 = arith.truncf %20 : vector<256x128xf32> to vector<256x128xbf16>
      %c0_16 = arith.constant 0 : index
      %c0_17 = arith.constant 0 : index
      %22 = vector.load %arg6[%c0_16, %c0_17] : memref<256x128xbf16, #tpu.memory_space<vmem>>, vector<256x128xbf16>
      tpu.vector_store %arg6[%c0_16, %c0_17], %21 {strides = array<i32>} : memref<256x128xbf16, #tpu.memory_space<vmem>>, vector<256x128xbf16>,
    } else {
    }
    return
  }
  func.func @transform_0(%arg0: i32, %arg1: i32, %arg2: i32) -> (i32, i32) {
    %c0_i32 = arith.constant 0 : i32
    return %arg0, %arg2 : i32, i32
  }
  func.func @transform_1(%arg0: i32, %arg1: i32, %arg2: i32) -> (i32, i32) {
    %c0_i32 = arith.constant 0 : i32
    return %arg2, %arg1 : i32, i32
  }
  func.func @transform_2(%arg0: i32, %arg1: i32, %arg2: i32) -> (i32, i32) {
    %c0_i32 = arith.constant 0 : i32
    %c0_i32_0 = arith.constant 0 : i32
    return %c0_i32, %arg1 : i32, i32
  }
  func.func @transform_3(%arg0: i32, %arg1: i32, %arg2: i32) -> (i32, i32) {
    %c0_i32 = arith.constant 0 : i32
    return %arg0, %arg1 : i32, i32
  }
}

module attributes {stable_mosaic.version = 11 : i64} {
  func.func @_mm_kernel(%arg0: i32, %arg1: i32, %arg2: i32, %arg3: memref<128x640xbf16, #tpu.memory_space<vmem>>, %arg4: memref<640x128xbf16, #tpu.memory_space<vmem>>, %arg5: memref<1x128xf32, #tpu.memory_space<vmem>>, %arg6: memref<128x128xbf16, #tpu.memory_space<vmem>>, %arg7: memref<128x128xf32, #tpu.memory_space<vmem>>) attributes {dimension_semantics = [#tpu.dimension_semantics<parallel>, #tpu.dimension_semantics<parallel>, #tpu.dimension_semantics<arbitrary>], iteration_bounds = array<i64: 1, 1, 1>, scalar_prefetch = 0 : i64, scratch_operands = 1 : i64, tpu.core_type = #tpu.core_type<tc>, window_params = [{transform_indices = @transform_0, window_bounds = array<i64: 128, 640>}, {transform_indices = @transform_1, window_bounds = array<i64: 640, 128>}, {transform_indices = @transform_2, window_bounds = array<i64: 1, 128>}, {transform_indices = @transform_3, window_bounds = array<i64: 128, 128>}]} {
    %c0_i32 = arith.constant 0 : i32
    %0 = arith.cmpi eq, %arg2, %c0_i32 : i32
    %1 = arith.extui %0 : i1 to i32
    %c0_i32_0 = arith.constant 0 : i32
    %2 = arith.cmpi ne, %1, %c0_i32_0 : i32
    scf.if %2 {
      %cst_10 = arith.constant 0.000000e+00 : f32
      %12 = vector.broadcast %cst_10 : f32 to vector<128x128xf32>
      %c0_11 = arith.constant 0 : index
      %c0_12 = arith.constant 0 : index
      %13 = vector.load %arg7[%c0_11, %c0_12] : memref<128x128xf32, #tpu.memory_space<vmem>>, vector<128x128xf32>
      tpu.vector_store %arg7[%c0_11, %c0_12], %12 {strides = array<i32>} : memref<128x128xf32, #tpu.memory_space<vmem>>, vector<128x128xf32>,
    } else {
    }
    %c0 = arith.constant 0 : index
    %c0_1 = arith.constant 0 : index
    %3 = vector.load %arg7[%c0, %c0_1] : memref<128x128xf32, #tpu.memory_space<vmem>>, vector<128x128xf32>
    %c0_2 = arith.constant 0 : index
    %c0_3 = arith.constant 0 : index
    %4 = vector.load %arg3[%c0_2, %c0_3] : memref<128x640xbf16, #tpu.memory_space<vmem>>, vector<128x640xbf16>
    %c0_4 = arith.constant 0 : index
    %c0_5 = arith.constant 0 : index
    %5 = vector.load %arg4[%c0_4, %c0_5] : memref<640x128xbf16, #tpu.memory_space<vmem>>, vector<640x128xbf16>
    %cst = arith.constant dense<0.000000e+00> : vector<128x128xf32>
    %6 = tpu.matmul %4, %5, %cst {dimension_numbers = #tpu.dot_dimension_numbers<[1], [0], [0], [1], [0, 0, 1, 1], [], []>} : vector<128x640xbf16>, vector<640x128xbf16>, vector<128x128xf32> -> vector<128x128xf32>
    %7 = arith.addf %3, %6 : vector<128x128xf32>
    %c0_6 = arith.constant 0 : index
    %c0_7 = arith.constant 0 : index
    %8 = vector.load %arg7[%c0_6, %c0_7] : memref<128x128xf32, #tpu.memory_space<vmem>>, vector<128x128xf32>
    tpu.vector_store %arg7[%c0_6, %c0_7], %7 {strides = array<i32>} : memref<128x128xf32, #tpu.memory_space<vmem>>, vector<128x128xf32>,
    %c0_i32_8 = arith.constant 0 : i32
    %9 = arith.cmpi eq, %arg2, %c0_i32_8 : i32
    %10 = arith.extui %9 : i1 to i32
    %c0_i32_9 = arith.constant 0 : i32
    %11 = arith.cmpi ne, %10, %c0_i32_9 : i32
    scf.if %11 {
      %c0_10 = arith.constant 0 : index
      %c0_11 = arith.constant 0 : index
      %12 = vector.load %arg7[%c0_10, %c0_11] : memref<128x128xf32, #tpu.memory_space<vmem>>, vector<128x128xf32>
      %c0_12 = arith.constant 0 : index
      %c0_13 = arith.constant 0 : index
      %13 = vector.load %arg5[%c0_12, %c0_13] : memref<1x128xf32, #tpu.memory_space<vmem>>, vector<1x128xf32>
      %14 = vector.broadcast %13 : vector<1x128xf32> to vector<128x128xf32>
      %15 = arith.addf %12, %14 : vector<128x128xf32>
      %cst_14 = arith.constant 0.000000e+00 : f32
      %16 = vector.broadcast %cst_14 : f32 to vector<128x128xf32>
      %17 = arith.cmpf ogt, %15, %16 : vector<128x128xf32>
      %cst_15 = arith.constant 0.00999999977 : f32
      %18 = vector.broadcast %cst_15 : f32 to vector<128x128xf32>
      %19 = arith.mulf %18, %15 : vector<128x128xf32>
      %20 = arith.select %17, %15, %19 : vector<128x128xi1>, vector<128x128xf32>
      %21 = arith.truncf %20 : vector<128x128xf32> to vector<128x128xbf16>
      %c0_16 = arith.constant 0 : index
      %c0_17 = arith.constant 0 : index
      %22 = vector.load %arg6[%c0_16, %c0_17] : memref<128x128xbf16, #tpu.memory_space<vmem>>, vector<128x128xbf16>
      tpu.vector_store %arg6[%c0_16, %c0_17], %21 {strides = array<i32>} : memref<128x128xbf16, #tpu.memory_space<vmem>>, vector<128x128xbf16>,
    } else {
    }
    return
  }
  func.func @transform_0(%arg0: i32, %arg1: i32, %arg2: i32) -> (i32, i32) {
    %c0_i32 = arith.constant 0 : i32
    return %arg0, %arg2 : i32, i32
  }
  func.func @transform_1(%arg0: i32, %arg1: i32, %arg2: i32) -> (i32, i32) {
    %c0_i32 = arith.constant 0 : i32
    return %arg2, %arg1 : i32, i32
  }
  func.func @transform_2(%arg0: i32, %arg1: i32, %arg2: i32) -> (i32, i32) {
    %c0_i32 = arith.constant 0 : i32
    %c0_i32_0 = arith.constant 0 : i32
    return %c0_i32, %arg1 : i32, i32
  }
  func.func @transform_3(%arg0: i32, %arg1: i32, %arg2: i32) -> (i32, i32) {
    %c0_i32 = arith.constant 0 : i32
    return %arg0, %arg1 : i32, i32
  }
}

module attributes {stable_mosaic.version = 11 : i64} {
  func.func @_mm_kernel(%arg0: i32, %arg1: i32, %arg2: i32, %arg3: memref<128x128xbf16, #tpu.memory_space<vmem>>, %arg4: memref<128x128xbf16, #tpu.memory_space<vmem>>, %arg5: memref<1x128xf32, #tpu.memory_space<vmem>>, %arg6: memref<128x128xbf16, #tpu.memory_space<vmem>>, %arg7: memref<128x128xf32, #tpu.memory_space<vmem>>) attributes {dimension_semantics = [#tpu.dimension_semantics<parallel>, #tpu.dimension_semantics<parallel>, #tpu.dimension_semantics<arbitrary>], iteration_bounds = array<i64: 1, 1, 1>, scalar_prefetch = 0 : i64, scratch_operands = 1 : i64, tpu.core_type = #tpu.core_type<tc>, window_params = [{transform_indices = @transform_0, window_bounds = array<i64: 128, 128>}, {transform_indices = @transform_1, window_bounds = array<i64: 128, 128>}, {transform_indices = @transform_2, window_bounds = array<i64: 1, 128>}, {transform_indices = @transform_3, window_bounds = array<i64: 128, 128>}]} {
    %c0_i32 = arith.constant 0 : i32
    %0 = arith.cmpi eq, %arg2, %c0_i32 : i32
    %1 = arith.extui %0 : i1 to i32
    %c0_i32_0 = arith.constant 0 : i32
    %2 = arith.cmpi ne, %1, %c0_i32_0 : i32
    scf.if %2 {
      %cst_10 = arith.constant 0.000000e+00 : f32
      %12 = vector.broadcast %cst_10 : f32 to vector<128x128xf32>
      %c0_11 = arith.constant 0 : index
      %c0_12 = arith.constant 0 : index
      %13 = vector.load %arg7[%c0_11, %c0_12] : memref<128x128xf32, #tpu.memory_space<vmem>>, vector<128x128xf32>
      tpu.vector_store %arg7[%c0_11, %c0_12], %12 {strides = array<i32>} : memref<128x128xf32, #tpu.memory_space<vmem>>, vector<128x128xf32>,
    } else {
    }
    %c0 = arith.constant 0 : index
    %c0_1 = arith.constant 0 : index
    %3 = vector.load %arg7[%c0, %c0_1] : memref<128x128xf32, #tpu.memory_space<vmem>>, vector<128x128xf32>
    %c0_2 = arith.constant 0 : index
    %c0_3 = arith.constant 0 : index
    %4 = vector.load %arg3[%c0_2, %c0_3] : memref<128x128xbf16, #tpu.memory_space<vmem>>, vector<128x128xbf16>
    %c0_4 = arith.constant 0 : index
    %c0_5 = arith.constant 0 : index
    %5 = vector.load %arg4[%c0_4, %c0_5] : memref<128x128xbf16, #tpu.memory_space<vmem>>, vector<128x128xbf16>
    %cst = arith.constant dense<0.000000e+00> : vector<128x128xf32>
    %6 = tpu.matmul %4, %5, %cst {dimension_numbers = #tpu.dot_dimension_numbers<[1], [0], [0], [1], [0, 0, 1, 1], [], []>} : vector<128x128xbf16>, vector<128x128xbf16>, vector<128x128xf32> -> vector<128x128xf32>
    %7 = arith.addf %3, %6 : vector<128x128xf32>
    %c0_6 = arith.constant 0 : index
    %c0_7 = arith.constant 0 : index
    %8 = vector.load %arg7[%c0_6, %c0_7] : memref<128x128xf32, #tpu.memory_space<vmem>>, vector<128x128xf32>
    tpu.vector_store %arg7[%c0_6, %c0_7], %7 {strides = array<i32>} : memref<128x128xf32, #tpu.memory_space<vmem>>, vector<128x128xf32>,
    %c0_i32_8 = arith.constant 0 : i32
    %9 = arith.cmpi eq, %arg2, %c0_i32_8 : i32
    %10 = arith.extui %9 : i1 to i32
    %c0_i32_9 = arith.constant 0 : i32
    %11 = arith.cmpi ne, %10, %c0_i32_9 : i32
    scf.if %11 {
      %c0_10 = arith.constant 0 : index
      %c0_11 = arith.constant 0 : index
      %12 = vector.load %arg7[%c0_10, %c0_11] : memref<128x128xf32, #tpu.memory_space<vmem>>, vector<128x128xf32>
      %c0_12 = arith.constant 0 : index
      %c0_13 = arith.constant 0 : index
      %13 = vector.load %arg5[%c0_12, %c0_13] : memref<1x128xf32, #tpu.memory_space<vmem>>, vector<1x128xf32>
      %14 = vector.broadcast %13 : vector<1x128xf32> to vector<128x128xf32>
      %15 = arith.addf %12, %14 : vector<128x128xf32>
      %16 = arith.truncf %15 : vector<128x128xf32> to vector<128x128xbf16>
      %c0_14 = arith.constant 0 : index
      %c0_15 = arith.constant 0 : index
      %17 = vector.load %arg6[%c0_14, %c0_15] : memref<128x128xbf16, #tpu.memory_space<vmem>>, vector<128x128xbf16>
      tpu.vector_store %arg6[%c0_14, %c0_15], %16 {strides = array<i32>} : memref<128x128xbf16, #tpu.memory_space<vmem>>, vector<128x128xbf16>,
    } else {
    }
    return
  }
  func.func @transform_0(%arg0: i32, %arg1: i32, %arg2: i32) -> (i32, i32) {
    %c0_i32 = arith.constant 0 : i32
    return %arg0, %arg2 : i32, i32
  }
  func.func @transform_1(%arg0: i32, %arg1: i32, %arg2: i32) -> (i32, i32) {
    %c0_i32 = arith.constant 0 : i32
    return %arg2, %arg1 : i32, i32
  }
  func.func @transform_2(%arg0: i32, %arg1: i32, %arg2: i32) -> (i32, i32) {
    %c0_i32 = arith.constant 0 : i32
    %c0_i32_0 = arith.constant 0 : i32
    return %c0_i32, %arg1 : i32, i32
  }
  func.func @transform_3(%arg0: i32, %arg1: i32, %arg2: i32) -> (i32, i32) {
    %c0_i32 = arith.constant 0 : i32
    return %arg0, %arg1 : i32, i32
  }
}

module attributes {stable_mosaic.version = 11 : i64} {
  func.func @_mm_res_kernel(%arg0: i32, %arg1: i32, %arg2: i32, %arg3: memref<128x1152xbf16, #tpu.memory_space<vmem>>, %arg4: memref<1152x128xbf16, #tpu.memory_space<vmem>>, %arg5: memref<1x128xf32, #tpu.memory_space<vmem>>, %arg6: memref<128x128xbf16, #tpu.memory_space<vmem>>, %arg7: memref<128x128xbf16, #tpu.memory_space<vmem>>, %arg8: memref<128x128xf32, #tpu.memory_space<vmem>>) attributes {dimension_semantics = [#tpu.dimension_semantics<parallel>, #tpu.dimension_semantics<parallel>, #tpu.dimension_semantics<arbitrary>], iteration_bounds = array<i64: 1, 1, 1>, scalar_prefetch = 0 : i64, scratch_operands = 1 : i64, tpu.core_type = #tpu.core_type<tc>, window_params = [{transform_indices = @transform_0, window_bounds = array<i64: 128, 1152>}, {transform_indices = @transform_1, window_bounds = array<i64: 1152, 128>}, {transform_indices = @transform_2, window_bounds = array<i64: 1, 128>}, {transform_indices = @transform_3, window_bounds = array<i64: 128, 128>}, {transform_indices = @transform_4, window_bounds = array<i64: 128, 128>}]} {
    %c0_i32 = arith.constant 0 : i32
    %0 = arith.cmpi eq, %arg2, %c0_i32 : i32
    %1 = arith.extui %0 : i1 to i32
    %c0_i32_0 = arith.constant 0 : i32
    %2 = arith.cmpi ne, %1, %c0_i32_0 : i32
    scf.if %2 {
      %cst_10 = arith.constant 0.000000e+00 : f32
      %12 = vector.broadcast %cst_10 : f32 to vector<128x128xf32>
      %c0_11 = arith.constant 0 : index
      %c0_12 = arith.constant 0 : index
      %13 = vector.load %arg8[%c0_11, %c0_12] : memref<128x128xf32, #tpu.memory_space<vmem>>, vector<128x128xf32>
      tpu.vector_store %arg8[%c0_11, %c0_12], %12 {strides = array<i32>} : memref<128x128xf32, #tpu.memory_space<vmem>>, vector<128x128xf32>,
    } else {
    }
    %c0 = arith.constant 0 : index
    %c0_1 = arith.constant 0 : index
    %3 = vector.load %arg8[%c0, %c0_1] : memref<128x128xf32, #tpu.memory_space<vmem>>, vector<128x128xf32>
    %c0_2 = arith.constant 0 : index
    %c0_3 = arith.constant 0 : index
    %4 = vector.load %arg3[%c0_2, %c0_3] : memref<128x1152xbf16, #tpu.memory_space<vmem>>, vector<128x1152xbf16>
    %c0_4 = arith.constant 0 : index
    %c0_5 = arith.constant 0 : index
    %5 = vector.load %arg4[%c0_4, %c0_5] : memref<1152x128xbf16, #tpu.memory_space<vmem>>, vector<1152x128xbf16>
    %cst = arith.constant dense<0.000000e+00> : vector<128x128xf32>
    %6 = tpu.matmul %4, %5, %cst {dimension_numbers = #tpu.dot_dimension_numbers<[1], [0], [0], [1], [0, 0, 1, 1], [], []>} : vector<128x1152xbf16>, vector<1152x128xbf16>, vector<128x128xf32> -> vector<128x128xf32>
    %7 = arith.addf %3, %6 : vector<128x128xf32>
    %c0_6 = arith.constant 0 : index
    %c0_7 = arith.constant 0 : index
    %8 = vector.load %arg8[%c0_6, %c0_7] : memref<128x128xf32, #tpu.memory_space<vmem>>, vector<128x128xf32>
    tpu.vector_store %arg8[%c0_6, %c0_7], %7 {strides = array<i32>} : memref<128x128xf32, #tpu.memory_space<vmem>>, vector<128x128xf32>,
    %c0_i32_8 = arith.constant 0 : i32
    %9 = arith.cmpi eq, %arg2, %c0_i32_8 : i32
    %10 = arith.extui %9 : i1 to i32
    %c0_i32_9 = arith.constant 0 : i32
    %11 = arith.cmpi ne, %10, %c0_i32_9 : i32
    scf.if %11 {
      %c0_10 = arith.constant 0 : index
      %c0_11 = arith.constant 0 : index
      %12 = vector.load %arg8[%c0_10, %c0_11] : memref<128x128xf32, #tpu.memory_space<vmem>>, vector<128x128xf32>
      %c0_12 = arith.constant 0 : index
      %c0_13 = arith.constant 0 : index
      %13 = vector.load %arg5[%c0_12, %c0_13] : memref<1x128xf32, #tpu.memory_space<vmem>>, vector<1x128xf32>
      %14 = vector.broadcast %13 : vector<1x128xf32> to vector<128x128xf32>
      %15 = arith.addf %12, %14 : vector<128x128xf32>
      %c0_14 = arith.constant 0 : index
      %c0_15 = arith.constant 0 : index
      %16 = vector.load %arg6[%c0_14, %c0_15] : memref<128x128xbf16, #tpu.memory_space<vmem>>, vector<128x128xbf16>
      %17 = arith.extf %16 : vector<128x128xbf16> to vector<128x128xf32>
      %18 = arith.addf %15, %17 : vector<128x128xf32>
      %cst_16 = arith.constant 0.000000e+00 : f32
      %19 = vector.broadcast %cst_16 : f32 to vector<128x128xf32>
      %20 = arith.cmpf ogt, %18, %19 : vector<128x128xf32>
      %cst_17 = arith.constant 0.00999999977 : f32
      %21 = vector.broadcast %cst_17 : f32 to vector<128x128xf32>
      %22 = arith.mulf %21, %18 : vector<128x128xf32>
      %23 = arith.select %20, %18, %22 : vector<128x128xi1>, vector<128x128xf32>
      %24 = arith.truncf %23 : vector<128x128xf32> to vector<128x128xbf16>
      %c0_18 = arith.constant 0 : index
      %c0_19 = arith.constant 0 : index
      %25 = vector.load %arg7[%c0_18, %c0_19] : memref<128x128xbf16, #tpu.memory_space<vmem>>, vector<128x128xbf16>
      tpu.vector_store %arg7[%c0_18, %c0_19], %24 {strides = array<i32>} : memref<128x128xbf16, #tpu.memory_space<vmem>>, vector<128x128xbf16>,
    } else {
    }
    return
  }
  func.func @transform_0(%arg0: i32, %arg1: i32, %arg2: i32) -> (i32, i32) {
    %c0_i32 = arith.constant 0 : i32
    return %arg0, %arg2 : i32, i32
  }
  func.func @transform_1(%arg0: i32, %arg1: i32, %arg2: i32) -> (i32, i32) {
    %c0_i32 = arith.constant 0 : i32
    return %arg2, %arg1 : i32, i32
  }
  func.func @transform_2(%arg0: i32, %arg1: i32, %arg2: i32) -> (i32, i32) {
    %c0_i32 = arith.constant 0 : i32
    %c0_i32_0 = arith.constant 0 : i32
    return %c0_i32, %arg1 : i32, i32
  }
  func.func @transform_3(%arg0: i32, %arg1: i32, %arg2: i32) -> (i32, i32) {
    %c0_i32 = arith.constant 0 : i32
    return %arg0, %arg1 : i32, i32
  }
  func.func @transform_4(%arg0: i32, %arg1: i32, %arg2: i32) -> (i32, i32) {
    %c0_i32 = arith.constant 0 : i32
    return %arg0, %arg1 : i32, i32
  }
}

module attributes {stable_mosaic.version = 11 : i64} {
  func.func @_mm_kernel(%arg0: i32, %arg1: i32, %arg2: i32, %arg3: memref<128x1152xbf16, #tpu.memory_space<vmem>>, %arg4: memref<1152x128xbf16, #tpu.memory_space<vmem>>, %arg5: memref<1x128xf32, #tpu.memory_space<vmem>>, %arg6: memref<128x128xbf16, #tpu.memory_space<vmem>>, %arg7: memref<128x128xf32, #tpu.memory_space<vmem>>) attributes {dimension_semantics = [#tpu.dimension_semantics<parallel>, #tpu.dimension_semantics<parallel>, #tpu.dimension_semantics<arbitrary>], iteration_bounds = array<i64: 1, 1, 1>, scalar_prefetch = 0 : i64, scratch_operands = 1 : i64, tpu.core_type = #tpu.core_type<tc>, window_params = [{transform_indices = @transform_0, window_bounds = array<i64: 128, 1152>}, {transform_indices = @transform_1, window_bounds = array<i64: 1152, 128>}, {transform_indices = @transform_2, window_bounds = array<i64: 1, 128>}, {transform_indices = @transform_3, window_bounds = array<i64: 128, 128>}]} {
    %c0_i32 = arith.constant 0 : i32
    %0 = arith.cmpi eq, %arg2, %c0_i32 : i32
    %1 = arith.extui %0 : i1 to i32
    %c0_i32_0 = arith.constant 0 : i32
    %2 = arith.cmpi ne, %1, %c0_i32_0 : i32
    scf.if %2 {
      %cst_10 = arith.constant 0.000000e+00 : f32
      %12 = vector.broadcast %cst_10 : f32 to vector<128x128xf32>
      %c0_11 = arith.constant 0 : index
      %c0_12 = arith.constant 0 : index
      %13 = vector.load %arg7[%c0_11, %c0_12] : memref<128x128xf32, #tpu.memory_space<vmem>>, vector<128x128xf32>
      tpu.vector_store %arg7[%c0_11, %c0_12], %12 {strides = array<i32>} : memref<128x128xf32, #tpu.memory_space<vmem>>, vector<128x128xf32>,
    } else {
    }
    %c0 = arith.constant 0 : index
    %c0_1 = arith.constant 0 : index
    %3 = vector.load %arg7[%c0, %c0_1] : memref<128x128xf32, #tpu.memory_space<vmem>>, vector<128x128xf32>
    %c0_2 = arith.constant 0 : index
    %c0_3 = arith.constant 0 : index
    %4 = vector.load %arg3[%c0_2, %c0_3] : memref<128x1152xbf16, #tpu.memory_space<vmem>>, vector<128x1152xbf16>
    %c0_4 = arith.constant 0 : index
    %c0_5 = arith.constant 0 : index
    %5 = vector.load %arg4[%c0_4, %c0_5] : memref<1152x128xbf16, #tpu.memory_space<vmem>>, vector<1152x128xbf16>
    %cst = arith.constant dense<0.000000e+00> : vector<128x128xf32>
    %6 = tpu.matmul %4, %5, %cst {dimension_numbers = #tpu.dot_dimension_numbers<[1], [0], [0], [1], [0, 0, 1, 1], [], []>} : vector<128x1152xbf16>, vector<1152x128xbf16>, vector<128x128xf32> -> vector<128x128xf32>
    %7 = arith.addf %3, %6 : vector<128x128xf32>
    %c0_6 = arith.constant 0 : index
    %c0_7 = arith.constant 0 : index
    %8 = vector.load %arg7[%c0_6, %c0_7] : memref<128x128xf32, #tpu.memory_space<vmem>>, vector<128x128xf32>
    tpu.vector_store %arg7[%c0_6, %c0_7], %7 {strides = array<i32>} : memref<128x128xf32, #tpu.memory_space<vmem>>, vector<128x128xf32>,
    %c0_i32_8 = arith.constant 0 : i32
    %9 = arith.cmpi eq, %arg2, %c0_i32_8 : i32
    %10 = arith.extui %9 : i1 to i32
    %c0_i32_9 = arith.constant 0 : i32
    %11 = arith.cmpi ne, %10, %c0_i32_9 : i32
    scf.if %11 {
      %c0_10 = arith.constant 0 : index
      %c0_11 = arith.constant 0 : index
      %12 = vector.load %arg7[%c0_10, %c0_11] : memref<128x128xf32, #tpu.memory_space<vmem>>, vector<128x128xf32>
      %c0_12 = arith.constant 0 : index
      %c0_13 = arith.constant 0 : index
      %13 = vector.load %arg5[%c0_12, %c0_13] : memref<1x128xf32, #tpu.memory_space<vmem>>, vector<1x128xf32>
      %14 = vector.broadcast %13 : vector<1x128xf32> to vector<128x128xf32>
      %15 = arith.addf %12, %14 : vector<128x128xf32>
      %cst_14 = arith.constant 0.000000e+00 : f32
      %16 = vector.broadcast %cst_14 : f32 to vector<128x128xf32>
      %17 = arith.cmpf ogt, %15, %16 : vector<128x128xf32>
      %cst_15 = arith.constant 0.00999999977 : f32
      %18 = vector.broadcast %cst_15 : f32 to vector<128x128xf32>
      %19 = arith.mulf %18, %15 : vector<128x128xf32>
      %20 = arith.select %17, %15, %19 : vector<128x128xi1>, vector<128x128xf32>
      %21 = arith.truncf %20 : vector<128x128xf32> to vector<128x128xbf16>
      %c0_16 = arith.constant 0 : index
      %c0_17 = arith.constant 0 : index
      %22 = vector.load %arg6[%c0_16, %c0_17] : memref<128x128xbf16, #tpu.memory_space<vmem>>, vector<128x128xbf16>
      tpu.vector_store %arg6[%c0_16, %c0_17], %21 {strides = array<i32>} : memref<128x128xbf16, #tpu.memory_space<vmem>>, vector<128x128xbf16>,
    } else {
    }
    return
  }
  func.func @transform_0(%arg0: i32, %arg1: i32, %arg2: i32) -> (i32, i32) {
    %c0_i32 = arith.constant 0 : i32
    return %arg0, %arg2 : i32, i32
  }
  func.func @transform_1(%arg0: i32, %arg1: i32, %arg2: i32) -> (i32, i32) {
    %c0_i32 = arith.constant 0 : i32
    return %arg2, %arg1 : i32, i32
  }
  func.func @transform_2(%arg0: i32, %arg1: i32, %arg2: i32) -> (i32, i32) {
    %c0_i32 = arith.constant 0 : i32
    %c0_i32_0 = arith.constant 0 : i32
    return %c0_i32, %arg1 : i32, i32
  }
  func.func @transform_3(%arg0: i32, %arg1: i32, %arg2: i32) -> (i32, i32) {
    %c0_i32 = arith.constant 0 : i32
    return %arg0, %arg1 : i32, i32
  }
}

module attributes {stable_mosaic.version = 11 : i64} {
  func.func @_mm_kernel(%arg0: i32, %arg1: i32, %arg2: i32, %arg3: memref<128x1408xbf16, #tpu.memory_space<vmem>>, %arg4: memref<1408x128xbf16, #tpu.memory_space<vmem>>, %arg5: memref<1x128xf32, #tpu.memory_space<vmem>>, %arg6: memref<128x128xbf16, #tpu.memory_space<vmem>>, %arg7: memref<128x128xf32, #tpu.memory_space<vmem>>) attributes {dimension_semantics = [#tpu.dimension_semantics<parallel>, #tpu.dimension_semantics<parallel>, #tpu.dimension_semantics<arbitrary>], iteration_bounds = array<i64: 1, 1, 1>, scalar_prefetch = 0 : i64, scratch_operands = 1 : i64, tpu.core_type = #tpu.core_type<tc>, window_params = [{transform_indices = @transform_0, window_bounds = array<i64: 128, 1408>}, {transform_indices = @transform_1, window_bounds = array<i64: 1408, 128>}, {transform_indices = @transform_2, window_bounds = array<i64: 1, 128>}, {transform_indices = @transform_3, window_bounds = array<i64: 128, 128>}]} {
    %c0_i32 = arith.constant 0 : i32
    %0 = arith.cmpi eq, %arg2, %c0_i32 : i32
    %1 = arith.extui %0 : i1 to i32
    %c0_i32_0 = arith.constant 0 : i32
    %2 = arith.cmpi ne, %1, %c0_i32_0 : i32
    scf.if %2 {
      %cst_10 = arith.constant 0.000000e+00 : f32
      %12 = vector.broadcast %cst_10 : f32 to vector<128x128xf32>
      %c0_11 = arith.constant 0 : index
      %c0_12 = arith.constant 0 : index
      %13 = vector.load %arg7[%c0_11, %c0_12] : memref<128x128xf32, #tpu.memory_space<vmem>>, vector<128x128xf32>
      tpu.vector_store %arg7[%c0_11, %c0_12], %12 {strides = array<i32>} : memref<128x128xf32, #tpu.memory_space<vmem>>, vector<128x128xf32>,
    } else {
    }
    %c0 = arith.constant 0 : index
    %c0_1 = arith.constant 0 : index
    %3 = vector.load %arg7[%c0, %c0_1] : memref<128x128xf32, #tpu.memory_space<vmem>>, vector<128x128xf32>
    %c0_2 = arith.constant 0 : index
    %c0_3 = arith.constant 0 : index
    %4 = vector.load %arg3[%c0_2, %c0_3] : memref<128x1408xbf16, #tpu.memory_space<vmem>>, vector<128x1408xbf16>
    %c0_4 = arith.constant 0 : index
    %c0_5 = arith.constant 0 : index
    %5 = vector.load %arg4[%c0_4, %c0_5] : memref<1408x128xbf16, #tpu.memory_space<vmem>>, vector<1408x128xbf16>
    %cst = arith.constant dense<0.000000e+00> : vector<128x128xf32>
    %6 = tpu.matmul %4, %5, %cst {dimension_numbers = #tpu.dot_dimension_numbers<[1], [0], [0], [1], [0, 0, 1, 1], [], []>} : vector<128x1408xbf16>, vector<1408x128xbf16>, vector<128x128xf32> -> vector<128x128xf32>
    %7 = arith.addf %3, %6 : vector<128x128xf32>
    %c0_6 = arith.constant 0 : index
    %c0_7 = arith.constant 0 : index
    %8 = vector.load %arg7[%c0_6, %c0_7] : memref<128x128xf32, #tpu.memory_space<vmem>>, vector<128x128xf32>
    tpu.vector_store %arg7[%c0_6, %c0_7], %7 {strides = array<i32>} : memref<128x128xf32, #tpu.memory_space<vmem>>, vector<128x128xf32>,
    %c0_i32_8 = arith.constant 0 : i32
    %9 = arith.cmpi eq, %arg2, %c0_i32_8 : i32
    %10 = arith.extui %9 : i1 to i32
    %c0_i32_9 = arith.constant 0 : i32
    %11 = arith.cmpi ne, %10, %c0_i32_9 : i32
    scf.if %11 {
      %c0_10 = arith.constant 0 : index
      %c0_11 = arith.constant 0 : index
      %12 = vector.load %arg7[%c0_10, %c0_11] : memref<128x128xf32, #tpu.memory_space<vmem>>, vector<128x128xf32>
      %c0_12 = arith.constant 0 : index
      %c0_13 = arith.constant 0 : index
      %13 = vector.load %arg5[%c0_12, %c0_13] : memref<1x128xf32, #tpu.memory_space<vmem>>, vector<1x128xf32>
      %14 = vector.broadcast %13 : vector<1x128xf32> to vector<128x128xf32>
      %15 = arith.addf %12, %14 : vector<128x128xf32>
      %cst_14 = arith.constant 0.000000e+00 : f32
      %16 = vector.broadcast %cst_14 : f32 to vector<128x128xf32>
      %17 = arith.cmpf ogt, %15, %16 : vector<128x128xf32>
      %cst_15 = arith.constant 0.00999999977 : f32
      %18 = vector.broadcast %cst_15 : f32 to vector<128x128xf32>
      %19 = arith.mulf %18, %15 : vector<128x128xf32>
      %20 = arith.select %17, %15, %19 : vector<128x128xi1>, vector<128x128xf32>
      %21 = arith.truncf %20 : vector<128x128xf32> to vector<128x128xbf16>
      %c0_16 = arith.constant 0 : index
      %c0_17 = arith.constant 0 : index
      %22 = vector.load %arg6[%c0_16, %c0_17] : memref<128x128xbf16, #tpu.memory_space<vmem>>, vector<128x128xbf16>
      tpu.vector_store %arg6[%c0_16, %c0_17], %21 {strides = array<i32>} : memref<128x128xbf16, #tpu.memory_space<vmem>>, vector<128x128xbf16>,
    } else {
    }
    return
  }
  func.func @transform_0(%arg0: i32, %arg1: i32, %arg2: i32) -> (i32, i32) {
    %c0_i32 = arith.constant 0 : i32
    return %arg0, %arg2 : i32, i32
  }
  func.func @transform_1(%arg0: i32, %arg1: i32, %arg2: i32) -> (i32, i32) {
    %c0_i32 = arith.constant 0 : i32
    return %arg2, %arg1 : i32, i32
  }
  func.func @transform_2(%arg0: i32, %arg1: i32, %arg2: i32) -> (i32, i32) {
    %c0_i32 = arith.constant 0 : i32
    %c0_i32_0 = arith.constant 0 : i32
    return %c0_i32, %arg1 : i32, i32
  }
  func.func @transform_3(%arg0: i32, %arg1: i32, %arg2: i32) -> (i32, i32) {
    %c0_i32 = arith.constant 0 : i32
    return %arg0, %arg1 : i32, i32
  }
}

module attributes {stable_mosaic.version = 11 : i64} {
  func.func @_mm_kernel(%arg0: i32, %arg1: i32, %arg2: i32, %arg3: memref<128x256xbf16, #tpu.memory_space<vmem>>, %arg4: memref<256x128xbf16, #tpu.memory_space<vmem>>, %arg5: memref<1x128xf32, #tpu.memory_space<vmem>>, %arg6: memref<128x128xbf16, #tpu.memory_space<vmem>>, %arg7: memref<128x128xf32, #tpu.memory_space<vmem>>) attributes {dimension_semantics = [#tpu.dimension_semantics<parallel>, #tpu.dimension_semantics<parallel>, #tpu.dimension_semantics<arbitrary>], iteration_bounds = array<i64: 1, 1, 1>, scalar_prefetch = 0 : i64, scratch_operands = 1 : i64, tpu.core_type = #tpu.core_type<tc>, window_params = [{transform_indices = @transform_0, window_bounds = array<i64: 128, 256>}, {transform_indices = @transform_1, window_bounds = array<i64: 256, 128>}, {transform_indices = @transform_2, window_bounds = array<i64: 1, 128>}, {transform_indices = @transform_3, window_bounds = array<i64: 128, 128>}]} {
    %c0_i32 = arith.constant 0 : i32
    %0 = arith.cmpi eq, %arg2, %c0_i32 : i32
    %1 = arith.extui %0 : i1 to i32
    %c0_i32_0 = arith.constant 0 : i32
    %2 = arith.cmpi ne, %1, %c0_i32_0 : i32
    scf.if %2 {
      %cst_10 = arith.constant 0.000000e+00 : f32
      %12 = vector.broadcast %cst_10 : f32 to vector<128x128xf32>
      %c0_11 = arith.constant 0 : index
      %c0_12 = arith.constant 0 : index
      %13 = vector.load %arg7[%c0_11, %c0_12] : memref<128x128xf32, #tpu.memory_space<vmem>>, vector<128x128xf32>
      tpu.vector_store %arg7[%c0_11, %c0_12], %12 {strides = array<i32>} : memref<128x128xf32, #tpu.memory_space<vmem>>, vector<128x128xf32>,
    } else {
    }
    %c0 = arith.constant 0 : index
    %c0_1 = arith.constant 0 : index
    %3 = vector.load %arg7[%c0, %c0_1] : memref<128x128xf32, #tpu.memory_space<vmem>>, vector<128x128xf32>
    %c0_2 = arith.constant 0 : index
    %c0_3 = arith.constant 0 : index
    %4 = vector.load %arg3[%c0_2, %c0_3] : memref<128x256xbf16, #tpu.memory_space<vmem>>, vector<128x256xbf16>
    %c0_4 = arith.constant 0 : index
    %c0_5 = arith.constant 0 : index
    %5 = vector.load %arg4[%c0_4, %c0_5] : memref<256x128xbf16, #tpu.memory_space<vmem>>, vector<256x128xbf16>
    %cst = arith.constant dense<0.000000e+00> : vector<128x128xf32>
    %6 = tpu.matmul %4, %5, %cst {dimension_numbers = #tpu.dot_dimension_numbers<[1], [0], [0], [1], [0, 0, 1, 1], [], []>} : vector<128x256xbf16>, vector<256x128xbf16>, vector<128x128xf32> -> vector<128x128xf32>
    %7 = arith.addf %3, %6 : vector<128x128xf32>
    %c0_6 = arith.constant 0 : index
    %c0_7 = arith.constant 0 : index
    %8 = vector.load %arg7[%c0_6, %c0_7] : memref<128x128xf32, #tpu.memory_space<vmem>>, vector<128x128xf32>
    tpu.vector_store %arg7[%c0_6, %c0_7], %7 {strides = array<i32>} : memref<128x128xf32, #tpu.memory_space<vmem>>, vector<128x128xf32>,
    %c0_i32_8 = arith.constant 0 : i32
    %9 = arith.cmpi eq, %arg2, %c0_i32_8 : i32
    %10 = arith.extui %9 : i1 to i32
    %c0_i32_9 = arith.constant 0 : i32
    %11 = arith.cmpi ne, %10, %c0_i32_9 : i32
    scf.if %11 {
      %c0_10 = arith.constant 0 : index
      %c0_11 = arith.constant 0 : index
      %12 = vector.load %arg7[%c0_10, %c0_11] : memref<128x128xf32, #tpu.memory_space<vmem>>, vector<128x128xf32>
      %c0_12 = arith.constant 0 : index
      %c0_13 = arith.constant 0 : index
      %13 = vector.load %arg5[%c0_12, %c0_13] : memref<1x128xf32, #tpu.memory_space<vmem>>, vector<1x128xf32>
      %14 = vector.broadcast %13 : vector<1x128xf32> to vector<128x128xf32>
      %15 = arith.addf %12, %14 : vector<128x128xf32>
      %16 = arith.truncf %15 : vector<128x128xf32> to vector<128x128xbf16>
      %c0_14 = arith.constant 0 : index
      %c0_15 = arith.constant 0 : index
      %17 = vector.load %arg6[%c0_14, %c0_15] : memref<128x128xbf16, #tpu.memory_space<vmem>>, vector<128x128xbf16>
      tpu.vector_store %arg6[%c0_14, %c0_15], %16 {strides = array<i32>} : memref<128x128xbf16, #tpu.memory_space<vmem>>, vector<128x128xbf16>,
    } else {
    }
    return
  }
  func.func @transform_0(%arg0: i32, %arg1: i32, %arg2: i32) -> (i32, i32) {
    %c0_i32 = arith.constant 0 : i32
    return %arg0, %arg2 : i32, i32
  }
  func.func @transform_1(%arg0: i32, %arg1: i32, %arg2: i32) -> (i32, i32) {
    %c0_i32 = arith.constant 0 : i32
    return %arg2, %arg1 : i32, i32
  }
  func.func @transform_2(%arg0: i32, %arg1: i32, %arg2: i32) -> (i32, i32) {
    %c0_i32 = arith.constant 0 : i32
    %c0_i32_0 = arith.constant 0 : i32
    return %c0_i32, %arg1 : i32, i32
  }
  func.func @transform_3(%arg0: i32, %arg1: i32, %arg2: i32) -> (i32, i32) {
    %c0_i32 = arith.constant 0 : i32
    return %arg0, %arg1 : i32, i32
  }
}

module attributes {stable_mosaic.version = 11 : i64} {
  func.func @_mm_res_kernel(%arg0: i32, %arg1: i32, %arg2: i32, %arg3: memref<128x640xbf16, #tpu.memory_space<vmem>>, %arg4: memref<640x128xbf16, #tpu.memory_space<vmem>>, %arg5: memref<1x128xf32, #tpu.memory_space<vmem>>, %arg6: memref<128x128xbf16, #tpu.memory_space<vmem>>, %arg7: memref<128x128xbf16, #tpu.memory_space<vmem>>, %arg8: memref<128x128xf32, #tpu.memory_space<vmem>>) attributes {dimension_semantics = [#tpu.dimension_semantics<parallel>, #tpu.dimension_semantics<parallel>, #tpu.dimension_semantics<arbitrary>], iteration_bounds = array<i64: 1, 1, 1>, scalar_prefetch = 0 : i64, scratch_operands = 1 : i64, tpu.core_type = #tpu.core_type<tc>, window_params = [{transform_indices = @transform_0, window_bounds = array<i64: 128, 640>}, {transform_indices = @transform_1, window_bounds = array<i64: 640, 128>}, {transform_indices = @transform_2, window_bounds = array<i64: 1, 128>}, {transform_indices = @transform_3, window_bounds = array<i64: 128, 128>}, {transform_indices = @transform_4, window_bounds = array<i64: 128, 128>}]} {
    %c0_i32 = arith.constant 0 : i32
    %0 = arith.cmpi eq, %arg2, %c0_i32 : i32
    %1 = arith.extui %0 : i1 to i32
    %c0_i32_0 = arith.constant 0 : i32
    %2 = arith.cmpi ne, %1, %c0_i32_0 : i32
    scf.if %2 {
      %cst_10 = arith.constant 0.000000e+00 : f32
      %12 = vector.broadcast %cst_10 : f32 to vector<128x128xf32>
      %c0_11 = arith.constant 0 : index
      %c0_12 = arith.constant 0 : index
      %13 = vector.load %arg8[%c0_11, %c0_12] : memref<128x128xf32, #tpu.memory_space<vmem>>, vector<128x128xf32>
      tpu.vector_store %arg8[%c0_11, %c0_12], %12 {strides = array<i32>} : memref<128x128xf32, #tpu.memory_space<vmem>>, vector<128x128xf32>,
    } else {
    }
    %c0 = arith.constant 0 : index
    %c0_1 = arith.constant 0 : index
    %3 = vector.load %arg8[%c0, %c0_1] : memref<128x128xf32, #tpu.memory_space<vmem>>, vector<128x128xf32>
    %c0_2 = arith.constant 0 : index
    %c0_3 = arith.constant 0 : index
    %4 = vector.load %arg3[%c0_2, %c0_3] : memref<128x640xbf16, #tpu.memory_space<vmem>>, vector<128x640xbf16>
    %c0_4 = arith.constant 0 : index
    %c0_5 = arith.constant 0 : index
    %5 = vector.load %arg4[%c0_4, %c0_5] : memref<640x128xbf16, #tpu.memory_space<vmem>>, vector<640x128xbf16>
    %cst = arith.constant dense<0.000000e+00> : vector<128x128xf32>
    %6 = tpu.matmul %4, %5, %cst {dimension_numbers = #tpu.dot_dimension_numbers<[1], [0], [0], [1], [0, 0, 1, 1], [], []>} : vector<128x640xbf16>, vector<640x128xbf16>, vector<128x128xf32> -> vector<128x128xf32>
    %7 = arith.addf %3, %6 : vector<128x128xf32>
    %c0_6 = arith.constant 0 : index
    %c0_7 = arith.constant 0 : index
    %8 = vector.load %arg8[%c0_6, %c0_7] : memref<128x128xf32, #tpu.memory_space<vmem>>, vector<128x128xf32>
    tpu.vector_store %arg8[%c0_6, %c0_7], %7 {strides = array<i32>} : memref<128x128xf32, #tpu.memory_space<vmem>>, vector<128x128xf32>,
    %c0_i32_8 = arith.constant 0 : i32
    %9 = arith.cmpi eq, %arg2, %c0_i32_8 : i32
    %10 = arith.extui %9 : i1 to i32
    %c0_i32_9 = arith.constant 0 : i32
    %11 = arith.cmpi ne, %10, %c0_i32_9 : i32
    scf.if %11 {
      %c0_10 = arith.constant 0 : index
      %c0_11 = arith.constant 0 : index
      %12 = vector.load %arg8[%c0_10, %c0_11] : memref<128x128xf32, #tpu.memory_space<vmem>>, vector<128x128xf32>
      %c0_12 = arith.constant 0 : index
      %c0_13 = arith.constant 0 : index
      %13 = vector.load %arg5[%c0_12, %c0_13] : memref<1x128xf32, #tpu.memory_space<vmem>>, vector<1x128xf32>
      %14 = vector.broadcast %13 : vector<1x128xf32> to vector<128x128xf32>
      %15 = arith.addf %12, %14 : vector<128x128xf32>
      %c0_14 = arith.constant 0 : index
      %c0_15 = arith.constant 0 : index
      %16 = vector.load %arg6[%c0_14, %c0_15] : memref<128x128xbf16, #tpu.memory_space<vmem>>, vector<128x128xbf16>
      %17 = arith.extf %16 : vector<128x128xbf16> to vector<128x128xf32>
      %18 = arith.addf %15, %17 : vector<128x128xf32>
      %cst_16 = arith.constant 0.000000e+00 : f32
      %19 = vector.broadcast %cst_16 : f32 to vector<128x128xf32>
      %20 = arith.cmpf ogt, %18, %19 : vector<128x128xf32>
      %cst_17 = arith.constant 0.00999999977 : f32
      %21 = vector.broadcast %cst_17 : f32 to vector<128x128xf32>
      %22 = arith.mulf %21, %18 : vector<128x128xf32>
      %23 = arith.select %20, %18, %22 : vector<128x128xi1>, vector<128x128xf32>
      %24 = arith.truncf %23 : vector<128x128xf32> to vector<128x128xbf16>
      %c0_18 = arith.constant 0 : index
      %c0_19 = arith.constant 0 : index
      %25 = vector.load %arg7[%c0_18, %c0_19] : memref<128x128xbf16, #tpu.memory_space<vmem>>, vector<128x128xbf16>
      tpu.vector_store %arg7[%c0_18, %c0_19], %24 {strides = array<i32>} : memref<128x128xbf16, #tpu.memory_space<vmem>>, vector<128x128xbf16>,
    } else {
    }
    return
  }
  func.func @transform_0(%arg0: i32, %arg1: i32, %arg2: i32) -> (i32, i32) {
    %c0_i32 = arith.constant 0 : i32
    return %arg0, %arg2 : i32, i32
  }
  func.func @transform_1(%arg0: i32, %arg1: i32, %arg2: i32) -> (i32, i32) {
    %c0_i32 = arith.constant 0 : i32
    return %arg2, %arg1 : i32, i32
  }
  func.func @transform_2(%arg0: i32, %arg1: i32, %arg2: i32) -> (i32, i32) {
    %c0_i32 = arith.constant 0 : i32
    %c0_i32_0 = arith.constant 0 : i32
    return %c0_i32, %arg1 : i32, i32
  }
  func.func @transform_3(%arg0: i32, %arg1: i32, %arg2: i32) -> (i32, i32) {
    %c0_i32 = arith.constant 0 : i32
    return %arg0, %arg1 : i32, i32
  }
  func.func @transform_4(%arg0: i32, %arg1: i32, %arg2: i32) -> (i32, i32) {
    %c0_i32 = arith.constant 0 : i32
    return %arg0, %arg1 : i32, i32
  }
}

module attributes {stable_mosaic.version = 11 : i64} {
  func.func @_mm_kernel(%arg0: i32, %arg1: i32, %arg2: i32, %arg3: memref<128x128xbf16, #tpu.memory_space<vmem>>, %arg4: memref<128x128xbf16, #tpu.memory_space<vmem>>, %arg5: memref<1x128xf32, #tpu.memory_space<vmem>>, %arg6: memref<128x128xf32, #tpu.memory_space<vmem>>, %arg7: memref<128x128xf32, #tpu.memory_space<vmem>>) attributes {dimension_semantics = [#tpu.dimension_semantics<parallel>, #tpu.dimension_semantics<parallel>, #tpu.dimension_semantics<arbitrary>], iteration_bounds = array<i64: 1, 1, 1>, scalar_prefetch = 0 : i64, scratch_operands = 1 : i64, tpu.core_type = #tpu.core_type<tc>, window_params = [{transform_indices = @transform_0, window_bounds = array<i64: 128, 128>}, {transform_indices = @transform_1, window_bounds = array<i64: 128, 128>}, {transform_indices = @transform_2, window_bounds = array<i64: 1, 128>}, {transform_indices = @transform_3, window_bounds = array<i64: 128, 128>}]} {
    %c0_i32 = arith.constant 0 : i32
    %0 = arith.cmpi eq, %arg2, %c0_i32 : i32
    %1 = arith.extui %0 : i1 to i32
    %c0_i32_0 = arith.constant 0 : i32
    %2 = arith.cmpi ne, %1, %c0_i32_0 : i32
    scf.if %2 {
      %cst_10 = arith.constant 0.000000e+00 : f32
      %12 = vector.broadcast %cst_10 : f32 to vector<128x128xf32>
      %c0_11 = arith.constant 0 : index
      %c0_12 = arith.constant 0 : index
      %13 = vector.load %arg7[%c0_11, %c0_12] : memref<128x128xf32, #tpu.memory_space<vmem>>, vector<128x128xf32>
      tpu.vector_store %arg7[%c0_11, %c0_12], %12 {strides = array<i32>} : memref<128x128xf32, #tpu.memory_space<vmem>>, vector<128x128xf32>,
    } else {
    }
    %c0 = arith.constant 0 : index
    %c0_1 = arith.constant 0 : index
    %3 = vector.load %arg7[%c0, %c0_1] : memref<128x128xf32, #tpu.memory_space<vmem>>, vector<128x128xf32>
    %c0_2 = arith.constant 0 : index
    %c0_3 = arith.constant 0 : index
    %4 = vector.load %arg3[%c0_2, %c0_3] : memref<128x128xbf16, #tpu.memory_space<vmem>>, vector<128x128xbf16>
    %c0_4 = arith.constant 0 : index
    %c0_5 = arith.constant 0 : index
    %5 = vector.load %arg4[%c0_4, %c0_5] : memref<128x128xbf16, #tpu.memory_space<vmem>>, vector<128x128xbf16>
    %cst = arith.constant dense<0.000000e+00> : vector<128x128xf32>
    %6 = tpu.matmul %4, %5, %cst {dimension_numbers = #tpu.dot_dimension_numbers<[1], [0], [0], [1], [0, 0, 1, 1], [], []>} : vector<128x128xbf16>, vector<128x128xbf16>, vector<128x128xf32> -> vector<128x128xf32>
    %7 = arith.addf %3, %6 : vector<128x128xf32>
    %c0_6 = arith.constant 0 : index
    %c0_7 = arith.constant 0 : index
    %8 = vector.load %arg7[%c0_6, %c0_7] : memref<128x128xf32, #tpu.memory_space<vmem>>, vector<128x128xf32>
    tpu.vector_store %arg7[%c0_6, %c0_7], %7 {strides = array<i32>} : memref<128x128xf32, #tpu.memory_space<vmem>>, vector<128x128xf32>,
    %c0_i32_8 = arith.constant 0 : i32
    %9 = arith.cmpi eq, %arg2, %c0_i32_8 : i32
    %10 = arith.extui %9 : i1 to i32
    %c0_i32_9 = arith.constant 0 : i32
    %11 = arith.cmpi ne, %10, %c0_i32_9 : i32
    scf.if %11 {
      %c0_10 = arith.constant 0 : index
      %c0_11 = arith.constant 0 : index
      %12 = vector.load %arg7[%c0_10, %c0_11] : memref<128x128xf32, #tpu.memory_space<vmem>>, vector<128x128xf32>
      %c0_12 = arith.constant 0 : index
      %c0_13 = arith.constant 0 : index
      %13 = vector.load %arg5[%c0_12, %c0_13] : memref<1x128xf32, #tpu.memory_space<vmem>>, vector<1x128xf32>
      %14 = vector.broadcast %13 : vector<1x128xf32> to vector<128x128xf32>
      %15 = arith.addf %12, %14 : vector<128x128xf32>
      %cst_14 = arith.constant 0.000000e+00 : f32
      %16 = vector.broadcast %cst_14 : f32 to vector<128x128xf32>
      %17 = arith.cmpf ogt, %15, %16 : vector<128x128xf32>
      %cst_15 = arith.constant 0.00999999977 : f32
      %18 = vector.broadcast %cst_15 : f32 to vector<128x128xf32>
      %19 = arith.mulf %18, %15 : vector<128x128xf32>
      %20 = arith.select %17, %15, %19 : vector<128x128xi1>, vector<128x128xf32>
      %c0_16 = arith.constant 0 : index
      %c0_17 = arith.constant 0 : index
      %21 = vector.load %arg6[%c0_16, %c0_17] : memref<128x128xf32, #tpu.memory_space<vmem>>, vector<128x128xf32>
      tpu.vector_store %arg6[%c0_16, %c0_17], %20 {strides = array<i32>} : memref<128x128xf32, #tpu.memory_space<vmem>>, vector<128x128xf32>,
    } else {
    }
    return
  }
  func.func @transform_0(%arg0: i32, %arg1: i32, %arg2: i32) -> (i32, i32) {
    %c0_i32 = arith.constant 0 : i32
    return %arg0, %arg2 : i32, i32
  }
  func.func @transform_1(%arg0: i32, %arg1: i32, %arg2: i32) -> (i32, i32) {
    %c0_i32 = arith.constant 0 : i32
    return %arg2, %arg1 : i32, i32
  }
  func.func @transform_2(%arg0: i32, %arg1: i32, %arg2: i32) -> (i32, i32) {
    %c0_i32 = arith.constant 0 : i32
    %c0_i32_0 = arith.constant 0 : i32
    return %c0_i32, %arg1 : i32, i32
  }
  func.func @transform_3(%arg0: i32, %arg1: i32, %arg2: i32) -> (i32, i32) {
    %c0_i32 = arith.constant 0 : i32
    return %arg0, %arg1 : i32, i32
  }
}

</mosaic_0001>

<llo_original>
// kernel: _lambda_.17
$region0: #{_lambda_.17}
  #allocation0 [shape = 'u32[]', space=smem, size = 0x4, offset = 0x4, fixed_abs, tag = 'smem constant byte address 0x4 - core index']
  #allocation1 [shape = 'u32[72,128]{1,0:T(1,128)}', space=vmem, size = 0x9000, scoped, tag = 'internal scratch']
  #allocation2 [shape = 'f32[256,128]{1,0:T(8,128)}', space=vmem, size = 0x20000, scoped, tag = 'scratch operand']
  %s0 = inlined_call_operand.vmem [shape: bf16[512,128], index: 0, kind: input, shape index: {}]
  %s1 = inlined_call_operand.hbm [shape: bf16[128,128], index: 1, kind: input, shape index: {}]
  %s2 = inlined_call_operand.hbm [shape: f32[1,128], index: 2, kind: input, shape index: {}]
  %s3 = inlined_call_operand.vmem [shape: bf16[512,128], index: 3, kind: output, shape index: {}]
  %s4 = sld [smem:[#allocation0]]
  $region61: #{_lambda_.17} parent=0
    _
  %s6 = ssub.s32 1, %s4
  %s7 = scalar_select 0, %s6, %s4
  $region1: #{_lambda_.17} parent=0
    #allocation3 [shape = 'u8[32768]{0}', space=vmem, size = 0x8000, scoped, tag = 'input window, operand 1, single buffered']
    #allocation4 [shape = 's32[2]{0}', space=sflag, size = 0x8, scoped, tag = 'scoped memory for _lambda_.17']
    #allocation5 [shape = 'u8[512]{0}', space=vmem, size = 0x400, scoped, tag = 'input window, operand 2, single buffered']
    #allocation6 [shape = 's32[1]{0}', space=sflag, size = 0x4, scoped, tag = 'scoped memory for _lambda_.17']
    %8 = vsyncpa [#allocation4], 0
    %9 = vsyncpa [#allocation6], 0
    loop: start=0, step=1, limit=4
    $region2: #{_lambda_.17} parent=1 // loop_pre_header
      _
    $region3: #{_lambda_.17} parent=1 // loop_header
      %s11 = sphi 0, %s15
      %p12 = scmp.ge.s32.totalorder %s11, 4
      %s18 = sphi 0, %s37
      %s19 = sphi 0, %s33
      %s20 = sphi 0, %s29
      %s21 = sphi 0, %s18
      %s22 = sphi 0, %s19
      %s23 = sphi 0, %s20
      %s24 = sphi 0, %s21
      %s25 = sphi 0, %s22
      %s26 = sphi 0, %s23
      %s42 = sphi 0, %s44
      %s45 = sphi 0, %s42
      %s46 = sphi 0, %s45
      %s62 = sphi 0, %s46
      %s70 = sphi 0, %s72
      %s73 = sphi 0, %s70
      %s74 = sphi 0, %s73
      %s90 = sphi 0, %s74
      %s96 = sphi 0, %s98
      %s99 = sphi 0, %s96
      %s100 = sphi 0, %s99
      %s116 = sphi 0, %s100
      %s124 = sphi 0, %s126
      %s127 = sphi 0, %s124
      %s128 = sphi 0, %s127
      %s144 = sphi 0, %s128
    $region4: #{_lambda_.17} parent=1 // loop_header_branch
      %14 = sbr.rel (%p12) target = $region8
    $region5: #{_lambda_.17} parent=1 // loop_body
      %s16 = ssub.s32 %s11, 1
      %s17 = ssub.s32 %s11, 2
      %s27 = sadd.s32 1, %s20
      %p28 = scmp.ge.s32.totalorder %s27, 1
      %s29 = scalar_select %p28, 0, %s27
      %s30 = sadd.s32 1, %s19
      %s31 = scalar_select %p28, %s30, %s19
      %p32 = scmp.ge.s32.totalorder %s31, 1
      %s33 = scalar_select %p32, 0, %s31
      %s34 = sadd.s32 1, %s18
      %s35 = scalar_select %p32, %s34, %s18
      %p36 = scmp.ge.s32.totalorder %s35, 2
      %s37 = scalar_select %p36, 0, %s35
      %s38 = ssub.s32 %s18, %s37
      %s39 = ssub.s32 %s20, %s29
      %s40 = sor.u32 %s38, %s39
      %p41 = scmp.eq.s32.totalorder %s40, 0
      %s43 = sadd.s32 %s42, 1
      %s44 = scalar_select %p41, %s42, %s43
      %p47 = pneg %p41
      %p48 = scmp.eq.s32.totalorder %s11, 1
      %p49 = por %p47, %p48
      %p50 = scmp.ne.s32.totalorder %s42, %s45
      %p51 = scmp.eq.s32.totalorder %s11, 0
      %p52 = por %p50, %p51
      %p53 = scmp.ne.s32.totalorder %s42, %s45
      %p54 = scmp.eq.s32.totalorder %s16, 1
      %p55 = por %p53, %p54
      %p56 = scmp.ne.s32.totalorder %s45, %s46
      %p57 = scmp.eq.s32.totalorder %s16, 0
      %p58 = por %p56, %p57
      %p59 = scmp.ne.s32.totalorder %s45, %s46
      %p60 = scmp.eq.s32.totalorder %s17, 1
      %p61 = por %p59, %p60
      %p63 = scmp.ne.s32.totalorder %s46, %s62
      %p64 = scmp.eq.s32.totalorder %s17, 0
      %p65 = por %p63, %p64
      %s66 = ssub.s32 %s20, %s29
      %s67 = ssub.s32 %s19, %s33
      %s68 = sor.u32 %s66, %s67
      %p69 = scmp.eq.s32.totalorder %s68, 0
      %s71 = sadd.s32 %s70, 1
      %s72 = scalar_select %p69, %s70, %s71
      %p75 = pneg %p69
      %p76 = scmp.eq.s32.totalorder %s11, 1
      %p77 = por %p75, %p76
      %p78 = scmp.ne.s32.totalorder %s70, %s73
      %p79 = scmp.eq.s32.totalorder %s11, 0
      %p80 = por %p78, %p79
      %p81 = scmp.ne.s32.totalorder %s70, %s73
      %p82 = scmp.eq.s32.totalorder %s16, 1
      %p83 = por %p81, %p82
      %p84 = scmp.ne.s32.totalorder %s73, %s74
      %p85 = scmp.eq.s32.totalorder %s16, 0
      %p86 = por %p84, %p85
      %p87 = scmp.ne.s32.totalorder %s73, %s74
      %p88 = scmp.eq.s32.totalorder %s17, 1
      %p89 = por %p87, %p88
      %p91 = scmp.ne.s32.totalorder %s74, %s90
      %p92 = scmp.eq.s32.totalorder %s17, 0
      %p93 = por %p91, %p92
      %s94 = ssub.s32 %s19, %s33
      %p95 = scmp.eq.s32.totalorder %s94, 0
      %s97 = sadd.s32 %s96, 1
      %s98 = scalar_select %p95, %s96, %s97
      %p101 = pneg %p95
      %p102 = scmp.eq.s32.totalorder %s11, 1
      %p103 = por %p101, %p102
      %p104 = scmp.ne.s32.totalorder %s96, %s99
      %p105 = scmp.eq.s32.totalorder %s11, 0
      %p106 = por %p104, %p105
      %p107 = scmp.ne.s32.totalorder %s96, %s99
      %p108 = scmp.eq.s32.totalorder %s16, 1
      %p109 = por %p107, %p108
      %p110 = scmp.ne.s32.totalorder %s99, %s100
      %p111 = scmp.eq.s32.totalorder %s16, 0
      %p112 = por %p110, %p111
      %p113 = scmp.ne.s32.totalorder %s99, %s100
      %p114 = scmp.eq.s32.totalorder %s17, 1
      %p115 = por %p113, %p114
      %p117 = scmp.ne.s32.totalorder %s100, %s116
      %p118 = scmp.eq.s32.totalorder %s17, 0
      %p119 = por %p117, %p118
      %s120 = ssub.s32 %s18, %s37
      %s121 = ssub.s32 %s19, %s33
      %s122 = sor.u32 %s120, %s121
      %p123 = scmp.eq.s32.totalorder %s122, 0
      %s125 = sadd.s32 %s124, 1
      %s126 = scalar_select %p123, %s124, %s125
      %p129 = pneg %p123
      %p130 = scmp.eq.s32.totalorder %s11, 1
      %p131 = por %p129, %p130
      %p132 = scmp.ne.s32.totalorder %s124, %s127
      %p133 = scmp.eq.s32.totalorder %s11, 0
      %p134 = por %p132, %p133
      %p135 = scmp.ne.s32.totalorder %s124, %s127
      %p136 = scmp.eq.s32.totalorder %s16, 1
      %p137 = por %p135, %p136
      %p138 = scmp.ne.s32.totalorder %s127, %s128
      %p139 = scmp.eq.s32.totalorder %s16, 0
      %p140 = por %p138, %p139
      %p141 = scmp.ne.s32.totalorder %s127, %s128
      %p142 = scmp.eq.s32.totalorder %s17, 1
      %p143 = por %p141, %p142
      %p145 = scmp.ne.s32.totalorder %s128, %s144
      %p146 = scmp.eq.s32.totalorder %s17, 0
      %p147 = por %p145, %p146
      %p148 = scmp.le.s32.totalorder 1, %s11
      %p149 = scmp.lt.s32.totalorder %s11, 3
      %p150 = pnand %p148, %p149
      %p151 = pneg %p150
      // Predicated region
      $region9: #{_lambda_.17} parent=5 // pred_check
        _
      $region10: #{_lambda_.17} parent=5 // pred_check_branch
        %153 = sbr.rel (%p150) target = $region12
      $region11: #{_lambda_.17} parent=5 // pred_region
        %s154 = ssub.s32 %s11, 1
        // Predicated region
        $region13: #{_lambda_.17} parent=11 // pred_check
          %p155 = pneg %p86
        $region14: #{_lambda_.17} parent=11 // pred_check_branch
          %157 = sbr.rel (%p155) target = $region16
        $region15: #{_lambda_.17} parent=11 // pred_region
          %s158 = smul.u32 16, %s23
          %160 = vsyncadd [#allocation4], 0
          %s161 = sadd.s32 %s22, %s158
          %s162 = smul.addr %s161, 4
          %s163 = scalar_lea.hbm %s1, %s162
          %s164 = sshll.u32 %s163, 4
          %s165 = int_to_ptr.hbm [resolvable:$true] %s164
          %s166 = sshll.u32 [#allocation3], 4
          %s167 = int_to_ptr.vmem [resolvable:$true] %s166
          %172 = dma.hbm_to_vmem [thread:$0]  %s165, 1024, %s167, [#allocation4], 64, 64, 4
        $region16: #{_lambda_.17} parent=11 // pred_fallthru
          _
        // Predicated region
        $region17: #{_lambda_.17} parent=11 // pred_check
          %p173 = pneg %p112
        $region18: #{_lambda_.17} parent=11 // pred_check_branch
          %175 = sbr.rel (%p173) target = $region20
        $region19: #{_lambda_.17} parent=11 // pred_region
          %177 = vsyncadd [#allocation6], 0
          %s178 = scalar_lea.hbm %s2, %s22
          %s180 = sshll.u32 %s178, 4
          %s181 = int_to_ptr.hbm [resolvable:$true] %s180
          %s182 = sshll.u32 [#allocation5], 4
          %s183 = int_to_ptr.vmem [resolvable:$true] %s182
          %185 = dma.hbm_to_vmem [thread:$0]  %s181, 16, %s183, [#allocation6]
        $region20: #{_lambda_.17} parent=11 // pred_fallthru
          _
      $region12: #{_lambda_.17} parent=5 // pred_fallthru
        _
      %p186 = scmp.lt.s32.totalorder %s11, 2
      // Predicated region
      $region21: #{_lambda_.17} parent=5 // pred_check
        %p187 = pneg %p186
      $region22: #{_lambda_.17} parent=5 // pred_check_branch
        %189 = sbr.rel (%p187) target = $region24
      $region23: #{_lambda_.17} parent=5 // pred_region
        // Predicated region
        $region25: #{_lambda_.17} parent=23 // pred_check
          %p190 = pneg %p52
        $region26: #{_lambda_.17} parent=23 // pred_check_branch
          %192 = sbr.rel (%p190) target = $region28
        $region27: #{_lambda_.17} parent=23 // pred_region
          %s193 = smul.u32 32, %s18
          %p194 = scmp.lt.s32.totalorder %s193, 63
          %s195 = scalar_select %p194, %s193, 63
          %p196 = scmp.lt.s32.totalorder %s20, 0
          %s197 = scalar_select %p196, %s20, 0
          %s198 = sadd.s32 %s197, %s195
          %s199 = smul.addr %s198, 4
          %s200 = scalar_lea.vmem %s0, %s199
          %s201 = smul.u32 32, %s18
        $region28: #{_lambda_.17} parent=23 // pred_fallthru
          _
      $region24: #{_lambda_.17} parent=5 // pred_fallthru
        _
      %p202 = scmp.le.s32.totalorder 1, %s11
      %p203 = scmp.lt.s32.totalorder %s11, 3
      %p204 = pnand %p202, %p203
      %p205 = pneg %p204
      // Predicated region
      $region29: #{_lambda_.17} parent=5 // pred_check
        _
      $region30: #{_lambda_.17} parent=5 // pred_check_branch
        %207 = sbr.rel (%p204) target = $region32
      $region31: #{_lambda_.17} parent=5 // pred_region
        %s208 = ssub.s32 %s11, 1
        // Predicated region
        $region33: #{_lambda_.17} parent=31 // pred_check
          %p209 = pneg %p86
        $region34: #{_lambda_.17} parent=31 // pred_check_branch
          %211 = sbr.rel (%p209) target = $region36
        $region35: #{_lambda_.17} parent=31 // pred_region
          %213 = dma.done [#allocation4], 1024
        $region36: #{_lambda_.17} parent=31 // pred_fallthru
          _
        // Predicated region
        $region37: #{_lambda_.17} parent=31 // pred_check
          %p214 = pneg %p112
        $region38: #{_lambda_.17} parent=31 // pred_check_branch
          %216 = sbr.rel (%p214) target = $region40
        $region39: #{_lambda_.17} parent=31 // pred_region
          %218 = dma.done [#allocation6], 16
        $region40: #{_lambda_.17} parent=31 // pred_fallthru
          _
        %s219 = smul.u32 32, %s21
        %p220 = scmp.lt.s32.totalorder %s219, 63
        %s221 = scalar_select %p220, %s219, 63
        %p222 = scmp.lt.s32.totalorder %s23, 0
        %s223 = scalar_select %p222, %s23, 0
        %s224 = sadd.s32 %s223, %s221
        %s225 = smul.addr %s224, 4
        %s226 = scalar_lea.vmem %s0, %s225
        %p227 = pneg %p58
        %p228 = pneg %p55
        %p229 = pneg %p86
        %p230 = pneg %p83
        %p231 = pneg %p112
        %p232 = pneg %p109
        %p233 = pneg %p140
        %p234 = pneg %p137
        %s235 = smul.u32 32, %s21
        %p236 = scmp.lt.s32.totalorder %s235, 63
        %s237 = scalar_select %p236, %s235, 63
        %p238 = scmp.lt.s32.totalorder %s22, 0
        %s239 = scalar_select %p238, %s22, 0
        %s240 = sadd.s32 %s239, %s237
        %s241 = smul.addr %s240, 4
        %s242 = scalar_lea.vmem %s3, %s241
        %s243 = smul.u32 32, %s21
        %p244 = scmp.lt.s32.totalorder %s243, 63
        %s245 = scalar_select %p244, %s243, 63
        %p246 = scmp.lt.s32.totalorder %s23, 0
        %s247 = scalar_select %p246, %s23, 0
        %s248 = sadd.s32 %s247, %s245
        %s249 = smul.addr %s248, 4
        %s250 = scalar_lea.vmem %s0, %s249
        %s251 = smul.u32 32, %s21
        %s252 = smul.u32 16, %s23
        %s253 = smul.u32 32, %s21
        %p254 = scmp.lt.s32.totalorder %s253, 63
        %s255 = scalar_select %p254, %s253, 63
        %p256 = scmp.lt.s32.totalorder %s22, 0
        %s257 = scalar_select %p256, %s22, 0
        %s258 = sadd.s32 %s257, %s255
        %s259 = smul.addr %s258, 4
        %s260 = scalar_lea.vmem %s3, %s259
        %s261 = smul.u32 32, %s21
        %p262 = scmp.eq.s32.totalorder %s23, 0
        // Predicated region
        $region41: #{_lambda_.17} parent=31 // pred_check
          %p263 = pneg %p262
        $region42: #{_lambda_.17} parent=31 // pred_check_branch
          %265 = sbr.rel (%p263) target = $region44
        $region43: #{_lambda_.17} parent=31 // pred_region
          %266 = vst [vmem:[#allocation2] sm:$0xff] 0.0
          %267 = vst [vmem:[#allocation2 + $0x8] sm:$0xff] 0.0
          %268 = vst [vmem:[#allocation2 + $0x10] sm:$0xff] 0.0
          %269 = vst [vmem:[#allocation2 + $0x18] sm:$0xff] 0.0
          %270 = vst [vmem:[#allocation2 + $0x20] sm:$0xff] 0.0
          %271 = vst [vmem:[#allocation2 + $0x28] sm:$0xff] 0.0
          %272 = vst [vmem:[#allocation2 + $0x30] sm:$0xff] 0.0
          %273 = vst [vmem:[#allocation2 + $0x38] sm:$0xff] 0.0
          %274 = vst [vmem:[#allocation2 + $0x40] sm:$0xff] 0.0
          %275 = vst [vmem:[#allocation2 + $0x48] sm:$0xff] 0.0
          %276 = vst [vmem:[#allocation2 + $0x50] sm:$0xff] 0.0
          %277 = vst [vmem:[#allocation2 + $0x58] sm:$0xff] 0.0
          %278 = vst [vmem:[#allocation2 + $0x60] sm:$0xff] 0.0
          %279 = vst [vmem:[#allocation2 + $0x68] sm:$0xff] 0.0
          %280 = vst [vmem:[#allocation2 + $0x70] sm:$0xff] 0.0
          %281 = vst [vmem:[#allocation2 + $0x78] sm:$0xff] 0.0
          %282 = vst [vmem:[#allocation2 + $0x80] sm:$0xff] 0.0
          %283 = vst [vmem:[#allocation2 + $0x88] sm:$0xff] 0.0
          %284 = vst [vmem:[#allocation2 + $0x90] sm:$0xff] 0.0
          %285 = vst [vmem:[#allocation2 + $0x98] sm:$0xff] 0.0
          %286 = vst [vmem:[#allocation2 + $0xa0] sm:$0xff] 0.0
          %287 = vst [vmem:[#allocation2 + $0xa8] sm:$0xff] 0.0
          %288 = vst [vmem:[#allocation2 + $0xb0] sm:$0xff] 0.0
          %289 = vst [vmem:[#allocation2 + $0xb8] sm:$0xff] 0.0
          %290 = vst [vmem:[#allocation2 + $0xc0] sm:$0xff] 0.0
          %291 = vst [vmem:[#allocation2 + $0xc8] sm:$0xff] 0.0
          %292 = vst [vmem:[#allocation2 + $0xd0] sm:$0xff] 0.0
          %293 = vst [vmem:[#allocation2 + $0xd8] sm:$0xff] 0.0
          %294 = vst [vmem:[#allocation2 + $0xe0] sm:$0xff] 0.0
          %295 = vst [vmem:[#allocation2 + $0xe8] sm:$0xff] 0.0
          %296 = vst [vmem:[#allocation2 + $0xf0] sm:$0xff] 0.0
          %297 = vst [vmem:[#allocation2 + $0xf8] sm:$0xff] 0.0
        $region44: #{_lambda_.17} parent=31 // pred_fallthru
          _
        %v298 = vld [vmem:[#allocation2] sm:$0xff]
        %v299 = vld [vmem:[#allocation2 + $0x8] sm:$0xff]
        %v300 = vld [vmem:[#allocation2 + $0x10] sm:$0xff]
        %v301 = vld [vmem:[#allocation2 + $0x18] sm:$0xff]
        %v302 = vld [vmem:[#allocation2 + $0x20] sm:$0xff]
        %v303 = vld [vmem:[#allocation2 + $0x28] sm:$0xff]
        %v304 = vld [vmem:[#allocation2 + $0x30] sm:$0xff]
        %v305 = vld [vmem:[#allocation2 + $0x38] sm:$0xff]
        %v306 = vld [vmem:[#allocation2 + $0x40] sm:$0xff]
        %v307 = vld [vmem:[#allocation2 + $0x48] sm:$0xff]
        %v308 = vld [vmem:[#allocation2 + $0x50] sm:$0xff]
        %v309 = vld [vmem:[#allocation2 + $0x58] sm:$0xff]
        %v310 = vld [vmem:[#allocation2 + $0x60] sm:$0xff]
        %v311 = vld [vmem:[#allocation2 + $0x68] sm:$0xff]
        %v312 = vld [vmem:[#allocation2 + $0x70] sm:$0xff]
        %v313 = vld [vmem:[#allocation2 + $0x78] sm:$0xff]
        %v314 = vld [vmem:[#allocation2 + $0x80] sm:$0xff]
        %v315 = vld [vmem:[#allocation2 + $0x88] sm:$0xff]
        %v316 = vld [vmem:[#allocation2 + $0x90] sm:$0xff]
        %v317 = vld [vmem:[#allocation2 + $0x98] sm:$0xff]
        %v318 = vld [vmem:[#allocation2 + $0xa0] sm:$0xff]
        %v319 = vld [vmem:[#allocation2 + $0xa8] sm:$0xff]
        %v320 = vld [vmem:[#allocation2 + $0xb0] sm:$0xff]
        %v321 = vld [vmem:[#allocation2 + $0xb8] sm:$0xff]
        %v322 = vld [vmem:[#allocation2 + $0xc0] sm:$0xff]
        %v323 = vld [vmem:[#allocation2 + $0xc8] sm:$0xff]
        %v324 = vld [vmem:[#allocation2 + $0xd0] sm:$0xff]
        %v325 = vld [vmem:[#allocation2 + $0xd8] sm:$0xff]
        %v326 = vld [vmem:[#allocation2 + $0xe0] sm:$0xff]
        %v327 = vld [vmem:[#allocation2 + $0xe8] sm:$0xff]
        %v328 = vld [vmem:[#allocation2 + $0xf0] sm:$0xff]
        %v329 = vld [vmem:[#allocation2 + $0xf8] sm:$0xff]
        %v330 = vld [vmem:[%s250] sm:$0xf]
        %v331 = vld [vmem:[%s250 + $0x4] sm:$0xf]
        %v332 = vld [vmem:[%s250 + $0x8] sm:$0xf]
        %v333 = vld [vmem:[%s250 + $0xc] sm:$0xf]
        %v334 = vld [vmem:[%s250 + $0x10] sm:$0xf]
        %v335 = vld [vmem:[%s250 + $0x14] sm:$0xf]
        %v336 = vld [vmem:[%s250 + $0x18] sm:$0xf]
        %v337 = vld [vmem:[%s250 + $0x1c] sm:$0xf]
        %v338 = vld [vmem:[%s250 + $0x20] sm:$0xf]
        %v339 = vld [vmem:[%s250 + $0x24] sm:$0xf]
        %v340 = vld [vmem:[%s250 + $0x28] sm:$0xf]
        %v341 = vld [vmem:[%s250 + $0x2c] sm:$0xf]
        %v342 = vld [vmem:[%s250 + $0x30] sm:$0xf]
        %v343 = vld [vmem:[%s250 + $0x34] sm:$0xf]
        %v344 = vld [vmem:[%s250 + $0x38] sm:$0xf]
        %v345 = vld [vmem:[%s250 + $0x3c] sm:$0xf]
        %v346 = vld [vmem:[%s250 + $0x40] sm:$0xf]
        %v347 = vld [vmem:[%s250 + $0x44] sm:$0xf]
        %v348 = vld [vmem:[%s250 + $0x48] sm:$0xf]
        %v349 = vld [vmem:[%s250 + $0x4c] sm:$0xf]
        %v350 = vld [vmem:[%s250 + $0x50] sm:$0xf]
        %v351 = vld [vmem:[%s250 + $0x54] sm:$0xf]
        %v352 = vld [vmem:[%s250 + $0x58] sm:$0xf]
        %v353 = vld [vmem:[%s250 + $0x5c] sm:$0xf]
        %v354 = vld [vmem:[%s250 + $0x60] sm:$0xf]
        %v355 = vld [vmem:[%s250 + $0x64] sm:$0xf]
        %v356 = vld [vmem:[%s250 + $0x68] sm:$0xf]
        %v357 = vld [vmem:[%s250 + $0x6c] sm:$0xf]
        %v358 = vld [vmem:[%s250 + $0x70] sm:$0xf]
        %v359 = vld [vmem:[%s250 + $0x74] sm:$0xf]
        %v360 = vld [vmem:[%s250 + $0x78] sm:$0xf]
        %v361 = vld [vmem:[%s250 + $0x7c] sm:$0xf]
        %v362 = vld [vmem:[#allocation3] sm:$0xf]
        %v363 = vld [vmem:[#allocation3 + $0x4] sm:$0xf]
        %v364 = vld [vmem:[#allocation3 + $0x8] sm:$0xf]
        %v365 = vld [vmem:[#allocation3 + $0xc] sm:$0xf]
        %v366 = vld [vmem:[#allocation3 + $0x10] sm:$0xf]
        %v367 = vld [vmem:[#allocation3 + $0x14] sm:$0xf]
        %v368 = vld [vmem:[#allocation3 + $0x18] sm:$0xf]
        %v369 = vld [vmem:[#allocation3 + $0x1c] sm:$0xf]
        %v370 = vld [vmem:[#allocation3 + $0x20] sm:$0xf]
        %v371 = vld [vmem:[#allocation3 + $0x24] sm:$0xf]
        %v372 = vld [vmem:[#allocation3 + $0x28] sm:$0xf]
        %v373 = vld [vmem:[#allocation3 + $0x2c] sm:$0xf]
        %v374 = vld [vmem:[#allocation3 + $0x30] sm:$0xf]
        %v375 = vld [vmem:[#allocation3 + $0x34] sm:$0xf]
        %v376 = vld [vmem:[#allocation3 + $0x38] sm:$0xf]
        %v377 = vld [vmem:[#allocation3 + $0x3c] sm:$0xf]
        %v410 = vunpack.c.l.b16 %v330
        %v411 = vunpack.c.l.b16 %v331
        %v412 = vunpack.c.l.b16 %v332
        %v413 = vunpack.c.l.b16 %v333
        %v414 = vunpack.c.l.b16 %v334
        %v415 = vunpack.c.l.b16 %v335
        %v416 = vunpack.c.l.b16 %v336
        %v417 = vunpack.c.l.b16 %v337
        %v418 = vunpack.c.l.b16 %v338
        %v419 = vunpack.c.l.b16 %v339
        %v420 = vunpack.c.l.b16 %v340
        %v421 = vunpack.c.l.b16 %v341
        %v422 = vunpack.c.l.b16 %v342
        %v423 = vunpack.c.l.b16 %v343
        %v424 = vunpack.c.l.b16 %v344
        %v425 = vunpack.c.l.b16 %v345
        %v426 = vunpack.c.l.b16 %v346
        %v427 = vunpack.c.l.b16 %v347
        %v428 = vunpack.c.l.b16 %v348
        %v429 = vunpack.c.l.b16 %v349
        %v430 = vunpack.c.l.b16 %v350
        %v431 = vunpack.c.l.b16 %v351
        %v432 = vunpack.c.l.b16 %v352
        %v433 = vunpack.c.l.b16 %v353
        %v434 = vunpack.c.l.b16 %v354
        %v435 = vunpack.c.l.b16 %v355
        %v436 = vunpack.c.l.b16 %v356
        %v437 = vunpack.c.l.b16 %v357
        %v438 = vunpack.c.l.b16 %v358
        %v439 = vunpack.c.l.b16 %v359
        %v440 = vunpack.c.l.b16 %v360
        %v441 = vunpack.c.l.b16 %v361
        %v442 = vpack.c.b16 %v411, %v410
        %v443 = vpack.c.b16 %v413, %v412
        %v444 = vpack.c.b16 %v415, %v414
        %v445 = vpack.c.b16 %v417, %v416
        %v446 = vpack.c.b16 %v419, %v418
        %v447 = vpack.c.b16 %v421, %v420
        %v448 = vpack.c.b16 %v423, %v422
        %v449 = vpack.c.b16 %v425, %v424
        %v450 = vpack.c.b16 %v427, %v426
        %v451 = vpack.c.b16 %v429, %v428
        %v452 = vpack.c.b16 %v431, %v430
        %v453 = vpack.c.b16 %v433, %v432
        %v454 = vpack.c.b16 %v435, %v434
        %v455 = vpack.c.b16 %v437, %v436
        %v456 = vpack.c.b16 %v439, %v438
        %v457 = vpack.c.b16 %v441, %v440
        %v490 = vunpack.c.l.b16 %v362
        %v491 = vunpack.c.l.b16 %v363
        %v492 = vunpack.c.l.b16 %v364
        %v493 = vunpack.c.l.b16 %v365
        %v494 = vunpack.c.l.b16 %v366
        %v495 = vunpack.c.l.b16 %v367
        %v496 = vunpack.c.l.b16 %v368
        %v497 = vunpack.c.l.b16 %v369
        %v498 = vunpack.c.l.b16 %v370
        %v499 = vunpack.c.l.b16 %v371
        %v500 = vunpack.c.l.b16 %v372
        %v501 = vunpack.c.l.b16 %v373
        %v502 = vunpack.c.l.b16 %v374
        %v503 = vunpack.c.l.b16 %v375
        %v504 = vunpack.c.l.b16 %v376
        %v505 = vunpack.c.l.b16 %v377
        %v506 = vpack.c.b16 %v491, %v490
        %v507 = vpack.c.b16 %v493, %v492
        %v508 = vpack.c.b16 %v495, %v494
        %v509 = vpack.c.b16 %v497, %v496
        %v510 = vpack.c.b16 %v499, %v498
        %v511 = vpack.c.b16 %v501, %v500
        %v512 = vpack.c.b16 %v503, %v502
        %v513 = vpack.c.b16 %v505, %v504
        %522 = vmatpush.bf16.msra.mxu0 %v513
        %523 = vmatpush.bf16.msra.mxu0 %v512
        %524 = vmatpush.bf16.msra.mxu0 %v511
        %525 = vmatpush.bf16.msra.mxu0 %v510
        %526 = vmatpush.bf16.msra.mxu0 %v509
        %527 = vmatpush.bf16.msra.mxu0 %v508
        %528 = vmatpush.bf16.msra.mxu0 %v507
        %529 = vmatpush.bf16.msra.mxu0 %v506
        %530 = vmatmul.bf16.gmra.mxu0 %v442
        %v531 = vpop.f32.mrf.mxu0
        %v532 = vadd.f32 0.0, %v531
        %v533 = vpop.f32.mrf.mxu0
        %v534 = vadd.f32 0.0, %v533
        %535 = vmatmul.bf16.gmra.mxu0 %v443
        %v536 = vpop.f32.mrf.mxu0
        %v537 = vadd.f32 0.0, %v536
        %v538 = vpop.f32.mrf.mxu0
        %v539 = vadd.f32 0.0, %v538
        %540 = vmatmul.bf16.gmra.mxu0 %v444
        %v541 = vpop.f32.mrf.mxu0
        %v542 = vadd.f32 0.0, %v541
        %v543 = vpop.f32.mrf.mxu0
        %v544 = vadd.f32 0.0, %v543
        %545 = vmatmul.bf16.gmra.mxu0 %v445
        %v546 = vpop.f32.mrf.mxu0
        %v547 = vadd.f32 0.0, %v546
        %v548 = vpop.f32.mrf.mxu0
        %v549 = vadd.f32 0.0, %v548
        %550 = vmatmul.bf16.gmra.mxu0 %v446
        %v551 = vpop.f32.mrf.mxu0
        %v552 = vadd.f32 0.0, %v551
        %v553 = vpop.f32.mrf.mxu0
        %v554 = vadd.f32 0.0, %v553
        %555 = vmatmul.bf16.gmra.mxu0 %v447
        %v556 = vpop.f32.mrf.mxu0
        %v557 = vadd.f32 0.0, %v556
        %v558 = vpop.f32.mrf.mxu0
        %v559 = vadd.f32 0.0, %v558
        %560 = vmatmul.bf16.gmra.mxu0 %v448
        %v561 = vpop.f32.mrf.mxu0
        %v562 = vadd.f32 0.0, %v561
        %v563 = vpop.f32.mrf.mxu0
        %v564 = vadd.f32 0.0, %v563
        %565 = vmatmul.bf16.gmra.mxu0 %v449
        %v566 = vpop.f32.mrf.mxu0
        %v567 = vadd.f32 0.0, %v566
        %v568 = vpop.f32.mrf.mxu0
        %v569 = vadd.f32 0.0, %v568
        %570 = vmatmul.bf16.gmra.mxu0 %v450
        %v571 = vpop.f32.mrf.mxu0
        %v572 = vadd.f32 0.0, %v571
        %v573 = vpop.f32.mrf.mxu0
        %v574 = vadd.f32 0.0, %v573
        %575 = vmatmul.bf16.gmra.mxu0 %v451
        %v576 = vpop.f32.mrf.mxu0
        %v577 = vadd.f32 0.0, %v576
        %v578 = vpop.f32.mrf.mxu0
        %v579 = vadd.f32 0.0, %v578
        %580 = vmatmul.bf16.gmra.mxu0 %v452
        %v581 = vpop.f32.mrf.mxu0
        %v582 = vadd.f32 0.0, %v581
        %v583 = vpop.f32.mrf.mxu0
        %v584 = vadd.f32 0.0, %v583
        %585 = vmatmul.bf16.gmra.mxu0 %v453
        %v586 = vpop.f32.mrf.mxu0
        %v587 = vadd.f32 0.0, %v586
        %v588 = vpop.f32.mrf.mxu0
        %v589 = vadd.f32 0.0, %v588
        %590 = vmatmul.bf16.gmra.mxu0 %v454
        %v591 = vpop.f32.mrf.mxu0
        %v592 = vadd.f32 0.0, %v591
        %v593 = vpop.f32.mrf.mxu0
        %v594 = vadd.f32 0.0, %v593
        %595 = vmatmul.bf16.gmra.mxu0 %v455
        %v596 = vpop.f32.mrf.mxu0
        %v597 = vadd.f32 0.0, %v596
        %v598 = vpop.f32.mrf.mxu0
        %v599 = vadd.f32 0.0, %v598
        %600 = vmatmul.bf16.gmra.mxu0 %v456
        %v601 = vpop.f32.mrf.mxu0
        %v602 = vadd.f32 0.0, %v601
        %v603 = vpop.f32.mrf.mxu0
        %v604 = vadd.f32 0.0, %v603
        %605 = vmatmul.bf16.gmra.mxu0 %v457
        %v606 = vpop.f32.mrf.mxu0
        %v607 = vadd.f32 0.0, %v606
        %v608 = vpop.f32.mrf.mxu0
        %v609 = vadd.f32 0.0, %v608
        %610 = vdwg.mxu0
        %v611 = vadd.f32 %v298, %v532
        %v612 = vadd.f32 %v299, %v534
        %v613 = vadd.f32 %v300, %v537
        %v614 = vadd.f32 %v301, %v539
        %v615 = vadd.f32 %v302, %v542
        %v616 = vadd.f32 %v303, %v544
        %v617 = vadd.f32 %v304, %v547
        %v618 = vadd.f32 %v305, %v549
        %v619 = vadd.f32 %v306, %v552
        %v620 = vadd.f32 %v307, %v554
        %v621 = vadd.f32 %v308, %v557
        %v622 = vadd.f32 %v309, %v559
        %v623 = vadd.f32 %v310, %v562
        %v624 = vadd.f32 %v311, %v564
        %v625 = vadd.f32 %v312, %v567
        %v626 = vadd.f32 %v313, %v569
        %v627 = vadd.f32 %v314, %v572
        %v628 = vadd.f32 %v315, %v574
        %v629 = vadd.f32 %v316, %v577
        %v630 = vadd.f32 %v317, %v579
        %v631 = vadd.f32 %v318, %v582
        %v632 = vadd.f32 %v319, %v584
        %v633 = vadd.f32 %v320, %v587
        %v634 = vadd.f32 %v321, %v589
        %v635 = vadd.f32 %v322, %v592
        %v636 = vadd.f32 %v323, %v594
        %v637 = vadd.f32 %v324, %v597
        %v638 = vadd.f32 %v325, %v599
        %v639 = vadd.f32 %v326, %v602
        %v640 = vadd.f32 %v327, %v604
        %v641 = vadd.f32 %v328, %v607
        %v642 = vadd.f32 %v329, %v609
        %643 = vst [vmem:[#allocation2] sm:$0xff] %v611
        %644 = vst [vmem:[#allocation2 + $0x8] sm:$0xff] %v612
        %645 = vst [vmem:[#allocation2 + $0x10] sm:$0xff] %v613
        %646 = vst [vmem:[#allocation2 + $0x18] sm:$0xff] %v614
        %647 = vst [vmem:[#allocation2 + $0x20] sm:$0xff] %v615
        %648 = vst [vmem:[#allocation2 + $0x28] sm:$0xff] %v616
        %649 = vst [vmem:[#allocation2 + $0x30] sm:$0xff] %v617
        %650 = vst [vmem:[#allocation2 + $0x38] sm:$0xff] %v618
        %651 = vst [vmem:[#allocation2 + $0x40] sm:$0xff] %v619
        %652 = vst [vmem:[#allocation2 + $0x48] sm:$0xff] %v620
        %653 = vst [vmem:[#allocation2 + $0x50] sm:$0xff] %v621
        %654 = vst [vmem:[#allocation2 + $0x58] sm:$0xff] %v622
        %655 = vst [vmem:[#allocation2 + $0x60] sm:$0xff] %v623
        %656 = vst [vmem:[#allocation2 + $0x68] sm:$0xff] %v624
        %657 = vst [vmem:[#allocation2 + $0x70] sm:$0xff] %v625
        %658 = vst [vmem:[#allocation2 + $0x78] sm:$0xff] %v626
        %659 = vst [vmem:[#allocation2 + $0x80] sm:$0xff] %v627
        %660 = vst [vmem:[#allocation2 + $0x88] sm:$0xff] %v628
        %661 = vst [vmem:[#allocation2 + $0x90] sm:$0xff] %v629
        %662 = vst [vmem:[#allocation2 + $0x98] sm:$0xff] %v630
        %663 = vst [vmem:[#allocation2 + $0xa0] sm:$0xff] %v631
        %664 = vst [vmem:[#allocation2 + $0xa8] sm:$0xff] %v632
        %665 = vst [vmem:[#allocation2 + $0xb0] sm:$0xff] %v633
        %666 = vst [vmem:[#allocation2 + $0xb8] sm:$0xff] %v634
        %667 = vst [vmem:[#allocation2 + $0xc0] sm:$0xff] %v635
        %668 = vst [vmem:[#allocation2 + $0xc8] sm:$0xff] %v636
        %669 = vst [vmem:[#allocation2 + $0xd0] sm:$0xff] %v637
        %670 = vst [vmem:[#allocation2 + $0xd8] sm:$0xff] %v638
        %671 = vst [vmem:[#allocation2 + $0xe0] sm:$0xff] %v639
        %672 = vst [vmem:[#allocation2 + $0xe8] sm:$0xff] %v640
        %673 = vst [vmem:[#allocation2 + $0xf0] sm:$0xff] %v641
        %674 = vst [vmem:[#allocation2 + $0xf8] sm:$0xff] %v642
        // Predicated region
        $region45: #{_lambda_.17} parent=31 // pred_check
          %p675 = pneg %p262
        $region46: #{_lambda_.17} parent=31 // pred_check_branch
          %677 = sbr.rel (%p675) target = $region48
        $region47: #{_lambda_.17} parent=31 // pred_region
          %v678 = vld [vmem:[#allocation2] sm:$0xff]
          %v679 = vld [vmem:[#allocation2 + $0x8] sm:$0xff]
          %v680 = vld [vmem:[#allocation2 + $0x10] sm:$0xff]
          %v681 = vld [vmem:[#allocation2 + $0x18] sm:$0xff]
          %v682 = vld [vmem:[#allocation2 + $0x20] sm:$0xff]
          %v683 = vld [vmem:[#allocation2 + $0x28] sm:$0xff]
          %v684 = vld [vmem:[#allocation2 + $0x30] sm:$0xff]
          %v685 = vld [vmem:[#allocation2 + $0x38] sm:$0xff]
          %v686 = vld [vmem:[#allocation2 + $0x40] sm:$0xff]
          %v687 = vld [vmem:[#allocation2 + $0x48] sm:$0xff]
          %v688 = vld [vmem:[#allocation2 + $0x50] sm:$0xff]
          %v689 = vld [vmem:[#allocation2 + $0x58] sm:$0xff]
          %v690 = vld [vmem:[#allocation2 + $0x60] sm:$0xff]
          %v691 = vld [vmem:[#allocation2 + $0x68] sm:$0xff]
          %v692 = vld [vmem:[#allocation2 + $0x70] sm:$0xff]
          %v693 = vld [vmem:[#allocation2 + $0x78] sm:$0xff]
          %v694 = vld [vmem:[#allocation2 + $0x80] sm:$0xff]
          %v695 = vld [vmem:[#allocation2 + $0x88] sm:$0xff]
          %v696 = vld [vmem:[#allocation2 + $0x90] sm:$0xff]
          %v697 = vld [vmem:[#allocation2 + $0x98] sm:$0xff]
          %v698 = vld [vmem:[#allocation2 + $0xa0] sm:$0xff]
          %v699 = vld [vmem:[#allocation2 + $0xa8] sm:$0xff]
          %v700 = vld [vmem:[#allocation2 + $0xb0] sm:$0xff]
          %v701 = vld [vmem:[#allocation2 + $0xb8] sm:$0xff]
          %v702 = vld [vmem:[#allocation2 + $0xc0] sm:$0xff]
          %v703 = vld [vmem:[#allocation2 + $0xc8] sm:$0xff]
          %v704 = vld [vmem:[#allocation2 + $0xd0] sm:$0xff]
          %v705 = vld [vmem:[#allocation2 + $0xd8] sm:$0xff]
          %v706 = vld [vmem:[#allocation2 + $0xe0] sm:$0xff]
          %v707 = vld [vmem:[#allocation2 + $0xe8] sm:$0xff]
          %v708 = vld [vmem:[#allocation2 + $0xf0] sm:$0xff]
          %v709 = vld [vmem:[#allocation2 + $0xf8] sm:$0xff]
          %v710 = vld [vmem:[#allocation5] sm:$0x1]
          %v712 = vperm.slane %v710, 0
          %v714 = vadd.f32 %v678, %v712
          %v715 = vadd.f32 %v679, %v712
          %v716 = vadd.f32 %v680, %v712
          %v717 = vadd.f32 %v681, %v712
          %v718 = vadd.f32 %v682, %v712
          %v719 = vadd.f32 %v683, %v712
          %v720 = vadd.f32 %v684, %v712
          %v721 = vadd.f32 %v685, %v712
          %v722 = vadd.f32 %v686, %v712
          %v723 = vadd.f32 %v687, %v712
          %v724 = vadd.f32 %v688, %v712
          %v725 = vadd.f32 %v689, %v712
          %v726 = vadd.f32 %v690, %v712
          %v727 = vadd.f32 %v691, %v712
          %v728 = vadd.f32 %v692, %v712
          %v729 = vadd.f32 %v693, %v712
          %v730 = vadd.f32 %v694, %v712
          %v731 = vadd.f32 %v695, %v712
          %v732 = vadd.f32 %v696, %v712
          %v733 = vadd.f32 %v697, %v712
          %v734 = vadd.f32 %v698, %v712
          %v735 = vadd.f32 %v699, %v712
          %v736 = vadd.f32 %v700, %v712
          %v737 = vadd.f32 %v701, %v712
          %v738 = vadd.f32 %v702, %v712
          %v739 = vadd.f32 %v703, %v712
          %v740 = vadd.f32 %v704, %v712
          %v741 = vadd.f32 %v705, %v712
          %v742 = vadd.f32 %v706, %v712
          %v743 = vadd.f32 %v707, %v712
          %v744 = vadd.f32 %v708, %v712
          %v745 = vadd.f32 %v709, %v712
          %vm746 = vcmp.gt.f32.partialorder %v714, 0.0
          %vm747 = vcmp.gt.f32.partialorder %v715, 0.0
          %vm748 = vcmp.gt.f32.partialorder %v716, 0.0
          %vm749 = vcmp.gt.f32.partialorder %v717, 0.0
          %vm750 = vcmp.gt.f32.partialorder %v718, 0.0
          %vm751 = vcmp.gt.f32.partialorder %v719, 0.0
          %vm752 = vcmp.gt.f32.partialorder %v720, 0.0
          %vm753 = vcmp.gt.f32.partialorder %v721, 0.0
          %vm754 = vcmp.gt.f32.partialorder %v722, 0.0
          %vm755 = vcmp.gt.f32.partialorder %v723, 0.0
          %vm756 = vcmp.gt.f32.partialorder %v724, 0.0
          %vm757 = vcmp.gt.f32.partialorder %v725, 0.0
          %vm758 = vcmp.gt.f32.partialorder %v726, 0.0
          %vm759 = vcmp.gt.f32.partialorder %v727, 0.0
          %vm760 = vcmp.gt.f32.partialorder %v728, 0.0
          %vm761 = vcmp.gt.f32.partialorder %v729, 0.0
          %vm762 = vcmp.gt.f32.partialorder %v730, 0.0
          %vm763 = vcmp.gt.f32.partialorder %v731, 0.0
          %vm764 = vcmp.gt.f32.partialorder %v732, 0.0
          %vm765 = vcmp.gt.f32.partialorder %v733, 0.0
          %vm766 = vcmp.gt.f32.partialorder %v734, 0.0
          %vm767 = vcmp.gt.f32.partialorder %v735, 0.0
          %vm768 = vcmp.gt.f32.partialorder %v736, 0.0
          %vm769 = vcmp.gt.f32.partialorder %v737, 0.0
          %vm770 = vcmp.gt.f32.partialorder %v738, 0.0
          %vm771 = vcmp.gt.f32.partialorder %v739, 0.0
          %vm772 = vcmp.gt.f32.partialorder %v740, 0.0
          %vm773 = vcmp.gt.f32.partialorder %v741, 0.0
          %vm774 = vcmp.gt.f32.partialorder %v742, 0.0
          %vm775 = vcmp.gt.f32.partialorder %v743, 0.0
          %vm776 = vcmp.gt.f32.partialorder %v744, 0.0
          %vm777 = vcmp.gt.f32.partialorder %v745, 0.0
          %v778 = vmul.f32 %v714, 0.01
          %v779 = vmul.f32 %v715, 0.01
          %v780 = vmul.f32 %v716, 0.01
          %v781 = vmul.f32 %v717, 0.01
          %v782 = vmul.f32 %v718, 0.01
          %v783 = vmul.f32 %v719, 0.01
          %v784 = vmul.f32 %v720, 0.01
          %v785 = vmul.f32 %v721, 0.01
          %v786 = vmul.f32 %v722, 0.01
          %v787 = vmul.f32 %v723, 0.01
          %v788 = vmul.f32 %v724, 0.01
          %v789 = vmul.f32 %v725, 0.01
          %v790 = vmul.f32 %v726, 0.01
          %v791 = vmul.f32 %v727, 0.01
          %v792 = vmul.f32 %v728, 0.01
          %v793 = vmul.f32 %v729, 0.01
          %v794 = vmul.f32 %v730, 0.01
          %v795 = vmul.f32 %v731, 0.01
          %v796 = vmul.f32 %v732, 0.01
          %v797 = vmul.f32 %v733, 0.01
          %v798 = vmul.f32 %v734, 0.01
          %v799 = vmul.f32 %v735, 0.01
          %v800 = vmul.f32 %v736, 0.01
          %v801 = vmul.f32 %v737, 0.01
          %v802 = vmul.f32 %v738, 0.01
          %v803 = vmul.f32 %v739, 0.01
          %v804 = vmul.f32 %v740, 0.01
          %v805 = vmul.f32 %v741, 0.01
          %v806 = vmul.f32 %v742, 0.01
          %v807 = vmul.f32 %v743, 0.01
          %v808 = vmul.f32 %v744, 0.01
          %v809 = vmul.f32 %v745, 0.01
          %v810 = vsel %vm746, %v714, %v778
          %v811 = vsel %vm747, %v715, %v779
          %v812 = vsel %vm748, %v716, %v780
          %v813 = vsel %vm749, %v717, %v781
          %v814 = vsel %vm750, %v718, %v782
          %v815 = vsel %vm751, %v719, %v783
          %v816 = vsel %vm752, %v720, %v784
          %v817 = vsel %vm753, %v721, %v785
          %v818 = vsel %vm754, %v722, %v786
          %v819 = vsel %vm755, %v723, %v787
          %v820 = vsel %vm756, %v724, %v788
          %v821 = vsel %vm757, %v725, %v789
          %v822 = vsel %vm758, %v726, %v790
          %v823 = vsel %vm759, %v727, %v791
          %v824 = vsel %vm760, %v728, %v792
          %v825 = vsel %vm761, %v729, %v793
          %v826 = vsel %vm762, %v730, %v794
          %v827 = vsel %vm763, %v731, %v795
          %v828 = vsel %vm764, %v732, %v796
          %v829 = vsel %vm765, %v733, %v797
          %v830 = vsel %vm766, %v734, %v798
          %v831 = vsel %vm767, %v735, %v799
          %v832 = vsel %vm768, %v736, %v800
          %v833 = vsel %vm769, %v737, %v801
          %v834 = vsel %vm770, %v738, %v802
          %v835 = vsel %vm771, %v739, %v803
          %v836 = vsel %vm772, %v740, %v804
          %v837 = vsel %vm773, %v741, %v805
          %v838 = vsel %vm774, %v742, %v806
          %v839 = vsel %vm775, %v743, %v807
          %v840 = vsel %vm776, %v744, %v808
          %v841 = vsel %vm777, %v745, %v809
          %v842 = vpack.c.bf16 %v810, %v810
          %v843 = vpack.c.bf16 %v811, %v811
          %v844 = vpack.c.bf16 %v812, %v812
          %v845 = vpack.c.bf16 %v813, %v813
          %v846 = vpack.c.bf16 %v814, %v814
          %v847 = vpack.c.bf16 %v815, %v815
          %v848 = vpack.c.bf16 %v816, %v816
          %v849 = vpack.c.bf16 %v817, %v817
          %v850 = vpack.c.bf16 %v818, %v818
          %v851 = vpack.c.bf16 %v819, %v819
          %v852 = vpack.c.bf16 %v820, %v820
          %v853 = vpack.c.bf16 %v821, %v821
          %v854 = vpack.c.bf16 %v822, %v822
          %v855 = vpack.c.bf16 %v823, %v823
          %v856 = vpack.c.bf16 %v824, %v824
          %v857 = vpack.c.bf16 %v825, %v825
          %v858 = vpack.c.bf16 %v826, %v826
          %v859 = vpack.c.bf16 %v827, %v827
          %v860 = vpack.c.bf16 %v828, %v828
          %v861 = vpack.c.bf16 %v829, %v829
          %v862 = vpack.c.bf16 %v830, %v830
          %v863 = vpack.c.bf16 %v831, %v831
          %v864 = vpack.c.bf16 %v832, %v832
          %v865 = vpack.c.bf16 %v833, %v833
          %v866 = vpack.c.bf16 %v834, %v834
          %v867 = vpack.c.bf16 %v835, %v835
          %v868 = vpack.c.bf16 %v836, %v836
          %v869 = vpack.c.bf16 %v837, %v837
          %v870 = vpack.c.bf16 %v838, %v838
          %v871 = vpack.c.bf16 %v839, %v839
          %v872 = vpack.c.bf16 %v840, %v840
          %v873 = vpack.c.bf16 %v841, %v841
          %874 = vst [vmem:[%s260] sm:$0xf] %v842
          %875 = vst [vmem:[%s260 + $0x4] sm:$0xf] %v843
          %876 = vst [vmem:[%s260 + $0x8] sm:$0xf] %v844
          %877 = vst [vmem:[%s260 + $0xc] sm:$0xf] %v845
          %878 = vst [vmem:[%s260 + $0x10] sm:$0xf] %v846
          %879 = vst [vmem:[%s260 + $0x14] sm:$0xf] %v847
          %880 = vst [vmem:[%s260 + $0x18] sm:$0xf] %v848
          %881 = vst [vmem:[%s260 + $0x1c] sm:$0xf] %v849
          %882 = vst [vmem:[%s260 + $0x20] sm:$0xf] %v850
          %883 = vst [vmem:[%s260 + $0x24] sm:$0xf] %v851
          %884 = vst [vmem:[%s260 + $0x28] sm:$0xf] %v852
          %885 = vst [vmem:[%s260 + $0x2c] sm:$0xf] %v853
          %886 = vst [vmem:[%s260 + $0x30] sm:$0xf] %v854
          %887 = vst [vmem:[%s260 + $0x34] sm:$0xf] %v855
          %888 = vst [vmem:[%s260 + $0x38] sm:$0xf] %v856
          %889 = vst [vmem:[%s260 + $0x3c] sm:$0xf] %v857
          %890 = vst [vmem:[%s260 + $0x40] sm:$0xf] %v858
          %891 = vst [vmem:[%s260 + $0x44] sm:$0xf] %v859
          %892 = vst [vmem:[%s260 + $0x48] sm:$0xf] %v860
          %893 = vst [vmem:[%s260 + $0x4c] sm:$0xf] %v861
          %894 = vst [vmem:[%s260 + $0x50] sm:$0xf] %v862
          %895 = vst [vmem:[%s260 + $0x54] sm:$0xf] %v863
          %896 = vst [vmem:[%s260 + $0x58] sm:$0xf] %v864
          %897 = vst [vmem:[%s260 + $0x5c] sm:$0xf] %v865
          %898 = vst [vmem:[%s260 + $0x60] sm:$0xf] %v866
          %899 = vst [vmem:[%s260 + $0x64] sm:$0xf] %v867
          %900 = vst [vmem:[%s260 + $0x68] sm:$0xf] %v868
          %901 = vst [vmem:[%s260 + $0x6c] sm:$0xf] %v869
          %902 = vst [vmem:[%s260 + $0x70] sm:$0xf] %v870
          %903 = vst [vmem:[%s260 + $0x74] sm:$0xf] %v871
          %904 = vst [vmem:[%s260 + $0x78] sm:$0xf] %v872
          %905 = vst [vmem:[%s260 + $0x7c] sm:$0xf] %v873
        $region48: #{_lambda_.17} parent=31 // pred_fallthru
          _
        %s906 = smul.u32 32, %s21
        %p907 = scmp.lt.s32.totalorder %s906, 63
        %s908 = scalar_select %p907, %s906, 63
        %p909 = scmp.lt.s32.totalorder %s22, 0
        %s910 = scalar_select %p909, %s22, 0
        %s911 = sadd.s32 %s910, %s908
        %s912 = smul.addr %s911, 4
        %s913 = scalar_lea.vmem %s3, %s912
        // Predicated region
        $region49: #{_lambda_.17} parent=31 // pred_check
          %p914 = pneg %p137
        $region50: #{_lambda_.17} parent=31 // pred_check_branch
          %916 = sbr.rel (%p914) target = $region52
        $region51: #{_lambda_.17} parent=31 // pred_region
          %s917 = smul.u32 32, %s21
        $region52: #{_lambda_.17} parent=31 // pred_fallthru
          _
      $region32: #{_lambda_.17} parent=5 // pred_fallthru
        _
      %p918 = scmp.le.s32.totalorder 2, %s11
      // Predicated region
      $region53: #{_lambda_.17} parent=5 // pred_check
        %p919 = pneg %p918
      $region54: #{_lambda_.17} parent=5 // pred_check_branch
        %921 = sbr.rel (%p919) target = $region56
      $region55: #{_lambda_.17} parent=5 // pred_region
        %s922 = ssub.s32 %s11, 2
        // Predicated region
        $region57: #{_lambda_.17} parent=55 // pred_check
          %p923 = pneg %p143
        $region58: #{_lambda_.17} parent=55 // pred_check_branch
          %925 = sbr.rel (%p923) target = $region60
        $region59: #{_lambda_.17} parent=55 // pred_region
          %s926 = smul.u32 32, %s24
          %p927 = scmp.lt.s32.totalorder %s926, 63
          %s928 = scalar_select %p927, %s926, 63
          %p929 = scmp.lt.s32.totalorder %s25, 0
          %s930 = scalar_select %p929, %s25, 0
          %s931 = sadd.s32 %s930, %s928
          %s932 = smul.addr %s931, 4
          %s933 = scalar_lea.vmem %s3, %s932
        $region60: #{_lambda_.17} parent=55 // pred_fallthru
          _
      $region56: #{_lambda_.17} parent=5 // pred_fallthru
        _
    $region6: #{_lambda_.17} parent=1 // loop_footer
      %s15 = sadd.s32 1, %s11
    $region7: #{_lambda_.17} parent=1 // loop_footer_branch
      %10 = sbr.rel target = $region3
    $region8: #{_lambda_.17} parent=1 // loop_exit
      _
    %934 = vsyncpa [#allocation4], 1
    %s935 = scalar_lea.sflag [#allocation4], 1
    %936 = vsyncpa %s935, 1
    %937 = vsyncpa [#allocation6], 1

// kernel: _lambda_.16
$region0: #{_lambda_.16}
  #allocation0 [shape = 'u32[]', space=smem, size = 0x4, offset = 0x4, fixed_abs, tag = 'smem constant byte address 0x4 - core index']
  #allocation1 [shape = 'u32[72,128]{1,0:T(1,128)}', space=vmem, size = 0x9000, scoped, tag = 'internal scratch']
  #allocation2 [shape = 'f32[256,128]{1,0:T(8,128)}', space=vmem, size = 0x20000, scoped, tag = 'scratch operand']
  %s0 = inlined_call_operand.vmem [shape: bf16[512,128], index: 0, kind: input, shape index: {}]
  %s1 = inlined_call_operand.vmem [shape: bf16[128,128], index: 1, kind: input, shape index: {}]
  %s2 = inlined_call_operand.vmem [shape: f32[1,128], index: 2, kind: input, shape index: {}]
  %s3 = inlined_call_operand.vmem [shape: bf16[512,128], index: 3, kind: output, shape index: {}]
  %s4 = sld [smem:[#allocation0]]
  $region53: #{_lambda_.16} parent=0
    _
  %s6 = ssub.s32 1, %s4
  %s7 = scalar_select 0, %s6, %s4
  loop: start=0, step=1, limit=4
  $region2: #{_lambda_.16} parent=0 // loop_pre_header
    _
  $region3: #{_lambda_.16} parent=0 // loop_header
    %s9 = sphi 0, %s13
    %p10 = scmp.ge.s32.totalorder %s9, 4
    %s16 = sphi 0, %s35
    %s17 = sphi 0, %s31
    %s18 = sphi 0, %s27
    %s19 = sphi 0, %s16
    %s20 = sphi 0, %s17
    %s21 = sphi 0, %s18
    %s22 = sphi 0, %s19
    %s23 = sphi 0, %s20
    %s24 = sphi 0, %s21
    %s40 = sphi 0, %s42
    %s43 = sphi 0, %s40
    %s44 = sphi 0, %s43
    %s60 = sphi 0, %s44
    %s68 = sphi 0, %s70
    %s71 = sphi 0, %s68
    %s72 = sphi 0, %s71
    %s88 = sphi 0, %s72
    %s94 = sphi 0, %s96
    %s97 = sphi 0, %s94
    %s98 = sphi 0, %s97
    %s114 = sphi 0, %s98
    %s122 = sphi 0, %s124
    %s125 = sphi 0, %s122
    %s126 = sphi 0, %s125
    %s142 = sphi 0, %s126
  $region4: #{_lambda_.16} parent=0 // loop_header_branch
    %12 = sbr.rel (%p10) target = $region8
  $region5: #{_lambda_.16} parent=0 // loop_body
    %s14 = ssub.s32 %s9, 1
    %s15 = ssub.s32 %s9, 2
    %s25 = sadd.s32 1, %s18
    %p26 = scmp.ge.s32.totalorder %s25, 1
    %s27 = scalar_select %p26, 0, %s25
    %s28 = sadd.s32 1, %s17
    %s29 = scalar_select %p26, %s28, %s17
    %p30 = scmp.ge.s32.totalorder %s29, 1
    %s31 = scalar_select %p30, 0, %s29
    %s32 = sadd.s32 1, %s16
    %s33 = scalar_select %p30, %s32, %s16
    %p34 = scmp.ge.s32.totalorder %s33, 2
    %s35 = scalar_select %p34, 0, %s33
    %s36 = ssub.s32 %s16, %s35
    %s37 = ssub.s32 %s18, %s27
    %s38 = sor.u32 %s36, %s37
    %p39 = scmp.eq.s32.totalorder %s38, 0
    %s41 = sadd.s32 %s40, 1
    %s42 = scalar_select %p39, %s40, %s41
    %p45 = pneg %p39
    %p46 = scmp.eq.s32.totalorder %s9, 1
    %p47 = por %p45, %p46
    %p48 = scmp.ne.s32.totalorder %s40, %s43
    %p49 = scmp.eq.s32.totalorder %s9, 0
    %p50 = por %p48, %p49
    %p51 = scmp.ne.s32.totalorder %s40, %s43
    %p52 = scmp.eq.s32.totalorder %s14, 1
    %p53 = por %p51, %p52
    %p54 = scmp.ne.s32.totalorder %s43, %s44
    %p55 = scmp.eq.s32.totalorder %s14, 0
    %p56 = por %p54, %p55
    %p57 = scmp.ne.s32.totalorder %s43, %s44
    %p58 = scmp.eq.s32.totalorder %s15, 1
    %p59 = por %p57, %p58
    %p61 = scmp.ne.s32.totalorder %s44, %s60
    %p62 = scmp.eq.s32.totalorder %s15, 0
    %p63 = por %p61, %p62
    %s64 = ssub.s32 %s18, %s27
    %s65 = ssub.s32 %s17, %s31
    %s66 = sor.u32 %s64, %s65
    %p67 = scmp.eq.s32.totalorder %s66, 0
    %s69 = sadd.s32 %s68, 1
    %s70 = scalar_select %p67, %s68, %s69
    %p73 = pneg %p67
    %p74 = scmp.eq.s32.totalorder %s9, 1
    %p75 = por %p73, %p74
    %p76 = scmp.ne.s32.totalorder %s68, %s71
    %p77 = scmp.eq.s32.totalorder %s9, 0
    %p78 = por %p76, %p77
    %p79 = scmp.ne.s32.totalorder %s68, %s71
    %p80 = scmp.eq.s32.totalorder %s14, 1
    %p81 = por %p79, %p80
    %p82 = scmp.ne.s32.totalorder %s71, %s72
    %p83 = scmp.eq.s32.totalorder %s14, 0
    %p84 = por %p82, %p83
    %p85 = scmp.ne.s32.totalorder %s71, %s72
    %p86 = scmp.eq.s32.totalorder %s15, 1
    %p87 = por %p85, %p86
    %p89 = scmp.ne.s32.totalorder %s72, %s88
    %p90 = scmp.eq.s32.totalorder %s15, 0
    %p91 = por %p89, %p90
    %s92 = ssub.s32 %s17, %s31
    %p93 = scmp.eq.s32.totalorder %s92, 0
    %s95 = sadd.s32 %s94, 1
    %s96 = scalar_select %p93, %s94, %s95
    %p99 = pneg %p93
    %p100 = scmp.eq.s32.totalorder %s9, 1
    %p101 = por %p99, %p100
    %p102 = scmp.ne.s32.totalorder %s94, %s97
    %p103 = scmp.eq.s32.totalorder %s9, 0
    %p104 = por %p102, %p103
    %p105 = scmp.ne.s32.totalorder %s94, %s97
    %p106 = scmp.eq.s32.totalorder %s14, 1
    %p107 = por %p105, %p106
    %p108 = scmp.ne.s32.totalorder %s97, %s98
    %p109 = scmp.eq.s32.totalorder %s14, 0
    %p110 = por %p108, %p109
    %p111 = scmp.ne.s32.totalorder %s97, %s98
    %p112 = scmp.eq.s32.totalorder %s15, 1
    %p113 = por %p111, %p112
    %p115 = scmp.ne.s32.totalorder %s98, %s114
    %p116 = scmp.eq.s32.totalorder %s15, 0
    %p117 = por %p115, %p116
    %s118 = ssub.s32 %s16, %s35
    %s119 = ssub.s32 %s17, %s31
    %s120 = sor.u32 %s118, %s119
    %p121 = scmp.eq.s32.totalorder %s120, 0
    %s123 = sadd.s32 %s122, 1
    %s124 = scalar_select %p121, %s122, %s123
    %p127 = pneg %p121
    %p128 = scmp.eq.s32.totalorder %s9, 1
    %p129 = por %p127, %p128
    %p130 = scmp.ne.s32.totalorder %s122, %s125
    %p131 = scmp.eq.s32.totalorder %s9, 0
    %p132 = por %p130, %p131
    %p133 = scmp.ne.s32.totalorder %s122, %s125
    %p134 = scmp.eq.s32.totalorder %s14, 1
    %p135 = por %p133, %p134
    %p136 = scmp.ne.s32.totalorder %s125, %s126
    %p137 = scmp.eq.s32.totalorder %s14, 0
    %p138 = por %p136, %p137
    %p139 = scmp.ne.s32.totalorder %s125, %s126
    %p140 = scmp.eq.s32.totalorder %s15, 1
    %p141 = por %p139, %p140
    %p143 = scmp.ne.s32.totalorder %s126, %s142
    %p144 = scmp.eq.s32.totalorder %s15, 0
    %p145 = por %p143, %p144
    %p146 = scmp.le.s32.totalorder 1, %s9
    %p147 = scmp.lt.s32.totalorder %s9, 3
    %p148 = pnand %p146, %p147
    %p149 = pneg %p148
    // Predicated region
    $region9: #{_lambda_.16} parent=5 // pred_check
      _
    $region10: #{_lambda_.16} parent=5 // pred_check_branch
      %151 = sbr.rel (%p148) target = $region12
    $region11: #{_lambda_.16} parent=5 // pred_region
      %s152 = ssub.s32 %s9, 1
      // Predicated region
      $region13: #{_lambda_.16} parent=11 // pred_check
        %p153 = pneg %p84
      $region14: #{_lambda_.16} parent=11 // pred_check_branch
        %155 = sbr.rel (%p153) target = $region16
      $region15: #{_lambda_.16} parent=11 // pred_region
        %s156 = smul.u32 16, %s21
        %p157 = scmp.lt.s32.totalorder %s156, 15
        %s158 = scalar_select %p157, %s156, 15
        %p159 = scmp.lt.s32.totalorder %s20, 0
        %s160 = scalar_select %p159, %s20, 0
        %s161 = sadd.s32 %s160, %s158
        %s162 = smul.addr %s161, 4
        %s163 = scalar_lea.vmem %s1, %s162
        %s164 = smul.u32 16, %s21
      $region16: #{_lambda_.16} parent=11 // pred_fallthru
        _
      // Predicated region
      $region17: #{_lambda_.16} parent=11 // pred_check
        %p165 = pneg %p110
      $region18: #{_lambda_.16} parent=11 // pred_check_branch
        %167 = sbr.rel (%p165) target = $region20
      $region19: #{_lambda_.16} parent=11 // pred_region
        %p168 = scmp.lt.s32.totalorder %s20, 0
        %s169 = scalar_select %p168, %s20, 0
        %s170 = scalar_lea.vmem %s2, %s169
      $region20: #{_lambda_.16} parent=11 // pred_fallthru
        _
    $region12: #{_lambda_.16} parent=5 // pred_fallthru
      _
    %p171 = scmp.lt.s32.totalorder %s9, 2
    // Predicated region
    $region21: #{_lambda_.16} parent=5 // pred_check
      %p172 = pneg %p171
    $region22: #{_lambda_.16} parent=5 // pred_check_branch
      %174 = sbr.rel (%p172) target = $region24
    $region23: #{_lambda_.16} parent=5 // pred_region
      // Predicated region
      $region25: #{_lambda_.16} parent=23 // pred_check
        %p175 = pneg %p50
      $region26: #{_lambda_.16} parent=23 // pred_check_branch
        %177 = sbr.rel (%p175) target = $region28
      $region27: #{_lambda_.16} parent=23 // pred_region
        %s178 = smul.u32 32, %s16
        %p179 = scmp.lt.s32.totalorder %s178, 63
        %s180 = scalar_select %p179, %s178, 63
        %p181 = scmp.lt.s32.totalorder %s18, 0
        %s182 = scalar_select %p181, %s18, 0
        %s183 = sadd.s32 %s182, %s180
        %s184 = smul.addr %s183, 4
        %s185 = scalar_lea.vmem %s0, %s184
        %s186 = smul.u32 32, %s16
      $region28: #{_lambda_.16} parent=23 // pred_fallthru
        _
    $region24: #{_lambda_.16} parent=5 // pred_fallthru
      _
    %p187 = scmp.le.s32.totalorder 1, %s9
    %p188 = scmp.lt.s32.totalorder %s9, 3
    %p189 = pnand %p187, %p188
    %p190 = pneg %p189
    // Predicated region
    $region29: #{_lambda_.16} parent=5 // pred_check
      _
    $region30: #{_lambda_.16} parent=5 // pred_check_branch
      %192 = sbr.rel (%p189) target = $region32
    $region31: #{_lambda_.16} parent=5 // pred_region
      %s193 = ssub.s32 %s9, 1
      %s194 = smul.u32 32, %s19
      %p195 = scmp.lt.s32.totalorder %s194, 63
      %s196 = scalar_select %p195, %s194, 63
      %p197 = scmp.lt.s32.totalorder %s21, 0
      %s198 = scalar_select %p197, %s21, 0
      %s199 = sadd.s32 %s198, %s196
      %s200 = smul.addr %s199, 4
      %s201 = scalar_lea.vmem %s0, %s200
      %p202 = pneg %p56
      %p203 = pneg %p53
      %s204 = smul.u32 16, %s21
      %p205 = scmp.lt.s32.totalorder %s204, 15
      %s206 = scalar_select %p205, %s204, 15
      %p207 = scmp.lt.s32.totalorder %s20, 0
      %s208 = scalar_select %p207, %s20, 0
      %s209 = sadd.s32 %s208, %s206
      %s210 = smul.addr %s209, 4
      %s211 = scalar_lea.vmem %s1, %s210
      %p212 = pneg %p84
      %p213 = pneg %p81
      %p214 = scmp.lt.s32.totalorder %s20, 0
      %s215 = scalar_select %p214, %s20, 0
      %s216 = scalar_lea.vmem %s2, %s215
      %p217 = pneg %p110
      %p218 = pneg %p107
      %p219 = pneg %p138
      %p220 = pneg %p135
      %s221 = smul.u32 32, %s19
      %p222 = scmp.lt.s32.totalorder %s221, 63
      %s223 = scalar_select %p222, %s221, 63
      %p224 = scmp.lt.s32.totalorder %s20, 0
      %s225 = scalar_select %p224, %s20, 0
      %s226 = sadd.s32 %s225, %s223
      %s227 = smul.addr %s226, 4
      %s228 = scalar_lea.vmem %s3, %s227
      %s229 = smul.u32 32, %s19
      %p230 = scmp.lt.s32.totalorder %s229, 63
      %s231 = scalar_select %p230, %s229, 63
      %p232 = scmp.lt.s32.totalorder %s21, 0
      %s233 = scalar_select %p232, %s21, 0
      %s234 = sadd.s32 %s233, %s231
      %s235 = smul.addr %s234, 4
      %s236 = scalar_lea.vmem %s0, %s235
      %s237 = smul.u32 32, %s19
      %s238 = smul.u32 16, %s21
      %p239 = scmp.lt.s32.totalorder %s238, 15
      %s240 = scalar_select %p239, %s238, 15
      %p241 = scmp.lt.s32.totalorder %s20, 0
      %s242 = scalar_select %p241, %s20, 0
      %s243 = sadd.s32 %s242, %s240
      %s244 = smul.addr %s243, 4
      %s245 = scalar_lea.vmem %s1, %s244
      %s246 = smul.u32 16, %s21
      %p247 = scmp.lt.s32.totalorder %s20, 0
      %s248 = scalar_select %p247, %s20, 0
      %s249 = scalar_lea.vmem %s2, %s248
      %s250 = smul.u32 32, %s19
      %p251 = scmp.lt.s32.totalorder %s250, 63
      %s252 = scalar_select %p251, %s250, 63
      %p253 = scmp.lt.s32.totalorder %s20, 0
      %s254 = scalar_select %p253, %s20, 0
      %s255 = sadd.s32 %s254, %s252
      %s256 = smul.addr %s255, 4
      %s257 = scalar_lea.vmem %s3, %s256
      %s258 = smul.u32 32, %s19
      %p259 = scmp.eq.s32.totalorder %s21, 0
      // Predicated region
      $region33: #{_lambda_.16} parent=31 // pred_check
        %p260 = pneg %p259
      $region34: #{_lambda_.16} parent=31 // pred_check_branch
        %262 = sbr.rel (%p260) target = $region36
      $region35: #{_lambda_.16} parent=31 // pred_region
        %263 = vst [vmem:[#allocation2] sm:$0xff] 0.0
        %264 = vst [vmem:[#allocation2 + $0x8] sm:$0xff] 0.0
        %265 = vst [vmem:[#allocation2 + $0x10] sm:$0xff] 0.0
        %266 = vst [vmem:[#allocation2 + $0x18] sm:$0xff] 0.0
        %267 = vst [vmem:[#allocation2 + $0x20] sm:$0xff] 0.0
        %268 = vst [vmem:[#allocation2 + $0x28] sm:$0xff] 0.0
        %269 = vst [vmem:[#allocation2 + $0x30] sm:$0xff] 0.0
        %270 = vst [vmem:[#allocation2 + $0x38] sm:$0xff] 0.0
        %271 = vst [vmem:[#allocation2 + $0x40] sm:$0xff] 0.0
        %272 = vst [vmem:[#allocation2 + $0x48] sm:$0xff] 0.0
        %273 = vst [vmem:[#allocation2 + $0x50] sm:$0xff] 0.0
        %274 = vst [vmem:[#allocation2 + $0x58] sm:$0xff] 0.0
        %275 = vst [vmem:[#allocation2 + $0x60] sm:$0xff] 0.0
        %276 = vst [vmem:[#allocation2 + $0x68] sm:$0xff] 0.0
        %277 = vst [vmem:[#allocation2 + $0x70] sm:$0xff] 0.0
        %278 = vst [vmem:[#allocation2 + $0x78] sm:$0xff] 0.0
        %279 = vst [vmem:[#allocation2 + $0x80] sm:$0xff] 0.0
        %280 = vst [vmem:[#allocation2 + $0x88] sm:$0xff] 0.0
        %281 = vst [vmem:[#allocation2 + $0x90] sm:$0xff] 0.0
        %282 = vst [vmem:[#allocation2 + $0x98] sm:$0xff] 0.0
        %283 = vst [vmem:[#allocation2 + $0xa0] sm:$0xff] 0.0
        %284 = vst [vmem:[#allocation2 + $0xa8] sm:$0xff] 0.0
        %285 = vst [vmem:[#allocation2 + $0xb0] sm:$0xff] 0.0
        %286 = vst [vmem:[#allocation2 + $0xb8] sm:$0xff] 0.0
        %287 = vst [vmem:[#allocation2 + $0xc0] sm:$0xff] 0.0
        %288 = vst [vmem:[#allocation2 + $0xc8] sm:$0xff] 0.0
        %289 = vst [vmem:[#allocation2 + $0xd0] sm:$0xff] 0.0
        %290 = vst [vmem:[#allocation2 + $0xd8] sm:$0xff] 0.0
        %291 = vst [vmem:[#allocation2 + $0xe0] sm:$0xff] 0.0
        %292 = vst [vmem:[#allocation2 + $0xe8] sm:$0xff] 0.0
        %293 = vst [vmem:[#allocation2 + $0xf0] sm:$0xff] 0.0
        %294 = vst [vmem:[#allocation2 + $0xf8] sm:$0xff] 0.0
      $region36: #{_lambda_.16} parent=31 // pred_fallthru
        _
      %v295 = vld [vmem:[#allocation2] sm:$0xff]
      %v296 = vld [vmem:[#allocation2 + $0x8] sm:$0xff]
      %v297 = vld [vmem:[#allocation2 + $0x10] sm:$0xff]
      %v298 = vld [vmem:[#allocation2 + $0x18] sm:$0xff]
      %v299 = vld [vmem:[#allocation2 + $0x20] sm:$0xff]
      %v300 = vld [vmem:[#allocation2 + $0x28] sm:$0xff]
      %v301 = vld [vmem:[#allocation2 + $0x30] sm:$0xff]
      %v302 = vld [vmem:[#allocation2 + $0x38] sm:$0xff]
      %v303 = vld [vmem:[#allocation2 + $0x40] sm:$0xff]
      %v304 = vld [vmem:[#allocation2 + $0x48] sm:$0xff]
      %v305 = vld [vmem:[#allocation2 + $0x50] sm:$0xff]
      %v306 = vld [vmem:[#allocation2 + $0x58] sm:$0xff]
      %v307 = vld [vmem:[#allocation2 + $0x60] sm:$0xff]
      %v308 = vld [vmem:[#allocation2 + $0x68] sm:$0xff]
      %v309 = vld [vmem:[#allocation2 + $0x70] sm:$0xff]
      %v310 = vld [vmem:[#allocation2 + $0x78] sm:$0xff]
      %v311 = vld [vmem:[#allocation2 + $0x80] sm:$0xff]
      %v312 = vld [vmem:[#allocation2 + $0x88] sm:$0xff]
      %v313 = vld [vmem:[#allocation2 + $0x90] sm:$0xff]
      %v314 = vld [vmem:[#allocation2 + $0x98] sm:$0xff]
      %v315 = vld [vmem:[#allocation2 + $0xa0] sm:$0xff]
      %v316 = vld [vmem:[#allocation2 + $0xa8] sm:$0xff]
      %v317 = vld [vmem:[#allocation2 + $0xb0] sm:$0xff]
      %v318 = vld [vmem:[#allocation2 + $0xb8] sm:$0xff]
      %v319 = vld [vmem:[#allocation2 + $0xc0] sm:$0xff]
      %v320 = vld [vmem:[#allocation2 + $0xc8] sm:$0xff]
      %v321 = vld [vmem:[#allocation2 + $0xd0] sm:$0xff]
      %v322 = vld [vmem:[#allocation2 + $0xd8] sm:$0xff]
      %v323 = vld [vmem:[#allocation2 + $0xe0] sm:$0xff]
      %v324 = vld [vmem:[#allocation2 + $0xe8] sm:$0xff]
      %v325 = vld [vmem:[#allocation2 + $0xf0] sm:$0xff]
      %v326 = vld [vmem:[#allocation2 + $0xf8] sm:$0xff]
      %v327 = vld [vmem:[%s236] sm:$0xf]
      %v328 = vld [vmem:[%s236 + $0x4] sm:$0xf]
      %v329 = vld [vmem:[%s236 + $0x8] sm:$0xf]
      %v330 = vld [vmem:[%s236 + $0xc] sm:$0xf]
      %v331 = vld [vmem:[%s236 + $0x10] sm:$0xf]
      %v332 = vld [vmem:[%s236 + $0x14] sm:$0xf]
      %v333 = vld [vmem:[%s236 + $0x18] sm:$0xf]
      %v334 = vld [vmem:[%s236 + $0x1c] sm:$0xf]
      %v335 = vld [vmem:[%s236 + $0x20] sm:$0xf]
      %v336 = vld [vmem:[%s236 + $0x24] sm:$0xf]
      %v337 = vld [vmem:[%s236 + $0x28] sm:$0xf]
      %v338 = vld [vmem:[%s236 + $0x2c] sm:$0xf]
      %v339 = vld [vmem:[%s236 + $0x30] sm:$0xf]
      %v340 = vld [vmem:[%s236 + $0x34] sm:$0xf]
      %v341 = vld [vmem:[%s236 + $0x38] sm:$0xf]
      %v342 = vld [vmem:[%s236 + $0x3c] sm:$0xf]
      %v343 = vld [vmem:[%s236 + $0x40] sm:$0xf]
      %v344 = vld [vmem:[%s236 + $0x44] sm:$0xf]
      %v345 = vld [vmem:[%s236 + $0x48] sm:$0xf]
      %v346 = vld [vmem:[%s236 + $0x4c] sm:$0xf]
      %v347 = vld [vmem:[%s236 + $0x50] sm:$0xf]
      %v348 = vld [vmem:[%s236 + $0x54] sm:$0xf]
      %v349 = vld [vmem:[%s236 + $0x58] sm:$0xf]
      %v350 = vld [vmem:[%s236 + $0x5c] sm:$0xf]
      %v351 = vld [vmem:[%s236 + $0x60] sm:$0xf]
      %v352 = vld [vmem:[%s236 + $0x64] sm:$0xf]
      %v353 = vld [vmem:[%s236 + $0x68] sm:$0xf]
      %v354 = vld [vmem:[%s236 + $0x6c] sm:$0xf]
      %v355 = vld [vmem:[%s236 + $0x70] sm:$0xf]
      %v356 = vld [vmem:[%s236 + $0x74] sm:$0xf]
      %v357 = vld [vmem:[%s236 + $0x78] sm:$0xf]
      %v358 = vld [vmem:[%s236 + $0x7c] sm:$0xf]
      %v359 = vld [vmem:[%s245] sm:$0xf]
      %v360 = vld [vmem:[%s245 + $0x4] sm:$0xf]
      %v361 = vld [vmem:[%s245 + $0x8] sm:$0xf]
      %v362 = vld [vmem:[%s245 + $0xc] sm:$0xf]
      %v363 = vld [vmem:[%s245 + $0x10] sm:$0xf]
      %v364 = vld [vmem:[%s245 + $0x14] sm:$0xf]
      %v365 = vld [vmem:[%s245 + $0x18] sm:$0xf]
      %v366 = vld [vmem:[%s245 + $0x1c] sm:$0xf]
      %v367 = vld [vmem:[%s245 + $0x20] sm:$0xf]
      %v368 = vld [vmem:[%s245 + $0x24] sm:$0xf]
      %v369 = vld [vmem:[%s245 + $0x28] sm:$0xf]
      %v370 = vld [vmem:[%s245 + $0x2c] sm:$0xf]
      %v371 = vld [vmem:[%s245 + $0x30] sm:$0xf]
      %v372 = vld [vmem:[%s245 + $0x34] sm:$0xf]
      %v373 = vld [vmem:[%s245 + $0x38] sm:$0xf]
      %v374 = vld [vmem:[%s245 + $0x3c] sm:$0xf]
      %v407 = vunpack.c.l.b16 %v327
      %v408 = vunpack.c.l.b16 %v328
      %v409 = vunpack.c.l.b16 %v329
      %v410 = vunpack.c.l.b16 %v330
      %v411 = vunpack.c.l.b16 %v331
      %v412 = vunpack.c.l.b16 %v332
      %v413 = vunpack.c.l.b16 %v333
      %v414 = vunpack.c.l.b16 %v334
      %v415 = vunpack.c.l.b16 %v335
      %v416 = vunpack.c.l.b16 %v336
      %v417 = vunpack.c.l.b16 %v337
      %v418 = vunpack.c.l.b16 %v338
      %v419 = vunpack.c.l.b16 %v339
      %v420 = vunpack.c.l.b16 %v340
      %v421 = vunpack.c.l.b16 %v341
      %v422 = vunpack.c.l.b16 %v342
      %v423 = vunpack.c.l.b16 %v343
      %v424 = vunpack.c.l.b16 %v344
      %v425 = vunpack.c.l.b16 %v345
      %v426 = vunpack.c.l.b16 %v346
      %v427 = vunpack.c.l.b16 %v347
      %v428 = vunpack.c.l.b16 %v348
      %v429 = vunpack.c.l.b16 %v349
      %v430 = vunpack.c.l.b16 %v350
      %v431 = vunpack.c.l.b16 %v351
      %v432 = vunpack.c.l.b16 %v352
      %v433 = vunpack.c.l.b16 %v353
      %v434 = vunpack.c.l.b16 %v354
      %v435 = vunpack.c.l.b16 %v355
      %v436 = vunpack.c.l.b16 %v356
      %v437 = vunpack.c.l.b16 %v357
      %v438 = vunpack.c.l.b16 %v358
      %v439 = vpack.c.b16 %v408, %v407
      %v440 = vpack.c.b16 %v410, %v409
      %v441 = vpack.c.b16 %v412, %v411
      %v442 = vpack.c.b16 %v414, %v413
      %v443 = vpack.c.b16 %v416, %v415
      %v444 = vpack.c.b16 %v418, %v417
      %v445 = vpack.c.b16 %v420, %v419
      %v446 = vpack.c.b16 %v422, %v421
      %v447 = vpack.c.b16 %v424, %v423
      %v448 = vpack.c.b16 %v426, %v425
      %v449 = vpack.c.b16 %v428, %v427
      %v450 = vpack.c.b16 %v430, %v429
      %v451 = vpack.c.b16 %v432, %v431
      %v452 = vpack.c.b16 %v434, %v433
      %v453 = vpack.c.b16 %v436, %v435
      %v454 = vpack.c.b16 %v438, %v437
      %v487 = vunpack.c.l.b16 %v359
      %v488 = vunpack.c.l.b16 %v360
      %v489 = vunpack.c.l.b16 %v361
      %v490 = vunpack.c.l.b16 %v362
      %v491 = vunpack.c.l.b16 %v363
      %v492 = vunpack.c.l.b16 %v364
      %v493 = vunpack.c.l.b16 %v365
      %v494 = vunpack.c.l.b16 %v366
      %v495 = vunpack.c.l.b16 %v367
      %v496 = vunpack.c.l.b16 %v368
      %v497 = vunpack.c.l.b16 %v369
      %v498 = vunpack.c.l.b16 %v370
      %v499 = vunpack.c.l.b16 %v371
      %v500 = vunpack.c.l.b16 %v372
      %v501 = vunpack.c.l.b16 %v373
      %v502 = vunpack.c.l.b16 %v374
      %v503 = vpack.c.b16 %v488, %v487
      %v504 = vpack.c.b16 %v490, %v489
      %v505 = vpack.c.b16 %v492, %v491
      %v506 = vpack.c.b16 %v494, %v493
      %v507 = vpack.c.b16 %v496, %v495
      %v508 = vpack.c.b16 %v498, %v497
      %v509 = vpack.c.b16 %v500, %v499
      %v510 = vpack.c.b16 %v502, %v501
      %519 = vmatpush.bf16.msra.mxu0 %v510
      %520 = vmatpush.bf16.msra.mxu0 %v509
      %521 = vmatpush.bf16.msra.mxu0 %v508
      %522 = vmatpush.bf16.msra.mxu0 %v507
      %523 = vmatpush.bf16.msra.mxu0 %v506
      %524 = vmatpush.bf16.msra.mxu0 %v505
      %525 = vmatpush.bf16.msra.mxu0 %v504
      %526 = vmatpush.bf16.msra.mxu0 %v503
      %527 = vmatmul.bf16.gmra.mxu0 %v439
      %v528 = vpop.f32.mrf.mxu0
      %v529 = vadd.f32 0.0, %v528
      %v530 = vpop.f32.mrf.mxu0
      %v531 = vadd.f32 0.0, %v530
      %532 = vmatmul.bf16.gmra.mxu0 %v440
      %v533 = vpop.f32.mrf.mxu0
      %v534 = vadd.f32 0.0, %v533
      %v535 = vpop.f32.mrf.mxu0
      %v536 = vadd.f32 0.0, %v535
      %537 = vmatmul.bf16.gmra.mxu0 %v441
      %v538 = vpop.f32.mrf.mxu0
      %v539 = vadd.f32 0.0, %v538
      %v540 = vpop.f32.mrf.mxu0
      %v541 = vadd.f32 0.0, %v540
      %542 = vmatmul.bf16.gmra.mxu0 %v442
      %v543 = vpop.f32.mrf.mxu0
      %v544 = vadd.f32 0.0, %v543
      %v545 = vpop.f32.mrf.mxu0
      %v546 = vadd.f32 0.0, %v545
      %547 = vmatmul.bf16.gmra.mxu0 %v443
      %v548 = vpop.f32.mrf.mxu0
      %v549 = vadd.f32 0.0, %v548
      %v550 = vpop.f32.mrf.mxu0
      %v551 = vadd.f32 0.0, %v550
      %552 = vmatmul.bf16.gmra.mxu0 %v444
      %v553 = vpop.f32.mrf.mxu0
      %v554 = vadd.f32 0.0, %v553
      %v555 = vpop.f32.mrf.mxu0
      %v556 = vadd.f32 0.0, %v555
      %557 = vmatmul.bf16.gmra.mxu0 %v445
      %v558 = vpop.f32.mrf.mxu0
      %v559 = vadd.f32 0.0, %v558
      %v560 = vpop.f32.mrf.mxu0
      %v561 = vadd.f32 0.0, %v560
      %562 = vmatmul.bf16.gmra.mxu0 %v446
      %v563 = vpop.f32.mrf.mxu0
      %v564 = vadd.f32 0.0, %v563
      %v565 = vpop.f32.mrf.mxu0
      %v566 = vadd.f32 0.0, %v565
      %567 = vmatmul.bf16.gmra.mxu0 %v447
      %v568 = vpop.f32.mrf.mxu0
      %v569 = vadd.f32 0.0, %v568
      %v570 = vpop.f32.mrf.mxu0
      %v571 = vadd.f32 0.0, %v570
      %572 = vmatmul.bf16.gmra.mxu0 %v448
      %v573 = vpop.f32.mrf.mxu0
      %v574 = vadd.f32 0.0, %v573
      %v575 = vpop.f32.mrf.mxu0
      %v576 = vadd.f32 0.0, %v575
      %577 = vmatmul.bf16.gmra.mxu0 %v449
      %v578 = vpop.f32.mrf.mxu0
      %v579 = vadd.f32 0.0, %v578
      %v580 = vpop.f32.mrf.mxu0
      %v581 = vadd.f32 0.0, %v580
      %582 = vmatmul.bf16.gmra.mxu0 %v450
      %v583 = vpop.f32.mrf.mxu0
      %v584 = vadd.f32 0.0, %v583
      %v585 = vpop.f32.mrf.mxu0
      %v586 = vadd.f32 0.0, %v585
      %587 = vmatmul.bf16.gmra.mxu0 %v451
      %v588 = vpop.f32.mrf.mxu0
      %v589 = vadd.f32 0.0, %v588
      %v590 = vpop.f32.mrf.mxu0
      %v591 = vadd.f32 0.0, %v590
      %592 = vmatmul.bf16.gmra.mxu0 %v452
      %v593 = vpop.f32.mrf.mxu0
      %v594 = vadd.f32 0.0, %v593
      %v595 = vpop.f32.mrf.mxu0
      %v596 = vadd.f32 0.0, %v595
      %597 = vmatmul.bf16.gmra.mxu0 %v453
      %v598 = vpop.f32.mrf.mxu0
      %v599 = vadd.f32 0.0, %v598
      %v600 = vpop.f32.mrf.mxu0
      %v601 = vadd.f32 0.0, %v600
      %602 = vmatmul.bf16.gmra.mxu0 %v454
      %v603 = vpop.f32.mrf.mxu0
      %v604 = vadd.f32 0.0, %v603
      %v605 = vpop.f32.mrf.mxu0
      %v606 = vadd.f32 0.0, %v605
      %607 = vdwg.mxu0
      %v608 = vadd.f32 %v295, %v529
      %v609 = vadd.f32 %v296, %v531
      %v610 = vadd.f32 %v297, %v534
      %v611 = vadd.f32 %v298, %v536
      %v612 = vadd.f32 %v299, %v539
      %v613 = vadd.f32 %v300, %v541
      %v614 = vadd.f32 %v301, %v544
      %v615 = vadd.f32 %v302, %v546
      %v616 = vadd.f32 %v303, %v549
      %v617 = vadd.f32 %v304, %v551
      %v618 = vadd.f32 %v305, %v554
      %v619 = vadd.f32 %v306, %v556
      %v620 = vadd.f32 %v307, %v559
      %v621 = vadd.f32 %v308, %v561
      %v622 = vadd.f32 %v309, %v564
      %v623 = vadd.f32 %v310, %v566
      %v624 = vadd.f32 %v311, %v569
      %v625 = vadd.f32 %v312, %v571
      %v626 = vadd.f32 %v313, %v574
      %v627 = vadd.f32 %v314, %v576
      %v628 = vadd.f32 %v315, %v579
      %v629 = vadd.f32 %v316, %v581
      %v630 = vadd.f32 %v317, %v584
      %v631 = vadd.f32 %v318, %v586
      %v632 = vadd.f32 %v319, %v589
      %v633 = vadd.f32 %v320, %v591
      %v634 = vadd.f32 %v321, %v594
      %v635 = vadd.f32 %v322, %v596
      %v636 = vadd.f32 %v323, %v599
      %v637 = vadd.f32 %v324, %v601
      %v638 = vadd.f32 %v325, %v604
      %v639 = vadd.f32 %v326, %v606
      %640 = vst [vmem:[#allocation2] sm:$0xff] %v608
      %641 = vst [vmem:[#allocation2 + $0x8] sm:$0xff] %v609
      %642 = vst [vmem:[#allocation2 + $0x10] sm:$0xff] %v610
      %643 = vst [vmem:[#allocation2 + $0x18] sm:$0xff] %v611
      %644 = vst [vmem:[#allocation2 + $0x20] sm:$0xff] %v612
      %645 = vst [vmem:[#allocation2 + $0x28] sm:$0xff] %v613
      %646 = vst [vmem:[#allocation2 + $0x30] sm:$0xff] %v614
      %647 = vst [vmem:[#allocation2 + $0x38] sm:$0xff] %v615
      %648 = vst [vmem:[#allocation2 + $0x40] sm:$0xff] %v616
      %649 = vst [vmem:[#allocation2 + $0x48] sm:$0xff] %v617
      %650 = vst [vmem:[#allocation2 + $0x50] sm:$0xff] %v618
      %651 = vst [vmem:[#allocation2 + $0x58] sm:$0xff] %v619
      %652 = vst [vmem:[#allocation2 + $0x60] sm:$0xff] %v620
      %653 = vst [vmem:[#allocation2 + $0x68] sm:$0xff] %v621
      %654 = vst [vmem:[#allocation2 + $0x70] sm:$0xff] %v622
      %655 = vst [vmem:[#allocation2 + $0x78] sm:$0xff] %v623
      %656 = vst [vmem:[#allocation2 + $0x80] sm:$0xff] %v624
      %657 = vst [vmem:[#allocation2 + $0x88] sm:$0xff] %v625
      %658 = vst [vmem:[#allocation2 + $0x90] sm:$0xff] %v626
      %659 = vst [vmem:[#allocation2 + $0x98] sm:$0xff] %v627
      %660 = vst [vmem:[#allocation2 + $0xa0] sm:$0xff] %v628
      %661 = vst [vmem:[#allocation2 + $0xa8] sm:$0xff] %v629
      %662 = vst [vmem:[#allocation2 + $0xb0] sm:$0xff] %v630
      %663 = vst [vmem:[#allocation2 + $0xb8] sm:$0xff] %v631
      %664 = vst [vmem:[#allocation2 + $0xc0] sm:$0xff] %v632
      %665 = vst [vmem:[#allocation2 + $0xc8] sm:$0xff] %v633
      %666 = vst [vmem:[#allocation2 + $0xd0] sm:$0xff] %v634
      %667 = vst [vmem:[#allocation2 + $0xd8] sm:$0xff] %v635
      %668 = vst [vmem:[#allocation2 + $0xe0] sm:$0xff] %v636
      %669 = vst [vmem:[#allocation2 + $0xe8] sm:$0xff] %v637
      %670 = vst [vmem:[#allocation2 + $0xf0] sm:$0xff] %v638
      %671 = vst [vmem:[#allocation2 + $0xf8] sm:$0xff] %v639
      // Predicated region
      $region37: #{_lambda_.16} parent=31 // pred_check
        %p672 = pneg %p259
      $region38: #{_lambda_.16} parent=31 // pred_check_branch
        %674 = sbr.rel (%p672) target = $region40
      $region39: #{_lambda_.16} parent=31 // pred_region
        %v675 = vld [vmem:[#allocation2] sm:$0xff]
        %v676 = vld [vmem:[#allocation2 + $0x8] sm:$0xff]
        %v677 = vld [vmem:[#allocation2 + $0x10] sm:$0xff]
        %v678 = vld [vmem:[#allocation2 + $0x18] sm:$0xff]
        %v679 = vld [vmem:[#allocation2 + $0x20] sm:$0xff]
        %v680 = vld [vmem:[#allocation2 + $0x28] sm:$0xff]
        %v681 = vld [vmem:[#allocation2 + $0x30] sm:$0xff]
        %v682 = vld [vmem:[#allocation2 + $0x38] sm:$0xff]
        %v683 = vld [vmem:[#allocation2 + $0x40] sm:$0xff]
        %v684 = vld [vmem:[#allocation2 + $0x48] sm:$0xff]
        %v685 = vld [vmem:[#allocation2 + $0x50] sm:$0xff]
        %v686 = vld [vmem:[#allocation2 + $0x58] sm:$0xff]
        %v687 = vld [vmem:[#allocation2 + $0x60] sm:$0xff]
        %v688 = vld [vmem:[#allocation2 + $0x68] sm:$0xff]
        %v689 = vld [vmem:[#allocation2 + $0x70] sm:$0xff]
        %v690 = vld [vmem:[#allocation2 + $0x78] sm:$0xff]
        %v691 = vld [vmem:[#allocation2 + $0x80] sm:$0xff]
        %v692 = vld [vmem:[#allocation2 + $0x88] sm:$0xff]
        %v693 = vld [vmem:[#allocation2 + $0x90] sm:$0xff]
        %v694 = vld [vmem:[#allocation2 + $0x98] sm:$0xff]
        %v695 = vld [vmem:[#allocation2 + $0xa0] sm:$0xff]
        %v696 = vld [vmem:[#allocation2 + $0xa8] sm:$0xff]
        %v697 = vld [vmem:[#allocation2 + $0xb0] sm:$0xff]
        %v698 = vld [vmem:[#allocation2 + $0xb8] sm:$0xff]
        %v699 = vld [vmem:[#allocation2 + $0xc0] sm:$0xff]
        %v700 = vld [vmem:[#allocation2 + $0xc8] sm:$0xff]
        %v701 = vld [vmem:[#allocation2 + $0xd0] sm:$0xff]
        %v702 = vld [vmem:[#allocation2 + $0xd8] sm:$0xff]
        %v703 = vld [vmem:[#allocation2 + $0xe0] sm:$0xff]
        %v704 = vld [vmem:[#allocation2 + $0xe8] sm:$0xff]
        %v705 = vld [vmem:[#allocation2 + $0xf0] sm:$0xff]
        %v706 = vld [vmem:[#allocation2 + $0xf8] sm:$0xff]
        %v707 = vld [vmem:[%s249] sm:$0x1]
        %v709 = vperm.slane %v707, 0
        %v711 = vadd.f32 %v675, %v709
        %v712 = vadd.f32 %v676, %v709
        %v713 = vadd.f32 %v677, %v709
        %v714 = vadd.f32 %v678, %v709
        %v715 = vadd.f32 %v679, %v709
        %v716 = vadd.f32 %v680, %v709
        %v717 = vadd.f32 %v681, %v709
        %v718 = vadd.f32 %v682, %v709
        %v719 = vadd.f32 %v683, %v709
        %v720 = vadd.f32 %v684, %v709
        %v721 = vadd.f32 %v685, %v709
        %v722 = vadd.f32 %v686, %v709
        %v723 = vadd.f32 %v687, %v709
        %v724 = vadd.f32 %v688, %v709
        %v725 = vadd.f32 %v689, %v709
        %v726 = vadd.f32 %v690, %v709
        %v727 = vadd.f32 %v691, %v709
        %v728 = vadd.f32 %v692, %v709
        %v729 = vadd.f32 %v693, %v709
        %v730 = vadd.f32 %v694, %v709
        %v731 = vadd.f32 %v695, %v709
        %v732 = vadd.f32 %v696, %v709
        %v733 = vadd.f32 %v697, %v709
        %v734 = vadd.f32 %v698, %v709
        %v735 = vadd.f32 %v699, %v709
        %v736 = vadd.f32 %v700, %v709
        %v737 = vadd.f32 %v701, %v709
        %v738 = vadd.f32 %v702, %v709
        %v739 = vadd.f32 %v703, %v709
        %v740 = vadd.f32 %v704, %v709
        %v741 = vadd.f32 %v705, %v709
        %v742 = vadd.f32 %v706, %v709
        %vm743 = vcmp.gt.f32.partialorder %v711, 0.0
        %vm744 = vcmp.gt.f32.partialorder %v712, 0.0
        %vm745 = vcmp.gt.f32.partialorder %v713, 0.0
        %vm746 = vcmp.gt.f32.partialorder %v714, 0.0
        %vm747 = vcmp.gt.f32.partialorder %v715, 0.0
        %vm748 = vcmp.gt.f32.partialorder %v716, 0.0
        %vm749 = vcmp.gt.f32.partialorder %v717, 0.0
        %vm750 = vcmp.gt.f32.partialorder %v718, 0.0
        %vm751 = vcmp.gt.f32.partialorder %v719, 0.0
        %vm752 = vcmp.gt.f32.partialorder %v720, 0.0
        %vm753 = vcmp.gt.f32.partialorder %v721, 0.0
        %vm754 = vcmp.gt.f32.partialorder %v722, 0.0
        %vm755 = vcmp.gt.f32.partialorder %v723, 0.0
        %vm756 = vcmp.gt.f32.partialorder %v724, 0.0
        %vm757 = vcmp.gt.f32.partialorder %v725, 0.0
        %vm758 = vcmp.gt.f32.partialorder %v726, 0.0
        %vm759 = vcmp.gt.f32.partialorder %v727, 0.0
        %vm760 = vcmp.gt.f32.partialorder %v728, 0.0
        %vm761 = vcmp.gt.f32.partialorder %v729, 0.0
        %vm762 = vcmp.gt.f32.partialorder %v730, 0.0
        %vm763 = vcmp.gt.f32.partialorder %v731, 0.0
        %vm764 = vcmp.gt.f32.partialorder %v732, 0.0
        %vm765 = vcmp.gt.f32.partialorder %v733, 0.0
        %vm766 = vcmp.gt.f32.partialorder %v734, 0.0
        %vm767 = vcmp.gt.f32.partialorder %v735, 0.0
        %vm768 = vcmp.gt.f32.partialorder %v736, 0.0
        %vm769 = vcmp.gt.f32.partialorder %v737, 0.0
        %vm770 = vcmp.gt.f32.partialorder %v738, 0.0
        %vm771 = vcmp.gt.f32.partialorder %v739, 0.0
        %vm772 = vcmp.gt.f32.partialorder %v740, 0.0
        %vm773 = vcmp.gt.f32.partialorder %v741, 0.0
        %vm774 = vcmp.gt.f32.partialorder %v742, 0.0
        %v775 = vmul.f32 %v711, 0.01
        %v776 = vmul.f32 %v712, 0.01
        %v777 = vmul.f32 %v713, 0.01
        %v778 = vmul.f32 %v714, 0.01
        %v779 = vmul.f32 %v715, 0.01
        %v780 = vmul.f32 %v716, 0.01
        %v781 = vmul.f32 %v717, 0.01
        %v782 = vmul.f32 %v718, 0.01
        %v783 = vmul.f32 %v719, 0.01
        %v784 = vmul.f32 %v720, 0.01
        %v785 = vmul.f32 %v721, 0.01
        %v786 = vmul.f32 %v722, 0.01
        %v787 = vmul.f32 %v723, 0.01
        %v788 = vmul.f32 %v724, 0.01
        %v789 = vmul.f32 %v725, 0.01
        %v790 = vmul.f32 %v726, 0.01
        %v791 = vmul.f32 %v727, 0.01
        %v792 = vmul.f32 %v728, 0.01
        %v793 = vmul.f32 %v729, 0.01
        %v794 = vmul.f32 %v730, 0.01
        %v795 = vmul.f32 %v731, 0.01
        %v796 = vmul.f32 %v732, 0.01
        %v797 = vmul.f32 %v733, 0.01
        %v798 = vmul.f32 %v734, 0.01
        %v799 = vmul.f32 %v735, 0.01
        %v800 = vmul.f32 %v736, 0.01
        %v801 = vmul.f32 %v737, 0.01
        %v802 = vmul.f32 %v738, 0.01
        %v803 = vmul.f32 %v739, 0.01
        %v804 = vmul.f32 %v740, 0.01
        %v805 = vmul.f32 %v741, 0.01
        %v806 = vmul.f32 %v742, 0.01
        %v807 = vsel %vm743, %v711, %v775
        %v808 = vsel %vm744, %v712, %v776
        %v809 = vsel %vm745, %v713, %v777
        %v810 = vsel %vm746, %v714, %v778
        %v811 = vsel %vm747, %v715, %v779
        %v812 = vsel %vm748, %v716, %v780
        %v813 = vsel %vm749, %v717, %v781
        %v814 = vsel %vm750, %v718, %v782
        %v815 = vsel %vm751, %v719, %v783
        %v816 = vsel %vm752, %v720, %v784
        %v817 = vsel %vm753, %v721, %v785
        %v818 = vsel %vm754, %v722, %v786
        %v819 = vsel %vm755, %v723, %v787
        %v820 = vsel %vm756, %v724, %v788
        %v821 = vsel %vm757, %v725, %v789
        %v822 = vsel %vm758, %v726, %v790
        %v823 = vsel %vm759, %v727, %v791
        %v824 = vsel %vm760, %v728, %v792
        %v825 = vsel %vm761, %v729, %v793
        %v826 = vsel %vm762, %v730, %v794
        %v827 = vsel %vm763, %v731, %v795
        %v828 = vsel %vm764, %v732, %v796
        %v829 = vsel %vm765, %v733, %v797
        %v830 = vsel %vm766, %v734, %v798
        %v831 = vsel %vm767, %v735, %v799
        %v832 = vsel %vm768, %v736, %v800
        %v833 = vsel %vm769, %v737, %v801
        %v834 = vsel %vm770, %v738, %v802
        %v835 = vsel %vm771, %v739, %v803
        %v836 = vsel %vm772, %v740, %v804
        %v837 = vsel %vm773, %v741, %v805
        %v838 = vsel %vm774, %v742, %v806
        %v839 = vpack.c.bf16 %v807, %v807
        %v840 = vpack.c.bf16 %v808, %v808
        %v841 = vpack.c.bf16 %v809, %v809
        %v842 = vpack.c.bf16 %v810, %v810
        %v843 = vpack.c.bf16 %v811, %v811
        %v844 = vpack.c.bf16 %v812, %v812
        %v845 = vpack.c.bf16 %v813, %v813
        %v846 = vpack.c.bf16 %v814, %v814
        %v847 = vpack.c.bf16 %v815, %v815
        %v848 = vpack.c.bf16 %v816, %v816
        %v849 = vpack.c.bf16 %v817, %v817
        %v850 = vpack.c.bf16 %v818, %v818
        %v851 = vpack.c.bf16 %v819, %v819
        %v852 = vpack.c.bf16 %v820, %v820
        %v853 = vpack.c.bf16 %v821, %v821
        %v854 = vpack.c.bf16 %v822, %v822
        %v855 = vpack.c.bf16 %v823, %v823
        %v856 = vpack.c.bf16 %v824, %v824
        %v857 = vpack.c.bf16 %v825, %v825
        %v858 = vpack.c.bf16 %v826, %v826
        %v859 = vpack.c.bf16 %v827, %v827
        %v860 = vpack.c.bf16 %v828, %v828
        %v861 = vpack.c.bf16 %v829, %v829
        %v862 = vpack.c.bf16 %v830, %v830
        %v863 = vpack.c.bf16 %v831, %v831
        %v864 = vpack.c.bf16 %v832, %v832
        %v865 = vpack.c.bf16 %v833, %v833
        %v866 = vpack.c.bf16 %v834, %v834
        %v867 = vpack.c.bf16 %v835, %v835
        %v868 = vpack.c.bf16 %v836, %v836
        %v869 = vpack.c.bf16 %v837, %v837
        %v870 = vpack.c.bf16 %v838, %v838
        %871 = vst [vmem:[%s257] sm:$0xf] %v839
        %872 = vst [vmem:[%s257 + $0x4] sm:$0xf] %v840
        %873 = vst [vmem:[%s257 + $0x8] sm:$0xf] %v841
        %874 = vst [vmem:[%s257 + $0xc] sm:$0xf] %v842
        %875 = vst [vmem:[%s257 + $0x10] sm:$0xf] %v843
        %876 = vst [vmem:[%s257 + $0x14] sm:$0xf] %v844
        %877 = vst [vmem:[%s257 + $0x18] sm:$0xf] %v845
        %878 = vst [vmem:[%s257 + $0x1c] sm:$0xf] %v846
        %879 = vst [vmem:[%s257 + $0x20] sm:$0xf] %v847
        %880 = vst [vmem:[%s257 + $0x24] sm:$0xf] %v848
        %881 = vst [vmem:[%s257 + $0x28] sm:$0xf] %v849
        %882 = vst [vmem:[%s257 + $0x2c] sm:$0xf] %v850
        %883 = vst [vmem:[%s257 + $0x30] sm:$0xf] %v851
        %884 = vst [vmem:[%s257 + $0x34] sm:$0xf] %v852
        %885 = vst [vmem:[%s257 + $0x38] sm:$0xf] %v853
        %886 = vst [vmem:[%s257 + $0x3c] sm:$0xf] %v854
        %887 = vst [vmem:[%s257 + $0x40] sm:$0xf] %v855
        %888 = vst [vmem:[%s257 + $0x44] sm:$0xf] %v856
        %889 = vst [vmem:[%s257 + $0x48] sm:$0xf] %v857
        %890 = vst [vmem:[%s257 + $0x4c] sm:$0xf] %v858
        %891 = vst [vmem:[%s257 + $0x50] sm:$0xf] %v859
        %892 = vst [vmem:[%s257 + $0x54] sm:$0xf] %v860
        %893 = vst [vmem:[%s257 + $0x58] sm:$0xf] %v861
        %894 = vst [vmem:[%s257 + $0x5c] sm:$0xf] %v862
        %895 = vst [vmem:[%s257 + $0x60] sm:$0xf] %v863
        %896 = vst [vmem:[%s257 + $0x64] sm:$0xf] %v864
        %897 = vst [vmem:[%s257 + $0x68] sm:$0xf] %v865
        %898 = vst [vmem:[%s257 + $0x6c] sm:$0xf] %v866
        %899 = vst [vmem:[%s257 + $0x70] sm:$0xf] %v867
        %900 = vst [vmem:[%s257 + $0x74] sm:$0xf] %v868
        %901 = vst [vmem:[%s257 + $0x78] sm:$0xf] %v869
        %902 = vst [vmem:[%s257 + $0x7c] sm:$0xf] %v870
      $region40: #{_lambda_.16} parent=31 // pred_fallthru
        _
      %s903 = smul.u32 32, %s19
      %p904 = scmp.lt.s32.totalorder %s903, 63
      %s905 = scalar_select %p904, %s903, 63
      %p906 = scmp.lt.s32.totalorder %s20, 0
      %s907 = scalar_select %p906, %s20, 0
      %s908 = sadd.s32 %s907, %s905
      %s909 = smul.addr %s908, 4
      %s910 = scalar_lea.vmem %s3, %s909
      // Predicated region
      $region41: #{_lambda_.16} parent=31 // pred_check
        %p911 = pneg %p135
      $region42: #{_lambda_.16} parent=31 // pred_check_branch
        %913 = sbr.rel (%p911) target = $region44
      $region43: #{_lambda_.16} parent=31 // pred_region
        %s914 = smul.u32 32, %s19
      $region44: #{_lambda_.16} parent=31 // pred_fallthru
        _
    $region32: #{_lambda_.16} parent=5 // pred_fallthru
      _
    %p915 = scmp.le.s32.totalorder 2, %s9
    // Predicated region
    $region45: #{_lambda_.16} parent=5 // pred_check
      %p916 = pneg %p915
    $region46: #{_lambda_.16} parent=5 // pred_check_branch
      %918 = sbr.rel (%p916) target = $region48
    $region47: #{_lambda_.16} parent=5 // pred_region
      %s919 = ssub.s32 %s9, 2
      // Predicated region
      $region49: #{_lambda_.16} parent=47 // pred_check
        %p920 = pneg %p141
      $region50: #{_lambda_.16} parent=47 // pred_check_branch
        %922 = sbr.rel (%p920) target = $region52
      $region51: #{_lambda_.16} parent=47 // pred_region
        %s923 = smul.u32 32, %s22
        %p924 = scmp.lt.s32.totalorder %s923, 63
        %s925 = scalar_select %p924, %s923, 63
        %p926 = scmp.lt.s32.totalorder %s23, 0
        %s927 = scalar_select %p926, %s23, 0
        %s928 = sadd.s32 %s927, %s925
        %s929 = smul.addr %s928, 4
        %s930 = scalar_lea.vmem %s3, %s929
      $region52: #{_lambda_.16} parent=47 // pred_fallthru
        _
    $region48: #{_lambda_.16} parent=5 // pred_fallthru
      _
  $region6: #{_lambda_.16} parent=0 // loop_footer
    %s13 = sadd.s32 1, %s9
  $region7: #{_lambda_.16} parent=0 // loop_footer_branch
    %8 = sbr.rel target = $region3
  $region8: #{_lambda_.16} parent=0 // loop_exit
    _

// kernel: _lambda_.18
$region0: #{_lambda_.18}
  #allocation0 [shape = 'u32[]', space=smem, size = 0x4, offset = 0x4, fixed_abs, tag = 'smem constant byte address 0x4 - core index']
  #allocation1 [shape = 'u32[72,128]{1,0:T(1,128)}', space=vmem, size = 0x9000, scoped, tag = 'internal scratch']
  #allocation2 [shape = 'f32[128,128]{1,0:T(8,128)}', space=vmem, size = 0x10000, scoped, tag = 'scratch operand']
  %s0 = inlined_call_operand.vmem [shape: bf16[128,640], index: 0, kind: input, shape index: {}]
  %s1 = inlined_call_operand.vmem [shape: bf16[640,128], index: 1, kind: input, shape index: {}]
  %s2 = inlined_call_operand.vmem [shape: f32[1,128], index: 2, kind: input, shape index: {}]
  %s3 = inlined_call_operand.vmem [shape: bf16[128,128], index: 3, kind: output, shape index: {}]
  %s4 = sld [smem:[#allocation0]]
  $region30: #{_lambda_.18} parent=0
    _
  %s6 = ssub.s32 1, %s4
  %s7 = scalar_select 0, %s6, %s4
  // Predicated region
  $region2: #{_lambda_.18} parent=0 // pred_check
    _
  $region3: #{_lambda_.18} parent=0 // pred_check_branch
    %9 = sbr.rel (0) target = $region5
  $region4: #{_lambda_.18} parent=0 // pred_region
    _
  $region5: #{_lambda_.18} parent=0 // pred_fallthru
    _
  // Predicated region
  $region6: #{_lambda_.18} parent=0 // pred_check
    _
  $region7: #{_lambda_.18} parent=0 // pred_check_branch
    %11 = sbr.rel (0) target = $region9
  $region8: #{_lambda_.18} parent=0 // pred_region
    _
  $region9: #{_lambda_.18} parent=0 // pred_fallthru
    _
  // Predicated region
  $region10: #{_lambda_.18} parent=0 // pred_check
    _
  $region11: #{_lambda_.18} parent=0 // pred_check_branch
    %13 = sbr.rel (0) target = $region13
  $region12: #{_lambda_.18} parent=0 // pred_region
    _
  $region13: #{_lambda_.18} parent=0 // pred_fallthru
    _
  %p14 = scmp.eq.s32.totalorder 0, 0
  // Predicated region
  $region14: #{_lambda_.18} parent=0 // pred_check
    %p15 = pneg %p14
  $region15: #{_lambda_.18} parent=0 // pred_check_branch
    %17 = sbr.rel (%p15) target = $region17
  $region16: #{_lambda_.18} parent=0 // pred_region
    %18 = vst [vmem:[#allocation2] sm:$0xff] 0.0
    %19 = vst [vmem:[#allocation2 + $0x8] sm:$0xff] 0.0
    %20 = vst [vmem:[#allocation2 + $0x10] sm:$0xff] 0.0
    %21 = vst [vmem:[#allocation2 + $0x18] sm:$0xff] 0.0
    %22 = vst [vmem:[#allocation2 + $0x20] sm:$0xff] 0.0
    %23 = vst [vmem:[#allocation2 + $0x28] sm:$0xff] 0.0
    %24 = vst [vmem:[#allocation2 + $0x30] sm:$0xff] 0.0
    %25 = vst [vmem:[#allocation2 + $0x38] sm:$0xff] 0.0
    %26 = vst [vmem:[#allocation2 + $0x40] sm:$0xff] 0.0
    %27 = vst [vmem:[#allocation2 + $0x48] sm:$0xff] 0.0
    %28 = vst [vmem:[#allocation2 + $0x50] sm:$0xff] 0.0
    %29 = vst [vmem:[#allocation2 + $0x58] sm:$0xff] 0.0
    %30 = vst [vmem:[#allocation2 + $0x60] sm:$0xff] 0.0
    %31 = vst [vmem:[#allocation2 + $0x68] sm:$0xff] 0.0
    %32 = vst [vmem:[#allocation2 + $0x70] sm:$0xff] 0.0
    %33 = vst [vmem:[#allocation2 + $0x78] sm:$0xff] 0.0
  $region17: #{_lambda_.18} parent=0 // pred_fallthru
    _
  %v34 = vld [vmem:[#allocation2] sm:$0xff]
  %v35 = vld [vmem:[#allocation2 + $0x8] sm:$0xff]
  %v36 = vld [vmem:[#allocation2 + $0x10] sm:$0xff]
  %v37 = vld [vmem:[#allocation2 + $0x18] sm:$0xff]
  %v38 = vld [vmem:[#allocation2 + $0x20] sm:$0xff]
  %v39 = vld [vmem:[#allocation2 + $0x28] sm:$0xff]
  %v40 = vld [vmem:[#allocation2 + $0x30] sm:$0xff]
  %v41 = vld [vmem:[#allocation2 + $0x38] sm:$0xff]
  %v42 = vld [vmem:[#allocation2 + $0x40] sm:$0xff]
  %v43 = vld [vmem:[#allocation2 + $0x48] sm:$0xff]
  %v44 = vld [vmem:[#allocation2 + $0x50] sm:$0xff]
  %v45 = vld [vmem:[#allocation2 + $0x58] sm:$0xff]
  %v46 = vld [vmem:[#allocation2 + $0x60] sm:$0xff]
  %v47 = vld [vmem:[#allocation2 + $0x68] sm:$0xff]
  %v48 = vld [vmem:[#allocation2 + $0x70] sm:$0xff]
  %v49 = vld [vmem:[#allocation2 + $0x78] sm:$0xff]
  %v50 = vld [vmem:[%s0] sm:$0xff]
  %v51 = vld [vmem:[%s0 + $0x8] sm:$0xff]
  %v52 = vld [vmem:[%s0 + $0x10] sm:$0xf]
  %v53 = vld [vmem:[%s0 + $0x14] sm:$0xff]
  %v54 = vld [vmem:[%s0 + $0x1c] sm:$0xff]
  %v55 = vld [vmem:[%s0 + $0x24] sm:$0xf]
  %v56 = vld [vmem:[%s0 + $0x28] sm:$0xff]
  %v57 = vld [vmem:[%s0 + $0x30] sm:$0xff]
  %v58 = vld [vmem:[%s0 + $0x38] sm:$0xf]
  %v59 = vld [vmem:[%s0 + $0x3c] sm:$0xff]
  %v60 = vld [vmem:[%s0 + $0x44] sm:$0xff]
  %v61 = vld [vmem:[%s0 + $0x4c] sm:$0xf]
  %v62 = vld [vmem:[%s0 + $0x50] sm:$0xff]
  %v63 = vld [vmem:[%s0 + $0x58] sm:$0xff]
  %v64 = vld [vmem:[%s0 + $0x60] sm:$0xf]
  %v65 = vld [vmem:[%s0 + $0x64] sm:$0xff]
  %v66 = vld [vmem:[%s0 + $0x6c] sm:$0xff]
  %v67 = vld [vmem:[%s0 + $0x74] sm:$0xf]
  %v68 = vld [vmem:[%s0 + $0x78] sm:$0xff]
  %v69 = vld [vmem:[%s0 + $0x80] sm:$0xff]
  %v70 = vld [vmem:[%s0 + $0x88] sm:$0xf]
  %v71 = vld [vmem:[%s0 + $0x8c] sm:$0xff]
  %v72 = vld [vmem:[%s0 + $0x94] sm:$0xff]
  %v73 = vld [vmem:[%s0 + $0x9c] sm:$0xf]
  %v74 = vld [vmem:[%s0 + $0xa0] sm:$0xff]
  %v75 = vld [vmem:[%s0 + $0xa8] sm:$0xff]
  %v76 = vld [vmem:[%s0 + $0xb0] sm:$0xf]
  %v77 = vld [vmem:[%s0 + $0xb4] sm:$0xff]
  %v78 = vld [vmem:[%s0 + $0xbc] sm:$0xff]
  %v79 = vld [vmem:[%s0 + $0xc4] sm:$0xf]
  %v80 = vld [vmem:[%s0 + $0xc8] sm:$0xff]
  %v81 = vld [vmem:[%s0 + $0xd0] sm:$0xff]
  %v82 = vld [vmem:[%s0 + $0xd8] sm:$0xf]
  %v83 = vld [vmem:[%s0 + $0xdc] sm:$0xff]
  %v84 = vld [vmem:[%s0 + $0xe4] sm:$0xff]
  %v85 = vld [vmem:[%s0 + $0xec] sm:$0xf]
  %v86 = vld [vmem:[%s0 + $0xf0] sm:$0xff]
  %v87 = vld [vmem:[%s0 + $0xf8] sm:$0xff]
  %v88 = vld [vmem:[%s0 + $0x100] sm:$0xf]
  %v89 = vld [vmem:[%s0 + $0x104] sm:$0xff]
  %v90 = vld [vmem:[%s0 + $0x10c] sm:$0xff]
  %v91 = vld [vmem:[%s0 + $0x114] sm:$0xf]
  %v92 = vld [vmem:[%s0 + $0x118] sm:$0xff]
  %v93 = vld [vmem:[%s0 + $0x120] sm:$0xff]
  %v94 = vld [vmem:[%s0 + $0x128] sm:$0xf]
  %v95 = vld [vmem:[%s0 + $0x12c] sm:$0xff]
  %v96 = vld [vmem:[%s0 + $0x134] sm:$0xff]
  %v97 = vld [vmem:[%s0 + $0x13c] sm:$0xf]
  %v98 = vld [vmem:[%s1] sm:$0xf]
  %v99 = vld [vmem:[%s1 + $0x4] sm:$0xf]
  %v100 = vld [vmem:[%s1 + $0x8] sm:$0xf]
  %v101 = vld [vmem:[%s1 + $0xc] sm:$0xf]
  %v102 = vld [vmem:[%s1 + $0x10] sm:$0xf]
  %v103 = vld [vmem:[%s1 + $0x14] sm:$0xf]
  %v104 = vld [vmem:[%s1 + $0x18] sm:$0xf]
  %v105 = vld [vmem:[%s1 + $0x1c] sm:$0xf]
  %v106 = vld [vmem:[%s1 + $0x20] sm:$0xf]
  %v107 = vld [vmem:[%s1 + $0x24] sm:$0xf]
  %v108 = vld [vmem:[%s1 + $0x28] sm:$0xf]
  %v109 = vld [vmem:[%s1 + $0x2c] sm:$0xf]
  %v110 = vld [vmem:[%s1 + $0x30] sm:$0xf]
  %v111 = vld [vmem:[%s1 + $0x34] sm:$0xf]
  %v112 = vld [vmem:[%s1 + $0x38] sm:$0xf]
  %v113 = vld [vmem:[%s1 + $0x3c] sm:$0xf]
  %v114 = vld [vmem:[%s1 + $0x40] sm:$0xf]
  %v115 = vld [vmem:[%s1 + $0x44] sm:$0xf]
  %v116 = vld [vmem:[%s1 + $0x48] sm:$0xf]
  %v117 = vld [vmem:[%s1 + $0x4c] sm:$0xf]
  %v118 = vld [vmem:[%s1 + $0x50] sm:$0xf]
  %v119 = vld [vmem:[%s1 + $0x54] sm:$0xf]
  %v120 = vld [vmem:[%s1 + $0x58] sm:$0xf]
  %v121 = vld [vmem:[%s1 + $0x5c] sm:$0xf]
  %v122 = vld [vmem:[%s1 + $0x60] sm:$0xf]
  %v123 = vld [vmem:[%s1 + $0x64] sm:$0xf]
  %v124 = vld [vmem:[%s1 + $0x68] sm:$0xf]
  %v125 = vld [vmem:[%s1 + $0x6c] sm:$0xf]
  %v126 = vld [vmem:[%s1 + $0x70] sm:$0xf]
  %v127 = vld [vmem:[%s1 + $0x74] sm:$0xf]
  %v128 = vld [vmem:[%s1 + $0x78] sm:$0xf]
  %v129 = vld [vmem:[%s1 + $0x7c] sm:$0xf]
  %v130 = vld [vmem:[%s1 + $0x80] sm:$0xf]
  %v131 = vld [vmem:[%s1 + $0x84] sm:$0xf]
  %v132 = vld [vmem:[%s1 + $0x88] sm:$0xf]
  %v133 = vld [vmem:[%s1 + $0x8c] sm:$0xf]
  %v134 = vld [vmem:[%s1 + $0x90] sm:$0xf]
  %v135 = vld [vmem:[%s1 + $0x94] sm:$0xf]
  %v136 = vld [vmem:[%s1 + $0x98] sm:$0xf]
  %v137 = vld [vmem:[%s1 + $0x9c] sm:$0xf]
  %v138 = vld [vmem:[%s1 + $0xa0] sm:$0xf]
  %v139 = vld [vmem:[%s1 + $0xa4] sm:$0xf]
  %v140 = vld [vmem:[%s1 + $0xa8] sm:$0xf]
  %v141 = vld [vmem:[%s1 + $0xac] sm:$0xf]
  %v142 = vld [vmem:[%s1 + $0xb0] sm:$0xf]
  %v143 = vld [vmem:[%s1 + $0xb4] sm:$0xf]
  %v144 = vld [vmem:[%s1 + $0xb8] sm:$0xf]
  %v145 = vld [vmem:[%s1 + $0xbc] sm:$0xf]
  %v146 = vld [vmem:[%s1 + $0xc0] sm:$0xf]
  %v147 = vld [vmem:[%s1 + $0xc4] sm:$0xf]
  %v148 = vld [vmem:[%s1 + $0xc8] sm:$0xf]
  %v149 = vld [vmem:[%s1 + $0xcc] sm:$0xf]
  %v150 = vld [vmem:[%s1 + $0xd0] sm:$0xf]
  %v151 = vld [vmem:[%s1 + $0xd4] sm:$0xf]
  %v152 = vld [vmem:[%s1 + $0xd8] sm:$0xf]
  %v153 = vld [vmem:[%s1 + $0xdc] sm:$0xf]
  %v154 = vld [vmem:[%s1 + $0xe0] sm:$0xf]
  %v155 = vld [vmem:[%s1 + $0xe4] sm:$0xf]
  %v156 = vld [vmem:[%s1 + $0xe8] sm:$0xf]
  %v157 = vld [vmem:[%s1 + $0xec] sm:$0xf]
  %v158 = vld [vmem:[%s1 + $0xf0] sm:$0xf]
  %v159 = vld [vmem:[%s1 + $0xf4] sm:$0xf]
  %v160 = vld [vmem:[%s1 + $0xf8] sm:$0xf]
  %v161 = vld [vmem:[%s1 + $0xfc] sm:$0xf]
  %v162 = vld [vmem:[%s1 + $0x100] sm:$0xf]
  %v163 = vld [vmem:[%s1 + $0x104] sm:$0xf]
  %v164 = vld [vmem:[%s1 + $0x108] sm:$0xf]
  %v165 = vld [vmem:[%s1 + $0x10c] sm:$0xf]
  %v166 = vld [vmem:[%s1 + $0x110] sm:$0xf]
  %v167 = vld [vmem:[%s1 + $0x114] sm:$0xf]
  %v168 = vld [vmem:[%s1 + $0x118] sm:$0xf]
  %v169 = vld [vmem:[%s1 + $0x11c] sm:$0xf]
  %v170 = vld [vmem:[%s1 + $0x120] sm:$0xf]
  %v171 = vld [vmem:[%s1 + $0x124] sm:$0xf]
  %v172 = vld [vmem:[%s1 + $0x128] sm:$0xf]
  %v173 = vld [vmem:[%s1 + $0x12c] sm:$0xf]
  %v174 = vld [vmem:[%s1 + $0x130] sm:$0xf]
  %v175 = vld [vmem:[%s1 + $0x134] sm:$0xf]
  %v176 = vld [vmem:[%s1 + $0x138] sm:$0xf]
  %v177 = vld [vmem:[%s1 + $0x13c] sm:$0xf]
  %v226 = vunpack.c.l.b16 %v50
  %v227 = vunpack.c.h.b16 %v50
  %v228 = vunpack.c.l.b16 %v51
  %v229 = vunpack.c.h.b16 %v51
  %v230 = vunpack.c.l.b16 %v52
  %v231 = vunpack.c.l.b16 %v53
  %v232 = vunpack.c.h.b16 %v53
  %v233 = vunpack.c.l.b16 %v54
  %v234 = vunpack.c.h.b16 %v54
  %v235 = vunpack.c.l.b16 %v55
  %v236 = vunpack.c.l.b16 %v56
  %v237 = vunpack.c.h.b16 %v56
  %v238 = vunpack.c.l.b16 %v57
  %v239 = vunpack.c.h.b16 %v57
  %v240 = vunpack.c.l.b16 %v58
  %v241 = vunpack.c.l.b16 %v59
  %v242 = vunpack.c.h.b16 %v59
  %v243 = vunpack.c.l.b16 %v60
  %v244 = vunpack.c.h.b16 %v60
  %v245 = vunpack.c.l.b16 %v61
  %v246 = vunpack.c.l.b16 %v62
  %v247 = vunpack.c.h.b16 %v62
  %v248 = vunpack.c.l.b16 %v63
  %v249 = vunpack.c.h.b16 %v63
  %v250 = vunpack.c.l.b16 %v64
  %v251 = vunpack.c.l.b16 %v65
  %v252 = vunpack.c.h.b16 %v65
  %v253 = vunpack.c.l.b16 %v66
  %v254 = vunpack.c.h.b16 %v66
  %v255 = vunpack.c.l.b16 %v67
  %v256 = vunpack.c.l.b16 %v68
  %v257 = vunpack.c.h.b16 %v68
  %v258 = vunpack.c.l.b16 %v69
  %v259 = vunpack.c.h.b16 %v69
  %v260 = vunpack.c.l.b16 %v70
  %v261 = vunpack.c.l.b16 %v71
  %v262 = vunpack.c.h.b16 %v71
  %v263 = vunpack.c.l.b16 %v72
  %v264 = vunpack.c.h.b16 %v72
  %v265 = vunpack.c.l.b16 %v73
  %v266 = vunpack.c.l.b16 %v74
  %v267 = vunpack.c.h.b16 %v74
  %v268 = vunpack.c.l.b16 %v75
  %v269 = vunpack.c.h.b16 %v75
  %v270 = vunpack.c.l.b16 %v76
  %v271 = vunpack.c.l.b16 %v77
  %v272 = vunpack.c.h.b16 %v77
  %v273 = vunpack.c.l.b16 %v78
  %v274 = vunpack.c.h.b16 %v78
  %v275 = vunpack.c.l.b16 %v79
  %v276 = vunpack.c.l.b16 %v80
  %v277 = vunpack.c.h.b16 %v80
  %v278 = vunpack.c.l.b16 %v81
  %v279 = vunpack.c.h.b16 %v81
  %v280 = vunpack.c.l.b16 %v82
  %v281 = vunpack.c.l.b16 %v83
  %v282 = vunpack.c.h.b16 %v83
  %v283 = vunpack.c.l.b16 %v84
  %v284 = vunpack.c.h.b16 %v84
  %v285 = vunpack.c.l.b16 %v85
  %v286 = vunpack.c.l.b16 %v86
  %v287 = vunpack.c.h.b16 %v86
  %v288 = vunpack.c.l.b16 %v87
  %v289 = vunpack.c.h.b16 %v87
  %v290 = vunpack.c.l.b16 %v88
  %v291 = vunpack.c.l.b16 %v89
  %v292 = vunpack.c.h.b16 %v89
  %v293 = vunpack.c.l.b16 %v90
  %v294 = vunpack.c.h.b16 %v90
  %v295 = vunpack.c.l.b16 %v91
  %v296 = vunpack.c.l.b16 %v92
  %v297 = vunpack.c.h.b16 %v92
  %v298 = vunpack.c.l.b16 %v93
  %v299 = vunpack.c.h.b16 %v93
  %v300 = vunpack.c.l.b16 %v94
  %v301 = vunpack.c.l.b16 %v95
  %v302 = vunpack.c.h.b16 %v95
  %v303 = vunpack.c.l.b16 %v96
  %v304 = vunpack.c.h.b16 %v96
  %v305 = vunpack.c.l.b16 %v97
  %v306 = vpack.c.b16 %v231, %v226
  %v307 = vpack.c.b16 %v232, %v227
  %v308 = vpack.c.b16 %v233, %v228
  %v309 = vpack.c.b16 %v234, %v229
  %v310 = vpack.c.b16 %v235, %v230
  %v311 = vpack.c.b16 %v241, %v236
  %v312 = vpack.c.b16 %v242, %v237
  %v313 = vpack.c.b16 %v243, %v238
  %v314 = vpack.c.b16 %v244, %v239
  %v315 = vpack.c.b16 %v245, %v240
  %v316 = vpack.c.b16 %v251, %v246
  %v317 = vpack.c.b16 %v252, %v247
  %v318 = vpack.c.b16 %v253, %v248
  %v319 = vpack.c.b16 %v254, %v249
  %v320 = vpack.c.b16 %v255, %v250
  %v321 = vpack.c.b16 %v261, %v256
  %v322 = vpack.c.b16 %v262, %v257
  %v323 = vpack.c.b16 %v263, %v258
  %v324 = vpack.c.b16 %v264, %v259
  %v325 = vpack.c.b16 %v265, %v260
  %v326 = vpack.c.b16 %v271, %v266
  %v327 = vpack.c.b16 %v272, %v267
  %v328 = vpack.c.b16 %v273, %v268
  %v329 = vpack.c.b16 %v274, %v269
  %v330 = vpack.c.b16 %v275, %v270
  %v331 = vpack.c.b16 %v281, %v276
  %v332 = vpack.c.b16 %v282, %v277
  %v333 = vpack.c.b16 %v283, %v278
  %v334 = vpack.c.b16 %v284, %v279
  %v335 = vpack.c.b16 %v285, %v280
  %v336 = vpack.c.b16 %v291, %v286
  %v337 = vpack.c.b16 %v292, %v287
  %v338 = vpack.c.b16 %v293, %v288
  %v339 = vpack.c.b16 %v294, %v289
  %v340 = vpack.c.b16 %v295, %v290
  %v341 = vpack.c.b16 %v301, %v296
  %v342 = vpack.c.b16 %v302, %v297
  %v343 = vpack.c.b16 %v303, %v298
  %v344 = vpack.c.b16 %v304, %v299
  %v345 = vpack.c.b16 %v305, %v300
  %v466 = vunpack.c.l.b16 %v98
  %v467 = vunpack.c.l.b16 %v99
  %v468 = vunpack.c.l.b16 %v100
  %v469 = vunpack.c.l.b16 %v101
  %v470 = vunpack.c.l.b16 %v102
  %v471 = vunpack.c.l.b16 %v103
  %v472 = vunpack.c.l.b16 %v104
  %v473 = vunpack.c.l.b16 %v105
  %v474 = vunpack.c.l.b16 %v106
  %v475 = vunpack.c.l.b16 %v107
  %v476 = vunpack.c.l.b16 %v108
  %v477 = vunpack.c.l.b16 %v109
  %v478 = vunpack.c.l.b16 %v110
  %v479 = vunpack.c.l.b16 %v111
  %v480 = vunpack.c.l.b16 %v112
  %v481 = vunpack.c.l.b16 %v113
  %v482 = vunpack.c.l.b16 %v114
  %v483 = vunpack.c.l.b16 %v115
  %v484 = vunpack.c.l.b16 %v116
  %v485 = vunpack.c.l.b16 %v117
  %v486 = vunpack.c.l.b16 %v118
  %v487 = vunpack.c.l.b16 %v119
  %v488 = vunpack.c.l.b16 %v120
  %v489 = vunpack.c.l.b16 %v121
  %v490 = vunpack.c.l.b16 %v122
  %v491 = vunpack.c.l.b16 %v123
  %v492 = vunpack.c.l.b16 %v124
  %v493 = vunpack.c.l.b16 %v125
  %v494 = vunpack.c.l.b16 %v126
  %v495 = vunpack.c.l.b16 %v127
  %v496 = vunpack.c.l.b16 %v128
  %v497 = vunpack.c.l.b16 %v129
  %v498 = vunpack.c.l.b16 %v130
  %v499 = vunpack.c.l.b16 %v131
  %v500 = vunpack.c.l.b16 %v132
  %v501 = vunpack.c.l.b16 %v133
  %v502 = vunpack.c.l.b16 %v134
  %v503 = vunpack.c.l.b16 %v135
  %v504 = vunpack.c.l.b16 %v136
  %v505 = vunpack.c.l.b16 %v137
  %v506 = vunpack.c.l.b16 %v138
  %v507 = vunpack.c.l.b16 %v139
  %v508 = vunpack.c.l.b16 %v140
  %v509 = vunpack.c.l.b16 %v141
  %v510 = vunpack.c.l.b16 %v142
  %v511 = vunpack.c.l.b16 %v143
  %v512 = vunpack.c.l.b16 %v144
  %v513 = vunpack.c.l.b16 %v145
  %v514 = vunpack.c.l.b16 %v146
  %v515 = vunpack.c.l.b16 %v147
  %v516 = vunpack.c.l.b16 %v148
  %v517 = vunpack.c.l.b16 %v149
  %v518 = vunpack.c.l.b16 %v150
  %v519 = vunpack.c.l.b16 %v151
  %v520 = vunpack.c.l.b16 %v152
  %v521 = vunpack.c.l.b16 %v153
  %v522 = vunpack.c.l.b16 %v154
  %v523 = vunpack.c.l.b16 %v155
  %v524 = vunpack.c.l.b16 %v156
  %v525 = vunpack.c.l.b16 %v157
  %v526 = vunpack.c.l.b16 %v158
  %v527 = vunpack.c.l.b16 %v159
  %v528 = vunpack.c.l.b16 %v160
  %v529 = vunpack.c.l.b16 %v161
  %v530 = vunpack.c.l.b16 %v162
  %v531 = vunpack.c.l.b16 %v163
  %v532 = vunpack.c.l.b16 %v164
  %v533 = vunpack.c.l.b16 %v165
  %v534 = vunpack.c.l.b16 %v166
  %v535 = vunpack.c.l.b16 %v167
  %v536 = vunpack.c.l.b16 %v168
  %v537 = vunpack.c.l.b16 %v169
  %v538 = vunpack.c.l.b16 %v170
  %v539 = vunpack.c.l.b16 %v171
  %v540 = vunpack.c.l.b16 %v172
  %v541 = vunpack.c.l.b16 %v173
  %v542 = vunpack.c.l.b16 %v174
  %v543 = vunpack.c.l.b16 %v175
  %v544 = vunpack.c.l.b16 %v176
  %v545 = vunpack.c.l.b16 %v177
  %v546 = vpack.c.b16 %v467, %v466
  %v547 = vpack.c.b16 %v469, %v468
  %v548 = vpack.c.b16 %v471, %v470
  %v549 = vpack.c.b16 %v473, %v472
  %v550 = vpack.c.b16 %v475, %v474
  %v551 = vpack.c.b16 %v477, %v476
  %v552 = vpack.c.b16 %v479, %v478
  %v553 = vpack.c.b16 %v481, %v480
  %v554 = vpack.c.b16 %v483, %v482
  %v555 = vpack.c.b16 %v485, %v484
  %v556 = vpack.c.b16 %v487, %v486
  %v557 = vpack.c.b16 %v489, %v488
  %v558 = vpack.c.b16 %v491, %v490
  %v559 = vpack.c.b16 %v493, %v492
  %v560 = vpack.c.b16 %v495, %v494
  %v561 = vpack.c.b16 %v497, %v496
  %v562 = vpack.c.b16 %v499, %v498
  %v563 = vpack.c.b16 %v501, %v500
  %v564 = vpack.c.b16 %v503, %v502
  %v565 = vpack.c.b16 %v505, %v504
  %v566 = vpack.c.b16 %v507, %v506
  %v567 = vpack.c.b16 %v509, %v508
  %v568 = vpack.c.b16 %v511, %v510
  %v569 = vpack.c.b16 %v513, %v512
  %v570 = vpack.c.b16 %v515, %v514
  %v571 = vpack.c.b16 %v517, %v516
  %v572 = vpack.c.b16 %v519, %v518
  %v573 = vpack.c.b16 %v521, %v520
  %v574 = vpack.c.b16 %v523, %v522
  %v575 = vpack.c.b16 %v525, %v524
  %v576 = vpack.c.b16 %v527, %v526
  %v577 = vpack.c.b16 %v529, %v528
  %v578 = vpack.c.b16 %v531, %v530
  %v579 = vpack.c.b16 %v533, %v532
  %v580 = vpack.c.b16 %v535, %v534
  %v581 = vpack.c.b16 %v537, %v536
  %v582 = vpack.c.b16 %v539, %v538
  %v583 = vpack.c.b16 %v541, %v540
  %v584 = vpack.c.b16 %v543, %v542
  %v585 = vpack.c.b16 %v545, %v544
  %626 = vmatpush.bf16.msra.mxu0 %v553
  %627 = vmatpush.bf16.msra.mxu0 %v552
  %628 = vmatpush.bf16.msra.mxu0 %v551
  %629 = vmatpush.bf16.msra.mxu0 %v550
  %630 = vmatpush.bf16.msra.mxu0 %v549
  %631 = vmatpush.bf16.msra.mxu0 %v548
  %632 = vmatpush.bf16.msra.mxu0 %v547
  %633 = vmatpush.bf16.msra.mxu0 %v546
  %634 = vmatmul.bf16.gmra.mxu0 %v306
  %v635 = vpop.f32.mrf.mxu0
  %v636 = vadd.f32 0.0, %v635
  %v637 = vpop.f32.mrf.mxu0
  %v638 = vadd.f32 0.0, %v637
  %639 = vmatmul.bf16.gmra.mxu0 %v311
  %v640 = vpop.f32.mrf.mxu0
  %v641 = vadd.f32 0.0, %v640
  %v642 = vpop.f32.mrf.mxu0
  %v643 = vadd.f32 0.0, %v642
  %644 = vmatmul.bf16.gmra.mxu0 %v316
  %v645 = vpop.f32.mrf.mxu0
  %v646 = vadd.f32 0.0, %v645
  %v647 = vpop.f32.mrf.mxu0
  %v648 = vadd.f32 0.0, %v647
  %649 = vmatmul.bf16.gmra.mxu0 %v321
  %v650 = vpop.f32.mrf.mxu0
  %v651 = vadd.f32 0.0, %v650
  %v652 = vpop.f32.mrf.mxu0
  %v653 = vadd.f32 0.0, %v652
  %654 = vmatmul.bf16.gmra.mxu0 %v326
  %v655 = vpop.f32.mrf.mxu0
  %v656 = vadd.f32 0.0, %v655
  %v657 = vpop.f32.mrf.mxu0
  %v658 = vadd.f32 0.0, %v657
  %659 = vmatmul.bf16.gmra.mxu0 %v331
  %v660 = vpop.f32.mrf.mxu0
  %v661 = vadd.f32 0.0, %v660
  %v662 = vpop.f32.mrf.mxu0
  %v663 = vadd.f32 0.0, %v662
  %664 = vmatmul.bf16.gmra.mxu0 %v336
  %v665 = vpop.f32.mrf.mxu0
  %v666 = vadd.f32 0.0, %v665
  %v667 = vpop.f32.mrf.mxu0
  %v668 = vadd.f32 0.0, %v667
  %669 = vmatmul.bf16.gmra.mxu0 %v341
  %v670 = vpop.f32.mrf.mxu0
  %v671 = vadd.f32 0.0, %v670
  %v672 = vpop.f32.mrf.mxu0
  %v673 = vadd.f32 0.0, %v672
  %674 = vdwg.mxu0
  %675 = vmatpush.bf16.msra.mxu0 %v561
  %676 = vmatpush.bf16.msra.mxu0 %v560
  %677 = vmatpush.bf16.msra.mxu0 %v559
  %678 = vmatpush.bf16.msra.mxu0 %v558
  %679 = vmatpush.bf16.msra.mxu0 %v557
  %680 = vmatpush.bf16.msra.mxu0 %v556
  %681 = vmatpush.bf16.msra.mxu0 %v555
  %682 = vmatpush.bf16.msra.mxu0 %v554
  %683 = vmatmul.bf16.gmra.mxu0 %v307
  %v684 = vpop.f32.mrf.mxu0
  %v685 = vadd.f32 %v636, %v684
  %v686 = vpop.f32.mrf.mxu0
  %v687 = vadd.f32 %v638, %v686
  %688 = vmatmul.bf16.gmra.mxu0 %v312
  %v689 = vpop.f32.mrf.mxu0
  %v690 = vadd.f32 %v641, %v689
  %v691 = vpop.f32.mrf.mxu0
  %v692 = vadd.f32 %v643, %v691
  %693 = vmatmul.bf16.gmra.mxu0 %v317
  %v694 = vpop.f32.mrf.mxu0
  %v695 = vadd.f32 %v646, %v694
  %v696 = vpop.f32.mrf.mxu0
  %v697 = vadd.f32 %v648, %v696
  %698 = vmatmul.bf16.gmra.mxu0 %v322
  %v699 = vpop.f32.mrf.mxu0
  %v700 = vadd.f32 %v651, %v699
  %v701 = vpop.f32.mrf.mxu0
  %v702 = vadd.f32 %v653, %v701
  %703 = vmatmul.bf16.gmra.mxu0 %v327
  %v704 = vpop.f32.mrf.mxu0
  %v705 = vadd.f32 %v656, %v704
  %v706 = vpop.f32.mrf.mxu0
  %v707 = vadd.f32 %v658, %v706
  %708 = vmatmul.bf16.gmra.mxu0 %v332
  %v709 = vpop.f32.mrf.mxu0
  %v710 = vadd.f32 %v661, %v709
  %v711 = vpop.f32.mrf.mxu0
  %v712 = vadd.f32 %v663, %v711
  %713 = vmatmul.bf16.gmra.mxu0 %v337
  %v714 = vpop.f32.mrf.mxu0
  %v715 = vadd.f32 %v666, %v714
  %v716 = vpop.f32.mrf.mxu0
  %v717 = vadd.f32 %v668, %v716
  %718 = vmatmul.bf16.gmra.mxu0 %v342
  %v719 = vpop.f32.mrf.mxu0
  %v720 = vadd.f32 %v671, %v719
  %v721 = vpop.f32.mrf.mxu0
  %v722 = vadd.f32 %v673, %v721
  %723 = vdwg.mxu0
  %724 = vmatpush.bf16.msra.mxu0 %v569
  %725 = vmatpush.bf16.msra.mxu0 %v568
  %726 = vmatpush.bf16.msra.mxu0 %v567
  %727 = vmatpush.bf16.msra.mxu0 %v566
  %728 = vmatpush.bf16.msra.mxu0 %v565
  %729 = vmatpush.bf16.msra.mxu0 %v564
  %730 = vmatpush.bf16.msra.mxu0 %v563
  %731 = vmatpush.bf16.msra.mxu0 %v562
  %732 = vmatmul.bf16.gmra.mxu0 %v308
  %v733 = vpop.f32.mrf.mxu0
  %v734 = vadd.f32 %v685, %v733
  %v735 = vpop.f32.mrf.mxu0
  %v736 = vadd.f32 %v687, %v735
  %737 = vmatmul.bf16.gmra.mxu0 %v313
  %v738 = vpop.f32.mrf.mxu0
  %v739 = vadd.f32 %v690, %v738
  %v740 = vpop.f32.mrf.mxu0
  %v741 = vadd.f32 %v692, %v740
  %742 = vmatmul.bf16.gmra.mxu0 %v318
  %v743 = vpop.f32.mrf.mxu0
  %v744 = vadd.f32 %v695, %v743
  %v745 = vpop.f32.mrf.mxu0
  %v746 = vadd.f32 %v697, %v745
  %747 = vmatmul.bf16.gmra.mxu0 %v323
  %v748 = vpop.f32.mrf.mxu0
  %v749 = vadd.f32 %v700, %v748
  %v750 = vpop.f32.mrf.mxu0
  %v751 = vadd.f32 %v702, %v750
  %752 = vmatmul.bf16.gmra.mxu0 %v328
  %v753 = vpop.f32.mrf.mxu0
  %v754 = vadd.f32 %v705, %v753
  %v755 = vpop.f32.mrf.mxu0
  %v756 = vadd.f32 %v707, %v755
  %757 = vmatmul.bf16.gmra.mxu0 %v333
  %v758 = vpop.f32.mrf.mxu0
  %v759 = vadd.f32 %v710, %v758
  %v760 = vpop.f32.mrf.mxu0
  %v761 = vadd.f32 %v712, %v760
  %762 = vmatmul.bf16.gmra.mxu0 %v338
  %v763 = vpop.f32.mrf.mxu0
  %v764 = vadd.f32 %v715, %v763
  %v765 = vpop.f32.mrf.mxu0
  %v766 = vadd.f32 %v717, %v765
  %767 = vmatmul.bf16.gmra.mxu0 %v343
  %v768 = vpop.f32.mrf.mxu0
  %v769 = vadd.f32 %v720, %v768
  %v770 = vpop.f32.mrf.mxu0
  %v771 = vadd.f32 %v722, %v770
  %772 = vdwg.mxu0
  %773 = vmatpush.bf16.msra.mxu0 %v577
  %774 = vmatpush.bf16.msra.mxu0 %v576
  %775 = vmatpush.bf16.msra.mxu0 %v575
  %776 = vmatpush.bf16.msra.mxu0 %v574
  %777 = vmatpush.bf16.msra.mxu0 %v573
  %778 = vmatpush.bf16.msra.mxu0 %v572
  %779 = vmatpush.bf16.msra.mxu0 %v571
  %780 = vmatpush.bf16.msra.mxu0 %v570
  %781 = vmatmul.bf16.gmra.mxu0 %v309
  %v782 = vpop.f32.mrf.mxu0
  %v783 = vadd.f32 %v734, %v782
  %v784 = vpop.f32.mrf.mxu0
  %v785 = vadd.f32 %v736, %v784
  %786 = vmatmul.bf16.gmra.mxu0 %v314
  %v787 = vpop.f32.mrf.mxu0
  %v788 = vadd.f32 %v739, %v787
  %v789 = vpop.f32.mrf.mxu0
  %v790 = vadd.f32 %v741, %v789
  %791 = vmatmul.bf16.gmra.mxu0 %v319
  %v792 = vpop.f32.mrf.mxu0
  %v793 = vadd.f32 %v744, %v792
  %v794 = vpop.f32.mrf.mxu0
  %v795 = vadd.f32 %v746, %v794
  %796 = vmatmul.bf16.gmra.mxu0 %v324
  %v797 = vpop.f32.mrf.mxu0
  %v798 = vadd.f32 %v749, %v797
  %v799 = vpop.f32.mrf.mxu0
  %v800 = vadd.f32 %v751, %v799
  %801 = vmatmul.bf16.gmra.mxu0 %v329
  %v802 = vpop.f32.mrf.mxu0
  %v803 = vadd.f32 %v754, %v802
  %v804 = vpop.f32.mrf.mxu0
  %v805 = vadd.f32 %v756, %v804
  %806 = vmatmul.bf16.gmra.mxu0 %v334
  %v807 = vpop.f32.mrf.mxu0
  %v808 = vadd.f32 %v759, %v807
  %v809 = vpop.f32.mrf.mxu0
  %v810 = vadd.f32 %v761, %v809
  %811 = vmatmul.bf16.gmra.mxu0 %v339
  %v812 = vpop.f32.mrf.mxu0
  %v813 = vadd.f32 %v764, %v812
  %v814 = vpop.f32.mrf.mxu0
  %v815 = vadd.f32 %v766, %v814
  %816 = vmatmul.bf16.gmra.mxu0 %v344
  %v817 = vpop.f32.mrf.mxu0
  %v818 = vadd.f32 %v769, %v817
  %v819 = vpop.f32.mrf.mxu0
  %v820 = vadd.f32 %v771, %v819
  %821 = vdwg.mxu0
  %822 = vmatpush.bf16.msra.mxu0 %v585
  %823 = vmatpush.bf16.msra.mxu0 %v584
  %824 = vmatpush.bf16.msra.mxu0 %v583
  %825 = vmatpush.bf16.msra.mxu0 %v582
  %826 = vmatpush.bf16.msra.mxu0 %v581
  %827 = vmatpush.bf16.msra.mxu0 %v580
  %828 = vmatpush.bf16.msra.mxu0 %v579
  %829 = vmatpush.bf16.msra.mxu0 %v578
  %830 = vmatmul.bf16.gmra.mxu0 %v310
  %v831 = vpop.f32.mrf.mxu0
  %v832 = vadd.f32 %v783, %v831
  %v833 = vpop.f32.mrf.mxu0
  %v834 = vadd.f32 %v785, %v833
  %835 = vmatmul.bf16.gmra.mxu0 %v315
  %v836 = vpop.f32.mrf.mxu0
  %v837 = vadd.f32 %v788, %v836
  %v838 = vpop.f32.mrf.mxu0
  %v839 = vadd.f32 %v790, %v838
  %840 = vmatmul.bf16.gmra.mxu0 %v320
  %v841 = vpop.f32.mrf.mxu0
  %v842 = vadd.f32 %v793, %v841
  %v843 = vpop.f32.mrf.mxu0
  %v844 = vadd.f32 %v795, %v843
  %845 = vmatmul.bf16.gmra.mxu0 %v325
  %v846 = vpop.f32.mrf.mxu0
  %v847 = vadd.f32 %v798, %v846
  %v848 = vpop.f32.mrf.mxu0
  %v849 = vadd.f32 %v800, %v848
  %850 = vmatmul.bf16.gmra.mxu0 %v330
  %v851 = vpop.f32.mrf.mxu0
  %v852 = vadd.f32 %v803, %v851
  %v853 = vpop.f32.mrf.mxu0
  %v854 = vadd.f32 %v805, %v853
  %855 = vmatmul.bf16.gmra.mxu0 %v335
  %v856 = vpop.f32.mrf.mxu0
  %v857 = vadd.f32 %v808, %v856
  %v858 = vpop.f32.mrf.mxu0
  %v859 = vadd.f32 %v810, %v858
  %860 = vmatmul.bf16.gmra.mxu0 %v340
  %v861 = vpop.f32.mrf.mxu0
  %v862 = vadd.f32 %v813, %v861
  %v863 = vpop.f32.mrf.mxu0
  %v864 = vadd.f32 %v815, %v863
  %865 = vmatmul.bf16.gmra.mxu0 %v345
  %v866 = vpop.f32.mrf.mxu0
  %v867 = vadd.f32 %v818, %v866
  %v868 = vpop.f32.mrf.mxu0
  %v869 = vadd.f32 %v820, %v868
  %870 = vdwg.mxu0
  %v871 = vadd.f32 %v34, %v832
  %v872 = vadd.f32 %v35, %v834
  %v873 = vadd.f32 %v36, %v837
  %v874 = vadd.f32 %v37, %v839
  %v875 = vadd.f32 %v38, %v842
  %v876 = vadd.f32 %v39, %v844
  %v877 = vadd.f32 %v40, %v847
  %v878 = vadd.f32 %v41, %v849
  %v879 = vadd.f32 %v42, %v852
  %v880 = vadd.f32 %v43, %v854
  %v881 = vadd.f32 %v44, %v857
  %v882 = vadd.f32 %v45, %v859
  %v883 = vadd.f32 %v46, %v862
  %v884 = vadd.f32 %v47, %v864
  %v885 = vadd.f32 %v48, %v867
  %v886 = vadd.f32 %v49, %v869
  %887 = vst [vmem:[#allocation2] sm:$0xff] %v871
  %888 = vst [vmem:[#allocation2 + $0x8] sm:$0xff] %v872
  %889 = vst [vmem:[#allocation2 + $0x10] sm:$0xff] %v873
  %890 = vst [vmem:[#allocation2 + $0x18] sm:$0xff] %v874
  %891 = vst [vmem:[#allocation2 + $0x20] sm:$0xff] %v875
  %892 = vst [vmem:[#allocation2 + $0x28] sm:$0xff] %v876
  %893 = vst [vmem:[#allocation2 + $0x30] sm:$0xff] %v877
  %894 = vst [vmem:[#allocation2 + $0x38] sm:$0xff] %v878
  %895 = vst [vmem:[#allocation2 + $0x40] sm:$0xff] %v879
  %896 = vst [vmem:[#allocation2 + $0x48] sm:$0xff] %v880
  %897 = vst [vmem:[#allocation2 + $0x50] sm:$0xff] %v881
  %898 = vst [vmem:[#allocation2 + $0x58] sm:$0xff] %v882
  %899 = vst [vmem:[#allocation2 + $0x60] sm:$0xff] %v883
  %900 = vst [vmem:[#allocation2 + $0x68] sm:$0xff] %v884
  %901 = vst [vmem:[#allocation2 + $0x70] sm:$0xff] %v885
  %902 = vst [vmem:[#allocation2 + $0x78] sm:$0xff] %v886
  // Predicated region
  $region18: #{_lambda_.18} parent=0 // pred_check
    %p903 = pneg %p14
  $region19: #{_lambda_.18} parent=0 // pred_check_branch
    %905 = sbr.rel (%p903) target = $region21
  $region20: #{_lambda_.18} parent=0 // pred_region
    %v906 = vld [vmem:[#allocation2] sm:$0xff]
    %v907 = vld [vmem:[#allocation2 + $0x8] sm:$0xff]
    %v908 = vld [vmem:[#allocation2 + $0x10] sm:$0xff]
    %v909 = vld [vmem:[#allocation2 + $0x18] sm:$0xff]
    %v910 = vld [vmem:[#allocation2 + $0x20] sm:$0xff]
    %v911 = vld [vmem:[#allocation2 + $0x28] sm:$0xff]
    %v912 = vld [vmem:[#allocation2 + $0x30] sm:$0xff]
    %v913 = vld [vmem:[#allocation2 + $0x38] sm:$0xff]
    %v914 = vld [vmem:[#allocation2 + $0x40] sm:$0xff]
    %v915 = vld [vmem:[#allocation2 + $0x48] sm:$0xff]
    %v916 = vld [vmem:[#allocation2 + $0x50] sm:$0xff]
    %v917 = vld [vmem:[#allocation2 + $0x58] sm:$0xff]
    %v918 = vld [vmem:[#allocation2 + $0x60] sm:$0xff]
    %v919 = vld [vmem:[#allocation2 + $0x68] sm:$0xff]
    %v920 = vld [vmem:[#allocation2 + $0x70] sm:$0xff]
    %v921 = vld [vmem:[#allocation2 + $0x78] sm:$0xff]
    %v922 = vld [vmem:[%s2] sm:$0x1]
    %v924 = vperm.slane %v922, 0
    %v926 = vadd.f32 %v906, %v924
    %v927 = vadd.f32 %v907, %v924
    %v928 = vadd.f32 %v908, %v924
    %v929 = vadd.f32 %v909, %v924
    %v930 = vadd.f32 %v910, %v924
    %v931 = vadd.f32 %v911, %v924
    %v932 = vadd.f32 %v912, %v924
    %v933 = vadd.f32 %v913, %v924
    %v934 = vadd.f32 %v914, %v924
    %v935 = vadd.f32 %v915, %v924
    %v936 = vadd.f32 %v916, %v924
    %v937 = vadd.f32 %v917, %v924
    %v938 = vadd.f32 %v918, %v924
    %v939 = vadd.f32 %v919, %v924
    %v940 = vadd.f32 %v920, %v924
    %v941 = vadd.f32 %v921, %v924
    %vm942 = vcmp.gt.f32.partialorder %v926, 0.0
    %vm943 = vcmp.gt.f32.partialorder %v927, 0.0
    %vm944 = vcmp.gt.f32.partialorder %v928, 0.0
    %vm945 = vcmp.gt.f32.partialorder %v929, 0.0
    %vm946 = vcmp.gt.f32.partialorder %v930, 0.0
    %vm947 = vcmp.gt.f32.partialorder %v931, 0.0
    %vm948 = vcmp.gt.f32.partialorder %v932, 0.0
    %vm949 = vcmp.gt.f32.partialorder %v933, 0.0
    %vm950 = vcmp.gt.f32.partialorder %v934, 0.0
    %vm951 = vcmp.gt.f32.partialorder %v935, 0.0
    %vm952 = vcmp.gt.f32.partialorder %v936, 0.0
    %vm953 = vcmp.gt.f32.partialorder %v937, 0.0
    %vm954 = vcmp.gt.f32.partialorder %v938, 0.0
    %vm955 = vcmp.gt.f32.partialorder %v939, 0.0
    %vm956 = vcmp.gt.f32.partialorder %v940, 0.0
    %vm957 = vcmp.gt.f32.partialorder %v941, 0.0
    %v958 = vmul.f32 %v926, 0.01
    %v959 = vmul.f32 %v927, 0.01
    %v960 = vmul.f32 %v928, 0.01
    %v961 = vmul.f32 %v929, 0.01
    %v962 = vmul.f32 %v930, 0.01
    %v963 = vmul.f32 %v931, 0.01
    %v964 = vmul.f32 %v932, 0.01
    %v965 = vmul.f32 %v933, 0.01
    %v966 = vmul.f32 %v934, 0.01
    %v967 = vmul.f32 %v935, 0.01
    %v968 = vmul.f32 %v936, 0.01
    %v969 = vmul.f32 %v937, 0.01
    %v970 = vmul.f32 %v938, 0.01
    %v971 = vmul.f32 %v939, 0.01
    %v972 = vmul.f32 %v940, 0.01
    %v973 = vmul.f32 %v941, 0.01
    %v974 = vsel %vm942, %v926, %v958
    %v975 = vsel %vm943, %v927, %v959
    %v976 = vsel %vm944, %v928, %v960
    %v977 = vsel %vm945, %v929, %v961
    %v978 = vsel %vm946, %v930, %v962
    %v979 = vsel %vm947, %v931, %v963
    %v980 = vsel %vm948, %v932, %v964
    %v981 = vsel %vm949, %v933, %v965
    %v982 = vsel %vm950, %v934, %v966
    %v983 = vsel %vm951, %v935, %v967
    %v984 = vsel %vm952, %v936, %v968
    %v985 = vsel %vm953, %v937, %v969
    %v986 = vsel %vm954, %v938, %v970
    %v987 = vsel %vm955, %v939, %v971
    %v988 = vsel %vm956, %v940, %v972
    %v989 = vsel %vm957, %v941, %v973
    %v990 = vpack.c.bf16 %v974, %v974
    %v991 = vpack.c.bf16 %v975, %v975
    %v992 = vpack.c.bf16 %v976, %v976
    %v993 = vpack.c.bf16 %v977, %v977
    %v994 = vpack.c.bf16 %v978, %v978
    %v995 = vpack.c.bf16 %v979, %v979
    %v996 = vpack.c.bf16 %v980, %v980
    %v997 = vpack.c.bf16 %v981, %v981
    %v998 = vpack.c.bf16 %v982, %v982
    %v999 = vpack.c.bf16 %v983, %v983
    %v1000 = vpack.c.bf16 %v984, %v984
    %v1001 = vpack.c.bf16 %v985, %v985
    %v1002 = vpack.c.bf16 %v986, %v986
    %v1003 = vpack.c.bf16 %v987, %v987
    %v1004 = vpack.c.bf16 %v988, %v988
    %v1005 = vpack.c.bf16 %v989, %v989
    %1006 = vst [vmem:[%s3] sm:$0xf] %v990
    %1007 = vst [vmem:[%s3 + $0x4] sm:$0xf] %v991
    %1008 = vst [vmem:[%s3 + $0x8] sm:$0xf] %v992
    %1009 = vst [vmem:[%s3 + $0xc] sm:$0xf] %v993
    %1010 = vst [vmem:[%s3 + $0x10] sm:$0xf] %v994
    %1011 = vst [vmem:[%s3 + $0x14] sm:$0xf] %v995
    %1012 = vst [vmem:[%s3 + $0x18] sm:$0xf] %v996
    %1013 = vst [vmem:[%s3 + $0x1c] sm:$0xf] %v997
    %1014 = vst [vmem:[%s3 + $0x20] sm:$0xf] %v998
    %1015 = vst [vmem:[%s3 + $0x24] sm:$0xf] %v999
    %1016 = vst [vmem:[%s3 + $0x28] sm:$0xf] %v1000
    %1017 = vst [vmem:[%s3 + $0x2c] sm:$0xf] %v1001
    %1018 = vst [vmem:[%s3 + $0x30] sm:$0xf] %v1002
    %1019 = vst [vmem:[%s3 + $0x34] sm:$0xf] %v1003
    %1020 = vst [vmem:[%s3 + $0x38] sm:$0xf] %v1004
    %1021 = vst [vmem:[%s3 + $0x3c] sm:$0xf] %v1005
  $region21: #{_lambda_.18} parent=0 // pred_fallthru
    _
  // Predicated region
  $region22: #{_lambda_.18} parent=0 // pred_check
    _
  $region23: #{_lambda_.18} parent=0 // pred_check_branch
    %1023 = sbr.rel (0) target = $region25
  $region24: #{_lambda_.18} parent=0 // pred_region
    _
  $region25: #{_lambda_.18} parent=0 // pred_fallthru
    _
  // Predicated region
  $region26: #{_lambda_.18} parent=0 // pred_check
    _
  $region27: #{_lambda_.18} parent=0 // pred_check_branch
    %1025 = sbr.rel (0) target = $region29
  $region28: #{_lambda_.18} parent=0 // pred_region
    _
  $region29: #{_lambda_.18} parent=0 // pred_fallthru
    _

// kernel: _lambda_.19
$region0: #{_lambda_.19}
  #allocation0 [shape = 'u32[]', space=smem, size = 0x4, offset = 0x4, fixed_abs, tag = 'smem constant byte address 0x4 - core index']
  #allocation1 [shape = 'u32[72,128]{1,0:T(1,128)}', space=vmem, size = 0x9000, scoped, tag = 'internal scratch']
  #allocation2 [shape = 'f32[128,128]{1,0:T(8,128)}', space=vmem, size = 0x10000, scoped, tag = 'scratch operand']
  %s0 = inlined_call_operand.vmem [shape: bf16[128,128], index: 0, kind: input, shape index: {}]
  %s1 = inlined_call_operand.vmem [shape: bf16[128,128], index: 1, kind: input, shape index: {}]
  %s2 = inlined_call_operand.vmem [shape: f32[1,128], index: 2, kind: input, shape index: {}]
  %s3 = inlined_call_operand.vmem [shape: bf16[128,128], index: 3, kind: output, shape index: {}]
  %s4 = sld [smem:[#allocation0]]
  $region30: #{_lambda_.19} parent=0
    _
  %s6 = ssub.s32 1, %s4
  %s7 = scalar_select 0, %s6, %s4
  // Predicated region
  $region2: #{_lambda_.19} parent=0 // pred_check
    _
  $region3: #{_lambda_.19} parent=0 // pred_check_branch
    %9 = sbr.rel (0) target = $region5
  $region4: #{_lambda_.19} parent=0 // pred_region
    _
  $region5: #{_lambda_.19} parent=0 // pred_fallthru
    _
  // Predicated region
  $region6: #{_lambda_.19} parent=0 // pred_check
    _
  $region7: #{_lambda_.19} parent=0 // pred_check_branch
    %11 = sbr.rel (0) target = $region9
  $region8: #{_lambda_.19} parent=0 // pred_region
    _
  $region9: #{_lambda_.19} parent=0 // pred_fallthru
    _
  // Predicated region
  $region10: #{_lambda_.19} parent=0 // pred_check
    _
  $region11: #{_lambda_.19} parent=0 // pred_check_branch
    %13 = sbr.rel (0) target = $region13
  $region12: #{_lambda_.19} parent=0 // pred_region
    _
  $region13: #{_lambda_.19} parent=0 // pred_fallthru
    _
  %p14 = scmp.eq.s32.totalorder 0, 0
  // Predicated region
  $region14: #{_lambda_.19} parent=0 // pred_check
    %p15 = pneg %p14
  $region15: #{_lambda_.19} parent=0 // pred_check_branch
    %17 = sbr.rel (%p15) target = $region17
  $region16: #{_lambda_.19} parent=0 // pred_region
    %18 = vst [vmem:[#allocation2] sm:$0xff] 0.0
    %19 = vst [vmem:[#allocation2 + $0x8] sm:$0xff] 0.0
    %20 = vst [vmem:[#allocation2 + $0x10] sm:$0xff] 0.0
    %21 = vst [vmem:[#allocation2 + $0x18] sm:$0xff] 0.0
    %22 = vst [vmem:[#allocation2 + $0x20] sm:$0xff] 0.0
    %23 = vst [vmem:[#allocation2 + $0x28] sm:$0xff] 0.0
    %24 = vst [vmem:[#allocation2 + $0x30] sm:$0xff] 0.0
    %25 = vst [vmem:[#allocation2 + $0x38] sm:$0xff] 0.0
    %26 = vst [vmem:[#allocation2 + $0x40] sm:$0xff] 0.0
    %27 = vst [vmem:[#allocation2 + $0x48] sm:$0xff] 0.0
    %28 = vst [vmem:[#allocation2 + $0x50] sm:$0xff] 0.0
    %29 = vst [vmem:[#allocation2 + $0x58] sm:$0xff] 0.0
    %30 = vst [vmem:[#allocation2 + $0x60] sm:$0xff] 0.0
    %31 = vst [vmem:[#allocation2 + $0x68] sm:$0xff] 0.0
    %32 = vst [vmem:[#allocation2 + $0x70] sm:$0xff] 0.0
    %33 = vst [vmem:[#allocation2 + $0x78] sm:$0xff] 0.0
  $region17: #{_lambda_.19} parent=0 // pred_fallthru
    _
  %v34 = vld [vmem:[#allocation2] sm:$0xff]
  %v35 = vld [vmem:[#allocation2 + $0x8] sm:$0xff]
  %v36 = vld [vmem:[#allocation2 + $0x10] sm:$0xff]
  %v37 = vld [vmem:[#allocation2 + $0x18] sm:$0xff]
  %v38 = vld [vmem:[#allocation2 + $0x20] sm:$0xff]
  %v39 = vld [vmem:[#allocation2 + $0x28] sm:$0xff]
  %v40 = vld [vmem:[#allocation2 + $0x30] sm:$0xff]
  %v41 = vld [vmem:[#allocation2 + $0x38] sm:$0xff]
  %v42 = vld [vmem:[#allocation2 + $0x40] sm:$0xff]
  %v43 = vld [vmem:[#allocation2 + $0x48] sm:$0xff]
  %v44 = vld [vmem:[#allocation2 + $0x50] sm:$0xff]
  %v45 = vld [vmem:[#allocation2 + $0x58] sm:$0xff]
  %v46 = vld [vmem:[#allocation2 + $0x60] sm:$0xff]
  %v47 = vld [vmem:[#allocation2 + $0x68] sm:$0xff]
  %v48 = vld [vmem:[#allocation2 + $0x70] sm:$0xff]
  %v49 = vld [vmem:[#allocation2 + $0x78] sm:$0xff]
  %v50 = vld [vmem:[%s0] sm:$0xf]
  %v51 = vld [vmem:[%s0 + $0x4] sm:$0xf]
  %v52 = vld [vmem:[%s0 + $0x8] sm:$0xf]
  %v53 = vld [vmem:[%s0 + $0xc] sm:$0xf]
  %v54 = vld [vmem:[%s0 + $0x10] sm:$0xf]
  %v55 = vld [vmem:[%s0 + $0x14] sm:$0xf]
  %v56 = vld [vmem:[%s0 + $0x18] sm:$0xf]
  %v57 = vld [vmem:[%s0 + $0x1c] sm:$0xf]
  %v58 = vld [vmem:[%s0 + $0x20] sm:$0xf]
  %v59 = vld [vmem:[%s0 + $0x24] sm:$0xf]
  %v60 = vld [vmem:[%s0 + $0x28] sm:$0xf]
  %v61 = vld [vmem:[%s0 + $0x2c] sm:$0xf]
  %v62 = vld [vmem:[%s0 + $0x30] sm:$0xf]
  %v63 = vld [vmem:[%s0 + $0x34] sm:$0xf]
  %v64 = vld [vmem:[%s0 + $0x38] sm:$0xf]
  %v65 = vld [vmem:[%s0 + $0x3c] sm:$0xf]
  %v66 = vld [vmem:[%s1] sm:$0xf]
  %v67 = vld [vmem:[%s1 + $0x4] sm:$0xf]
  %v68 = vld [vmem:[%s1 + $0x8] sm:$0xf]
  %v69 = vld [vmem:[%s1 + $0xc] sm:$0xf]
  %v70 = vld [vmem:[%s1 + $0x10] sm:$0xf]
  %v71 = vld [vmem:[%s1 + $0x14] sm:$0xf]
  %v72 = vld [vmem:[%s1 + $0x18] sm:$0xf]
  %v73 = vld [vmem:[%s1 + $0x1c] sm:$0xf]
  %v74 = vld [vmem:[%s1 + $0x20] sm:$0xf]
  %v75 = vld [vmem:[%s1 + $0x24] sm:$0xf]
  %v76 = vld [vmem:[%s1 + $0x28] sm:$0xf]
  %v77 = vld [vmem:[%s1 + $0x2c] sm:$0xf]
  %v78 = vld [vmem:[%s1 + $0x30] sm:$0xf]
  %v79 = vld [vmem:[%s1 + $0x34] sm:$0xf]
  %v80 = vld [vmem:[%s1 + $0x38] sm:$0xf]
  %v81 = vld [vmem:[%s1 + $0x3c] sm:$0xf]
  %v98 = vunpack.c.l.b16 %v50
  %v99 = vunpack.c.l.b16 %v51
  %v100 = vunpack.c.l.b16 %v52
  %v101 = vunpack.c.l.b16 %v53
  %v102 = vunpack.c.l.b16 %v54
  %v103 = vunpack.c.l.b16 %v55
  %v104 = vunpack.c.l.b16 %v56
  %v105 = vunpack.c.l.b16 %v57
  %v106 = vunpack.c.l.b16 %v58
  %v107 = vunpack.c.l.b16 %v59
  %v108 = vunpack.c.l.b16 %v60
  %v109 = vunpack.c.l.b16 %v61
  %v110 = vunpack.c.l.b16 %v62
  %v111 = vunpack.c.l.b16 %v63
  %v112 = vunpack.c.l.b16 %v64
  %v113 = vunpack.c.l.b16 %v65
  %v114 = vpack.c.b16 %v99, %v98
  %v115 = vpack.c.b16 %v101, %v100
  %v116 = vpack.c.b16 %v103, %v102
  %v117 = vpack.c.b16 %v105, %v104
  %v118 = vpack.c.b16 %v107, %v106
  %v119 = vpack.c.b16 %v109, %v108
  %v120 = vpack.c.b16 %v111, %v110
  %v121 = vpack.c.b16 %v113, %v112
  %v146 = vunpack.c.l.b16 %v66
  %v147 = vunpack.c.l.b16 %v67
  %v148 = vunpack.c.l.b16 %v68
  %v149 = vunpack.c.l.b16 %v69
  %v150 = vunpack.c.l.b16 %v70
  %v151 = vunpack.c.l.b16 %v71
  %v152 = vunpack.c.l.b16 %v72
  %v153 = vunpack.c.l.b16 %v73
  %v154 = vunpack.c.l.b16 %v74
  %v155 = vunpack.c.l.b16 %v75
  %v156 = vunpack.c.l.b16 %v76
  %v157 = vunpack.c.l.b16 %v77
  %v158 = vunpack.c.l.b16 %v78
  %v159 = vunpack.c.l.b16 %v79
  %v160 = vunpack.c.l.b16 %v80
  %v161 = vunpack.c.l.b16 %v81
  %v162 = vpack.c.b16 %v147, %v146
  %v163 = vpack.c.b16 %v149, %v148
  %v164 = vpack.c.b16 %v151, %v150
  %v165 = vpack.c.b16 %v153, %v152
  %v166 = vpack.c.b16 %v155, %v154
  %v167 = vpack.c.b16 %v157, %v156
  %v168 = vpack.c.b16 %v159, %v158
  %v169 = vpack.c.b16 %v161, %v160
  %178 = vmatpush.bf16.msra.mxu0 %v169
  %179 = vmatpush.bf16.msra.mxu0 %v168
  %180 = vmatpush.bf16.msra.mxu0 %v167
  %181 = vmatpush.bf16.msra.mxu0 %v166
  %182 = vmatpush.bf16.msra.mxu0 %v165
  %183 = vmatpush.bf16.msra.mxu0 %v164
  %184 = vmatpush.bf16.msra.mxu0 %v163
  %185 = vmatpush.bf16.msra.mxu0 %v162
  %186 = vmatmul.bf16.gmra.mxu0 %v114
  %v187 = vpop.f32.mrf.mxu0
  %v188 = vadd.f32 0.0, %v187
  %v189 = vpop.f32.mrf.mxu0
  %v190 = vadd.f32 0.0, %v189
  %191 = vmatmul.bf16.gmra.mxu0 %v115
  %v192 = vpop.f32.mrf.mxu0
  %v193 = vadd.f32 0.0, %v192
  %v194 = vpop.f32.mrf.mxu0
  %v195 = vadd.f32 0.0, %v194
  %196 = vmatmul.bf16.gmra.mxu0 %v116
  %v197 = vpop.f32.mrf.mxu0
  %v198 = vadd.f32 0.0, %v197
  %v199 = vpop.f32.mrf.mxu0
  %v200 = vadd.f32 0.0, %v199
  %201 = vmatmul.bf16.gmra.mxu0 %v117
  %v202 = vpop.f32.mrf.mxu0
  %v203 = vadd.f32 0.0, %v202
  %v204 = vpop.f32.mrf.mxu0
  %v205 = vadd.f32 0.0, %v204
  %206 = vmatmul.bf16.gmra.mxu0 %v118
  %v207 = vpop.f32.mrf.mxu0
  %v208 = vadd.f32 0.0, %v207
  %v209 = vpop.f32.mrf.mxu0
  %v210 = vadd.f32 0.0, %v209
  %211 = vmatmul.bf16.gmra.mxu0 %v119
  %v212 = vpop.f32.mrf.mxu0
  %v213 = vadd.f32 0.0, %v212
  %v214 = vpop.f32.mrf.mxu0
  %v215 = vadd.f32 0.0, %v214
  %216 = vmatmul.bf16.gmra.mxu0 %v120
  %v217 = vpop.f32.mrf.mxu0
  %v218 = vadd.f32 0.0, %v217
  %v219 = vpop.f32.mrf.mxu0
  %v220 = vadd.f32 0.0, %v219
  %221 = vmatmul.bf16.gmra.mxu0 %v121
  %v222 = vpop.f32.mrf.mxu0
  %v223 = vadd.f32 0.0, %v222
  %v224 = vpop.f32.mrf.mxu0
  %v225 = vadd.f32 0.0, %v224
  %226 = vdwg.mxu0
  %v227 = vadd.f32 %v34, %v188
  %v228 = vadd.f32 %v35, %v190
  %v229 = vadd.f32 %v36, %v193
  %v230 = vadd.f32 %v37, %v195
  %v231 = vadd.f32 %v38, %v198
  %v232 = vadd.f32 %v39, %v200
  %v233 = vadd.f32 %v40, %v203
  %v234 = vadd.f32 %v41, %v205
  %v235 = vadd.f32 %v42, %v208
  %v236 = vadd.f32 %v43, %v210
  %v237 = vadd.f32 %v44, %v213
  %v238 = vadd.f32 %v45, %v215
  %v239 = vadd.f32 %v46, %v218
  %v240 = vadd.f32 %v47, %v220
  %v241 = vadd.f32 %v48, %v223
  %v242 = vadd.f32 %v49, %v225
  %243 = vst [vmem:[#allocation2] sm:$0xff] %v227
  %244 = vst [vmem:[#allocation2 + $0x8] sm:$0xff] %v228
  %245 = vst [vmem:[#allocation2 + $0x10] sm:$0xff] %v229
  %246 = vst [vmem:[#allocation2 + $0x18] sm:$0xff] %v230
  %247 = vst [vmem:[#allocation2 + $0x20] sm:$0xff] %v231
  %248 = vst [vmem:[#allocation2 + $0x28] sm:$0xff] %v232
  %249 = vst [vmem:[#allocation2 + $0x30] sm:$0xff] %v233
  %250 = vst [vmem:[#allocation2 + $0x38] sm:$0xff] %v234
  %251 = vst [vmem:[#allocation2 + $0x40] sm:$0xff] %v235
  %252 = vst [vmem:[#allocation2 + $0x48] sm:$0xff] %v236
  %253 = vst [vmem:[#allocation2 + $0x50] sm:$0xff] %v237
  %254 = vst [vmem:[#allocation2 + $0x58] sm:$0xff] %v238
  %255 = vst [vmem:[#allocation2 + $0x60] sm:$0xff] %v239
  %256 = vst [vmem:[#allocation2 + $0x68] sm:$0xff] %v240
  %257 = vst [vmem:[#allocation2 + $0x70] sm:$0xff] %v241
  %258 = vst [vmem:[#allocation2 + $0x78] sm:$0xff] %v242
  // Predicated region
  $region18: #{_lambda_.19} parent=0 // pred_check
    %p259 = pneg %p14
  $region19: #{_lambda_.19} parent=0 // pred_check_branch
    %261 = sbr.rel (%p259) target = $region21
  $region20: #{_lambda_.19} parent=0 // pred_region
    %v262 = vld [vmem:[#allocation2] sm:$0xff]
    %v263 = vld [vmem:[#allocation2 + $0x8] sm:$0xff]
    %v264 = vld [vmem:[#allocation2 + $0x10] sm:$0xff]
    %v265 = vld [vmem:[#allocation2 + $0x18] sm:$0xff]
    %v266 = vld [vmem:[#allocation2 + $0x20] sm:$0xff]
    %v267 = vld [vmem:[#allocation2 + $0x28] sm:$0xff]
    %v268 = vld [vmem:[#allocation2 + $0x30] sm:$0xff]
    %v269 = vld [vmem:[#allocation2 + $0x38] sm:$0xff]
    %v270 = vld [vmem:[#allocation2 + $0x40] sm:$0xff]
    %v271 = vld [vmem:[#allocation2 + $0x48] sm:$0xff]
    %v272 = vld [vmem:[#allocation2 + $0x50] sm:$0xff]
    %v273 = vld [vmem:[#allocation2 + $0x58] sm:$0xff]
    %v274 = vld [vmem:[#allocation2 + $0x60] sm:$0xff]
    %v275 = vld [vmem:[#allocation2 + $0x68] sm:$0xff]
    %v276 = vld [vmem:[#allocation2 + $0x70] sm:$0xff]
    %v277 = vld [vmem:[#allocation2 + $0x78] sm:$0xff]
    %v278 = vld [vmem:[%s2] sm:$0x1]
    %v280 = vperm.slane %v278, 0
    %v282 = vadd.f32 %v262, %v280
    %v283 = vadd.f32 %v263, %v280
    %v284 = vadd.f32 %v264, %v280
    %v285 = vadd.f32 %v265, %v280
    %v286 = vadd.f32 %v266, %v280
    %v287 = vadd.f32 %v267, %v280
    %v288 = vadd.f32 %v268, %v280
    %v289 = vadd.f32 %v269, %v280
    %v290 = vadd.f32 %v270, %v280
    %v291 = vadd.f32 %v271, %v280
    %v292 = vadd.f32 %v272, %v280
    %v293 = vadd.f32 %v273, %v280
    %v294 = vadd.f32 %v274, %v280
    %v295 = vadd.f32 %v275, %v280
    %v296 = vadd.f32 %v276, %v280
    %v297 = vadd.f32 %v277, %v280
    %v298 = vpack.c.bf16 %v282, %v282
    %v299 = vpack.c.bf16 %v283, %v283
    %v300 = vpack.c.bf16 %v284, %v284
    %v301 = vpack.c.bf16 %v285, %v285
    %v302 = vpack.c.bf16 %v286, %v286
    %v303 = vpack.c.bf16 %v287, %v287
    %v304 = vpack.c.bf16 %v288, %v288
    %v305 = vpack.c.bf16 %v289, %v289
    %v306 = vpack.c.bf16 %v290, %v290
    %v307 = vpack.c.bf16 %v291, %v291
    %v308 = vpack.c.bf16 %v292, %v292
    %v309 = vpack.c.bf16 %v293, %v293
    %v310 = vpack.c.bf16 %v294, %v294
    %v311 = vpack.c.bf16 %v295, %v295
    %v312 = vpack.c.bf16 %v296, %v296
    %v313 = vpack.c.bf16 %v297, %v297
    %314 = vst [vmem:[%s3] sm:$0xf] %v298
    %315 = vst [vmem:[%s3 + $0x4] sm:$0xf] %v299
    %316 = vst [vmem:[%s3 + $0x8] sm:$0xf] %v300
    %317 = vst [vmem:[%s3 + $0xc] sm:$0xf] %v301
    %318 = vst [vmem:[%s3 + $0x10] sm:$0xf] %v302
    %319 = vst [vmem:[%s3 + $0x14] sm:$0xf] %v303
    %320 = vst [vmem:[%s3 + $0x18] sm:$0xf] %v304
    %321 = vst [vmem:[%s3 + $0x1c] sm:$0xf] %v305
    %322 = vst [vmem:[%s3 + $0x20] sm:$0xf] %v306
    %323 = vst [vmem:[%s3 + $0x24] sm:$0xf] %v307
    %324 = vst [vmem:[%s3 + $0x28] sm:$0xf] %v308
    %325 = vst [vmem:[%s3 + $0x2c] sm:$0xf] %v309
    %326 = vst [vmem:[%s3 + $0x30] sm:$0xf] %v310
    %327 = vst [vmem:[%s3 + $0x34] sm:$0xf] %v311
    %328 = vst [vmem:[%s3 + $0x38] sm:$0xf] %v312
    %329 = vst [vmem:[%s3 + $0x3c] sm:$0xf] %v313
  $region21: #{_lambda_.19} parent=0 // pred_fallthru
    _
  // Predicated region
  $region22: #{_lambda_.19} parent=0 // pred_check
    _
  $region23: #{_lambda_.19} parent=0 // pred_check_branch
    %331 = sbr.rel (0) target = $region25
  $region24: #{_lambda_.19} parent=0 // pred_region
    _
  $region25: #{_lambda_.19} parent=0 // pred_fallthru
    _
  // Predicated region
  $region26: #{_lambda_.19} parent=0 // pred_check
    _
  $region27: #{_lambda_.19} parent=0 // pred_check_branch
    %333 = sbr.rel (0) target = $region29
  $region28: #{_lambda_.19} parent=0 // pred_region
    _
  $region29: #{_lambda_.19} parent=0 // pred_fallthru
    _

// kernel: _lambda_.20
$region0: #{_lambda_.20}
  #allocation0 [shape = 'u32[]', space=smem, size = 0x4, offset = 0x4, fixed_abs, tag = 'smem constant byte address 0x4 - core index']
  #allocation1 [shape = 'u32[72,128]{1,0:T(1,128)}', space=vmem, size = 0x9000, scoped, tag = 'internal scratch']
  #allocation2 [shape = 'f32[128,128]{1,0:T(8,128)}', space=vmem, size = 0x10000, scoped, tag = 'scratch operand']
  %s0 = inlined_call_operand.vmem [shape: bf16[128,1152], index: 0, kind: input, shape index: {}]
  %s1 = inlined_call_operand.vmem [shape: bf16[1152,128], index: 1, kind: input, shape index: {}]
  %s2 = inlined_call_operand.vmem [shape: f32[1,128], index: 2, kind: input, shape index: {}]
  %s3 = inlined_call_operand.vmem [shape: bf16[128,128], index: 3, kind: input, shape index: {}]
  %s4 = inlined_call_operand.vmem [shape: bf16[128,128], index: 4, kind: output, shape index: {}]
  %s5 = sld [smem:[#allocation0]]
  $region34: #{_lambda_.20} parent=0
    _
  %s7 = ssub.s32 1, %s5
  %s8 = scalar_select 0, %s7, %s5
  // Predicated region
  $region2: #{_lambda_.20} parent=0 // pred_check
    _
  $region3: #{_lambda_.20} parent=0 // pred_check_branch
    %10 = sbr.rel (0) target = $region5
  $region4: #{_lambda_.20} parent=0 // pred_region
    _
  $region5: #{_lambda_.20} parent=0 // pred_fallthru
    _
  // Predicated region
  $region6: #{_lambda_.20} parent=0 // pred_check
    _
  $region7: #{_lambda_.20} parent=0 // pred_check_branch
    %12 = sbr.rel (0) target = $region9
  $region8: #{_lambda_.20} parent=0 // pred_region
    _
  $region9: #{_lambda_.20} parent=0 // pred_fallthru
    _
  // Predicated region
  $region10: #{_lambda_.20} parent=0 // pred_check
    _
  $region11: #{_lambda_.20} parent=0 // pred_check_branch
    %14 = sbr.rel (0) target = $region13
  $region12: #{_lambda_.20} parent=0 // pred_region
    _
  $region13: #{_lambda_.20} parent=0 // pred_fallthru
    _
  // Predicated region
  $region14: #{_lambda_.20} parent=0 // pred_check
    _
  $region15: #{_lambda_.20} parent=0 // pred_check_branch
    %16 = sbr.rel (0) target = $region17
  $region16: #{_lambda_.20} parent=0 // pred_region
    _
  $region17: #{_lambda_.20} parent=0 // pred_fallthru
    _
  %p17 = scmp.eq.s32.totalorder 0, 0
  // Predicated region
  $region18: #{_lambda_.20} parent=0 // pred_check
    %p18 = pneg %p17
  $region19: #{_lambda_.20} parent=0 // pred_check_branch
    %20 = sbr.rel (%p18) target = $region21
  $region20: #{_lambda_.20} parent=0 // pred_region
    %21 = vst [vmem:[#allocation2] sm:$0xff] 0.0
    %22 = vst [vmem:[#allocation2 + $0x8] sm:$0xff] 0.0
    %23 = vst [vmem:[#allocation2 + $0x10] sm:$0xff] 0.0
    %24 = vst [vmem:[#allocation2 + $0x18] sm:$0xff] 0.0
    %25 = vst [vmem:[#allocation2 + $0x20] sm:$0xff] 0.0
    %26 = vst [vmem:[#allocation2 + $0x28] sm:$0xff] 0.0
    %27 = vst [vmem:[#allocation2 + $0x30] sm:$0xff] 0.0
    %28 = vst [vmem:[#allocation2 + $0x38] sm:$0xff] 0.0
    %29 = vst [vmem:[#allocation2 + $0x40] sm:$0xff] 0.0
    %30 = vst [vmem:[#allocation2 + $0x48] sm:$0xff] 0.0
    %31 = vst [vmem:[#allocation2 + $0x50] sm:$0xff] 0.0
    %32 = vst [vmem:[#allocation2 + $0x58] sm:$0xff] 0.0
    %33 = vst [vmem:[#allocation2 + $0x60] sm:$0xff] 0.0
    %34 = vst [vmem:[#allocation2 + $0x68] sm:$0xff] 0.0
    %35 = vst [vmem:[#allocation2 + $0x70] sm:$0xff] 0.0
    %36 = vst [vmem:[#allocation2 + $0x78] sm:$0xff] 0.0
  $region21: #{_lambda_.20} parent=0 // pred_fallthru
    _
  %v37 = vld [vmem:[#allocation2] sm:$0xff]
  %v38 = vld [vmem:[#allocation2 + $0x8] sm:$0xff]
  %v39 = vld [vmem:[#allocation2 + $0x10] sm:$0xff]
  %v40 = vld [vmem:[#allocation2 + $0x18] sm:$0xff]
  %v41 = vld [vmem:[#allocation2 + $0x20] sm:$0xff]
  %v42 = vld [vmem:[#allocation2 + $0x28] sm:$0xff]
  %v43 = vld [vmem:[#allocation2 + $0x30] sm:$0xff]
  %v44 = vld [vmem:[#allocation2 + $0x38] sm:$0xff]
  %v45 = vld [vmem:[#allocation2 + $0x40] sm:$0xff]
  %v46 = vld [vmem:[#allocation2 + $0x48] sm:$0xff]
  %v47 = vld [vmem:[#allocation2 + $0x50] sm:$0xff]
  %v48 = vld [vmem:[#allocation2 + $0x58] sm:$0xff]
  %v49 = vld [vmem:[#allocation2 + $0x60] sm:$0xff]
  %v50 = vld [vmem:[#allocation2 + $0x68] sm:$0xff]
  %v51 = vld [vmem:[#allocation2 + $0x70] sm:$0xff]
  %v52 = vld [vmem:[#allocation2 + $0x78] sm:$0xff]
  %v53 = vld [vmem:[%s0] sm:$0xff]
  %v54 = vld [vmem:[%s0 + $0x8] sm:$0xff]
  %v55 = vld [vmem:[%s0 + $0x10] sm:$0xff]
  %v56 = vld [vmem:[%s0 + $0x18] sm:$0xff]
  %v57 = vld [vmem:[%s0 + $0x20] sm:$0xf]
  %v58 = vld [vmem:[%s0 + $0x24] sm:$0xff]
  %v59 = vld [vmem:[%s0 + $0x2c] sm:$0xff]
  %v60 = vld [vmem:[%s0 + $0x34] sm:$0xff]
  %v61 = vld [vmem:[%s0 + $0x3c] sm:$0xff]
  %v62 = vld [vmem:[%s0 + $0x44] sm:$0xf]
  %v63 = vld [vmem:[%s0 + $0x48] sm:$0xff]
  %v64 = vld [vmem:[%s0 + $0x50] sm:$0xff]
  %v65 = vld [vmem:[%s0 + $0x58] sm:$0xff]
  %v66 = vld [vmem:[%s0 + $0x60] sm:$0xff]
  %v67 = vld [vmem:[%s0 + $0x68] sm:$0xf]
  %v68 = vld [vmem:[%s0 + $0x6c] sm:$0xff]
  %v69 = vld [vmem:[%s0 + $0x74] sm:$0xff]
  %v70 = vld [vmem:[%s0 + $0x7c] sm:$0xff]
  %v71 = vld [vmem:[%s0 + $0x84] sm:$0xff]
  %v72 = vld [vmem:[%s0 + $0x8c] sm:$0xf]
  %v73 = vld [vmem:[%s0 + $0x90] sm:$0xff]
  %v74 = vld [vmem:[%s0 + $0x98] sm:$0xff]
  %v75 = vld [vmem:[%s0 + $0xa0] sm:$0xff]
  %v76 = vld [vmem:[%s0 + $0xa8] sm:$0xff]
  %v77 = vld [vmem:[%s0 + $0xb0] sm:$0xf]
  %v78 = vld [vmem:[%s0 + $0xb4] sm:$0xff]
  %v79 = vld [vmem:[%s0 + $0xbc] sm:$0xff]
  %v80 = vld [vmem:[%s0 + $0xc4] sm:$0xff]
  %v81 = vld [vmem:[%s0 + $0xcc] sm:$0xff]
  %v82 = vld [vmem:[%s0 + $0xd4] sm:$0xf]
  %v83 = vld [vmem:[%s0 + $0xd8] sm:$0xff]
  %v84 = vld [vmem:[%s0 + $0xe0] sm:$0xff]
  %v85 = vld [vmem:[%s0 + $0xe8] sm:$0xff]
  %v86 = vld [vmem:[%s0 + $0xf0] sm:$0xff]
  %v87 = vld [vmem:[%s0 + $0xf8] sm:$0xf]
  %v88 = vld [vmem:[%s0 + $0xfc] sm:$0xff]
  %v89 = vld [vmem:[%s0 + $0x104] sm:$0xff]
  %v90 = vld [vmem:[%s0 + $0x10c] sm:$0xff]
  %v91 = vld [vmem:[%s0 + $0x114] sm:$0xff]
  %v92 = vld [vmem:[%s0 + $0x11c] sm:$0xf]
  %v93 = vld [vmem:[%s0 + $0x120] sm:$0xff]
  %v94 = vld [vmem:[%s0 + $0x128] sm:$0xff]
  %v95 = vld [vmem:[%s0 + $0x130] sm:$0xff]
  %v96 = vld [vmem:[%s0 + $0x138] sm:$0xff]
  %v97 = vld [vmem:[%s0 + $0x140] sm:$0xf]
  %v98 = vld [vmem:[%s0 + $0x144] sm:$0xff]
  %v99 = vld [vmem:[%s0 + $0x14c] sm:$0xff]
  %v100 = vld [vmem:[%s0 + $0x154] sm:$0xff]
  %v101 = vld [vmem:[%s0 + $0x15c] sm:$0xff]
  %v102 = vld [vmem:[%s0 + $0x164] sm:$0xf]
  %v103 = vld [vmem:[%s0 + $0x168] sm:$0xff]
  %v104 = vld [vmem:[%s0 + $0x170] sm:$0xff]
  %v105 = vld [vmem:[%s0 + $0x178] sm:$0xff]
  %v106 = vld [vmem:[%s0 + $0x180] sm:$0xff]
  %v107 = vld [vmem:[%s0 + $0x188] sm:$0xf]
  %v108 = vld [vmem:[%s0 + $0x18c] sm:$0xff]
  %v109 = vld [vmem:[%s0 + $0x194] sm:$0xff]
  %v110 = vld [vmem:[%s0 + $0x19c] sm:$0xff]
  %v111 = vld [vmem:[%s0 + $0x1a4] sm:$0xff]
  %v112 = vld [vmem:[%s0 + $0x1ac] sm:$0xf]
  %v113 = vld [vmem:[%s0 + $0x1b0] sm:$0xff]
  %v114 = vld [vmem:[%s0 + $0x1b8] sm:$0xff]
  %v115 = vld [vmem:[%s0 + $0x1c0] sm:$0xff]
  %v116 = vld [vmem:[%s0 + $0x1c8] sm:$0xff]
  %v117 = vld [vmem:[%s0 + $0x1d0] sm:$0xf]
  %v118 = vld [vmem:[%s0 + $0x1d4] sm:$0xff]
  %v119 = vld [vmem:[%s0 + $0x1dc] sm:$0xff]
  %v120 = vld [vmem:[%s0 + $0x1e4] sm:$0xff]
  %v121 = vld [vmem:[%s0 + $0x1ec] sm:$0xff]
  %v122 = vld [vmem:[%s0 + $0x1f4] sm:$0xf]
  %v123 = vld [vmem:[%s0 + $0x1f8] sm:$0xff]
  %v124 = vld [vmem:[%s0 + $0x200] sm:$0xff]
  %v125 = vld [vmem:[%s0 + $0x208] sm:$0xff]
  %v126 = vld [vmem:[%s0 + $0x210] sm:$0xff]
  %v127 = vld [vmem:[%s0 + $0x218] sm:$0xf]
  %v128 = vld [vmem:[%s0 + $0x21c] sm:$0xff]
  %v129 = vld [vmem:[%s0 + $0x224] sm:$0xff]
  %v130 = vld [vmem:[%s0 + $0x22c] sm:$0xff]
  %v131 = vld [vmem:[%s0 + $0x234] sm:$0xff]
  %v132 = vld [vmem:[%s0 + $0x23c] sm:$0xf]
  %v133 = vld [vmem:[%s1] sm:$0xf]
  %v134 = vld [vmem:[%s1 + $0x4] sm:$0xf]
  %v135 = vld [vmem:[%s1 + $0x8] sm:$0xf]
  %v136 = vld [vmem:[%s1 + $0xc] sm:$0xf]
  %v137 = vld [vmem:[%s1 + $0x10] sm:$0xf]
  %v138 = vld [vmem:[%s1 + $0x14] sm:$0xf]
  %v139 = vld [vmem:[%s1 + $0x18] sm:$0xf]
  %v140 = vld [vmem:[%s1 + $0x1c] sm:$0xf]
  %v141 = vld [vmem:[%s1 + $0x20] sm:$0xf]
  %v142 = vld [vmem:[%s1 + $0x24] sm:$0xf]
  %v143 = vld [vmem:[%s1 + $0x28] sm:$0xf]
  %v144 = vld [vmem:[%s1 + $0x2c] sm:$0xf]
  %v145 = vld [vmem:[%s1 + $0x30] sm:$0xf]
  %v146 = vld [vmem:[%s1 + $0x34] sm:$0xf]
  %v147 = vld [vmem:[%s1 + $0x38] sm:$0xf]
  %v148 = vld [vmem:[%s1 + $0x3c] sm:$0xf]
  %v149 = vld [vmem:[%s1 + $0x40] sm:$0xf]
  %v150 = vld [vmem:[%s1 + $0x44] sm:$0xf]
  %v151 = vld [vmem:[%s1 + $0x48] sm:$0xf]
  %v152 = vld [vmem:[%s1 + $0x4c] sm:$0xf]
  %v153 = vld [vmem:[%s1 + $0x50] sm:$0xf]
  %v154 = vld [vmem:[%s1 + $0x54] sm:$0xf]
  %v155 = vld [vmem:[%s1 + $0x58] sm:$0xf]
  %v156 = vld [vmem:[%s1 + $0x5c] sm:$0xf]
  %v157 = vld [vmem:[%s1 + $0x60] sm:$0xf]
  %v158 = vld [vmem:[%s1 + $0x64] sm:$0xf]
  %v159 = vld [vmem:[%s1 + $0x68] sm:$0xf]
  %v160 = vld [vmem:[%s1 + $0x6c] sm:$0xf]
  %v161 = vld [vmem:[%s1 + $0x70] sm:$0xf]
  %v162 = vld [vmem:[%s1 + $0x74] sm:$0xf]
  %v163 = vld [vmem:[%s1 + $0x78] sm:$0xf]
  %v164 = vld [vmem:[%s1 + $0x7c] sm:$0xf]
  %v165 = vld [vmem:[%s1 + $0x80] sm:$0xf]
  %v166 = vld [vmem:[%s1 + $0x84] sm:$0xf]
  %v167 = vld [vmem:[%s1 + $0x88] sm:$0xf]
  %v168 = vld [vmem:[%s1 + $0x8c] sm:$0xf]
  %v169 = vld [vmem:[%s1 + $0x90] sm:$0xf]
  %v170 = vld [vmem:[%s1 + $0x94] sm:$0xf]
  %v171 = vld [vmem:[%s1 + $0x98] sm:$0xf]
  %v172 = vld [vmem:[%s1 + $0x9c] sm:$0xf]
  %v173 = vld [vmem:[%s1 + $0xa0] sm:$0xf]
  %v174 = vld [vmem:[%s1 + $0xa4] sm:$0xf]
  %v175 = vld [vmem:[%s1 + $0xa8] sm:$0xf]
  %v176 = vld [vmem:[%s1 + $0xac] sm:$0xf]
  %v177 = vld [vmem:[%s1 + $0xb0] sm:$0xf]
  %v178 = vld [vmem:[%s1 + $0xb4] sm:$0xf]
  %v179 = vld [vmem:[%s1 + $0xb8] sm:$0xf]
  %v180 = vld [vmem:[%s1 + $0xbc] sm:$0xf]
  %v181 = vld [vmem:[%s1 + $0xc0] sm:$0xf]
  %v182 = vld [vmem:[%s1 + $0xc4] sm:$0xf]
  %v183 = vld [vmem:[%s1 + $0xc8] sm:$0xf]
  %v184 = vld [vmem:[%s1 + $0xcc] sm:$0xf]
  %v185 = vld [vmem:[%s1 + $0xd0] sm:$0xf]
  %v186 = vld [vmem:[%s1 + $0xd4] sm:$0xf]
  %v187 = vld [vmem:[%s1 + $0xd8] sm:$0xf]
  %v188 = vld [vmem:[%s1 + $0xdc] sm:$0xf]
  %v189 = vld [vmem:[%s1 + $0xe0] sm:$0xf]
  %v190 = vld [vmem:[%s1 + $0xe4] sm:$0xf]
  %v191 = vld [vmem:[%s1 + $0xe8] sm:$0xf]
  %v192 = vld [vmem:[%s1 + $0xec] sm:$0xf]
  %v193 = vld [vmem:[%s1 + $0xf0] sm:$0xf]
  %v194 = vld [vmem:[%s1 + $0xf4] sm:$0xf]
  %v195 = vld [vmem:[%s1 + $0xf8] sm:$0xf]
  %v196 = vld [vmem:[%s1 + $0xfc] sm:$0xf]
  %v197 = vld [vmem:[%s1 + $0x100] sm:$0xf]
  %v198 = vld [vmem:[%s1 + $0x104] sm:$0xf]
  %v199 = vld [vmem:[%s1 + $0x108] sm:$0xf]
  %v200 = vld [vmem:[%s1 + $0x10c] sm:$0xf]
  %v201 = vld [vmem:[%s1 + $0x110] sm:$0xf]
  %v202 = vld [vmem:[%s1 + $0x114] sm:$0xf]
  %v203 = vld [vmem:[%s1 + $0x118] sm:$0xf]
  %v204 = vld [vmem:[%s1 + $0x11c] sm:$0xf]
  %v205 = vld [vmem:[%s1 + $0x120] sm:$0xf]
  %v206 = vld [vmem:[%s1 + $0x124] sm:$0xf]
  %v207 = vld [vmem:[%s1 + $0x128] sm:$0xf]
  %v208 = vld [vmem:[%s1 + $0x12c] sm:$0xf]
  %v209 = vld [vmem:[%s1 + $0x130] sm:$0xf]
  %v210 = vld [vmem:[%s1 + $0x134] sm:$0xf]
  %v211 = vld [vmem:[%s1 + $0x138] sm:$0xf]
  %v212 = vld [vmem:[%s1 + $0x13c] sm:$0xf]
  %v213 = vld [vmem:[%s1 + $0x140] sm:$0xf]
  %v214 = vld [vmem:[%s1 + $0x144] sm:$0xf]
  %v215 = vld [vmem:[%s1 + $0x148] sm:$0xf]
  %v216 = vld [vmem:[%s1 + $0x14c] sm:$0xf]
  %v217 = vld [vmem:[%s1 + $0x150] sm:$0xf]
  %v218 = vld [vmem:[%s1 + $0x154] sm:$0xf]
  %v219 = vld [vmem:[%s1 + $0x158] sm:$0xf]
  %v220 = vld [vmem:[%s1 + $0x15c] sm:$0xf]
  %v221 = vld [vmem:[%s1 + $0x160] sm:$0xf]
  %v222 = vld [vmem:[%s1 + $0x164] sm:$0xf]
  %v223 = vld [vmem:[%s1 + $0x168] sm:$0xf]
  %v224 = vld [vmem:[%s1 + $0x16c] sm:$0xf]
  %v225 = vld [vmem:[%s1 + $0x170] sm:$0xf]
  %v226 = vld [vmem:[%s1 + $0x174] sm:$0xf]
  %v227 = vld [vmem:[%s1 + $0x178] sm:$0xf]
  %v228 = vld [vmem:[%s1 + $0x17c] sm:$0xf]
  %v229 = vld [vmem:[%s1 + $0x180] sm:$0xf]
  %v230 = vld [vmem:[%s1 + $0x184] sm:$0xf]
  %v231 = vld [vmem:[%s1 + $0x188] sm:$0xf]
  %v232 = vld [vmem:[%s1 + $0x18c] sm:$0xf]
  %v233 = vld [vmem:[%s1 + $0x190] sm:$0xf]
  %v234 = vld [vmem:[%s1 + $0x194] sm:$0xf]
  %v235 = vld [vmem:[%s1 + $0x198] sm:$0xf]
  %v236 = vld [vmem:[%s1 + $0x19c] sm:$0xf]
  %v237 = vld [vmem:[%s1 + $0x1a0] sm:$0xf]
  %v238 = vld [vmem:[%s1 + $0x1a4] sm:$0xf]
  %v239 = vld [vmem:[%s1 + $0x1a8] sm:$0xf]
  %v240 = vld [vmem:[%s1 + $0x1ac] sm:$0xf]
  %v241 = vld [vmem:[%s1 + $0x1b0] sm:$0xf]
  %v242 = vld [vmem:[%s1 + $0x1b4] sm:$0xf]
  %v243 = vld [vmem:[%s1 + $0x1b8] sm:$0xf]
  %v244 = vld [vmem:[%s1 + $0x1bc] sm:$0xf]
  %v245 = vld [vmem:[%s1 + $0x1c0] sm:$0xf]
  %v246 = vld [vmem:[%s1 + $0x1c4] sm:$0xf]
  %v247 = vld [vmem:[%s1 + $0x1c8] sm:$0xf]
  %v248 = vld [vmem:[%s1 + $0x1cc] sm:$0xf]
  %v249 = vld [vmem:[%s1 + $0x1d0] sm:$0xf]
  %v250 = vld [vmem:[%s1 + $0x1d4] sm:$0xf]
  %v251 = vld [vmem:[%s1 + $0x1d8] sm:$0xf]
  %v252 = vld [vmem:[%s1 + $0x1dc] sm:$0xf]
  %v253 = vld [vmem:[%s1 + $0x1e0] sm:$0xf]
  %v254 = vld [vmem:[%s1 + $0x1e4] sm:$0xf]
  %v255 = vld [vmem:[%s1 + $0x1e8] sm:$0xf]
  %v256 = vld [vmem:[%s1 + $0x1ec] sm:$0xf]
  %v257 = vld [vmem:[%s1 + $0x1f0] sm:$0xf]
  %v258 = vld [vmem:[%s1 + $0x1f4] sm:$0xf]
  %v259 = vld [vmem:[%s1 + $0x1f8] sm:$0xf]
  %v260 = vld [vmem:[%s1 + $0x1fc] sm:$0xf]
  %v261 = vld [vmem:[%s1 + $0x200] sm:$0xf]
  %v262 = vld [vmem:[%s1 + $0x204] sm:$0xf]
  %v263 = vld [vmem:[%s1 + $0x208] sm:$0xf]
  %v264 = vld [vmem:[%s1 + $0x20c] sm:$0xf]
  %v265 = vld [vmem:[%s1 + $0x210] sm:$0xf]
  %v266 = vld [vmem:[%s1 + $0x214] sm:$0xf]
  %v267 = vld [vmem:[%s1 + $0x218] sm:$0xf]
  %v268 = vld [vmem:[%s1 + $0x21c] sm:$0xf]
  %v269 = vld [vmem:[%s1 + $0x220] sm:$0xf]
  %v270 = vld [vmem:[%s1 + $0x224] sm:$0xf]
  %v271 = vld [vmem:[%s1 + $0x228] sm:$0xf]
  %v272 = vld [vmem:[%s1 + $0x22c] sm:$0xf]
  %v273 = vld [vmem:[%s1 + $0x230] sm:$0xf]
  %v274 = vld [vmem:[%s1 + $0x234] sm:$0xf]
  %v275 = vld [vmem:[%s1 + $0x238] sm:$0xf]
  %v276 = vld [vmem:[%s1 + $0x23c] sm:$0xf]
  %v357 = vunpack.c.l.b16 %v53
  %v358 = vunpack.c.h.b16 %v53
  %v359 = vunpack.c.l.b16 %v54
  %v360 = vunpack.c.h.b16 %v54
  %v361 = vunpack.c.l.b16 %v55
  %v362 = vunpack.c.h.b16 %v55
  %v363 = vunpack.c.l.b16 %v56
  %v364 = vunpack.c.h.b16 %v56
  %v365 = vunpack.c.l.b16 %v57
  %v366 = vunpack.c.l.b16 %v58
  %v367 = vunpack.c.h.b16 %v58
  %v368 = vunpack.c.l.b16 %v59
  %v369 = vunpack.c.h.b16 %v59
  %v370 = vunpack.c.l.b16 %v60
  %v371 = vunpack.c.h.b16 %v60
  %v372 = vunpack.c.l.b16 %v61
  %v373 = vunpack.c.h.b16 %v61
  %v374 = vunpack.c.l.b16 %v62
  %v375 = vunpack.c.l.b16 %v63
  %v376 = vunpack.c.h.b16 %v63
  %v377 = vunpack.c.l.b16 %v64
  %v378 = vunpack.c.h.b16 %v64
  %v379 = vunpack.c.l.b16 %v65
  %v380 = vunpack.c.h.b16 %v65
  %v381 = vunpack.c.l.b16 %v66
  %v382 = vunpack.c.h.b16 %v66
  %v383 = vunpack.c.l.b16 %v67
  %v384 = vunpack.c.l.b16 %v68
  %v385 = vunpack.c.h.b16 %v68
  %v386 = vunpack.c.l.b16 %v69
  %v387 = vunpack.c.h.b16 %v69
  %v388 = vunpack.c.l.b16 %v70
  %v389 = vunpack.c.h.b16 %v70
  %v390 = vunpack.c.l.b16 %v71
  %v391 = vunpack.c.h.b16 %v71
  %v392 = vunpack.c.l.b16 %v72
  %v393 = vunpack.c.l.b16 %v73
  %v394 = vunpack.c.h.b16 %v73
  %v395 = vunpack.c.l.b16 %v74
  %v396 = vunpack.c.h.b16 %v74
  %v397 = vunpack.c.l.b16 %v75
  %v398 = vunpack.c.h.b16 %v75
  %v399 = vunpack.c.l.b16 %v76
  %v400 = vunpack.c.h.b16 %v76
  %v401 = vunpack.c.l.b16 %v77
  %v402 = vunpack.c.l.b16 %v78
  %v403 = vunpack.c.h.b16 %v78
  %v404 = vunpack.c.l.b16 %v79
  %v405 = vunpack.c.h.b16 %v79
  %v406 = vunpack.c.l.b16 %v80
  %v407 = vunpack.c.h.b16 %v80
  %v408 = vunpack.c.l.b16 %v81
  %v409 = vunpack.c.h.b16 %v81
  %v410 = vunpack.c.l.b16 %v82
  %v411 = vunpack.c.l.b16 %v83
  %v412 = vunpack.c.h.b16 %v83
  %v413 = vunpack.c.l.b16 %v84
  %v414 = vunpack.c.h.b16 %v84
  %v415 = vunpack.c.l.b16 %v85
  %v416 = vunpack.c.h.b16 %v85
  %v417 = vunpack.c.l.b16 %v86
  %v418 = vunpack.c.h.b16 %v86
  %v419 = vunpack.c.l.b16 %v87
  %v420 = vunpack.c.l.b16 %v88
  %v421 = vunpack.c.h.b16 %v88
  %v422 = vunpack.c.l.b16 %v89
  %v423 = vunpack.c.h.b16 %v89
  %v424 = vunpack.c.l.b16 %v90
  %v425 = vunpack.c.h.b16 %v90
  %v426 = vunpack.c.l.b16 %v91
  %v427 = vunpack.c.h.b16 %v91
  %v428 = vunpack.c.l.b16 %v92
  %v429 = vunpack.c.l.b16 %v93
  %v430 = vunpack.c.h.b16 %v93
  %v431 = vunpack.c.l.b16 %v94
  %v432 = vunpack.c.h.b16 %v94
  %v433 = vunpack.c.l.b16 %v95
  %v434 = vunpack.c.h.b16 %v95
  %v435 = vunpack.c.l.b16 %v96
  %v436 = vunpack.c.h.b16 %v96
  %v437 = vunpack.c.l.b16 %v97
  %v438 = vunpack.c.l.b16 %v98
  %v439 = vunpack.c.h.b16 %v98
  %v440 = vunpack.c.l.b16 %v99
  %v441 = vunpack.c.h.b16 %v99
  %v442 = vunpack.c.l.b16 %v100
  %v443 = vunpack.c.h.b16 %v100
  %v444 = vunpack.c.l.b16 %v101
  %v445 = vunpack.c.h.b16 %v101
  %v446 = vunpack.c.l.b16 %v102
  %v447 = vunpack.c.l.b16 %v103
  %v448 = vunpack.c.h.b16 %v103
  %v449 = vunpack.c.l.b16 %v104
  %v450 = vunpack.c.h.b16 %v104
  %v451 = vunpack.c.l.b16 %v105
  %v452 = vunpack.c.h.b16 %v105
  %v453 = vunpack.c.l.b16 %v106
  %v454 = vunpack.c.h.b16 %v106
  %v455 = vunpack.c.l.b16 %v107
  %v456 = vunpack.c.l.b16 %v108
  %v457 = vunpack.c.h.b16 %v108
  %v458 = vunpack.c.l.b16 %v109
  %v459 = vunpack.c.h.b16 %v109
  %v460 = vunpack.c.l.b16 %v110
  %v461 = vunpack.c.h.b16 %v110
  %v462 = vunpack.c.l.b16 %v111
  %v463 = vunpack.c.h.b16 %v111
  %v464 = vunpack.c.l.b16 %v112
  %v465 = vunpack.c.l.b16 %v113
  %v466 = vunpack.c.h.b16 %v113
  %v467 = vunpack.c.l.b16 %v114
  %v468 = vunpack.c.h.b16 %v114
  %v469 = vunpack.c.l.b16 %v115
  %v470 = vunpack.c.h.b16 %v115
  %v471 = vunpack.c.l.b16 %v116
  %v472 = vunpack.c.h.b16 %v116
  %v473 = vunpack.c.l.b16 %v117
  %v474 = vunpack.c.l.b16 %v118
  %v475 = vunpack.c.h.b16 %v118
  %v476 = vunpack.c.l.b16 %v119
  %v477 = vunpack.c.h.b16 %v119
  %v478 = vunpack.c.l.b16 %v120
  %v479 = vunpack.c.h.b16 %v120
  %v480 = vunpack.c.l.b16 %v121
  %v481 = vunpack.c.h.b16 %v121
  %v482 = vunpack.c.l.b16 %v122
  %v483 = vunpack.c.l.b16 %v123
  %v484 = vunpack.c.h.b16 %v123
  %v485 = vunpack.c.l.b16 %v124
  %v486 = vunpack.c.h.b16 %v124
  %v487 = vunpack.c.l.b16 %v125
  %v488 = vunpack.c.h.b16 %v125
  %v489 = vunpack.c.l.b16 %v126
  %v490 = vunpack.c.h.b16 %v126
  %v491 = vunpack.c.l.b16 %v127
  %v492 = vunpack.c.l.b16 %v128
  %v493 = vunpack.c.h.b16 %v128
  %v494 = vunpack.c.l.b16 %v129
  %v495 = vunpack.c.h.b16 %v129
  %v496 = vunpack.c.l.b16 %v130
  %v497 = vunpack.c.h.b16 %v130
  %v498 = vunpack.c.l.b16 %v131
  %v499 = vunpack.c.h.b16 %v131
  %v500 = vunpack.c.l.b16 %v132
  %v501 = vpack.c.b16 %v366, %v357
  %v502 = vpack.c.b16 %v367, %v358
  %v503 = vpack.c.b16 %v368, %v359
  %v504 = vpack.c.b16 %v369, %v360
  %v505 = vpack.c.b16 %v370, %v361
  %v506 = vpack.c.b16 %v371, %v362
  %v507 = vpack.c.b16 %v372, %v363
  %v508 = vpack.c.b16 %v373, %v364
  %v509 = vpack.c.b16 %v374, %v365
  %v510 = vpack.c.b16 %v384, %v375
  %v511 = vpack.c.b16 %v385, %v376
  %v512 = vpack.c.b16 %v386, %v377
  %v513 = vpack.c.b16 %v387, %v378
  %v514 = vpack.c.b16 %v388, %v379
  %v515 = vpack.c.b16 %v389, %v380
  %v516 = vpack.c.b16 %v390, %v381
  %v517 = vpack.c.b16 %v391, %v382
  %v518 = vpack.c.b16 %v392, %v383
  %v519 = vpack.c.b16 %v402, %v393
  %v520 = vpack.c.b16 %v403, %v394
  %v521 = vpack.c.b16 %v404, %v395
  %v522 = vpack.c.b16 %v405, %v396
  %v523 = vpack.c.b16 %v406, %v397
  %v524 = vpack.c.b16 %v407, %v398
  %v525 = vpack.c.b16 %v408, %v399
  %v526 = vpack.c.b16 %v409, %v400
  %v527 = vpack.c.b16 %v410, %v401
  %v528 = vpack.c.b16 %v420, %v411
  %v529 = vpack.c.b16 %v421, %v412
  %v530 = vpack.c.b16 %v422, %v413
  %v531 = vpack.c.b16 %v423, %v414
  %v532 = vpack.c.b16 %v424, %v415
  %v533 = vpack.c.b16 %v425, %v416
  %v534 = vpack.c.b16 %v426, %v417
  %v535 = vpack.c.b16 %v427, %v418
  %v536 = vpack.c.b16 %v428, %v419
  %v537 = vpack.c.b16 %v438, %v429
  %v538 = vpack.c.b16 %v439, %v430
  %v539 = vpack.c.b16 %v440, %v431
  %v540 = vpack.c.b16 %v441, %v432
  %v541 = vpack.c.b16 %v442, %v433
  %v542 = vpack.c.b16 %v443, %v434
  %v543 = vpack.c.b16 %v444, %v435
  %v544 = vpack.c.b16 %v445, %v436
  %v545 = vpack.c.b16 %v446, %v437
  %v546 = vpack.c.b16 %v456, %v447
  %v547 = vpack.c.b16 %v457, %v448
  %v548 = vpack.c.b16 %v458, %v449
  %v549 = vpack.c.b16 %v459, %v450
  %v550 = vpack.c.b16 %v460, %v451
  %v551 = vpack.c.b16 %v461, %v452
  %v552 = vpack.c.b16 %v462, %v453
  %v553 = vpack.c.b16 %v463, %v454
  %v554 = vpack.c.b16 %v464, %v455
  %v555 = vpack.c.b16 %v474, %v465
  %v556 = vpack.c.b16 %v475, %v466
  %v557 = vpack.c.b16 %v476, %v467
  %v558 = vpack.c.b16 %v477, %v468
  %v559 = vpack.c.b16 %v478, %v469
  %v560 = vpack.c.b16 %v479, %v470
  %v561 = vpack.c.b16 %v480, %v471
  %v562 = vpack.c.b16 %v481, %v472
  %v563 = vpack.c.b16 %v482, %v473
  %v564 = vpack.c.b16 %v492, %v483
  %v565 = vpack.c.b16 %v493, %v484
  %v566 = vpack.c.b16 %v494, %v485
  %v567 = vpack.c.b16 %v495, %v486
  %v568 = vpack.c.b16 %v496, %v487
  %v569 = vpack.c.b16 %v497, %v488
  %v570 = vpack.c.b16 %v498, %v489
  %v571 = vpack.c.b16 %v499, %v490
  %v572 = vpack.c.b16 %v500, %v491
  %v789 = vunpack.c.l.b16 %v133
  %v790 = vunpack.c.l.b16 %v134
  %v791 = vunpack.c.l.b16 %v135
  %v792 = vunpack.c.l.b16 %v136
  %v793 = vunpack.c.l.b16 %v137
  %v794 = vunpack.c.l.b16 %v138
  %v795 = vunpack.c.l.b16 %v139
  %v796 = vunpack.c.l.b16 %v140
  %v797 = vunpack.c.l.b16 %v141
  %v798 = vunpack.c.l.b16 %v142
  %v799 = vunpack.c.l.b16 %v143
  %v800 = vunpack.c.l.b16 %v144
  %v801 = vunpack.c.l.b16 %v145
  %v802 = vunpack.c.l.b16 %v146
  %v803 = vunpack.c.l.b16 %v147
  %v804 = vunpack.c.l.b16 %v148
  %v805 = vunpack.c.l.b16 %v149
  %v806 = vunpack.c.l.b16 %v150
  %v807 = vunpack.c.l.b16 %v151
  %v808 = vunpack.c.l.b16 %v152
  %v809 = vunpack.c.l.b16 %v153
  %v810 = vunpack.c.l.b16 %v154
  %v811 = vunpack.c.l.b16 %v155
  %v812 = vunpack.c.l.b16 %v156
  %v813 = vunpack.c.l.b16 %v157
  %v814 = vunpack.c.l.b16 %v158
  %v815 = vunpack.c.l.b16 %v159
  %v816 = vunpack.c.l.b16 %v160
  %v817 = vunpack.c.l.b16 %v161
  %v818 = vunpack.c.l.b16 %v162
  %v819 = vunpack.c.l.b16 %v163
  %v820 = vunpack.c.l.b16 %v164
  %v821 = vunpack.c.l.b16 %v165
  %v822 = vunpack.c.l.b16 %v166
  %v823 = vunpack.c.l.b16 %v167
  %v824 = vunpack.c.l.b16 %v168
  %v825 = vunpack.c.l.b16 %v169
  %v826 = vunpack.c.l.b16 %v170
  %v827 = vunpack.c.l.b16 %v171
  %v828 = vunpack.c.l.b16 %v172
  %v829 = vunpack.c.l.b16 %v173
  %v830 = vunpack.c.l.b16 %v174
  %v831 = vunpack.c.l.b16 %v175
  %v832 = vunpack.c.l.b16 %v176
  %v833 = vunpack.c.l.b16 %v177
  %v834 = vunpack.c.l.b16 %v178
  %v835 = vunpack.c.l.b16 %v179
  %v836 = vunpack.c.l.b16 %v180
  %v837 = vunpack.c.l.b16 %v181
  %v838 = vunpack.c.l.b16 %v182
  %v839 = vunpack.c.l.b16 %v183
  %v840 = vunpack.c.l.b16 %v184
  %v841 = vunpack.c.l.b16 %v185
  %v842 = vunpack.c.l.b16 %v186
  %v843 = vunpack.c.l.b16 %v187
  %v844 = vunpack.c.l.b16 %v188
  %v845 = vunpack.c.l.b16 %v189
  %v846 = vunpack.c.l.b16 %v190
  %v847 = vunpack.c.l.b16 %v191
  %v848 = vunpack.c.l.b16 %v192
  %v849 = vunpack.c.l.b16 %v193
  %v850 = vunpack.c.l.b16 %v194
  %v851 = vunpack.c.l.b16 %v195
  %v852 = vunpack.c.l.b16 %v196
  %v853 = vunpack.c.l.b16 %v197
  %v854 = vunpack.c.l.b16 %v198
  %v855 = vunpack.c.l.b16 %v199
  %v856 = vunpack.c.l.b16 %v200
  %v857 = vunpack.c.l.b16 %v201
  %v858 = vunpack.c.l.b16 %v202
  %v859 = vunpack.c.l.b16 %v203
  %v860 = vunpack.c.l.b16 %v204
  %v861 = vunpack.c.l.b16 %v205
  %v862 = vunpack.c.l.b16 %v206
  %v863 = vunpack.c.l.b16 %v207
  %v864 = vunpack.c.l.b16 %v208
  %v865 = vunpack.c.l.b16 %v209
  %v866 = vunpack.c.l.b16 %v210
  %v867 = vunpack.c.l.b16 %v211
  %v868 = vunpack.c.l.b16 %v212
  %v869 = vunpack.c.l.b16 %v213
  %v870 = vunpack.c.l.b16 %v214
  %v871 = vunpack.c.l.b16 %v215
  %v872 = vunpack.c.l.b16 %v216
  %v873 = vunpack.c.l.b16 %v217
  %v874 = vunpack.c.l.b16 %v218
  %v875 = vunpack.c.l.b16 %v219
  %v876 = vunpack.c.l.b16 %v220
  %v877 = vunpack.c.l.b16 %v221
  %v878 = vunpack.c.l.b16 %v222
  %v879 = vunpack.c.l.b16 %v223
  %v880 = vunpack.c.l.b16 %v224
  %v881 = vunpack.c.l.b16 %v225
  %v882 = vunpack.c.l.b16 %v226
  %v883 = vunpack.c.l.b16 %v227
  %v884 = vunpack.c.l.b16 %v228
  %v885 = vunpack.c.l.b16 %v229
  %v886 = vunpack.c.l.b16 %v230
  %v887 = vunpack.c.l.b16 %v231
  %v888 = vunpack.c.l.b16 %v232
  %v889 = vunpack.c.l.b16 %v233
  %v890 = vunpack.c.l.b16 %v234
  %v891 = vunpack.c.l.b16 %v235
  %v892 = vunpack.c.l.b16 %v236
  %v893 = vunpack.c.l.b16 %v237
  %v894 = vunpack.c.l.b16 %v238
  %v895 = vunpack.c.l.b16 %v239
  %v896 = vunpack.c.l.b16 %v240
  %v897 = vunpack.c.l.b16 %v241
  %v898 = vunpack.c.l.b16 %v242
  %v899 = vunpack.c.l.b16 %v243
  %v900 = vunpack.c.l.b16 %v244
  %v901 = vunpack.c.l.b16 %v245
  %v902 = vunpack.c.l.b16 %v246
  %v903 = vunpack.c.l.b16 %v247
  %v904 = vunpack.c.l.b16 %v248
  %v905 = vunpack.c.l.b16 %v249
  %v906 = vunpack.c.l.b16 %v250
  %v907 = vunpack.c.l.b16 %v251
  %v908 = vunpack.c.l.b16 %v252
  %v909 = vunpack.c.l.b16 %v253
  %v910 = vunpack.c.l.b16 %v254
  %v911 = vunpack.c.l.b16 %v255
  %v912 = vunpack.c.l.b16 %v256
  %v913 = vunpack.c.l.b16 %v257
  %v914 = vunpack.c.l.b16 %v258
  %v915 = vunpack.c.l.b16 %v259
  %v916 = vunpack.c.l.b16 %v260
  %v917 = vunpack.c.l.b16 %v261
  %v918 = vunpack.c.l.b16 %v262
  %v919 = vunpack.c.l.b16 %v263
  %v920 = vunpack.c.l.b16 %v264
  %v921 = vunpack.c.l.b16 %v265
  %v922 = vunpack.c.l.b16 %v266
  %v923 = vunpack.c.l.b16 %v267
  %v924 = vunpack.c.l.b16 %v268
  %v925 = vunpack.c.l.b16 %v269
  %v926 = vunpack.c.l.b16 %v270
  %v927 = vunpack.c.l.b16 %v271
  %v928 = vunpack.c.l.b16 %v272
  %v929 = vunpack.c.l.b16 %v273
  %v930 = vunpack.c.l.b16 %v274
  %v931 = vunpack.c.l.b16 %v275
  %v932 = vunpack.c.l.b16 %v276
  %v933 = vpack.c.b16 %v790, %v789
  %v934 = vpack.c.b16 %v792, %v791
  %v935 = vpack.c.b16 %v794, %v793
  %v936 = vpack.c.b16 %v796, %v795
  %v937 = vpack.c.b16 %v798, %v797
  %v938 = vpack.c.b16 %v800, %v799
  %v939 = vpack.c.b16 %v802, %v801
  %v940 = vpack.c.b16 %v804, %v803
  %v941 = vpack.c.b16 %v806, %v805
  %v942 = vpack.c.b16 %v808, %v807
  %v943 = vpack.c.b16 %v810, %v809
  %v944 = vpack.c.b16 %v812, %v811
  %v945 = vpack.c.b16 %v814, %v813
  %v946 = vpack.c.b16 %v816, %v815
  %v947 = vpack.c.b16 %v818, %v817
  %v948 = vpack.c.b16 %v820, %v819
  %v949 = vpack.c.b16 %v822, %v821
  %v950 = vpack.c.b16 %v824, %v823
  %v951 = vpack.c.b16 %v826, %v825
  %v952 = vpack.c.b16 %v828, %v827
  %v953 = vpack.c.b16 %v830, %v829
  %v954 = vpack.c.b16 %v832, %v831
  %v955 = vpack.c.b16 %v834, %v833
  %v956 = vpack.c.b16 %v836, %v835
  %v957 = vpack.c.b16 %v838, %v837
  %v958 = vpack.c.b16 %v840, %v839
  %v959 = vpack.c.b16 %v842, %v841
  %v960 = vpack.c.b16 %v844, %v843
  %v961 = vpack.c.b16 %v846, %v845
  %v962 = vpack.c.b16 %v848, %v847
  %v963 = vpack.c.b16 %v850, %v849
  %v964 = vpack.c.b16 %v852, %v851
  %v965 = vpack.c.b16 %v854, %v853
  %v966 = vpack.c.b16 %v856, %v855
  %v967 = vpack.c.b16 %v858, %v857
  %v968 = vpack.c.b16 %v860, %v859
  %v969 = vpack.c.b16 %v862, %v861
  %v970 = vpack.c.b16 %v864, %v863
  %v971 = vpack.c.b16 %v866, %v865
  %v972 = vpack.c.b16 %v868, %v867
  %v973 = vpack.c.b16 %v870, %v869
  %v974 = vpack.c.b16 %v872, %v871
  %v975 = vpack.c.b16 %v874, %v873
  %v976 = vpack.c.b16 %v876, %v875
  %v977 = vpack.c.b16 %v878, %v877
  %v978 = vpack.c.b16 %v880, %v879
  %v979 = vpack.c.b16 %v882, %v881
  %v980 = vpack.c.b16 %v884, %v883
  %v981 = vpack.c.b16 %v886, %v885
  %v982 = vpack.c.b16 %v888, %v887
  %v983 = vpack.c.b16 %v890, %v889
  %v984 = vpack.c.b16 %v892, %v891
  %v985 = vpack.c.b16 %v894, %v893
  %v986 = vpack.c.b16 %v896, %v895
  %v987 = vpack.c.b16 %v898, %v897
  %v988 = vpack.c.b16 %v900, %v899
  %v989 = vpack.c.b16 %v902, %v901
  %v990 = vpack.c.b16 %v904, %v903
  %v991 = vpack.c.b16 %v906, %v905
  %v992 = vpack.c.b16 %v908, %v907
  %v993 = vpack.c.b16 %v910, %v909
  %v994 = vpack.c.b16 %v912, %v911
  %v995 = vpack.c.b16 %v914, %v913
  %v996 = vpack.c.b16 %v916, %v915
  %v997 = vpack.c.b16 %v918, %v917
  %v998 = vpack.c.b16 %v920, %v919
  %v999 = vpack.c.b16 %v922, %v921
  %v1000 = vpack.c.b16 %v924, %v923
  %v1001 = vpack.c.b16 %v926, %v925
  %v1002 = vpack.c.b16 %v928, %v927
  %v1003 = vpack.c.b16 %v930, %v929
  %v1004 = vpack.c.b16 %v932, %v931
  %1077 = vmatpush.bf16.msra.mxu0 %v940
  %1078 = vmatpush.bf16.msra.mxu0 %v939
  %1079 = vmatpush.bf16.msra.mxu0 %v938
  %1080 = vmatpush.bf16.msra.mxu0 %v937
  %1081 = vmatpush.bf16.msra.mxu0 %v936
  %1082 = vmatpush.bf16.msra.mxu0 %v935
  %1083 = vmatpush.bf16.msra.mxu0 %v934
  %1084 = vmatpush.bf16.msra.mxu0 %v933
  %1085 = vmatmul.bf16.gmra.mxu0 %v501
  %v1086 = vpop.f32.mrf.mxu0
  %v1087 = vadd.f32 0.0, %v1086
  %v1088 = vpop.f32.mrf.mxu0
  %v1089 = vadd.f32 0.0, %v1088
  %1090 = vmatmul.bf16.gmra.mxu0 %v510
  %v1091 = vpop.f32.mrf.mxu0
  %v1092 = vadd.f32 0.0, %v1091
  %v1093 = vpop.f32.mrf.mxu0
  %v1094 = vadd.f32 0.0, %v1093
  %1095 = vmatmul.bf16.gmra.mxu0 %v519
  %v1096 = vpop.f32.mrf.mxu0
  %v1097 = vadd.f32 0.0, %v1096
  %v1098 = vpop.f32.mrf.mxu0
  %v1099 = vadd.f32 0.0, %v1098
  %1100 = vmatmul.bf16.gmra.mxu0 %v528
  %v1101 = vpop.f32.mrf.mxu0
  %v1102 = vadd.f32 0.0, %v1101
  %v1103 = vpop.f32.mrf.mxu0
  %v1104 = vadd.f32 0.0, %v1103
  %1105 = vmatmul.bf16.gmra.mxu0 %v537
  %v1106 = vpop.f32.mrf.mxu0
  %v1107 = vadd.f32 0.0, %v1106
  %v1108 = vpop.f32.mrf.mxu0
  %v1109 = vadd.f32 0.0, %v1108
  %1110 = vmatmul.bf16.gmra.mxu0 %v546
  %v1111 = vpop.f32.mrf.mxu0
  %v1112 = vadd.f32 0.0, %v1111
  %v1113 = vpop.f32.mrf.mxu0
  %v1114 = vadd.f32 0.0, %v1113
  %1115 = vmatmul.bf16.gmra.mxu0 %v555
  %v1116 = vpop.f32.mrf.mxu0
  %v1117 = vadd.f32 0.0, %v1116
  %v1118 = vpop.f32.mrf.mxu0
  %v1119 = vadd.f32 0.0, %v1118
  %1120 = vmatmul.bf16.gmra.mxu0 %v564
  %v1121 = vpop.f32.mrf.mxu0
  %v1122 = vadd.f32 0.0, %v1121
  %v1123 = vpop.f32.mrf.mxu0
  %v1124 = vadd.f32 0.0, %v1123
  %1125 = vdwg.mxu0
  %1126 = vmatpush.bf16.msra.mxu0 %v948
  %1127 = vmatpush.bf16.msra.mxu0 %v947
  %1128 = vmatpush.bf16.msra.mxu0 %v946
  %1129 = vmatpush.bf16.msra.mxu0 %v945
  %1130 = vmatpush.bf16.msra.mxu0 %v944
  %1131 = vmatpush.bf16.msra.mxu0 %v943
  %1132 = vmatpush.bf16.msra.mxu0 %v942
  %1133 = vmatpush.bf16.msra.mxu0 %v941
  %1134 = vmatmul.bf16.gmra.mxu0 %v502
  %v1135 = vpop.f32.mrf.mxu0
  %v1136 = vadd.f32 %v1087, %v1135
  %v1137 = vpop.f32.mrf.mxu0
  %v1138 = vadd.f32 %v1089, %v1137
  %1139 = vmatmul.bf16.gmra.mxu0 %v511
  %v1140 = vpop.f32.mrf.mxu0
  %v1141 = vadd.f32 %v1092, %v1140
  %v1142 = vpop.f32.mrf.mxu0
  %v1143 = vadd.f32 %v1094, %v1142
  %1144 = vmatmul.bf16.gmra.mxu0 %v520
  %v1145 = vpop.f32.mrf.mxu0
  %v1146 = vadd.f32 %v1097, %v1145
  %v1147 = vpop.f32.mrf.mxu0
  %v1148 = vadd.f32 %v1099, %v1147
  %1149 = vmatmul.bf16.gmra.mxu0 %v529
  %v1150 = vpop.f32.mrf.mxu0
  %v1151 = vadd.f32 %v1102, %v1150
  %v1152 = vpop.f32.mrf.mxu0
  %v1153 = vadd.f32 %v1104, %v1152
  %1154 = vmatmul.bf16.gmra.mxu0 %v538
  %v1155 = vpop.f32.mrf.mxu0
  %v1156 = vadd.f32 %v1107, %v1155
  %v1157 = vpop.f32.mrf.mxu0
  %v1158 = vadd.f32 %v1109, %v1157
  %1159 = vmatmul.bf16.gmra.mxu0 %v547
  %v1160 = vpop.f32.mrf.mxu0
  %v1161 = vadd.f32 %v1112, %v1160
  %v1162 = vpop.f32.mrf.mxu0
  %v1163 = vadd.f32 %v1114, %v1162
  %1164 = vmatmul.bf16.gmra.mxu0 %v556
  %v1165 = vpop.f32.mrf.mxu0
  %v1166 = vadd.f32 %v1117, %v1165
  %v1167 = vpop.f32.mrf.mxu0
  %v1168 = vadd.f32 %v1119, %v1167
  %1169 = vmatmul.bf16.gmra.mxu0 %v565
  %v1170 = vpop.f32.mrf.mxu0
  %v1171 = vadd.f32 %v1122, %v1170
  %v1172 = vpop.f32.mrf.mxu0
  %v1173 = vadd.f32 %v1124, %v1172
  %1174 = vdwg.mxu0
  %1175 = vmatpush.bf16.msra.mxu0 %v956
  %1176 = vmatpush.bf16.msra.mxu0 %v955
  %1177 = vmatpush.bf16.msra.mxu0 %v954
  %1178 = vmatpush.bf16.msra.mxu0 %v953
  %1179 = vmatpush.bf16.msra.mxu0 %v952
  %1180 = vmatpush.bf16.msra.mxu0 %v951
  %1181 = vmatpush.bf16.msra.mxu0 %v950
  %1182 = vmatpush.bf16.msra.mxu0 %v949
  %1183 = vmatmul.bf16.gmra.mxu0 %v503
  %v1184 = vpop.f32.mrf.mxu0
  %v1185 = vadd.f32 %v1136, %v1184
  %v1186 = vpop.f32.mrf.mxu0
  %v1187 = vadd.f32 %v1138, %v1186
  %1188 = vmatmul.bf16.gmra.mxu0 %v512
  %v1189 = vpop.f32.mrf.mxu0
  %v1190 = vadd.f32 %v1141, %v1189
  %v1191 = vpop.f32.mrf.mxu0
  %v1192 = vadd.f32 %v1143, %v1191
  %1193 = vmatmul.bf16.gmra.mxu0 %v521
  %v1194 = vpop.f32.mrf.mxu0
  %v1195 = vadd.f32 %v1146, %v1194
  %v1196 = vpop.f32.mrf.mxu0
  %v1197 = vadd.f32 %v1148, %v1196
  %1198 = vmatmul.bf16.gmra.mxu0 %v530
  %v1199 = vpop.f32.mrf.mxu0
  %v1200 = vadd.f32 %v1151, %v1199
  %v1201 = vpop.f32.mrf.mxu0
  %v1202 = vadd.f32 %v1153, %v1201
  %1203 = vmatmul.bf16.gmra.mxu0 %v539
  %v1204 = vpop.f32.mrf.mxu0
  %v1205 = vadd.f32 %v1156, %v1204
  %v1206 = vpop.f32.mrf.mxu0
  %v1207 = vadd.f32 %v1158, %v1206
  %1208 = vmatmul.bf16.gmra.mxu0 %v548
  %v1209 = vpop.f32.mrf.mxu0
  %v1210 = vadd.f32 %v1161, %v1209
  %v1211 = vpop.f32.mrf.mxu0
  %v1212 = vadd.f32 %v1163, %v1211
  %1213 = vmatmul.bf16.gmra.mxu0 %v557
  %v1214 = vpop.f32.mrf.mxu0
  %v1215 = vadd.f32 %v1166, %v1214
  %v1216 = vpop.f32.mrf.mxu0
  %v1217 = vadd.f32 %v1168, %v1216
  %1218 = vmatmul.bf16.gmra.mxu0 %v566
  %v1219 = vpop.f32.mrf.mxu0
  %v1220 = vadd.f32 %v1171, %v1219
  %v1221 = vpop.f32.mrf.mxu0
  %v1222 = vadd.f32 %v1173, %v1221
  %1223 = vdwg.mxu0
  %1224 = vmatpush.bf16.msra.mxu0 %v964
  %1225 = vmatpush.bf16.msra.mxu0 %v963
  %1226 = vmatpush.bf16.msra.mxu0 %v962
  %1227 = vmatpush.bf16.msra.mxu0 %v961
  %1228 = vmatpush.bf16.msra.mxu0 %v960
  %1229 = vmatpush.bf16.msra.mxu0 %v959
  %1230 = vmatpush.bf16.msra.mxu0 %v958
  %1231 = vmatpush.bf16.msra.mxu0 %v957
  %1232 = vmatmul.bf16.gmra.mxu0 %v504
  %v1233 = vpop.f32.mrf.mxu0
  %v1234 = vadd.f32 %v1185, %v1233
  %v1235 = vpop.f32.mrf.mxu0
  %v1236 = vadd.f32 %v1187, %v1235
  %1237 = vmatmul.bf16.gmra.mxu0 %v513
  %v1238 = vpop.f32.mrf.mxu0
  %v1239 = vadd.f32 %v1190, %v1238
  %v1240 = vpop.f32.mrf.mxu0
  %v1241 = vadd.f32 %v1192, %v1240
  %1242 = vmatmul.bf16.gmra.mxu0 %v522
  %v1243 = vpop.f32.mrf.mxu0
  %v1244 = vadd.f32 %v1195, %v1243
  %v1245 = vpop.f32.mrf.mxu0
  %v1246 = vadd.f32 %v1197, %v1245
  %1247 = vmatmul.bf16.gmra.mxu0 %v531
  %v1248 = vpop.f32.mrf.mxu0
  %v1249 = vadd.f32 %v1200, %v1248
  %v1250 = vpop.f32.mrf.mxu0
  %v1251 = vadd.f32 %v1202, %v1250
  %1252 = vmatmul.bf16.gmra.mxu0 %v540
  %v1253 = vpop.f32.mrf.mxu0
  %v1254 = vadd.f32 %v1205, %v1253
  %v1255 = vpop.f32.mrf.mxu0
  %v1256 = vadd.f32 %v1207, %v1255
  %1257 = vmatmul.bf16.gmra.mxu0 %v549
  %v1258 = vpop.f32.mrf.mxu0
  %v1259 = vadd.f32 %v1210, %v1258
  %v1260 = vpop.f32.mrf.mxu0
  %v1261 = vadd.f32 %v1212, %v1260
  %1262 = vmatmul.bf16.gmra.mxu0 %v558
  %v1263 = vpop.f32.mrf.mxu0
  %v1264 = vadd.f32 %v1215, %v1263
  %v1265 = vpop.f32.mrf.mxu0
  %v1266 = vadd.f32 %v1217, %v1265
  %1267 = vmatmul.bf16.gmra.mxu0 %v567
  %v1268 = vpop.f32.mrf.mxu0
  %v1269 = vadd.f32 %v1220, %v1268
  %v1270 = vpop.f32.mrf.mxu0
  %v1271 = vadd.f32 %v1222, %v1270
  %1272 = vdwg.mxu0
  %1273 = vmatpush.bf16.msra.mxu0 %v972
  %1274 = vmatpush.bf16.msra.mxu0 %v971
  %1275 = vmatpush.bf16.msra.mxu0 %v970
  %1276 = vmatpush.bf16.msra.mxu0 %v969
  %1277 = vmatpush.bf16.msra.mxu0 %v968
  %1278 = vmatpush.bf16.msra.mxu0 %v967
  %1279 = vmatpush.bf16.msra.mxu0 %v966
  %1280 = vmatpush.bf16.msra.mxu0 %v965
  %1281 = vmatmul.bf16.gmra.mxu0 %v505
  %v1282 = vpop.f32.mrf.mxu0
  %v1283 = vadd.f32 %v1234, %v1282
  %v1284 = vpop.f32.mrf.mxu0
  %v1285 = vadd.f32 %v1236, %v1284
  %1286 = vmatmul.bf16.gmra.mxu0 %v514
  %v1287 = vpop.f32.mrf.mxu0
  %v1288 = vadd.f32 %v1239, %v1287
  %v1289 = vpop.f32.mrf.mxu0
  %v1290 = vadd.f32 %v1241, %v1289
  %1291 = vmatmul.bf16.gmra.mxu0 %v523
  %v1292 = vpop.f32.mrf.mxu0
  %v1293 = vadd.f32 %v1244, %v1292
  %v1294 = vpop.f32.mrf.mxu0
  %v1295 = vadd.f32 %v1246, %v1294
  %1296 = vmatmul.bf16.gmra.mxu0 %v532
  %v1297 = vpop.f32.mrf.mxu0
  %v1298 = vadd.f32 %v1249, %v1297
  %v1299 = vpop.f32.mrf.mxu0
  %v1300 = vadd.f32 %v1251, %v1299
  %1301 = vmatmul.bf16.gmra.mxu0 %v541
  %v1302 = vpop.f32.mrf.mxu0
  %v1303 = vadd.f32 %v1254, %v1302
  %v1304 = vpop.f32.mrf.mxu0
  %v1305 = vadd.f32 %v1256, %v1304
  %1306 = vmatmul.bf16.gmra.mxu0 %v550
  %v1307 = vpop.f32.mrf.mxu0
  %v1308 = vadd.f32 %v1259, %v1307
  %v1309 = vpop.f32.mrf.mxu0
  %v1310 = vadd.f32 %v1261, %v1309
  %1311 = vmatmul.bf16.gmra.mxu0 %v559
  %v1312 = vpop.f32.mrf.mxu0
  %v1313 = vadd.f32 %v1264, %v1312
  %v1314 = vpop.f32.mrf.mxu0
  %v1315 = vadd.f32 %v1266, %v1314
  %1316 = vmatmul.bf16.gmra.mxu0 %v568
  %v1317 = vpop.f32.mrf.mxu0
  %v1318 = vadd.f32 %v1269, %v1317
  %v1319 = vpop.f32.mrf.mxu0
  %v1320 = vadd.f32 %v1271, %v1319
  %1321 = vdwg.mxu0
  %1322 = vmatpush.bf16.msra.mxu0 %v980
  %1323 = vmatpush.bf16.msra.mxu0 %v979
  %1324 = vmatpush.bf16.msra.mxu0 %v978
  %1325 = vmatpush.bf16.msra.mxu0 %v977
  %1326 = vmatpush.bf16.msra.mxu0 %v976
  %1327 = vmatpush.bf16.msra.mxu0 %v975
  %1328 = vmatpush.bf16.msra.mxu0 %v974
  %1329 = vmatpush.bf16.msra.mxu0 %v973
  %1330 = vmatmul.bf16.gmra.mxu0 %v506
  %v1331 = vpop.f32.mrf.mxu0
  %v1332 = vadd.f32 %v1283, %v1331
  %v1333 = vpop.f32.mrf.mxu0
  %v1334 = vadd.f32 %v1285, %v1333
  %1335 = vmatmul.bf16.gmra.mxu0 %v515
  %v1336 = vpop.f32.mrf.mxu0
  %v1337 = vadd.f32 %v1288, %v1336
  %v1338 = vpop.f32.mrf.mxu0
  %v1339 = vadd.f32 %v1290, %v1338
  %1340 = vmatmul.bf16.gmra.mxu0 %v524
  %v1341 = vpop.f32.mrf.mxu0
  %v1342 = vadd.f32 %v1293, %v1341
  %v1343 = vpop.f32.mrf.mxu0
  %v1344 = vadd.f32 %v1295, %v1343
  %1345 = vmatmul.bf16.gmra.mxu0 %v533
  %v1346 = vpop.f32.mrf.mxu0
  %v1347 = vadd.f32 %v1298, %v1346
  %v1348 = vpop.f32.mrf.mxu0
  %v1349 = vadd.f32 %v1300, %v1348
  %1350 = vmatmul.bf16.gmra.mxu0 %v542
  %v1351 = vpop.f32.mrf.mxu0
  %v1352 = vadd.f32 %v1303, %v1351
  %v1353 = vpop.f32.mrf.mxu0
  %v1354 = vadd.f32 %v1305, %v1353
  %1355 = vmatmul.bf16.gmra.mxu0 %v551
  %v1356 = vpop.f32.mrf.mxu0
  %v1357 = vadd.f32 %v1308, %v1356
  %v1358 = vpop.f32.mrf.mxu0
  %v1359 = vadd.f32 %v1310, %v1358
  %1360 = vmatmul.bf16.gmra.mxu0 %v560
  %v1361 = vpop.f32.mrf.mxu0
  %v1362 = vadd.f32 %v1313, %v1361
  %v1363 = vpop.f32.mrf.mxu0
  %v1364 = vadd.f32 %v1315, %v1363
  %1365 = vmatmul.bf16.gmra.mxu0 %v569
  %v1366 = vpop.f32.mrf.mxu0
  %v1367 = vadd.f32 %v1318, %v1366
  %v1368 = vpop.f32.mrf.mxu0
  %v1369 = vadd.f32 %v1320, %v1368
  %1370 = vdwg.mxu0
  %1371 = vmatpush.bf16.msra.mxu0 %v988
  %1372 = vmatpush.bf16.msra.mxu0 %v987
  %1373 = vmatpush.bf16.msra.mxu0 %v986
  %1374 = vmatpush.bf16.msra.mxu0 %v985
  %1375 = vmatpush.bf16.msra.mxu0 %v984
  %1376 = vmatpush.bf16.msra.mxu0 %v983
  %1377 = vmatpush.bf16.msra.mxu0 %v982
  %1378 = vmatpush.bf16.msra.mxu0 %v981
  %1379 = vmatmul.bf16.gmra.mxu0 %v507
  %v1380 = vpop.f32.mrf.mxu0
  %v1381 = vadd.f32 %v1332, %v1380
  %v1382 = vpop.f32.mrf.mxu0
  %v1383 = vadd.f32 %v1334, %v1382
  %1384 = vmatmul.bf16.gmra.mxu0 %v516
  %v1385 = vpop.f32.mrf.mxu0
  %v1386 = vadd.f32 %v1337, %v1385
  %v1387 = vpop.f32.mrf.mxu0
  %v1388 = vadd.f32 %v1339, %v1387
  %1389 = vmatmul.bf16.gmra.mxu0 %v525
  %v1390 = vpop.f32.mrf.mxu0
  %v1391 = vadd.f32 %v1342, %v1390
  %v1392 = vpop.f32.mrf.mxu0
  %v1393 = vadd.f32 %v1344, %v1392
  %1394 = vmatmul.bf16.gmra.mxu0 %v534
  %v1395 = vpop.f32.mrf.mxu0
  %v1396 = vadd.f32 %v1347, %v1395
  %v1397 = vpop.f32.mrf.mxu0
  %v1398 = vadd.f32 %v1349, %v1397
  %1399 = vmatmul.bf16.gmra.mxu0 %v543
  %v1400 = vpop.f32.mrf.mxu0
  %v1401 = vadd.f32 %v1352, %v1400
  %v1402 = vpop.f32.mrf.mxu0
  %v1403 = vadd.f32 %v1354, %v1402
  %1404 = vmatmul.bf16.gmra.mxu0 %v552
  %v1405 = vpop.f32.mrf.mxu0
  %v1406 = vadd.f32 %v1357, %v1405
  %v1407 = vpop.f32.mrf.mxu0
  %v1408 = vadd.f32 %v1359, %v1407
  %1409 = vmatmul.bf16.gmra.mxu0 %v561
  %v1410 = vpop.f32.mrf.mxu0
  %v1411 = vadd.f32 %v1362, %v1410
  %v1412 = vpop.f32.mrf.mxu0
  %v1413 = vadd.f32 %v1364, %v1412
  %1414 = vmatmul.bf16.gmra.mxu0 %v570
  %v1415 = vpop.f32.mrf.mxu0
  %v1416 = vadd.f32 %v1367, %v1415
  %v1417 = vpop.f32.mrf.mxu0
  %v1418 = vadd.f32 %v1369, %v1417
  %1419 = vdwg.mxu0
  %1420 = vmatpush.bf16.msra.mxu0 %v996
  %1421 = vmatpush.bf16.msra.mxu0 %v995
  %1422 = vmatpush.bf16.msra.mxu0 %v994
  %1423 = vmatpush.bf16.msra.mxu0 %v993
  %1424 = vmatpush.bf16.msra.mxu0 %v992
  %1425 = vmatpush.bf16.msra.mxu0 %v991
  %1426 = vmatpush.bf16.msra.mxu0 %v990
  %1427 = vmatpush.bf16.msra.mxu0 %v989
  %1428 = vmatmul.bf16.gmra.mxu0 %v508
  %v1429 = vpop.f32.mrf.mxu0
  %v1430 = vadd.f32 %v1381, %v1429
  %v1431 = vpop.f32.mrf.mxu0
  %v1432 = vadd.f32 %v1383, %v1431
  %1433 = vmatmul.bf16.gmra.mxu0 %v517
  %v1434 = vpop.f32.mrf.mxu0
  %v1435 = vadd.f32 %v1386, %v1434
  %v1436 = vpop.f32.mrf.mxu0
  %v1437 = vadd.f32 %v1388, %v1436
  %1438 = vmatmul.bf16.gmra.mxu0 %v526
  %v1439 = vpop.f32.mrf.mxu0
  %v1440 = vadd.f32 %v1391, %v1439
  %v1441 = vpop.f32.mrf.mxu0
  %v1442 = vadd.f32 %v1393, %v1441
  %1443 = vmatmul.bf16.gmra.mxu0 %v535
  %v1444 = vpop.f32.mrf.mxu0
  %v1445 = vadd.f32 %v1396, %v1444
  %v1446 = vpop.f32.mrf.mxu0
  %v1447 = vadd.f32 %v1398, %v1446
  %1448 = vmatmul.bf16.gmra.mxu0 %v544
  %v1449 = vpop.f32.mrf.mxu0
  %v1450 = vadd.f32 %v1401, %v1449
  %v1451 = vpop.f32.mrf.mxu0
  %v1452 = vadd.f32 %v1403, %v1451
  %1453 = vmatmul.bf16.gmra.mxu0 %v553
  %v1454 = vpop.f32.mrf.mxu0
  %v1455 = vadd.f32 %v1406, %v1454
  %v1456 = vpop.f32.mrf.mxu0
  %v1457 = vadd.f32 %v1408, %v1456
  %1458 = vmatmul.bf16.gmra.mxu0 %v562
  %v1459 = vpop.f32.mrf.mxu0
  %v1460 = vadd.f32 %v1411, %v1459
  %v1461 = vpop.f32.mrf.mxu0
  %v1462 = vadd.f32 %v1413, %v1461
  %1463 = vmatmul.bf16.gmra.mxu0 %v571
  %v1464 = vpop.f32.mrf.mxu0
  %v1465 = vadd.f32 %v1416, %v1464
  %v1466 = vpop.f32.mrf.mxu0
  %v1467 = vadd.f32 %v1418, %v1466
  %1468 = vdwg.mxu0
  %1469 = vmatpush.bf16.msra.mxu0 %v1004
  %1470 = vmatpush.bf16.msra.mxu0 %v1003
  %1471 = vmatpush.bf16.msra.mxu0 %v1002
  %1472 = vmatpush.bf16.msra.mxu0 %v1001
  %1473 = vmatpush.bf16.msra.mxu0 %v1000
  %1474 = vmatpush.bf16.msra.mxu0 %v999
  %1475 = vmatpush.bf16.msra.mxu0 %v998
  %1476 = vmatpush.bf16.msra.mxu0 %v997
  %1477 = vmatmul.bf16.gmra.mxu0 %v509
  %v1478 = vpop.f32.mrf.mxu0
  %v1479 = vadd.f32 %v1430, %v1478
  %v1480 = vpop.f32.mrf.mxu0
  %v1481 = vadd.f32 %v1432, %v1480
  %1482 = vmatmul.bf16.gmra.mxu0 %v518
  %v1483 = vpop.f32.mrf.mxu0
  %v1484 = vadd.f32 %v1435, %v1483
  %v1485 = vpop.f32.mrf.mxu0
  %v1486 = vadd.f32 %v1437, %v1485
  %1487 = vmatmul.bf16.gmra.mxu0 %v527
  %v1488 = vpop.f32.mrf.mxu0
  %v1489 = vadd.f32 %v1440, %v1488
  %v1490 = vpop.f32.mrf.mxu0
  %v1491 = vadd.f32 %v1442, %v1490
  %1492 = vmatmul.bf16.gmra.mxu0 %v536
  %v1493 = vpop.f32.mrf.mxu0
  %v1494 = vadd.f32 %v1445, %v1493
  %v1495 = vpop.f32.mrf.mxu0
  %v1496 = vadd.f32 %v1447, %v1495
  %1497 = vmatmul.bf16.gmra.mxu0 %v545
  %v1498 = vpop.f32.mrf.mxu0
  %v1499 = vadd.f32 %v1450, %v1498
  %v1500 = vpop.f32.mrf.mxu0
  %v1501 = vadd.f32 %v1452, %v1500
  %1502 = vmatmul.bf16.gmra.mxu0 %v554
  %v1503 = vpop.f32.mrf.mxu0
  %v1504 = vadd.f32 %v1455, %v1503
  %v1505 = vpop.f32.mrf.mxu0
  %v1506 = vadd.f32 %v1457, %v1505
  %1507 = vmatmul.bf16.gmra.mxu0 %v563
  %v1508 = vpop.f32.mrf.mxu0
  %v1509 = vadd.f32 %v1460, %v1508
  %v1510 = vpop.f32.mrf.mxu0
  %v1511 = vadd.f32 %v1462, %v1510
  %1512 = vmatmul.bf16.gmra.mxu0 %v572
  %v1513 = vpop.f32.mrf.mxu0
  %v1514 = vadd.f32 %v1465, %v1513
  %v1515 = vpop.f32.mrf.mxu0
  %v1516 = vadd.f32 %v1467, %v1515
  %1517 = vdwg.mxu0
  %v1518 = vadd.f32 %v37, %v1479
  %v1519 = vadd.f32 %v38, %v1481
  %v1520 = vadd.f32 %v39, %v1484
  %v1521 = vadd.f32 %v40, %v1486
  %v1522 = vadd.f32 %v41, %v1489
  %v1523 = vadd.f32 %v42, %v1491
  %v1524 = vadd.f32 %v43, %v1494
  %v1525 = vadd.f32 %v44, %v1496
  %v1526 = vadd.f32 %v45, %v1499
  %v1527 = vadd.f32 %v46, %v1501
  %v1528 = vadd.f32 %v47, %v1504
  %v1529 = vadd.f32 %v48, %v1506
  %v1530 = vadd.f32 %v49, %v1509
  %v1531 = vadd.f32 %v50, %v1511
  %v1532 = vadd.f32 %v51, %v1514
  %v1533 = vadd.f32 %v52, %v1516
  %1534 = vst [vmem:[#allocation2] sm:$0xff] %v1518
  %1535 = vst [vmem:[#allocation2 + $0x8] sm:$0xff] %v1519
  %1536 = vst [vmem:[#allocation2 + $0x10] sm:$0xff] %v1520
  %1537 = vst [vmem:[#allocation2 + $0x18] sm:$0xff] %v1521
  %1538 = vst [vmem:[#allocation2 + $0x20] sm:$0xff] %v1522
  %1539 = vst [vmem:[#allocation2 + $0x28] sm:$0xff] %v1523
  %1540 = vst [vmem:[#allocation2 + $0x30] sm:$0xff] %v1524
  %1541 = vst [vmem:[#allocation2 + $0x38] sm:$0xff] %v1525
  %1542 = vst [vmem:[#allocation2 + $0x40] sm:$0xff] %v1526
  %1543 = vst [vmem:[#allocation2 + $0x48] sm:$0xff] %v1527
  %1544 = vst [vmem:[#allocation2 + $0x50] sm:$0xff] %v1528
  %1545 = vst [vmem:[#allocation2 + $0x58] sm:$0xff] %v1529
  %1546 = vst [vmem:[#allocation2 + $0x60] sm:$0xff] %v1530
  %1547 = vst [vmem:[#allocation2 + $0x68] sm:$0xff] %v1531
  %1548 = vst [vmem:[#allocation2 + $0x70] sm:$0xff] %v1532
  %1549 = vst [vmem:[#allocation2 + $0x78] sm:$0xff] %v1533
  // Predicated region
  $region22: #{_lambda_.20} parent=0 // pred_check
    %p1550 = pneg %p17
  $region23: #{_lambda_.20} parent=0 // pred_check_branch
    %1552 = sbr.rel (%p1550) target = $region25
  $region24: #{_lambda_.20} parent=0 // pred_region
    %v1553 = vld [vmem:[#allocation2] sm:$0xff]
    %v1554 = vld [vmem:[#allocation2 + $0x8] sm:$0xff]
    %v1555 = vld [vmem:[#allocation2 + $0x10] sm:$0xff]
    %v1556 = vld [vmem:[#allocation2 + $0x18] sm:$0xff]
    %v1557 = vld [vmem:[#allocation2 + $0x20] sm:$0xff]
    %v1558 = vld [vmem:[#allocation2 + $0x28] sm:$0xff]
    %v1559 = vld [vmem:[#allocation2 + $0x30] sm:$0xff]
    %v1560 = vld [vmem:[#allocation2 + $0x38] sm:$0xff]
    %v1561 = vld [vmem:[#allocation2 + $0x40] sm:$0xff]
    %v1562 = vld [vmem:[#allocation2 + $0x48] sm:$0xff]
    %v1563 = vld [vmem:[#allocation2 + $0x50] sm:$0xff]
    %v1564 = vld [vmem:[#allocation2 + $0x58] sm:$0xff]
    %v1565 = vld [vmem:[#allocation2 + $0x60] sm:$0xff]
    %v1566 = vld [vmem:[#allocation2 + $0x68] sm:$0xff]
    %v1567 = vld [vmem:[#allocation2 + $0x70] sm:$0xff]
    %v1568 = vld [vmem:[#allocation2 + $0x78] sm:$0xff]
    %v1569 = vld [vmem:[%s2] sm:$0x1]
    %v1571 = vperm.slane %v1569, 0
    %v1573 = vadd.f32 %v1553, %v1571
    %v1574 = vadd.f32 %v1554, %v1571
    %v1575 = vadd.f32 %v1555, %v1571
    %v1576 = vadd.f32 %v1556, %v1571
    %v1577 = vadd.f32 %v1557, %v1571
    %v1578 = vadd.f32 %v1558, %v1571
    %v1579 = vadd.f32 %v1559, %v1571
    %v1580 = vadd.f32 %v1560, %v1571
    %v1581 = vadd.f32 %v1561, %v1571
    %v1582 = vadd.f32 %v1562, %v1571
    %v1583 = vadd.f32 %v1563, %v1571
    %v1584 = vadd.f32 %v1564, %v1571
    %v1585 = vadd.f32 %v1565, %v1571
    %v1586 = vadd.f32 %v1566, %v1571
    %v1587 = vadd.f32 %v1567, %v1571
    %v1588 = vadd.f32 %v1568, %v1571
    %v1589 = vld [vmem:[%s3] sm:$0xf]
    %v1590 = vld [vmem:[%s3 + $0x4] sm:$0xf]
    %v1591 = vld [vmem:[%s3 + $0x8] sm:$0xf]
    %v1592 = vld [vmem:[%s3 + $0xc] sm:$0xf]
    %v1593 = vld [vmem:[%s3 + $0x10] sm:$0xf]
    %v1594 = vld [vmem:[%s3 + $0x14] sm:$0xf]
    %v1595 = vld [vmem:[%s3 + $0x18] sm:$0xf]
    %v1596 = vld [vmem:[%s3 + $0x1c] sm:$0xf]
    %v1597 = vld [vmem:[%s3 + $0x20] sm:$0xf]
    %v1598 = vld [vmem:[%s3 + $0x24] sm:$0xf]
    %v1599 = vld [vmem:[%s3 + $0x28] sm:$0xf]
    %v1600 = vld [vmem:[%s3 + $0x2c] sm:$0xf]
    %v1601 = vld [vmem:[%s3 + $0x30] sm:$0xf]
    %v1602 = vld [vmem:[%s3 + $0x34] sm:$0xf]
    %v1603 = vld [vmem:[%s3 + $0x38] sm:$0xf]
    %v1604 = vld [vmem:[%s3 + $0x3c] sm:$0xf]
    %v1605 = vunpack.c.l.bf16 %v1589
    %v1606 = vunpack.c.l.bf16 %v1590
    %v1607 = vunpack.c.l.bf16 %v1591
    %v1608 = vunpack.c.l.bf16 %v1592
    %v1609 = vunpack.c.l.bf16 %v1593
    %v1610 = vunpack.c.l.bf16 %v1594
    %v1611 = vunpack.c.l.bf16 %v1595
    %v1612 = vunpack.c.l.bf16 %v1596
    %v1613 = vunpack.c.l.bf16 %v1597
    %v1614 = vunpack.c.l.bf16 %v1598
    %v1615 = vunpack.c.l.bf16 %v1599
    %v1616 = vunpack.c.l.bf16 %v1600
    %v1617 = vunpack.c.l.bf16 %v1601
    %v1618 = vunpack.c.l.bf16 %v1602
    %v1619 = vunpack.c.l.bf16 %v1603
    %v1620 = vunpack.c.l.bf16 %v1604
    %v1621 = vadd.f32 %v1573, %v1605
    %v1622 = vadd.f32 %v1574, %v1606
    %v1623 = vadd.f32 %v1575, %v1607
    %v1624 = vadd.f32 %v1576, %v1608
    %v1625 = vadd.f32 %v1577, %v1609
    %v1626 = vadd.f32 %v1578, %v1610
    %v1627 = vadd.f32 %v1579, %v1611
    %v1628 = vadd.f32 %v1580, %v1612
    %v1629 = vadd.f32 %v1581, %v1613
    %v1630 = vadd.f32 %v1582, %v1614
    %v1631 = vadd.f32 %v1583, %v1615
    %v1632 = vadd.f32 %v1584, %v1616
    %v1633 = vadd.f32 %v1585, %v1617
    %v1634 = vadd.f32 %v1586, %v1618
    %v1635 = vadd.f32 %v1587, %v1619
    %v1636 = vadd.f32 %v1588, %v1620
    %vm1637 = vcmp.gt.f32.partialorder %v1621, 0.0
    %vm1638 = vcmp.gt.f32.partialorder %v1622, 0.0
    %vm1639 = vcmp.gt.f32.partialorder %v1623, 0.0
    %vm1640 = vcmp.gt.f32.partialorder %v1624, 0.0
    %vm1641 = vcmp.gt.f32.partialorder %v1625, 0.0
    %vm1642 = vcmp.gt.f32.partialorder %v1626, 0.0
    %vm1643 = vcmp.gt.f32.partialorder %v1627, 0.0
    %vm1644 = vcmp.gt.f32.partialorder %v1628, 0.0
    %vm1645 = vcmp.gt.f32.partialorder %v1629, 0.0
    %vm1646 = vcmp.gt.f32.partialorder %v1630, 0.0
    %vm1647 = vcmp.gt.f32.partialorder %v1631, 0.0
    %vm1648 = vcmp.gt.f32.partialorder %v1632, 0.0
    %vm1649 = vcmp.gt.f32.partialorder %v1633, 0.0
    %vm1650 = vcmp.gt.f32.partialorder %v1634, 0.0
    %vm1651 = vcmp.gt.f32.partialorder %v1635, 0.0
    %vm1652 = vcmp.gt.f32.partialorder %v1636, 0.0
    %v1653 = vmul.f32 %v1621, 0.01
    %v1654 = vmul.f32 %v1622, 0.01
    %v1655 = vmul.f32 %v1623, 0.01
    %v1656 = vmul.f32 %v1624, 0.01
    %v1657 = vmul.f32 %v1625, 0.01
    %v1658 = vmul.f32 %v1626, 0.01
    %v1659 = vmul.f32 %v1627, 0.01
    %v1660 = vmul.f32 %v1628, 0.01
    %v1661 = vmul.f32 %v1629, 0.01
    %v1662 = vmul.f32 %v1630, 0.01
    %v1663 = vmul.f32 %v1631, 0.01
    %v1664 = vmul.f32 %v1632, 0.01
    %v1665 = vmul.f32 %v1633, 0.01
    %v1666 = vmul.f32 %v1634, 0.01
    %v1667 = vmul.f32 %v1635, 0.01
    %v1668 = vmul.f32 %v1636, 0.01
    %v1669 = vsel %vm1637, %v1621, %v1653
    %v1670 = vsel %vm1638, %v1622, %v1654
    %v1671 = vsel %vm1639, %v1623, %v1655
    %v1672 = vsel %vm1640, %v1624, %v1656
    %v1673 = vsel %vm1641, %v1625, %v1657
    %v1674 = vsel %vm1642, %v1626, %v1658
    %v1675 = vsel %vm1643, %v1627, %v1659
    %v1676 = vsel %vm1644, %v1628, %v1660
    %v1677 = vsel %vm1645, %v1629, %v1661
    %v1678 = vsel %vm1646, %v1630, %v1662
    %v1679 = vsel %vm1647, %v1631, %v1663
    %v1680 = vsel %vm1648, %v1632, %v1664
    %v1681 = vsel %vm1649, %v1633, %v1665
    %v1682 = vsel %vm1650, %v1634, %v1666
    %v1683 = vsel %vm1651, %v1635, %v1667
    %v1684 = vsel %vm1652, %v1636, %v1668
    %v1685 = vpack.c.bf16 %v1669, %v1669
    %v1686 = vpack.c.bf16 %v1670, %v1670
    %v1687 = vpack.c.bf16 %v1671, %v1671
    %v1688 = vpack.c.bf16 %v1672, %v1672
    %v1689 = vpack.c.bf16 %v1673, %v1673
    %v1690 = vpack.c.bf16 %v1674, %v1674
    %v1691 = vpack.c.bf16 %v1675, %v1675
    %v1692 = vpack.c.bf16 %v1676, %v1676
    %v1693 = vpack.c.bf16 %v1677, %v1677
    %v1694 = vpack.c.bf16 %v1678, %v1678
    %v1695 = vpack.c.bf16 %v1679, %v1679
    %v1696 = vpack.c.bf16 %v1680, %v1680
    %v1697 = vpack.c.bf16 %v1681, %v1681
    %v1698 = vpack.c.bf16 %v1682, %v1682
    %v1699 = vpack.c.bf16 %v1683, %v1683
    %v1700 = vpack.c.bf16 %v1684, %v1684
    %1701 = vst [vmem:[%s4] sm:$0xf] %v1685
    %1702 = vst [vmem:[%s4 + $0x4] sm:$0xf] %v1686
    %1703 = vst [vmem:[%s4 + $0x8] sm:$0xf] %v1687
    %1704 = vst [vmem:[%s4 + $0xc] sm:$0xf] %v1688
    %1705 = vst [vmem:[%s4 + $0x10] sm:$0xf] %v1689
    %1706 = vst [vmem:[%s4 + $0x14] sm:$0xf] %v1690
    %1707 = vst [vmem:[%s4 + $0x18] sm:$0xf] %v1691
    %1708 = vst [vmem:[%s4 + $0x1c] sm:$0xf] %v1692
    %1709 = vst [vmem:[%s4 + $0x20] sm:$0xf] %v1693
    %1710 = vst [vmem:[%s4 + $0x24] sm:$0xf] %v1694
    %1711 = vst [vmem:[%s4 + $0x28] sm:$0xf] %v1695
    %1712 = vst [vmem:[%s4 + $0x2c] sm:$0xf] %v1696
    %1713 = vst [vmem:[%s4 + $0x30] sm:$0xf] %v1697
    %1714 = vst [vmem:[%s4 + $0x34] sm:$0xf] %v1698
    %1715 = vst [vmem:[%s4 + $0x38] sm:$0xf] %v1699
    %1716 = vst [vmem:[%s4 + $0x3c] sm:$0xf] %v1700
  $region25: #{_lambda_.20} parent=0 // pred_fallthru
    _
  // Predicated region
  $region26: #{_lambda_.20} parent=0 // pred_check
    _
  $region27: #{_lambda_.20} parent=0 // pred_check_branch
    %1718 = sbr.rel (0) target = $region29
  $region28: #{_lambda_.20} parent=0 // pred_region
    _
  $region29: #{_lambda_.20} parent=0 // pred_fallthru
    _
  // Predicated region
  $region30: #{_lambda_.20} parent=0 // pred_check
    _
  $region31: #{_lambda_.20} parent=0 // pred_check_branch
    %1720 = sbr.rel (0) target = $region33
  $region32: #{_lambda_.20} parent=0 // pred_region
    _
  $region33: #{_lambda_.20} parent=0 // pred_fallthru
    _

// kernel: _lambda_.21
$region0: #{_lambda_.21}
  #allocation0 [shape = 'u32[]', space=smem, size = 0x4, offset = 0x4, fixed_abs, tag = 'smem constant byte address 0x4 - core index']
  #allocation1 [shape = 'u32[72,128]{1,0:T(1,128)}', space=vmem, size = 0x9000, scoped, tag = 'internal scratch']
  #allocation2 [shape = 'f32[128,128]{1,0:T(8,128)}', space=vmem, size = 0x10000, scoped, tag = 'scratch operand']
  %s0 = inlined_call_operand.vmem [shape: bf16[128,1152], index: 0, kind: input, shape index: {}]
  %s1 = inlined_call_operand.vmem [shape: bf16[1152,128], index: 1, kind: input, shape index: {}]
  %s2 = inlined_call_operand.vmem [shape: f32[1,128], index: 2, kind: input, shape index: {}]
  %s3 = inlined_call_operand.vmem [shape: bf16[128,128], index: 3, kind: output, shape index: {}]
  %s4 = sld [smem:[#allocation0]]
  $region30: #{_lambda_.21} parent=0
    _
  %s6 = ssub.s32 1, %s4
  %s7 = scalar_select 0, %s6, %s4
  // Predicated region
  $region2: #{_lambda_.21} parent=0 // pred_check
    _
  $region3: #{_lambda_.21} parent=0 // pred_check_branch
    %9 = sbr.rel (0) target = $region5
  $region4: #{_lambda_.21} parent=0 // pred_region
    _
  $region5: #{_lambda_.21} parent=0 // pred_fallthru
    _
  // Predicated region
  $region6: #{_lambda_.21} parent=0 // pred_check
    _
  $region7: #{_lambda_.21} parent=0 // pred_check_branch
    %11 = sbr.rel (0) target = $region9
  $region8: #{_lambda_.21} parent=0 // pred_region
    _
  $region9: #{_lambda_.21} parent=0 // pred_fallthru
    _
  // Predicated region
  $region10: #{_lambda_.21} parent=0 // pred_check
    _
  $region11: #{_lambda_.21} parent=0 // pred_check_branch
    %13 = sbr.rel (0) target = $region13
  $region12: #{_lambda_.21} parent=0 // pred_region
    _
  $region13: #{_lambda_.21} parent=0 // pred_fallthru
    _
  %p14 = scmp.eq.s32.totalorder 0, 0
  // Predicated region
  $region14: #{_lambda_.21} parent=0 // pred_check
    %p15 = pneg %p14
  $region15: #{_lambda_.21} parent=0 // pred_check_branch
    %17 = sbr.rel (%p15) target = $region17
  $region16: #{_lambda_.21} parent=0 // pred_region
    %18 = vst [vmem:[#allocation2] sm:$0xff] 0.0
    %19 = vst [vmem:[#allocation2 + $0x8] sm:$0xff] 0.0
    %20 = vst [vmem:[#allocation2 + $0x10] sm:$0xff] 0.0
    %21 = vst [vmem:[#allocation2 + $0x18] sm:$0xff] 0.0
    %22 = vst [vmem:[#allocation2 + $0x20] sm:$0xff] 0.0
    %23 = vst [vmem:[#allocation2 + $0x28] sm:$0xff] 0.0
    %24 = vst [vmem:[#allocation2 + $0x30] sm:$0xff] 0.0
    %25 = vst [vmem:[#allocation2 + $0x38] sm:$0xff] 0.0
    %26 = vst [vmem:[#allocation2 + $0x40] sm:$0xff] 0.0
    %27 = vst [vmem:[#allocation2 + $0x48] sm:$0xff] 0.0
    %28 = vst [vmem:[#allocation2 + $0x50] sm:$0xff] 0.0
    %29 = vst [vmem:[#allocation2 + $0x58] sm:$0xff] 0.0
    %30 = vst [vmem:[#allocation2 + $0x60] sm:$0xff] 0.0
    %31 = vst [vmem:[#allocation2 + $0x68] sm:$0xff] 0.0
    %32 = vst [vmem:[#allocation2 + $0x70] sm:$0xff] 0.0
    %33 = vst [vmem:[#allocation2 + $0x78] sm:$0xff] 0.0
  $region17: #{_lambda_.21} parent=0 // pred_fallthru
    _
  %v34 = vld [vmem:[#allocation2] sm:$0xff]
  %v35 = vld [vmem:[#allocation2 + $0x8] sm:$0xff]
  %v36 = vld [vmem:[#allocation2 + $0x10] sm:$0xff]
  %v37 = vld [vmem:[#allocation2 + $0x18] sm:$0xff]
  %v38 = vld [vmem:[#allocation2 + $0x20] sm:$0xff]
  %v39 = vld [vmem:[#allocation2 + $0x28] sm:$0xff]
  %v40 = vld [vmem:[#allocation2 + $0x30] sm:$0xff]
  %v41 = vld [vmem:[#allocation2 + $0x38] sm:$0xff]
  %v42 = vld [vmem:[#allocation2 + $0x40] sm:$0xff]
  %v43 = vld [vmem:[#allocation2 + $0x48] sm:$0xff]
  %v44 = vld [vmem:[#allocation2 + $0x50] sm:$0xff]
  %v45 = vld [vmem:[#allocation2 + $0x58] sm:$0xff]
  %v46 = vld [vmem:[#allocation2 + $0x60] sm:$0xff]
  %v47 = vld [vmem:[#allocation2 + $0x68] sm:$0xff]
  %v48 = vld [vmem:[#allocation2 + $0x70] sm:$0xff]
  %v49 = vld [vmem:[#allocation2 + $0x78] sm:$0xff]
  %v50 = vld [vmem:[%s0] sm:$0xff]
  %v51 = vld [vmem:[%s0 + $0x8] sm:$0xff]
  %v52 = vld [vmem:[%s0 + $0x10] sm:$0xff]
  %v53 = vld [vmem:[%s0 + $0x18] sm:$0xff]
  %v54 = vld [vmem:[%s0 + $0x20] sm:$0xf]
  %v55 = vld [vmem:[%s0 + $0x24] sm:$0xff]
  %v56 = vld [vmem:[%s0 + $0x2c] sm:$0xff]
  %v57 = vld [vmem:[%s0 + $0x34] sm:$0xff]
  %v58 = vld [vmem:[%s0 + $0x3c] sm:$0xff]
  %v59 = vld [vmem:[%s0 + $0x44] sm:$0xf]
  %v60 = vld [vmem:[%s0 + $0x48] sm:$0xff]
  %v61 = vld [vmem:[%s0 + $0x50] sm:$0xff]
  %v62 = vld [vmem:[%s0 + $0x58] sm:$0xff]
  %v63 = vld [vmem:[%s0 + $0x60] sm:$0xff]
  %v64 = vld [vmem:[%s0 + $0x68] sm:$0xf]
  %v65 = vld [vmem:[%s0 + $0x6c] sm:$0xff]
  %v66 = vld [vmem:[%s0 + $0x74] sm:$0xff]
  %v67 = vld [vmem:[%s0 + $0x7c] sm:$0xff]
  %v68 = vld [vmem:[%s0 + $0x84] sm:$0xff]
  %v69 = vld [vmem:[%s0 + $0x8c] sm:$0xf]
  %v70 = vld [vmem:[%s0 + $0x90] sm:$0xff]
  %v71 = vld [vmem:[%s0 + $0x98] sm:$0xff]
  %v72 = vld [vmem:[%s0 + $0xa0] sm:$0xff]
  %v73 = vld [vmem:[%s0 + $0xa8] sm:$0xff]
  %v74 = vld [vmem:[%s0 + $0xb0] sm:$0xf]
  %v75 = vld [vmem:[%s0 + $0xb4] sm:$0xff]
  %v76 = vld [vmem:[%s0 + $0xbc] sm:$0xff]
  %v77 = vld [vmem:[%s0 + $0xc4] sm:$0xff]
  %v78 = vld [vmem:[%s0 + $0xcc] sm:$0xff]
  %v79 = vld [vmem:[%s0 + $0xd4] sm:$0xf]
  %v80 = vld [vmem:[%s0 + $0xd8] sm:$0xff]
  %v81 = vld [vmem:[%s0 + $0xe0] sm:$0xff]
  %v82 = vld [vmem:[%s0 + $0xe8] sm:$0xff]
  %v83 = vld [vmem:[%s0 + $0xf0] sm:$0xff]
  %v84 = vld [vmem:[%s0 + $0xf8] sm:$0xf]
  %v85 = vld [vmem:[%s0 + $0xfc] sm:$0xff]
  %v86 = vld [vmem:[%s0 + $0x104] sm:$0xff]
  %v87 = vld [vmem:[%s0 + $0x10c] sm:$0xff]
  %v88 = vld [vmem:[%s0 + $0x114] sm:$0xff]
  %v89 = vld [vmem:[%s0 + $0x11c] sm:$0xf]
  %v90 = vld [vmem:[%s0 + $0x120] sm:$0xff]
  %v91 = vld [vmem:[%s0 + $0x128] sm:$0xff]
  %v92 = vld [vmem:[%s0 + $0x130] sm:$0xff]
  %v93 = vld [vmem:[%s0 + $0x138] sm:$0xff]
  %v94 = vld [vmem:[%s0 + $0x140] sm:$0xf]
  %v95 = vld [vmem:[%s0 + $0x144] sm:$0xff]
  %v96 = vld [vmem:[%s0 + $0x14c] sm:$0xff]
  %v97 = vld [vmem:[%s0 + $0x154] sm:$0xff]
  %v98 = vld [vmem:[%s0 + $0x15c] sm:$0xff]
  %v99 = vld [vmem:[%s0 + $0x164] sm:$0xf]
  %v100 = vld [vmem:[%s0 + $0x168] sm:$0xff]
  %v101 = vld [vmem:[%s0 + $0x170] sm:$0xff]
  %v102 = vld [vmem:[%s0 + $0x178] sm:$0xff]
  %v103 = vld [vmem:[%s0 + $0x180] sm:$0xff]
  %v104 = vld [vmem:[%s0 + $0x188] sm:$0xf]
  %v105 = vld [vmem:[%s0 + $0x18c] sm:$0xff]
  %v106 = vld [vmem:[%s0 + $0x194] sm:$0xff]
  %v107 = vld [vmem:[%s0 + $0x19c] sm:$0xff]
  %v108 = vld [vmem:[%s0 + $0x1a4] sm:$0xff]
  %v109 = vld [vmem:[%s0 + $0x1ac] sm:$0xf]
  %v110 = vld [vmem:[%s0 + $0x1b0] sm:$0xff]
  %v111 = vld [vmem:[%s0 + $0x1b8] sm:$0xff]
  %v112 = vld [vmem:[%s0 + $0x1c0] sm:$0xff]
  %v113 = vld [vmem:[%s0 + $0x1c8] sm:$0xff]
  %v114 = vld [vmem:[%s0 + $0x1d0] sm:$0xf]
  %v115 = vld [vmem:[%s0 + $0x1d4] sm:$0xff]
  %v116 = vld [vmem:[%s0 + $0x1dc] sm:$0xff]
  %v117 = vld [vmem:[%s0 + $0x1e4] sm:$0xff]
  %v118 = vld [vmem:[%s0 + $0x1ec] sm:$0xff]
  %v119 = vld [vmem:[%s0 + $0x1f4] sm:$0xf]
  %v120 = vld [vmem:[%s0 + $0x1f8] sm:$0xff]
  %v121 = vld [vmem:[%s0 + $0x200] sm:$0xff]
  %v122 = vld [vmem:[%s0 + $0x208] sm:$0xff]
  %v123 = vld [vmem:[%s0 + $0x210] sm:$0xff]
  %v124 = vld [vmem:[%s0 + $0x218] sm:$0xf]
  %v125 = vld [vmem:[%s0 + $0x21c] sm:$0xff]
  %v126 = vld [vmem:[%s0 + $0x224] sm:$0xff]
  %v127 = vld [vmem:[%s0 + $0x22c] sm:$0xff]
  %v128 = vld [vmem:[%s0 + $0x234] sm:$0xff]
  %v129 = vld [vmem:[%s0 + $0x23c] sm:$0xf]
  %v130 = vld [vmem:[%s1] sm:$0xf]
  %v131 = vld [vmem:[%s1 + $0x4] sm:$0xf]
  %v132 = vld [vmem:[%s1 + $0x8] sm:$0xf]
  %v133 = vld [vmem:[%s1 + $0xc] sm:$0xf]
  %v134 = vld [vmem:[%s1 + $0x10] sm:$0xf]
  %v135 = vld [vmem:[%s1 + $0x14] sm:$0xf]
  %v136 = vld [vmem:[%s1 + $0x18] sm:$0xf]
  %v137 = vld [vmem:[%s1 + $0x1c] sm:$0xf]
  %v138 = vld [vmem:[%s1 + $0x20] sm:$0xf]
  %v139 = vld [vmem:[%s1 + $0x24] sm:$0xf]
  %v140 = vld [vmem:[%s1 + $0x28] sm:$0xf]
  %v141 = vld [vmem:[%s1 + $0x2c] sm:$0xf]
  %v142 = vld [vmem:[%s1 + $0x30] sm:$0xf]
  %v143 = vld [vmem:[%s1 + $0x34] sm:$0xf]
  %v144 = vld [vmem:[%s1 + $0x38] sm:$0xf]
  %v145 = vld [vmem:[%s1 + $0x3c] sm:$0xf]
  %v146 = vld [vmem:[%s1 + $0x40] sm:$0xf]
  %v147 = vld [vmem:[%s1 + $0x44] sm:$0xf]
  %v148 = vld [vmem:[%s1 + $0x48] sm:$0xf]
  %v149 = vld [vmem:[%s1 + $0x4c] sm:$0xf]
  %v150 = vld [vmem:[%s1 + $0x50] sm:$0xf]
  %v151 = vld [vmem:[%s1 + $0x54] sm:$0xf]
  %v152 = vld [vmem:[%s1 + $0x58] sm:$0xf]
  %v153 = vld [vmem:[%s1 + $0x5c] sm:$0xf]
  %v154 = vld [vmem:[%s1 + $0x60] sm:$0xf]
  %v155 = vld [vmem:[%s1 + $0x64] sm:$0xf]
  %v156 = vld [vmem:[%s1 + $0x68] sm:$0xf]
  %v157 = vld [vmem:[%s1 + $0x6c] sm:$0xf]
  %v158 = vld [vmem:[%s1 + $0x70] sm:$0xf]
  %v159 = vld [vmem:[%s1 + $0x74] sm:$0xf]
  %v160 = vld [vmem:[%s1 + $0x78] sm:$0xf]
  %v161 = vld [vmem:[%s1 + $0x7c] sm:$0xf]
  %v162 = vld [vmem:[%s1 + $0x80] sm:$0xf]
  %v163 = vld [vmem:[%s1 + $0x84] sm:$0xf]
  %v164 = vld [vmem:[%s1 + $0x88] sm:$0xf]
  %v165 = vld [vmem:[%s1 + $0x8c] sm:$0xf]
  %v166 = vld [vmem:[%s1 + $0x90] sm:$0xf]
  %v167 = vld [vmem:[%s1 + $0x94] sm:$0xf]
  %v168 = vld [vmem:[%s1 + $0x98] sm:$0xf]
  %v169 = vld [vmem:[%s1 + $0x9c] sm:$0xf]
  %v170 = vld [vmem:[%s1 + $0xa0] sm:$0xf]
  %v171 = vld [vmem:[%s1 + $0xa4] sm:$0xf]
  %v172 = vld [vmem:[%s1 + $0xa8] sm:$0xf]
  %v173 = vld [vmem:[%s1 + $0xac] sm:$0xf]
  %v174 = vld [vmem:[%s1 + $0xb0] sm:$0xf]
  %v175 = vld [vmem:[%s1 + $0xb4] sm:$0xf]
  %v176 = vld [vmem:[%s1 + $0xb8] sm:$0xf]
  %v177 = vld [vmem:[%s1 + $0xbc] sm:$0xf]
  %v178 = vld [vmem:[%s1 + $0xc0] sm:$0xf]
  %v179 = vld [vmem:[%s1 + $0xc4] sm:$0xf]
  %v180 = vld [vmem:[%s1 + $0xc8] sm:$0xf]
  %v181 = vld [vmem:[%s1 + $0xcc] sm:$0xf]
  %v182 = vld [vmem:[%s1 + $0xd0] sm:$0xf]
  %v183 = vld [vmem:[%s1 + $0xd4] sm:$0xf]
  %v184 = vld [vmem:[%s1 + $0xd8] sm:$0xf]
  %v185 = vld [vmem:[%s1 + $0xdc] sm:$0xf]
  %v186 = vld [vmem:[%s1 + $0xe0] sm:$0xf]
  %v187 = vld [vmem:[%s1 + $0xe4] sm:$0xf]
  %v188 = vld [vmem:[%s1 + $0xe8] sm:$0xf]
  %v189 = vld [vmem:[%s1 + $0xec] sm:$0xf]
  %v190 = vld [vmem:[%s1 + $0xf0] sm:$0xf]
  %v191 = vld [vmem:[%s1 + $0xf4] sm:$0xf]
  %v192 = vld [vmem:[%s1 + $0xf8] sm:$0xf]
  %v193 = vld [vmem:[%s1 + $0xfc] sm:$0xf]
  %v194 = vld [vmem:[%s1 + $0x100] sm:$0xf]
  %v195 = vld [vmem:[%s1 + $0x104] sm:$0xf]
  %v196 = vld [vmem:[%s1 + $0x108] sm:$0xf]
  %v197 = vld [vmem:[%s1 + $0x10c] sm:$0xf]
  %v198 = vld [vmem:[%s1 + $0x110] sm:$0xf]
  %v199 = vld [vmem:[%s1 + $0x114] sm:$0xf]
  %v200 = vld [vmem:[%s1 + $0x118] sm:$0xf]
  %v201 = vld [vmem:[%s1 + $0x11c] sm:$0xf]
  %v202 = vld [vmem:[%s1 + $0x120] sm:$0xf]
  %v203 = vld [vmem:[%s1 + $0x124] sm:$0xf]
  %v204 = vld [vmem:[%s1 + $0x128] sm:$0xf]
  %v205 = vld [vmem:[%s1 + $0x12c] sm:$0xf]
  %v206 = vld [vmem:[%s1 + $0x130] sm:$0xf]
  %v207 = vld [vmem:[%s1 + $0x134] sm:$0xf]
  %v208 = vld [vmem:[%s1 + $0x138] sm:$0xf]
  %v209 = vld [vmem:[%s1 + $0x13c] sm:$0xf]
  %v210 = vld [vmem:[%s1 + $0x140] sm:$0xf]
  %v211 = vld [vmem:[%s1 + $0x144] sm:$0xf]
  %v212 = vld [vmem:[%s1 + $0x148] sm:$0xf]
  %v213 = vld [vmem:[%s1 + $0x14c] sm:$0xf]
  %v214 = vld [vmem:[%s1 + $0x150] sm:$0xf]
  %v215 = vld [vmem:[%s1 + $0x154] sm:$0xf]
  %v216 = vld [vmem:[%s1 + $0x158] sm:$0xf]
  %v217 = vld [vmem:[%s1 + $0x15c] sm:$0xf]
  %v218 = vld [vmem:[%s1 + $0x160] sm:$0xf]
  %v219 = vld [vmem:[%s1 + $0x164] sm:$0xf]
  %v220 = vld [vmem:[%s1 + $0x168] sm:$0xf]
  %v221 = vld [vmem:[%s1 + $0x16c] sm:$0xf]
  %v222 = vld [vmem:[%s1 + $0x170] sm:$0xf]
  %v223 = vld [vmem:[%s1 + $0x174] sm:$0xf]
  %v224 = vld [vmem:[%s1 + $0x178] sm:$0xf]
  %v225 = vld [vmem:[%s1 + $0x17c] sm:$0xf]
  %v226 = vld [vmem:[%s1 + $0x180] sm:$0xf]
  %v227 = vld [vmem:[%s1 + $0x184] sm:$0xf]
  %v228 = vld [vmem:[%s1 + $0x188] sm:$0xf]
  %v229 = vld [vmem:[%s1 + $0x18c] sm:$0xf]
  %v230 = vld [vmem:[%s1 + $0x190] sm:$0xf]
  %v231 = vld [vmem:[%s1 + $0x194] sm:$0xf]
  %v232 = vld [vmem:[%s1 + $0x198] sm:$0xf]
  %v233 = vld [vmem:[%s1 + $0x19c] sm:$0xf]
  %v234 = vld [vmem:[%s1 + $0x1a0] sm:$0xf]
  %v235 = vld [vmem:[%s1 + $0x1a4] sm:$0xf]
  %v236 = vld [vmem:[%s1 + $0x1a8] sm:$0xf]
  %v237 = vld [vmem:[%s1 + $0x1ac] sm:$0xf]
  %v238 = vld [vmem:[%s1 + $0x1b0] sm:$0xf]
  %v239 = vld [vmem:[%s1 + $0x1b4] sm:$0xf]
  %v240 = vld [vmem:[%s1 + $0x1b8] sm:$0xf]
  %v241 = vld [vmem:[%s1 + $0x1bc] sm:$0xf]
  %v242 = vld [vmem:[%s1 + $0x1c0] sm:$0xf]
  %v243 = vld [vmem:[%s1 + $0x1c4] sm:$0xf]
  %v244 = vld [vmem:[%s1 + $0x1c8] sm:$0xf]
  %v245 = vld [vmem:[%s1 + $0x1cc] sm:$0xf]
  %v246 = vld [vmem:[%s1 + $0x1d0] sm:$0xf]
  %v247 = vld [vmem:[%s1 + $0x1d4] sm:$0xf]
  %v248 = vld [vmem:[%s1 + $0x1d8] sm:$0xf]
  %v249 = vld [vmem:[%s1 + $0x1dc] sm:$0xf]
  %v250 = vld [vmem:[%s1 + $0x1e0] sm:$0xf]
  %v251 = vld [vmem:[%s1 + $0x1e4] sm:$0xf]
  %v252 = vld [vmem:[%s1 + $0x1e8] sm:$0xf]
  %v253 = vld [vmem:[%s1 + $0x1ec] sm:$0xf]
  %v254 = vld [vmem:[%s1 + $0x1f0] sm:$0xf]
  %v255 = vld [vmem:[%s1 + $0x1f4] sm:$0xf]
  %v256 = vld [vmem:[%s1 + $0x1f8] sm:$0xf]
  %v257 = vld [vmem:[%s1 + $0x1fc] sm:$0xf]
  %v258 = vld [vmem:[%s1 + $0x200] sm:$0xf]
  %v259 = vld [vmem:[%s1 + $0x204] sm:$0xf]
  %v260 = vld [vmem:[%s1 + $0x208] sm:$0xf]
  %v261 = vld [vmem:[%s1 + $0x20c] sm:$0xf]
  %v262 = vld [vmem:[%s1 + $0x210] sm:$0xf]
  %v263 = vld [vmem:[%s1 + $0x214] sm:$0xf]
  %v264 = vld [vmem:[%s1 + $0x218] sm:$0xf]
  %v265 = vld [vmem:[%s1 + $0x21c] sm:$0xf]
  %v266 = vld [vmem:[%s1 + $0x220] sm:$0xf]
  %v267 = vld [vmem:[%s1 + $0x224] sm:$0xf]
  %v268 = vld [vmem:[%s1 + $0x228] sm:$0xf]
  %v269 = vld [vmem:[%s1 + $0x22c] sm:$0xf]
  %v270 = vld [vmem:[%s1 + $0x230] sm:$0xf]
  %v271 = vld [vmem:[%s1 + $0x234] sm:$0xf]
  %v272 = vld [vmem:[%s1 + $0x238] sm:$0xf]
  %v273 = vld [vmem:[%s1 + $0x23c] sm:$0xf]
  %v354 = vunpack.c.l.b16 %v50
  %v355 = vunpack.c.h.b16 %v50
  %v356 = vunpack.c.l.b16 %v51
  %v357 = vunpack.c.h.b16 %v51
  %v358 = vunpack.c.l.b16 %v52
  %v359 = vunpack.c.h.b16 %v52
  %v360 = vunpack.c.l.b16 %v53
  %v361 = vunpack.c.h.b16 %v53
  %v362 = vunpack.c.l.b16 %v54
  %v363 = vunpack.c.l.b16 %v55
  %v364 = vunpack.c.h.b16 %v55
  %v365 = vunpack.c.l.b16 %v56
  %v366 = vunpack.c.h.b16 %v56
  %v367 = vunpack.c.l.b16 %v57
  %v368 = vunpack.c.h.b16 %v57
  %v369 = vunpack.c.l.b16 %v58
  %v370 = vunpack.c.h.b16 %v58
  %v371 = vunpack.c.l.b16 %v59
  %v372 = vunpack.c.l.b16 %v60
  %v373 = vunpack.c.h.b16 %v60
  %v374 = vunpack.c.l.b16 %v61
  %v375 = vunpack.c.h.b16 %v61
  %v376 = vunpack.c.l.b16 %v62
  %v377 = vunpack.c.h.b16 %v62
  %v378 = vunpack.c.l.b16 %v63
  %v379 = vunpack.c.h.b16 %v63
  %v380 = vunpack.c.l.b16 %v64
  %v381 = vunpack.c.l.b16 %v65
  %v382 = vunpack.c.h.b16 %v65
  %v383 = vunpack.c.l.b16 %v66
  %v384 = vunpack.c.h.b16 %v66
  %v385 = vunpack.c.l.b16 %v67
  %v386 = vunpack.c.h.b16 %v67
  %v387 = vunpack.c.l.b16 %v68
  %v388 = vunpack.c.h.b16 %v68
  %v389 = vunpack.c.l.b16 %v69
  %v390 = vunpack.c.l.b16 %v70
  %v391 = vunpack.c.h.b16 %v70
  %v392 = vunpack.c.l.b16 %v71
  %v393 = vunpack.c.h.b16 %v71
  %v394 = vunpack.c.l.b16 %v72
  %v395 = vunpack.c.h.b16 %v72
  %v396 = vunpack.c.l.b16 %v73
  %v397 = vunpack.c.h.b16 %v73
  %v398 = vunpack.c.l.b16 %v74
  %v399 = vunpack.c.l.b16 %v75
  %v400 = vunpack.c.h.b16 %v75
  %v401 = vunpack.c.l.b16 %v76
  %v402 = vunpack.c.h.b16 %v76
  %v403 = vunpack.c.l.b16 %v77
  %v404 = vunpack.c.h.b16 %v77
  %v405 = vunpack.c.l.b16 %v78
  %v406 = vunpack.c.h.b16 %v78
  %v407 = vunpack.c.l.b16 %v79
  %v408 = vunpack.c.l.b16 %v80
  %v409 = vunpack.c.h.b16 %v80
  %v410 = vunpack.c.l.b16 %v81
  %v411 = vunpack.c.h.b16 %v81
  %v412 = vunpack.c.l.b16 %v82
  %v413 = vunpack.c.h.b16 %v82
  %v414 = vunpack.c.l.b16 %v83
  %v415 = vunpack.c.h.b16 %v83
  %v416 = vunpack.c.l.b16 %v84
  %v417 = vunpack.c.l.b16 %v85
  %v418 = vunpack.c.h.b16 %v85
  %v419 = vunpack.c.l.b16 %v86
  %v420 = vunpack.c.h.b16 %v86
  %v421 = vunpack.c.l.b16 %v87
  %v422 = vunpack.c.h.b16 %v87
  %v423 = vunpack.c.l.b16 %v88
  %v424 = vunpack.c.h.b16 %v88
  %v425 = vunpack.c.l.b16 %v89
  %v426 = vunpack.c.l.b16 %v90
  %v427 = vunpack.c.h.b16 %v90
  %v428 = vunpack.c.l.b16 %v91
  %v429 = vunpack.c.h.b16 %v91
  %v430 = vunpack.c.l.b16 %v92
  %v431 = vunpack.c.h.b16 %v92
  %v432 = vunpack.c.l.b16 %v93
  %v433 = vunpack.c.h.b16 %v93
  %v434 = vunpack.c.l.b16 %v94
  %v435 = vunpack.c.l.b16 %v95
  %v436 = vunpack.c.h.b16 %v95
  %v437 = vunpack.c.l.b16 %v96
  %v438 = vunpack.c.h.b16 %v96
  %v439 = vunpack.c.l.b16 %v97
  %v440 = vunpack.c.h.b16 %v97
  %v441 = vunpack.c.l.b16 %v98
  %v442 = vunpack.c.h.b16 %v98
  %v443 = vunpack.c.l.b16 %v99
  %v444 = vunpack.c.l.b16 %v100
  %v445 = vunpack.c.h.b16 %v100
  %v446 = vunpack.c.l.b16 %v101
  %v447 = vunpack.c.h.b16 %v101
  %v448 = vunpack.c.l.b16 %v102
  %v449 = vunpack.c.h.b16 %v102
  %v450 = vunpack.c.l.b16 %v103
  %v451 = vunpack.c.h.b16 %v103
  %v452 = vunpack.c.l.b16 %v104
  %v453 = vunpack.c.l.b16 %v105
  %v454 = vunpack.c.h.b16 %v105
  %v455 = vunpack.c.l.b16 %v106
  %v456 = vunpack.c.h.b16 %v106
  %v457 = vunpack.c.l.b16 %v107
  %v458 = vunpack.c.h.b16 %v107
  %v459 = vunpack.c.l.b16 %v108
  %v460 = vunpack.c.h.b16 %v108
  %v461 = vunpack.c.l.b16 %v109
  %v462 = vunpack.c.l.b16 %v110
  %v463 = vunpack.c.h.b16 %v110
  %v464 = vunpack.c.l.b16 %v111
  %v465 = vunpack.c.h.b16 %v111
  %v466 = vunpack.c.l.b16 %v112
  %v467 = vunpack.c.h.b16 %v112
  %v468 = vunpack.c.l.b16 %v113
  %v469 = vunpack.c.h.b16 %v113
  %v470 = vunpack.c.l.b16 %v114
  %v471 = vunpack.c.l.b16 %v115
  %v472 = vunpack.c.h.b16 %v115
  %v473 = vunpack.c.l.b16 %v116
  %v474 = vunpack.c.h.b16 %v116
  %v475 = vunpack.c.l.b16 %v117
  %v476 = vunpack.c.h.b16 %v117
  %v477 = vunpack.c.l.b16 %v118
  %v478 = vunpack.c.h.b16 %v118
  %v479 = vunpack.c.l.b16 %v119
  %v480 = vunpack.c.l.b16 %v120
  %v481 = vunpack.c.h.b16 %v120
  %v482 = vunpack.c.l.b16 %v121
  %v483 = vunpack.c.h.b16 %v121
  %v484 = vunpack.c.l.b16 %v122
  %v485 = vunpack.c.h.b16 %v122
  %v486 = vunpack.c.l.b16 %v123
  %v487 = vunpack.c.h.b16 %v123
  %v488 = vunpack.c.l.b16 %v124
  %v489 = vunpack.c.l.b16 %v125
  %v490 = vunpack.c.h.b16 %v125
  %v491 = vunpack.c.l.b16 %v126
  %v492 = vunpack.c.h.b16 %v126
  %v493 = vunpack.c.l.b16 %v127
  %v494 = vunpack.c.h.b16 %v127
  %v495 = vunpack.c.l.b16 %v128
  %v496 = vunpack.c.h.b16 %v128
  %v497 = vunpack.c.l.b16 %v129
  %v498 = vpack.c.b16 %v363, %v354
  %v499 = vpack.c.b16 %v364, %v355
  %v500 = vpack.c.b16 %v365, %v356
  %v501 = vpack.c.b16 %v366, %v357
  %v502 = vpack.c.b16 %v367, %v358
  %v503 = vpack.c.b16 %v368, %v359
  %v504 = vpack.c.b16 %v369, %v360
  %v505 = vpack.c.b16 %v370, %v361
  %v506 = vpack.c.b16 %v371, %v362
  %v507 = vpack.c.b16 %v381, %v372
  %v508 = vpack.c.b16 %v382, %v373
  %v509 = vpack.c.b16 %v383, %v374
  %v510 = vpack.c.b16 %v384, %v375
  %v511 = vpack.c.b16 %v385, %v376
  %v512 = vpack.c.b16 %v386, %v377
  %v513 = vpack.c.b16 %v387, %v378
  %v514 = vpack.c.b16 %v388, %v379
  %v515 = vpack.c.b16 %v389, %v380
  %v516 = vpack.c.b16 %v399, %v390
  %v517 = vpack.c.b16 %v400, %v391
  %v518 = vpack.c.b16 %v401, %v392
  %v519 = vpack.c.b16 %v402, %v393
  %v520 = vpack.c.b16 %v403, %v394
  %v521 = vpack.c.b16 %v404, %v395
  %v522 = vpack.c.b16 %v405, %v396
  %v523 = vpack.c.b16 %v406, %v397
  %v524 = vpack.c.b16 %v407, %v398
  %v525 = vpack.c.b16 %v417, %v408
  %v526 = vpack.c.b16 %v418, %v409
  %v527 = vpack.c.b16 %v419, %v410
  %v528 = vpack.c.b16 %v420, %v411
  %v529 = vpack.c.b16 %v421, %v412
  %v530 = vpack.c.b16 %v422, %v413
  %v531 = vpack.c.b16 %v423, %v414
  %v532 = vpack.c.b16 %v424, %v415
  %v533 = vpack.c.b16 %v425, %v416
  %v534 = vpack.c.b16 %v435, %v426
  %v535 = vpack.c.b16 %v436, %v427
  %v536 = vpack.c.b16 %v437, %v428
  %v537 = vpack.c.b16 %v438, %v429
  %v538 = vpack.c.b16 %v439, %v430
  %v539 = vpack.c.b16 %v440, %v431
  %v540 = vpack.c.b16 %v441, %v432
  %v541 = vpack.c.b16 %v442, %v433
  %v542 = vpack.c.b16 %v443, %v434
  %v543 = vpack.c.b16 %v453, %v444
  %v544 = vpack.c.b16 %v454, %v445
  %v545 = vpack.c.b16 %v455, %v446
  %v546 = vpack.c.b16 %v456, %v447
  %v547 = vpack.c.b16 %v457, %v448
  %v548 = vpack.c.b16 %v458, %v449
  %v549 = vpack.c.b16 %v459, %v450
  %v550 = vpack.c.b16 %v460, %v451
  %v551 = vpack.c.b16 %v461, %v452
  %v552 = vpack.c.b16 %v471, %v462
  %v553 = vpack.c.b16 %v472, %v463
  %v554 = vpack.c.b16 %v473, %v464
  %v555 = vpack.c.b16 %v474, %v465
  %v556 = vpack.c.b16 %v475, %v466
  %v557 = vpack.c.b16 %v476, %v467
  %v558 = vpack.c.b16 %v477, %v468
  %v559 = vpack.c.b16 %v478, %v469
  %v560 = vpack.c.b16 %v479, %v470
  %v561 = vpack.c.b16 %v489, %v480
  %v562 = vpack.c.b16 %v490, %v481
  %v563 = vpack.c.b16 %v491, %v482
  %v564 = vpack.c.b16 %v492, %v483
  %v565 = vpack.c.b16 %v493, %v484
  %v566 = vpack.c.b16 %v494, %v485
  %v567 = vpack.c.b16 %v495, %v486
  %v568 = vpack.c.b16 %v496, %v487
  %v569 = vpack.c.b16 %v497, %v488
  %v786 = vunpack.c.l.b16 %v130
  %v787 = vunpack.c.l.b16 %v131
  %v788 = vunpack.c.l.b16 %v132
  %v789 = vunpack.c.l.b16 %v133
  %v790 = vunpack.c.l.b16 %v134
  %v791 = vunpack.c.l.b16 %v135
  %v792 = vunpack.c.l.b16 %v136
  %v793 = vunpack.c.l.b16 %v137
  %v794 = vunpack.c.l.b16 %v138
  %v795 = vunpack.c.l.b16 %v139
  %v796 = vunpack.c.l.b16 %v140
  %v797 = vunpack.c.l.b16 %v141
  %v798 = vunpack.c.l.b16 %v142
  %v799 = vunpack.c.l.b16 %v143
  %v800 = vunpack.c.l.b16 %v144
  %v801 = vunpack.c.l.b16 %v145
  %v802 = vunpack.c.l.b16 %v146
  %v803 = vunpack.c.l.b16 %v147
  %v804 = vunpack.c.l.b16 %v148
  %v805 = vunpack.c.l.b16 %v149
  %v806 = vunpack.c.l.b16 %v150
  %v807 = vunpack.c.l.b16 %v151
  %v808 = vunpack.c.l.b16 %v152
  %v809 = vunpack.c.l.b16 %v153
  %v810 = vunpack.c.l.b16 %v154
  %v811 = vunpack.c.l.b16 %v155
  %v812 = vunpack.c.l.b16 %v156
  %v813 = vunpack.c.l.b16 %v157
  %v814 = vunpack.c.l.b16 %v158
  %v815 = vunpack.c.l.b16 %v159
  %v816 = vunpack.c.l.b16 %v160
  %v817 = vunpack.c.l.b16 %v161
  %v818 = vunpack.c.l.b16 %v162
  %v819 = vunpack.c.l.b16 %v163
  %v820 = vunpack.c.l.b16 %v164
  %v821 = vunpack.c.l.b16 %v165
  %v822 = vunpack.c.l.b16 %v166
  %v823 = vunpack.c.l.b16 %v167
  %v824 = vunpack.c.l.b16 %v168
  %v825 = vunpack.c.l.b16 %v169
  %v826 = vunpack.c.l.b16 %v170
  %v827 = vunpack.c.l.b16 %v171
  %v828 = vunpack.c.l.b16 %v172
  %v829 = vunpack.c.l.b16 %v173
  %v830 = vunpack.c.l.b16 %v174
  %v831 = vunpack.c.l.b16 %v175
  %v832 = vunpack.c.l.b16 %v176
  %v833 = vunpack.c.l.b16 %v177
  %v834 = vunpack.c.l.b16 %v178
  %v835 = vunpack.c.l.b16 %v179
  %v836 = vunpack.c.l.b16 %v180
  %v837 = vunpack.c.l.b16 %v181
  %v838 = vunpack.c.l.b16 %v182
  %v839 = vunpack.c.l.b16 %v183
  %v840 = vunpack.c.l.b16 %v184
  %v841 = vunpack.c.l.b16 %v185
  %v842 = vunpack.c.l.b16 %v186
  %v843 = vunpack.c.l.b16 %v187
  %v844 = vunpack.c.l.b16 %v188
  %v845 = vunpack.c.l.b16 %v189
  %v846 = vunpack.c.l.b16 %v190
  %v847 = vunpack.c.l.b16 %v191
  %v848 = vunpack.c.l.b16 %v192
  %v849 = vunpack.c.l.b16 %v193
  %v850 = vunpack.c.l.b16 %v194
  %v851 = vunpack.c.l.b16 %v195
  %v852 = vunpack.c.l.b16 %v196
  %v853 = vunpack.c.l.b16 %v197
  %v854 = vunpack.c.l.b16 %v198
  %v855 = vunpack.c.l.b16 %v199
  %v856 = vunpack.c.l.b16 %v200
  %v857 = vunpack.c.l.b16 %v201
  %v858 = vunpack.c.l.b16 %v202
  %v859 = vunpack.c.l.b16 %v203
  %v860 = vunpack.c.l.b16 %v204
  %v861 = vunpack.c.l.b16 %v205
  %v862 = vunpack.c.l.b16 %v206
  %v863 = vunpack.c.l.b16 %v207
  %v864 = vunpack.c.l.b16 %v208
  %v865 = vunpack.c.l.b16 %v209
  %v866 = vunpack.c.l.b16 %v210
  %v867 = vunpack.c.l.b16 %v211
  %v868 = vunpack.c.l.b16 %v212
  %v869 = vunpack.c.l.b16 %v213
  %v870 = vunpack.c.l.b16 %v214
  %v871 = vunpack.c.l.b16 %v215
  %v872 = vunpack.c.l.b16 %v216
  %v873 = vunpack.c.l.b16 %v217
  %v874 = vunpack.c.l.b16 %v218
  %v875 = vunpack.c.l.b16 %v219
  %v876 = vunpack.c.l.b16 %v220
  %v877 = vunpack.c.l.b16 %v221
  %v878 = vunpack.c.l.b16 %v222
  %v879 = vunpack.c.l.b16 %v223
  %v880 = vunpack.c.l.b16 %v224
  %v881 = vunpack.c.l.b16 %v225
  %v882 = vunpack.c.l.b16 %v226
  %v883 = vunpack.c.l.b16 %v227
  %v884 = vunpack.c.l.b16 %v228
  %v885 = vunpack.c.l.b16 %v229
  %v886 = vunpack.c.l.b16 %v230
  %v887 = vunpack.c.l.b16 %v231
  %v888 = vunpack.c.l.b16 %v232
  %v889 = vunpack.c.l.b16 %v233
  %v890 = vunpack.c.l.b16 %v234
  %v891 = vunpack.c.l.b16 %v235
  %v892 = vunpack.c.l.b16 %v236
  %v893 = vunpack.c.l.b16 %v237
  %v894 = vunpack.c.l.b16 %v238
  %v895 = vunpack.c.l.b16 %v239
  %v896 = vunpack.c.l.b16 %v240
  %v897 = vunpack.c.l.b16 %v241
  %v898 = vunpack.c.l.b16 %v242
  %v899 = vunpack.c.l.b16 %v243
  %v900 = vunpack.c.l.b16 %v244
  %v901 = vunpack.c.l.b16 %v245
  %v902 = vunpack.c.l.b16 %v246
  %v903 = vunpack.c.l.b16 %v247
  %v904 = vunpack.c.l.b16 %v248
  %v905 = vunpack.c.l.b16 %v249
  %v906 = vunpack.c.l.b16 %v250
  %v907 = vunpack.c.l.b16 %v251
  %v908 = vunpack.c.l.b16 %v252
  %v909 = vunpack.c.l.b16 %v253
  %v910 = vunpack.c.l.b16 %v254
  %v911 = vunpack.c.l.b16 %v255
  %v912 = vunpack.c.l.b16 %v256
  %v913 = vunpack.c.l.b16 %v257
  %v914 = vunpack.c.l.b16 %v258
  %v915 = vunpack.c.l.b16 %v259
  %v916 = vunpack.c.l.b16 %v260
  %v917 = vunpack.c.l.b16 %v261
  %v918 = vunpack.c.l.b16 %v262
  %v919 = vunpack.c.l.b16 %v263
  %v920 = vunpack.c.l.b16 %v264
  %v921 = vunpack.c.l.b16 %v265
  %v922 = vunpack.c.l.b16 %v266
  %v923 = vunpack.c.l.b16 %v267
  %v924 = vunpack.c.l.b16 %v268
  %v925 = vunpack.c.l.b16 %v269
  %v926 = vunpack.c.l.b16 %v270
  %v927 = vunpack.c.l.b16 %v271
  %v928 = vunpack.c.l.b16 %v272
  %v929 = vunpack.c.l.b16 %v273
  %v930 = vpack.c.b16 %v787, %v786
  %v931 = vpack.c.b16 %v789, %v788
  %v932 = vpack.c.b16 %v791, %v790
  %v933 = vpack.c.b16 %v793, %v792
  %v934 = vpack.c.b16 %v795, %v794
  %v935 = vpack.c.b16 %v797, %v796
  %v936 = vpack.c.b16 %v799, %v798
  %v937 = vpack.c.b16 %v801, %v800
  %v938 = vpack.c.b16 %v803, %v802
  %v939 = vpack.c.b16 %v805, %v804
  %v940 = vpack.c.b16 %v807, %v806
  %v941 = vpack.c.b16 %v809, %v808
  %v942 = vpack.c.b16 %v811, %v810
  %v943 = vpack.c.b16 %v813, %v812
  %v944 = vpack.c.b16 %v815, %v814
  %v945 = vpack.c.b16 %v817, %v816
  %v946 = vpack.c.b16 %v819, %v818
  %v947 = vpack.c.b16 %v821, %v820
  %v948 = vpack.c.b16 %v823, %v822
  %v949 = vpack.c.b16 %v825, %v824
  %v950 = vpack.c.b16 %v827, %v826
  %v951 = vpack.c.b16 %v829, %v828
  %v952 = vpack.c.b16 %v831, %v830
  %v953 = vpack.c.b16 %v833, %v832
  %v954 = vpack.c.b16 %v835, %v834
  %v955 = vpack.c.b16 %v837, %v836
  %v956 = vpack.c.b16 %v839, %v838
  %v957 = vpack.c.b16 %v841, %v840
  %v958 = vpack.c.b16 %v843, %v842
  %v959 = vpack.c.b16 %v845, %v844
  %v960 = vpack.c.b16 %v847, %v846
  %v961 = vpack.c.b16 %v849, %v848
  %v962 = vpack.c.b16 %v851, %v850
  %v963 = vpack.c.b16 %v853, %v852
  %v964 = vpack.c.b16 %v855, %v854
  %v965 = vpack.c.b16 %v857, %v856
  %v966 = vpack.c.b16 %v859, %v858
  %v967 = vpack.c.b16 %v861, %v860
  %v968 = vpack.c.b16 %v863, %v862
  %v969 = vpack.c.b16 %v865, %v864
  %v970 = vpack.c.b16 %v867, %v866
  %v971 = vpack.c.b16 %v869, %v868
  %v972 = vpack.c.b16 %v871, %v870
  %v973 = vpack.c.b16 %v873, %v872
  %v974 = vpack.c.b16 %v875, %v874
  %v975 = vpack.c.b16 %v877, %v876
  %v976 = vpack.c.b16 %v879, %v878
  %v977 = vpack.c.b16 %v881, %v880
  %v978 = vpack.c.b16 %v883, %v882
  %v979 = vpack.c.b16 %v885, %v884
  %v980 = vpack.c.b16 %v887, %v886
  %v981 = vpack.c.b16 %v889, %v888
  %v982 = vpack.c.b16 %v891, %v890
  %v983 = vpack.c.b16 %v893, %v892
  %v984 = vpack.c.b16 %v895, %v894
  %v985 = vpack.c.b16 %v897, %v896
  %v986 = vpack.c.b16 %v899, %v898
  %v987 = vpack.c.b16 %v901, %v900
  %v988 = vpack.c.b16 %v903, %v902
  %v989 = vpack.c.b16 %v905, %v904
  %v990 = vpack.c.b16 %v907, %v906
  %v991 = vpack.c.b16 %v909, %v908
  %v992 = vpack.c.b16 %v911, %v910
  %v993 = vpack.c.b16 %v913, %v912
  %v994 = vpack.c.b16 %v915, %v914
  %v995 = vpack.c.b16 %v917, %v916
  %v996 = vpack.c.b16 %v919, %v918
  %v997 = vpack.c.b16 %v921, %v920
  %v998 = vpack.c.b16 %v923, %v922
  %v999 = vpack.c.b16 %v925, %v924
  %v1000 = vpack.c.b16 %v927, %v926
  %v1001 = vpack.c.b16 %v929, %v928
  %1074 = vmatpush.bf16.msra.mxu0 %v937
  %1075 = vmatpush.bf16.msra.mxu0 %v936
  %1076 = vmatpush.bf16.msra.mxu0 %v935
  %1077 = vmatpush.bf16.msra.mxu0 %v934
  %1078 = vmatpush.bf16.msra.mxu0 %v933
  %1079 = vmatpush.bf16.msra.mxu0 %v932
  %1080 = vmatpush.bf16.msra.mxu0 %v931
  %1081 = vmatpush.bf16.msra.mxu0 %v930
  %1082 = vmatmul.bf16.gmra.mxu0 %v498
  %v1083 = vpop.f32.mrf.mxu0
  %v1084 = vadd.f32 0.0, %v1083
  %v1085 = vpop.f32.mrf.mxu0
  %v1086 = vadd.f32 0.0, %v1085
  %1087 = vmatmul.bf16.gmra.mxu0 %v507
  %v1088 = vpop.f32.mrf.mxu0
  %v1089 = vadd.f32 0.0, %v1088
  %v1090 = vpop.f32.mrf.mxu0
  %v1091 = vadd.f32 0.0, %v1090
  %1092 = vmatmul.bf16.gmra.mxu0 %v516
  %v1093 = vpop.f32.mrf.mxu0
  %v1094 = vadd.f32 0.0, %v1093
  %v1095 = vpop.f32.mrf.mxu0
  %v1096 = vadd.f32 0.0, %v1095
  %1097 = vmatmul.bf16.gmra.mxu0 %v525
  %v1098 = vpop.f32.mrf.mxu0
  %v1099 = vadd.f32 0.0, %v1098
  %v1100 = vpop.f32.mrf.mxu0
  %v1101 = vadd.f32 0.0, %v1100
  %1102 = vmatmul.bf16.gmra.mxu0 %v534
  %v1103 = vpop.f32.mrf.mxu0
  %v1104 = vadd.f32 0.0, %v1103
  %v1105 = vpop.f32.mrf.mxu0
  %v1106 = vadd.f32 0.0, %v1105
  %1107 = vmatmul.bf16.gmra.mxu0 %v543
  %v1108 = vpop.f32.mrf.mxu0
  %v1109 = vadd.f32 0.0, %v1108
  %v1110 = vpop.f32.mrf.mxu0
  %v1111 = vadd.f32 0.0, %v1110
  %1112 = vmatmul.bf16.gmra.mxu0 %v552
  %v1113 = vpop.f32.mrf.mxu0
  %v1114 = vadd.f32 0.0, %v1113
  %v1115 = vpop.f32.mrf.mxu0
  %v1116 = vadd.f32 0.0, %v1115
  %1117 = vmatmul.bf16.gmra.mxu0 %v561
  %v1118 = vpop.f32.mrf.mxu0
  %v1119 = vadd.f32 0.0, %v1118
  %v1120 = vpop.f32.mrf.mxu0
  %v1121 = vadd.f32 0.0, %v1120
  %1122 = vdwg.mxu0
  %1123 = vmatpush.bf16.msra.mxu0 %v945
  %1124 = vmatpush.bf16.msra.mxu0 %v944
  %1125 = vmatpush.bf16.msra.mxu0 %v943
  %1126 = vmatpush.bf16.msra.mxu0 %v942
  %1127 = vmatpush.bf16.msra.mxu0 %v941
  %1128 = vmatpush.bf16.msra.mxu0 %v940
  %1129 = vmatpush.bf16.msra.mxu0 %v939
  %1130 = vmatpush.bf16.msra.mxu0 %v938
  %1131 = vmatmul.bf16.gmra.mxu0 %v499
  %v1132 = vpop.f32.mrf.mxu0
  %v1133 = vadd.f32 %v1084, %v1132
  %v1134 = vpop.f32.mrf.mxu0
  %v1135 = vadd.f32 %v1086, %v1134
  %1136 = vmatmul.bf16.gmra.mxu0 %v508
  %v1137 = vpop.f32.mrf.mxu0
  %v1138 = vadd.f32 %v1089, %v1137
  %v1139 = vpop.f32.mrf.mxu0
  %v1140 = vadd.f32 %v1091, %v1139
  %1141 = vmatmul.bf16.gmra.mxu0 %v517
  %v1142 = vpop.f32.mrf.mxu0
  %v1143 = vadd.f32 %v1094, %v1142
  %v1144 = vpop.f32.mrf.mxu0
  %v1145 = vadd.f32 %v1096, %v1144
  %1146 = vmatmul.bf16.gmra.mxu0 %v526
  %v1147 = vpop.f32.mrf.mxu0
  %v1148 = vadd.f32 %v1099, %v1147
  %v1149 = vpop.f32.mrf.mxu0
  %v1150 = vadd.f32 %v1101, %v1149
  %1151 = vmatmul.bf16.gmra.mxu0 %v535
  %v1152 = vpop.f32.mrf.mxu0
  %v1153 = vadd.f32 %v1104, %v1152
  %v1154 = vpop.f32.mrf.mxu0
  %v1155 = vadd.f32 %v1106, %v1154
  %1156 = vmatmul.bf16.gmra.mxu0 %v544
  %v1157 = vpop.f32.mrf.mxu0
  %v1158 = vadd.f32 %v1109, %v1157
  %v1159 = vpop.f32.mrf.mxu0
  %v1160 = vadd.f32 %v1111, %v1159
  %1161 = vmatmul.bf16.gmra.mxu0 %v553
  %v1162 = vpop.f32.mrf.mxu0
  %v1163 = vadd.f32 %v1114, %v1162
  %v1164 = vpop.f32.mrf.mxu0
  %v1165 = vadd.f32 %v1116, %v1164
  %1166 = vmatmul.bf16.gmra.mxu0 %v562
  %v1167 = vpop.f32.mrf.mxu0
  %v1168 = vadd.f32 %v1119, %v1167
  %v1169 = vpop.f32.mrf.mxu0
  %v1170 = vadd.f32 %v1121, %v1169
  %1171 = vdwg.mxu0
  %1172 = vmatpush.bf16.msra.mxu0 %v953
  %1173 = vmatpush.bf16.msra.mxu0 %v952
  %1174 = vmatpush.bf16.msra.mxu0 %v951
  %1175 = vmatpush.bf16.msra.mxu0 %v950
  %1176 = vmatpush.bf16.msra.mxu0 %v949
  %1177 = vmatpush.bf16.msra.mxu0 %v948
  %1178 = vmatpush.bf16.msra.mxu0 %v947
  %1179 = vmatpush.bf16.msra.mxu0 %v946
  %1180 = vmatmul.bf16.gmra.mxu0 %v500
  %v1181 = vpop.f32.mrf.mxu0
  %v1182 = vadd.f32 %v1133, %v1181
  %v1183 = vpop.f32.mrf.mxu0
  %v1184 = vadd.f32 %v1135, %v1183
  %1185 = vmatmul.bf16.gmra.mxu0 %v509
  %v1186 = vpop.f32.mrf.mxu0
  %v1187 = vadd.f32 %v1138, %v1186
  %v1188 = vpop.f32.mrf.mxu0
  %v1189 = vadd.f32 %v1140, %v1188
  %1190 = vmatmul.bf16.gmra.mxu0 %v518
  %v1191 = vpop.f32.mrf.mxu0
  %v1192 = vadd.f32 %v1143, %v1191
  %v1193 = vpop.f32.mrf.mxu0
  %v1194 = vadd.f32 %v1145, %v1193
  %1195 = vmatmul.bf16.gmra.mxu0 %v527
  %v1196 = vpop.f32.mrf.mxu0
  %v1197 = vadd.f32 %v1148, %v1196
  %v1198 = vpop.f32.mrf.mxu0
  %v1199 = vadd.f32 %v1150, %v1198
  %1200 = vmatmul.bf16.gmra.mxu0 %v536
  %v1201 = vpop.f32.mrf.mxu0
  %v1202 = vadd.f32 %v1153, %v1201
  %v1203 = vpop.f32.mrf.mxu0
  %v1204 = vadd.f32 %v1155, %v1203
  %1205 = vmatmul.bf16.gmra.mxu0 %v545
  %v1206 = vpop.f32.mrf.mxu0
  %v1207 = vadd.f32 %v1158, %v1206
  %v1208 = vpop.f32.mrf.mxu0
  %v1209 = vadd.f32 %v1160, %v1208
  %1210 = vmatmul.bf16.gmra.mxu0 %v554
  %v1211 = vpop.f32.mrf.mxu0
  %v1212 = vadd.f32 %v1163, %v1211
  %v1213 = vpop.f32.mrf.mxu0
  %v1214 = vadd.f32 %v1165, %v1213
  %1215 = vmatmul.bf16.gmra.mxu0 %v563
  %v1216 = vpop.f32.mrf.mxu0
  %v1217 = vadd.f32 %v1168, %v1216
  %v1218 = vpop.f32.mrf.mxu0
  %v1219 = vadd.f32 %v1170, %v1218
  %1220 = vdwg.mxu0
  %1221 = vmatpush.bf16.msra.mxu0 %v961
  %1222 = vmatpush.bf16.msra.mxu0 %v960
  %1223 = vmatpush.bf16.msra.mxu0 %v959
  %1224 = vmatpush.bf16.msra.mxu0 %v958
  %1225 = vmatpush.bf16.msra.mxu0 %v957
  %1226 = vmatpush.bf16.msra.mxu0 %v956
  %1227 = vmatpush.bf16.msra.mxu0 %v955
  %1228 = vmatpush.bf16.msra.mxu0 %v954
  %1229 = vmatmul.bf16.gmra.mxu0 %v501
  %v1230 = vpop.f32.mrf.mxu0
  %v1231 = vadd.f32 %v1182, %v1230
  %v1232 = vpop.f32.mrf.mxu0
  %v1233 = vadd.f32 %v1184, %v1232
  %1234 = vmatmul.bf16.gmra.mxu0 %v510
  %v1235 = vpop.f32.mrf.mxu0
  %v1236 = vadd.f32 %v1187, %v1235
  %v1237 = vpop.f32.mrf.mxu0
  %v1238 = vadd.f32 %v1189, %v1237
  %1239 = vmatmul.bf16.gmra.mxu0 %v519
  %v1240 = vpop.f32.mrf.mxu0
  %v1241 = vadd.f32 %v1192, %v1240
  %v1242 = vpop.f32.mrf.mxu0
  %v1243 = vadd.f32 %v1194, %v1242
  %1244 = vmatmul.bf16.gmra.mxu0 %v528
  %v1245 = vpop.f32.mrf.mxu0
  %v1246 = vadd.f32 %v1197, %v1245
  %v1247 = vpop.f32.mrf.mxu0
  %v1248 = vadd.f32 %v1199, %v1247
  %1249 = vmatmul.bf16.gmra.mxu0 %v537
  %v1250 = vpop.f32.mrf.mxu0
  %v1251 = vadd.f32 %v1202, %v1250
  %v1252 = vpop.f32.mrf.mxu0
  %v1253 = vadd.f32 %v1204, %v1252
  %1254 = vmatmul.bf16.gmra.mxu0 %v546
  %v1255 = vpop.f32.mrf.mxu0
  %v1256 = vadd.f32 %v1207, %v1255
  %v1257 = vpop.f32.mrf.mxu0
  %v1258 = vadd.f32 %v1209, %v1257
  %1259 = vmatmul.bf16.gmra.mxu0 %v555
  %v1260 = vpop.f32.mrf.mxu0
  %v1261 = vadd.f32 %v1212, %v1260
  %v1262 = vpop.f32.mrf.mxu0
  %v1263 = vadd.f32 %v1214, %v1262
  %1264 = vmatmul.bf16.gmra.mxu0 %v564
  %v1265 = vpop.f32.mrf.mxu0
  %v1266 = vadd.f32 %v1217, %v1265
  %v1267 = vpop.f32.mrf.mxu0
  %v1268 = vadd.f32 %v1219, %v1267
  %1269 = vdwg.mxu0
  %1270 = vmatpush.bf16.msra.mxu0 %v969
  %1271 = vmatpush.bf16.msra.mxu0 %v968
  %1272 = vmatpush.bf16.msra.mxu0 %v967
  %1273 = vmatpush.bf16.msra.mxu0 %v966
  %1274 = vmatpush.bf16.msra.mxu0 %v965
  %1275 = vmatpush.bf16.msra.mxu0 %v964
  %1276 = vmatpush.bf16.msra.mxu0 %v963
  %1277 = vmatpush.bf16.msra.mxu0 %v962
  %1278 = vmatmul.bf16.gmra.mxu0 %v502
  %v1279 = vpop.f32.mrf.mxu0
  %v1280 = vadd.f32 %v1231, %v1279
  %v1281 = vpop.f32.mrf.mxu0
  %v1282 = vadd.f32 %v1233, %v1281
  %1283 = vmatmul.bf16.gmra.mxu0 %v511
  %v1284 = vpop.f32.mrf.mxu0
  %v1285 = vadd.f32 %v1236, %v1284
  %v1286 = vpop.f32.mrf.mxu0
  %v1287 = vadd.f32 %v1238, %v1286
  %1288 = vmatmul.bf16.gmra.mxu0 %v520
  %v1289 = vpop.f32.mrf.mxu0
  %v1290 = vadd.f32 %v1241, %v1289
  %v1291 = vpop.f32.mrf.mxu0
  %v1292 = vadd.f32 %v1243, %v1291
  %1293 = vmatmul.bf16.gmra.mxu0 %v529
  %v1294 = vpop.f32.mrf.mxu0
  %v1295 = vadd.f32 %v1246, %v1294
  %v1296 = vpop.f32.mrf.mxu0
  %v1297 = vadd.f32 %v1248, %v1296
  %1298 = vmatmul.bf16.gmra.mxu0 %v538
  %v1299 = vpop.f32.mrf.mxu0
  %v1300 = vadd.f32 %v1251, %v1299
  %v1301 = vpop.f32.mrf.mxu0
  %v1302 = vadd.f32 %v1253, %v1301
  %1303 = vmatmul.bf16.gmra.mxu0 %v547
  %v1304 = vpop.f32.mrf.mxu0
  %v1305 = vadd.f32 %v1256, %v1304
  %v1306 = vpop.f32.mrf.mxu0
  %v1307 = vadd.f32 %v1258, %v1306
  %1308 = vmatmul.bf16.gmra.mxu0 %v556
  %v1309 = vpop.f32.mrf.mxu0
  %v1310 = vadd.f32 %v1261, %v1309
  %v1311 = vpop.f32.mrf.mxu0
  %v1312 = vadd.f32 %v1263, %v1311
  %1313 = vmatmul.bf16.gmra.mxu0 %v565
  %v1314 = vpop.f32.mrf.mxu0
  %v1315 = vadd.f32 %v1266, %v1314
  %v1316 = vpop.f32.mrf.mxu0
  %v1317 = vadd.f32 %v1268, %v1316
  %1318 = vdwg.mxu0
  %1319 = vmatpush.bf16.msra.mxu0 %v977
  %1320 = vmatpush.bf16.msra.mxu0 %v976
  %1321 = vmatpush.bf16.msra.mxu0 %v975
  %1322 = vmatpush.bf16.msra.mxu0 %v974
  %1323 = vmatpush.bf16.msra.mxu0 %v973
  %1324 = vmatpush.bf16.msra.mxu0 %v972
  %1325 = vmatpush.bf16.msra.mxu0 %v971
  %1326 = vmatpush.bf16.msra.mxu0 %v970
  %1327 = vmatmul.bf16.gmra.mxu0 %v503
  %v1328 = vpop.f32.mrf.mxu0
  %v1329 = vadd.f32 %v1280, %v1328
  %v1330 = vpop.f32.mrf.mxu0
  %v1331 = vadd.f32 %v1282, %v1330
  %1332 = vmatmul.bf16.gmra.mxu0 %v512
  %v1333 = vpop.f32.mrf.mxu0
  %v1334 = vadd.f32 %v1285, %v1333
  %v1335 = vpop.f32.mrf.mxu0
  %v1336 = vadd.f32 %v1287, %v1335
  %1337 = vmatmul.bf16.gmra.mxu0 %v521
  %v1338 = vpop.f32.mrf.mxu0
  %v1339 = vadd.f32 %v1290, %v1338
  %v1340 = vpop.f32.mrf.mxu0
  %v1341 = vadd.f32 %v1292, %v1340
  %1342 = vmatmul.bf16.gmra.mxu0 %v530
  %v1343 = vpop.f32.mrf.mxu0
  %v1344 = vadd.f32 %v1295, %v1343
  %v1345 = vpop.f32.mrf.mxu0
  %v1346 = vadd.f32 %v1297, %v1345
  %1347 = vmatmul.bf16.gmra.mxu0 %v539
  %v1348 = vpop.f32.mrf.mxu0
  %v1349 = vadd.f32 %v1300, %v1348
  %v1350 = vpop.f32.mrf.mxu0
  %v1351 = vadd.f32 %v1302, %v1350
  %1352 = vmatmul.bf16.gmra.mxu0 %v548
  %v1353 = vpop.f32.mrf.mxu0
  %v1354 = vadd.f32 %v1305, %v1353
  %v1355 = vpop.f32.mrf.mxu0
  %v1356 = vadd.f32 %v1307, %v1355
  %1357 = vmatmul.bf16.gmra.mxu0 %v557
  %v1358 = vpop.f32.mrf.mxu0
  %v1359 = vadd.f32 %v1310, %v1358
  %v1360 = vpop.f32.mrf.mxu0
  %v1361 = vadd.f32 %v1312, %v1360
  %1362 = vmatmul.bf16.gmra.mxu0 %v566
  %v1363 = vpop.f32.mrf.mxu0
  %v1364 = vadd.f32 %v1315, %v1363
  %v1365 = vpop.f32.mrf.mxu0
  %v1366 = vadd.f32 %v1317, %v1365
  %1367 = vdwg.mxu0
  %1368 = vmatpush.bf16.msra.mxu0 %v985
  %1369 = vmatpush.bf16.msra.mxu0 %v984
  %1370 = vmatpush.bf16.msra.mxu0 %v983
  %1371 = vmatpush.bf16.msra.mxu0 %v982
  %1372 = vmatpush.bf16.msra.mxu0 %v981
  %1373 = vmatpush.bf16.msra.mxu0 %v980
  %1374 = vmatpush.bf16.msra.mxu0 %v979
  %1375 = vmatpush.bf16.msra.mxu0 %v978
  %1376 = vmatmul.bf16.gmra.mxu0 %v504
  %v1377 = vpop.f32.mrf.mxu0
  %v1378 = vadd.f32 %v1329, %v1377
  %v1379 = vpop.f32.mrf.mxu0
  %v1380 = vadd.f32 %v1331, %v1379
  %1381 = vmatmul.bf16.gmra.mxu0 %v513
  %v1382 = vpop.f32.mrf.mxu0
  %v1383 = vadd.f32 %v1334, %v1382
  %v1384 = vpop.f32.mrf.mxu0
  %v1385 = vadd.f32 %v1336, %v1384
  %1386 = vmatmul.bf16.gmra.mxu0 %v522
  %v1387 = vpop.f32.mrf.mxu0
  %v1388 = vadd.f32 %v1339, %v1387
  %v1389 = vpop.f32.mrf.mxu0
  %v1390 = vadd.f32 %v1341, %v1389
  %1391 = vmatmul.bf16.gmra.mxu0 %v531
  %v1392 = vpop.f32.mrf.mxu0
  %v1393 = vadd.f32 %v1344, %v1392
  %v1394 = vpop.f32.mrf.mxu0
  %v1395 = vadd.f32 %v1346, %v1394
  %1396 = vmatmul.bf16.gmra.mxu0 %v540
  %v1397 = vpop.f32.mrf.mxu0
  %v1398 = vadd.f32 %v1349, %v1397
  %v1399 = vpop.f32.mrf.mxu0
  %v1400 = vadd.f32 %v1351, %v1399
  %1401 = vmatmul.bf16.gmra.mxu0 %v549
  %v1402 = vpop.f32.mrf.mxu0
  %v1403 = vadd.f32 %v1354, %v1402
  %v1404 = vpop.f32.mrf.mxu0
  %v1405 = vadd.f32 %v1356, %v1404
  %1406 = vmatmul.bf16.gmra.mxu0 %v558
  %v1407 = vpop.f32.mrf.mxu0
  %v1408 = vadd.f32 %v1359, %v1407
  %v1409 = vpop.f32.mrf.mxu0
  %v1410 = vadd.f32 %v1361, %v1409
  %1411 = vmatmul.bf16.gmra.mxu0 %v567
  %v1412 = vpop.f32.mrf.mxu0
  %v1413 = vadd.f32 %v1364, %v1412
  %v1414 = vpop.f32.mrf.mxu0
  %v1415 = vadd.f32 %v1366, %v1414
  %1416 = vdwg.mxu0
  %1417 = vmatpush.bf16.msra.mxu0 %v993
  %1418 = vmatpush.bf16.msra.mxu0 %v992
  %1419 = vmatpush.bf16.msra.mxu0 %v991
  %1420 = vmatpush.bf16.msra.mxu0 %v990
  %1421 = vmatpush.bf16.msra.mxu0 %v989
  %1422 = vmatpush.bf16.msra.mxu0 %v988
  %1423 = vmatpush.bf16.msra.mxu0 %v987
  %1424 = vmatpush.bf16.msra.mxu0 %v986
  %1425 = vmatmul.bf16.gmra.mxu0 %v505
  %v1426 = vpop.f32.mrf.mxu0
  %v1427 = vadd.f32 %v1378, %v1426
  %v1428 = vpop.f32.mrf.mxu0
  %v1429 = vadd.f32 %v1380, %v1428
  %1430 = vmatmul.bf16.gmra.mxu0 %v514
  %v1431 = vpop.f32.mrf.mxu0
  %v1432 = vadd.f32 %v1383, %v1431
  %v1433 = vpop.f32.mrf.mxu0
  %v1434 = vadd.f32 %v1385, %v1433
  %1435 = vmatmul.bf16.gmra.mxu0 %v523
  %v1436 = vpop.f32.mrf.mxu0
  %v1437 = vadd.f32 %v1388, %v1436
  %v1438 = vpop.f32.mrf.mxu0
  %v1439 = vadd.f32 %v1390, %v1438
  %1440 = vmatmul.bf16.gmra.mxu0 %v532
  %v1441 = vpop.f32.mrf.mxu0
  %v1442 = vadd.f32 %v1393, %v1441
  %v1443 = vpop.f32.mrf.mxu0
  %v1444 = vadd.f32 %v1395, %v1443
  %1445 = vmatmul.bf16.gmra.mxu0 %v541
  %v1446 = vpop.f32.mrf.mxu0
  %v1447 = vadd.f32 %v1398, %v1446
  %v1448 = vpop.f32.mrf.mxu0
  %v1449 = vadd.f32 %v1400, %v1448
  %1450 = vmatmul.bf16.gmra.mxu0 %v550
  %v1451 = vpop.f32.mrf.mxu0
  %v1452 = vadd.f32 %v1403, %v1451
  %v1453 = vpop.f32.mrf.mxu0
  %v1454 = vadd.f32 %v1405, %v1453
  %1455 = vmatmul.bf16.gmra.mxu0 %v559
  %v1456 = vpop.f32.mrf.mxu0
  %v1457 = vadd.f32 %v1408, %v1456
  %v1458 = vpop.f32.mrf.mxu0
  %v1459 = vadd.f32 %v1410, %v1458
  %1460 = vmatmul.bf16.gmra.mxu0 %v568
  %v1461 = vpop.f32.mrf.mxu0
  %v1462 = vadd.f32 %v1413, %v1461
  %v1463 = vpop.f32.mrf.mxu0
  %v1464 = vadd.f32 %v1415, %v1463
  %1465 = vdwg.mxu0
  %1466 = vmatpush.bf16.msra.mxu0 %v1001
  %1467 = vmatpush.bf16.msra.mxu0 %v1000
  %1468 = vmatpush.bf16.msra.mxu0 %v999
  %1469 = vmatpush.bf16.msra.mxu0 %v998
  %1470 = vmatpush.bf16.msra.mxu0 %v997
  %1471 = vmatpush.bf16.msra.mxu0 %v996
  %1472 = vmatpush.bf16.msra.mxu0 %v995
  %1473 = vmatpush.bf16.msra.mxu0 %v994
  %1474 = vmatmul.bf16.gmra.mxu0 %v506
  %v1475 = vpop.f32.mrf.mxu0
  %v1476 = vadd.f32 %v1427, %v1475
  %v1477 = vpop.f32.mrf.mxu0
  %v1478 = vadd.f32 %v1429, %v1477
  %1479 = vmatmul.bf16.gmra.mxu0 %v515
  %v1480 = vpop.f32.mrf.mxu0
  %v1481 = vadd.f32 %v1432, %v1480
  %v1482 = vpop.f32.mrf.mxu0
  %v1483 = vadd.f32 %v1434, %v1482
  %1484 = vmatmul.bf16.gmra.mxu0 %v524
  %v1485 = vpop.f32.mrf.mxu0
  %v1486 = vadd.f32 %v1437, %v1485
  %v1487 = vpop.f32.mrf.mxu0
  %v1488 = vadd.f32 %v1439, %v1487
  %1489 = vmatmul.bf16.gmra.mxu0 %v533
  %v1490 = vpop.f32.mrf.mxu0
  %v1491 = vadd.f32 %v1442, %v1490
  %v1492 = vpop.f32.mrf.mxu0
  %v1493 = vadd.f32 %v1444, %v1492
  %1494 = vmatmul.bf16.gmra.mxu0 %v542
  %v1495 = vpop.f32.mrf.mxu0
  %v1496 = vadd.f32 %v1447, %v1495
  %v1497 = vpop.f32.mrf.mxu0
  %v1498 = vadd.f32 %v1449, %v1497
  %1499 = vmatmul.bf16.gmra.mxu0 %v551
  %v1500 = vpop.f32.mrf.mxu0
  %v1501 = vadd.f32 %v1452, %v1500
  %v1502 = vpop.f32.mrf.mxu0
  %v1503 = vadd.f32 %v1454, %v1502
  %1504 = vmatmul.bf16.gmra.mxu0 %v560
  %v1505 = vpop.f32.mrf.mxu0
  %v1506 = vadd.f32 %v1457, %v1505
  %v1507 = vpop.f32.mrf.mxu0
  %v1508 = vadd.f32 %v1459, %v1507
  %1509 = vmatmul.bf16.gmra.mxu0 %v569
  %v1510 = vpop.f32.mrf.mxu0
  %v1511 = vadd.f32 %v1462, %v1510
  %v1512 = vpop.f32.mrf.mxu0
  %v1513 = vadd.f32 %v1464, %v1512
  %1514 = vdwg.mxu0
  %v1515 = vadd.f32 %v34, %v1476
  %v1516 = vadd.f32 %v35, %v1478
  %v1517 = vadd.f32 %v36, %v1481
  %v1518 = vadd.f32 %v37, %v1483
  %v1519 = vadd.f32 %v38, %v1486
  %v1520 = vadd.f32 %v39, %v1488
  %v1521 = vadd.f32 %v40, %v1491
  %v1522 = vadd.f32 %v41, %v1493
  %v1523 = vadd.f32 %v42, %v1496
  %v1524 = vadd.f32 %v43, %v1498
  %v1525 = vadd.f32 %v44, %v1501
  %v1526 = vadd.f32 %v45, %v1503
  %v1527 = vadd.f32 %v46, %v1506
  %v1528 = vadd.f32 %v47, %v1508
  %v1529 = vadd.f32 %v48, %v1511
  %v1530 = vadd.f32 %v49, %v1513
  %1531 = vst [vmem:[#allocation2] sm:$0xff] %v1515
  %1532 = vst [vmem:[#allocation2 + $0x8] sm:$0xff] %v1516
  %1533 = vst [vmem:[#allocation2 + $0x10] sm:$0xff] %v1517
  %1534 = vst [vmem:[#allocation2 + $0x18] sm:$0xff] %v1518
  %1535 = vst [vmem:[#allocation2 + $0x20] sm:$0xff] %v1519
  %1536 = vst [vmem:[#allocation2 + $0x28] sm:$0xff] %v1520
  %1537 = vst [vmem:[#allocation2 + $0x30] sm:$0xff] %v1521
  %1538 = vst [vmem:[#allocation2 + $0x38] sm:$0xff] %v1522
  %1539 = vst [vmem:[#allocation2 + $0x40] sm:$0xff] %v1523
  %1540 = vst [vmem:[#allocation2 + $0x48] sm:$0xff] %v1524
  %1541 = vst [vmem:[#allocation2 + $0x50] sm:$0xff] %v1525
  %1542 = vst [vmem:[#allocation2 + $0x58] sm:$0xff] %v1526
  %1543 = vst [vmem:[#allocation2 + $0x60] sm:$0xff] %v1527
  %1544 = vst [vmem:[#allocation2 + $0x68] sm:$0xff] %v1528
  %1545 = vst [vmem:[#allocation2 + $0x70] sm:$0xff] %v1529
  %1546 = vst [vmem:[#allocation2 + $0x78] sm:$0xff] %v1530
  // Predicated region
  $region18: #{_lambda_.21} parent=0 // pred_check
    %p1547 = pneg %p14
  $region19: #{_lambda_.21} parent=0 // pred_check_branch
    %1549 = sbr.rel (%p1547) target = $region21
  $region20: #{_lambda_.21} parent=0 // pred_region
    %v1550 = vld [vmem:[#allocation2] sm:$0xff]
    %v1551 = vld [vmem:[#allocation2 + $0x8] sm:$0xff]
    %v1552 = vld [vmem:[#allocation2 + $0x10] sm:$0xff]
    %v1553 = vld [vmem:[#allocation2 + $0x18] sm:$0xff]
    %v1554 = vld [vmem:[#allocation2 + $0x20] sm:$0xff]
    %v1555 = vld [vmem:[#allocation2 + $0x28] sm:$0xff]
    %v1556 = vld [vmem:[#allocation2 + $0x30] sm:$0xff]
    %v1557 = vld [vmem:[#allocation2 + $0x38] sm:$0xff]
    %v1558 = vld [vmem:[#allocation2 + $0x40] sm:$0xff]
    %v1559 = vld [vmem:[#allocation2 + $0x48] sm:$0xff]
    %v1560 = vld [vmem:[#allocation2 + $0x50] sm:$0xff]
    %v1561 = vld [vmem:[#allocation2 + $0x58] sm:$0xff]
    %v1562 = vld [vmem:[#allocation2 + $0x60] sm:$0xff]
    %v1563 = vld [vmem:[#allocation2 + $0x68] sm:$0xff]
    %v1564 = vld [vmem:[#allocation2 + $0x70] sm:$0xff]
    %v1565 = vld [vmem:[#allocation2 + $0x78] sm:$0xff]
    %v1566 = vld [vmem:[%s2] sm:$0x1]
    %v1568 = vperm.slane %v1566, 0
    %v1570 = vadd.f32 %v1550, %v1568
    %v1571 = vadd.f32 %v1551, %v1568
    %v1572 = vadd.f32 %v1552, %v1568
    %v1573 = vadd.f32 %v1553, %v1568
    %v1574 = vadd.f32 %v1554, %v1568
    %v1575 = vadd.f32 %v1555, %v1568
    %v1576 = vadd.f32 %v1556, %v1568
    %v1577 = vadd.f32 %v1557, %v1568
    %v1578 = vadd.f32 %v1558, %v1568
    %v1579 = vadd.f32 %v1559, %v1568
    %v1580 = vadd.f32 %v1560, %v1568
    %v1581 = vadd.f32 %v1561, %v1568
    %v1582 = vadd.f32 %v1562, %v1568
    %v1583 = vadd.f32 %v1563, %v1568
    %v1584 = vadd.f32 %v1564, %v1568
    %v1585 = vadd.f32 %v1565, %v1568
    %vm1586 = vcmp.gt.f32.partialorder %v1570, 0.0
    %vm1587 = vcmp.gt.f32.partialorder %v1571, 0.0
    %vm1588 = vcmp.gt.f32.partialorder %v1572, 0.0
    %vm1589 = vcmp.gt.f32.partialorder %v1573, 0.0
    %vm1590 = vcmp.gt.f32.partialorder %v1574, 0.0
    %vm1591 = vcmp.gt.f32.partialorder %v1575, 0.0
    %vm1592 = vcmp.gt.f32.partialorder %v1576, 0.0
    %vm1593 = vcmp.gt.f32.partialorder %v1577, 0.0
    %vm1594 = vcmp.gt.f32.partialorder %v1578, 0.0
    %vm1595 = vcmp.gt.f32.partialorder %v1579, 0.0
    %vm1596 = vcmp.gt.f32.partialorder %v1580, 0.0
    %vm1597 = vcmp.gt.f32.partialorder %v1581, 0.0
    %vm1598 = vcmp.gt.f32.partialorder %v1582, 0.0
    %vm1599 = vcmp.gt.f32.partialorder %v1583, 0.0
    %vm1600 = vcmp.gt.f32.partialorder %v1584, 0.0
    %vm1601 = vcmp.gt.f32.partialorder %v1585, 0.0
    %v1602 = vmul.f32 %v1570, 0.01
    %v1603 = vmul.f32 %v1571, 0.01
    %v1604 = vmul.f32 %v1572, 0.01
    %v1605 = vmul.f32 %v1573, 0.01
    %v1606 = vmul.f32 %v1574, 0.01
    %v1607 = vmul.f32 %v1575, 0.01
    %v1608 = vmul.f32 %v1576, 0.01
    %v1609 = vmul.f32 %v1577, 0.01
    %v1610 = vmul.f32 %v1578, 0.01
    %v1611 = vmul.f32 %v1579, 0.01
    %v1612 = vmul.f32 %v1580, 0.01
    %v1613 = vmul.f32 %v1581, 0.01
    %v1614 = vmul.f32 %v1582, 0.01
    %v1615 = vmul.f32 %v1583, 0.01
    %v1616 = vmul.f32 %v1584, 0.01
    %v1617 = vmul.f32 %v1585, 0.01
    %v1618 = vsel %vm1586, %v1570, %v1602
    %v1619 = vsel %vm1587, %v1571, %v1603
    %v1620 = vsel %vm1588, %v1572, %v1604
    %v1621 = vsel %vm1589, %v1573, %v1605
    %v1622 = vsel %vm1590, %v1574, %v1606
    %v1623 = vsel %vm1591, %v1575, %v1607
    %v1624 = vsel %vm1592, %v1576, %v1608
    %v1625 = vsel %vm1593, %v1577, %v1609
    %v1626 = vsel %vm1594, %v1578, %v1610
    %v1627 = vsel %vm1595, %v1579, %v1611
    %v1628 = vsel %vm1596, %v1580, %v1612
    %v1629 = vsel %vm1597, %v1581, %v1613
    %v1630 = vsel %vm1598, %v1582, %v1614
    %v1631 = vsel %vm1599, %v1583, %v1615
    %v1632 = vsel %vm1600, %v1584, %v1616
    %v1633 = vsel %vm1601, %v1585, %v1617
    %v1634 = vpack.c.bf16 %v1618, %v1618
    %v1635 = vpack.c.bf16 %v1619, %v1619
    %v1636 = vpack.c.bf16 %v1620, %v1620
    %v1637 = vpack.c.bf16 %v1621, %v1621
    %v1638 = vpack.c.bf16 %v1622, %v1622
    %v1639 = vpack.c.bf16 %v1623, %v1623
    %v1640 = vpack.c.bf16 %v1624, %v1624
    %v1641 = vpack.c.bf16 %v1625, %v1625
    %v1642 = vpack.c.bf16 %v1626, %v1626
    %v1643 = vpack.c.bf16 %v1627, %v1627
    %v1644 = vpack.c.bf16 %v1628, %v1628
    %v1645 = vpack.c.bf16 %v1629, %v1629
    %v1646 = vpack.c.bf16 %v1630, %v1630
    %v1647 = vpack.c.bf16 %v1631, %v1631
    %v1648 = vpack.c.bf16 %v1632, %v1632
    %v1649 = vpack.c.bf16 %v1633, %v1633
    %1650 = vst [vmem:[%s3] sm:$0xf] %v1634
    %1651 = vst [vmem:[%s3 + $0x4] sm:$0xf] %v1635
    %1652 = vst [vmem:[%s3 + $0x8] sm:$0xf] %v1636
    %1653 = vst [vmem:[%s3 + $0xc] sm:$0xf] %v1637
    %1654 = vst [vmem:[%s3 + $0x10] sm:$0xf] %v1638
    %1655 = vst [vmem:[%s3 + $0x14] sm:$0xf] %v1639
    %1656 = vst [vmem:[%s3 + $0x18] sm:$0xf] %v1640
    %1657 = vst [vmem:[%s3 + $0x1c] sm:$0xf] %v1641
    %1658 = vst [vmem:[%s3 + $0x20] sm:$0xf] %v1642
    %1659 = vst [vmem:[%s3 + $0x24] sm:$0xf] %v1643
    %1660 = vst [vmem:[%s3 + $0x28] sm:$0xf] %v1644
    %1661 = vst [vmem:[%s3 + $0x2c] sm:$0xf] %v1645
    %1662 = vst [vmem:[%s3 + $0x30] sm:$0xf] %v1646
    %1663 = vst [vmem:[%s3 + $0x34] sm:$0xf] %v1647
    %1664 = vst [vmem:[%s3 + $0x38] sm:$0xf] %v1648
    %1665 = vst [vmem:[%s3 + $0x3c] sm:$0xf] %v1649
  $region21: #{_lambda_.21} parent=0 // pred_fallthru
    _
  // Predicated region
  $region22: #{_lambda_.21} parent=0 // pred_check
    _
  $region23: #{_lambda_.21} parent=0 // pred_check_branch
    %1667 = sbr.rel (0) target = $region25
  $region24: #{_lambda_.21} parent=0 // pred_region
    _
  $region25: #{_lambda_.21} parent=0 // pred_fallthru
    _
  // Predicated region
  $region26: #{_lambda_.21} parent=0 // pred_check
    _
  $region27: #{_lambda_.21} parent=0 // pred_check_branch
    %1669 = sbr.rel (0) target = $region29
  $region28: #{_lambda_.21} parent=0 // pred_region
    _
  $region29: #{_lambda_.21} parent=0 // pred_fallthru
    _

// kernel: _lambda_.24
$region0: #{_lambda_.24}
  #allocation0 [shape = 'u32[]', space=smem, size = 0x4, offset = 0x4, fixed_abs, tag = 'smem constant byte address 0x4 - core index']
  #allocation1 [shape = 'u32[72,128]{1,0:T(1,128)}', space=vmem, size = 0x9000, scoped, tag = 'internal scratch']
  #allocation2 [shape = 'f32[128,128]{1,0:T(8,128)}', space=vmem, size = 0x10000, scoped, tag = 'scratch operand']
  %s0 = inlined_call_operand.vmem [shape: bf16[128,256], index: 0, kind: input, shape index: {}]
  %s1 = inlined_call_operand.vmem [shape: bf16[256,128], index: 1, kind: input, shape index: {}]
  %s2 = inlined_call_operand.vmem [shape: f32[1,128], index: 2, kind: input, shape index: {}]
  %s3 = inlined_call_operand.vmem [shape: bf16[128,128], index: 3, kind: output, shape index: {}]
  %s4 = sld [smem:[#allocation0]]
  $region30: #{_lambda_.24} parent=0
    _
  %s6 = ssub.s32 1, %s4
  %s7 = scalar_select 0, %s6, %s4
  // Predicated region
  $region2: #{_lambda_.24} parent=0 // pred_check
    _
  $region3: #{_lambda_.24} parent=0 // pred_check_branch
    %9 = sbr.rel (0) target = $region5
  $region4: #{_lambda_.24} parent=0 // pred_region
    _
  $region5: #{_lambda_.24} parent=0 // pred_fallthru
    _
  // Predicated region
  $region6: #{_lambda_.24} parent=0 // pred_check
    _
  $region7: #{_lambda_.24} parent=0 // pred_check_branch
    %11 = sbr.rel (0) target = $region9
  $region8: #{_lambda_.24} parent=0 // pred_region
    _
  $region9: #{_lambda_.24} parent=0 // pred_fallthru
    _
  // Predicated region
  $region10: #{_lambda_.24} parent=0 // pred_check
    _
  $region11: #{_lambda_.24} parent=0 // pred_check_branch
    %13 = sbr.rel (0) target = $region13
  $region12: #{_lambda_.24} parent=0 // pred_region
    _
  $region13: #{_lambda_.24} parent=0 // pred_fallthru
    _
  %p14 = scmp.eq.s32.totalorder 0, 0
  // Predicated region
  $region14: #{_lambda_.24} parent=0 // pred_check
    %p15 = pneg %p14
  $region15: #{_lambda_.24} parent=0 // pred_check_branch
    %17 = sbr.rel (%p15) target = $region17
  $region16: #{_lambda_.24} parent=0 // pred_region
    %18 = vst [vmem:[#allocation2] sm:$0xff] 0.0
    %19 = vst [vmem:[#allocation2 + $0x8] sm:$0xff] 0.0
    %20 = vst [vmem:[#allocation2 + $0x10] sm:$0xff] 0.0
    %21 = vst [vmem:[#allocation2 + $0x18] sm:$0xff] 0.0
    %22 = vst [vmem:[#allocation2 + $0x20] sm:$0xff] 0.0
    %23 = vst [vmem:[#allocation2 + $0x28] sm:$0xff] 0.0
    %24 = vst [vmem:[#allocation2 + $0x30] sm:$0xff] 0.0
    %25 = vst [vmem:[#allocation2 + $0x38] sm:$0xff] 0.0
    %26 = vst [vmem:[#allocation2 + $0x40] sm:$0xff] 0.0
    %27 = vst [vmem:[#allocation2 + $0x48] sm:$0xff] 0.0
    %28 = vst [vmem:[#allocation2 + $0x50] sm:$0xff] 0.0
    %29 = vst [vmem:[#allocation2 + $0x58] sm:$0xff] 0.0
    %30 = vst [vmem:[#allocation2 + $0x60] sm:$0xff] 0.0
    %31 = vst [vmem:[#allocation2 + $0x68] sm:$0xff] 0.0
    %32 = vst [vmem:[#allocation2 + $0x70] sm:$0xff] 0.0
    %33 = vst [vmem:[#allocation2 + $0x78] sm:$0xff] 0.0
  $region17: #{_lambda_.24} parent=0 // pred_fallthru
    _
  %v34 = vld [vmem:[#allocation2] sm:$0xff]
  %v35 = vld [vmem:[#allocation2 + $0x8] sm:$0xff]
  %v36 = vld [vmem:[#allocation2 + $0x10] sm:$0xff]
  %v37 = vld [vmem:[#allocation2 + $0x18] sm:$0xff]
  %v38 = vld [vmem:[#allocation2 + $0x20] sm:$0xff]
  %v39 = vld [vmem:[#allocation2 + $0x28] sm:$0xff]
  %v40 = vld [vmem:[#allocation2 + $0x30] sm:$0xff]
  %v41 = vld [vmem:[#allocation2 + $0x38] sm:$0xff]
  %v42 = vld [vmem:[#allocation2 + $0x40] sm:$0xff]
  %v43 = vld [vmem:[#allocation2 + $0x48] sm:$0xff]
  %v44 = vld [vmem:[#allocation2 + $0x50] sm:$0xff]
  %v45 = vld [vmem:[#allocation2 + $0x58] sm:$0xff]
  %v46 = vld [vmem:[#allocation2 + $0x60] sm:$0xff]
  %v47 = vld [vmem:[#allocation2 + $0x68] sm:$0xff]
  %v48 = vld [vmem:[#allocation2 + $0x70] sm:$0xff]
  %v49 = vld [vmem:[#allocation2 + $0x78] sm:$0xff]
  %v50 = vld [vmem:[%s0] sm:$0xff]
  %v51 = vld [vmem:[%s0 + $0x8] sm:$0xff]
  %v52 = vld [vmem:[%s0 + $0x10] sm:$0xff]
  %v53 = vld [vmem:[%s0 + $0x18] sm:$0xff]
  %v54 = vld [vmem:[%s0 + $0x20] sm:$0xff]
  %v55 = vld [vmem:[%s0 + $0x28] sm:$0xff]
  %v56 = vld [vmem:[%s0 + $0x30] sm:$0xff]
  %v57 = vld [vmem:[%s0 + $0x38] sm:$0xff]
  %v58 = vld [vmem:[%s0 + $0x40] sm:$0xff]
  %v59 = vld [vmem:[%s0 + $0x48] sm:$0xff]
  %v60 = vld [vmem:[%s0 + $0x50] sm:$0xff]
  %v61 = vld [vmem:[%s0 + $0x58] sm:$0xff]
  %v62 = vld [vmem:[%s0 + $0x60] sm:$0xff]
  %v63 = vld [vmem:[%s0 + $0x68] sm:$0xff]
  %v64 = vld [vmem:[%s0 + $0x70] sm:$0xff]
  %v65 = vld [vmem:[%s0 + $0x78] sm:$0xff]
  %v66 = vld [vmem:[%s1] sm:$0xf]
  %v67 = vld [vmem:[%s1 + $0x4] sm:$0xf]
  %v68 = vld [vmem:[%s1 + $0x8] sm:$0xf]
  %v69 = vld [vmem:[%s1 + $0xc] sm:$0xf]
  %v70 = vld [vmem:[%s1 + $0x10] sm:$0xf]
  %v71 = vld [vmem:[%s1 + $0x14] sm:$0xf]
  %v72 = vld [vmem:[%s1 + $0x18] sm:$0xf]
  %v73 = vld [vmem:[%s1 + $0x1c] sm:$0xf]
  %v74 = vld [vmem:[%s1 + $0x20] sm:$0xf]
  %v75 = vld [vmem:[%s1 + $0x24] sm:$0xf]
  %v76 = vld [vmem:[%s1 + $0x28] sm:$0xf]
  %v77 = vld [vmem:[%s1 + $0x2c] sm:$0xf]
  %v78 = vld [vmem:[%s1 + $0x30] sm:$0xf]
  %v79 = vld [vmem:[%s1 + $0x34] sm:$0xf]
  %v80 = vld [vmem:[%s1 + $0x38] sm:$0xf]
  %v81 = vld [vmem:[%s1 + $0x3c] sm:$0xf]
  %v82 = vld [vmem:[%s1 + $0x40] sm:$0xf]
  %v83 = vld [vmem:[%s1 + $0x44] sm:$0xf]
  %v84 = vld [vmem:[%s1 + $0x48] sm:$0xf]
  %v85 = vld [vmem:[%s1 + $0x4c] sm:$0xf]
  %v86 = vld [vmem:[%s1 + $0x50] sm:$0xf]
  %v87 = vld [vmem:[%s1 + $0x54] sm:$0xf]
  %v88 = vld [vmem:[%s1 + $0x58] sm:$0xf]
  %v89 = vld [vmem:[%s1 + $0x5c] sm:$0xf]
  %v90 = vld [vmem:[%s1 + $0x60] sm:$0xf]
  %v91 = vld [vmem:[%s1 + $0x64] sm:$0xf]
  %v92 = vld [vmem:[%s1 + $0x68] sm:$0xf]
  %v93 = vld [vmem:[%s1 + $0x6c] sm:$0xf]
  %v94 = vld [vmem:[%s1 + $0x70] sm:$0xf]
  %v95 = vld [vmem:[%s1 + $0x74] sm:$0xf]
  %v96 = vld [vmem:[%s1 + $0x78] sm:$0xf]
  %v97 = vld [vmem:[%s1 + $0x7c] sm:$0xf]
  %v114 = vunpack.c.l.b16 %v50
  %v115 = vunpack.c.h.b16 %v50
  %v116 = vunpack.c.l.b16 %v51
  %v117 = vunpack.c.h.b16 %v51
  %v118 = vunpack.c.l.b16 %v52
  %v119 = vunpack.c.h.b16 %v52
  %v120 = vunpack.c.l.b16 %v53
  %v121 = vunpack.c.h.b16 %v53
  %v122 = vunpack.c.l.b16 %v54
  %v123 = vunpack.c.h.b16 %v54
  %v124 = vunpack.c.l.b16 %v55
  %v125 = vunpack.c.h.b16 %v55
  %v126 = vunpack.c.l.b16 %v56
  %v127 = vunpack.c.h.b16 %v56
  %v128 = vunpack.c.l.b16 %v57
  %v129 = vunpack.c.h.b16 %v57
  %v130 = vunpack.c.l.b16 %v58
  %v131 = vunpack.c.h.b16 %v58
  %v132 = vunpack.c.l.b16 %v59
  %v133 = vunpack.c.h.b16 %v59
  %v134 = vunpack.c.l.b16 %v60
  %v135 = vunpack.c.h.b16 %v60
  %v136 = vunpack.c.l.b16 %v61
  %v137 = vunpack.c.h.b16 %v61
  %v138 = vunpack.c.l.b16 %v62
  %v139 = vunpack.c.h.b16 %v62
  %v140 = vunpack.c.l.b16 %v63
  %v141 = vunpack.c.h.b16 %v63
  %v142 = vunpack.c.l.b16 %v64
  %v143 = vunpack.c.h.b16 %v64
  %v144 = vunpack.c.l.b16 %v65
  %v145 = vunpack.c.h.b16 %v65
  %v146 = vpack.c.b16 %v116, %v114
  %v147 = vpack.c.b16 %v117, %v115
  %v148 = vpack.c.b16 %v120, %v118
  %v149 = vpack.c.b16 %v121, %v119
  %v150 = vpack.c.b16 %v124, %v122
  %v151 = vpack.c.b16 %v125, %v123
  %v152 = vpack.c.b16 %v128, %v126
  %v153 = vpack.c.b16 %v129, %v127
  %v154 = vpack.c.b16 %v132, %v130
  %v155 = vpack.c.b16 %v133, %v131
  %v156 = vpack.c.b16 %v136, %v134
  %v157 = vpack.c.b16 %v137, %v135
  %v158 = vpack.c.b16 %v140, %v138
  %v159 = vpack.c.b16 %v141, %v139
  %v160 = vpack.c.b16 %v144, %v142
  %v161 = vpack.c.b16 %v145, %v143
  %v210 = vunpack.c.l.b16 %v66
  %v211 = vunpack.c.l.b16 %v67
  %v212 = vunpack.c.l.b16 %v68
  %v213 = vunpack.c.l.b16 %v69
  %v214 = vunpack.c.l.b16 %v70
  %v215 = vunpack.c.l.b16 %v71
  %v216 = vunpack.c.l.b16 %v72
  %v217 = vunpack.c.l.b16 %v73
  %v218 = vunpack.c.l.b16 %v74
  %v219 = vunpack.c.l.b16 %v75
  %v220 = vunpack.c.l.b16 %v76
  %v221 = vunpack.c.l.b16 %v77
  %v222 = vunpack.c.l.b16 %v78
  %v223 = vunpack.c.l.b16 %v79
  %v224 = vunpack.c.l.b16 %v80
  %v225 = vunpack.c.l.b16 %v81
  %v226 = vunpack.c.l.b16 %v82
  %v227 = vunpack.c.l.b16 %v83
  %v228 = vunpack.c.l.b16 %v84
  %v229 = vunpack.c.l.b16 %v85
  %v230 = vunpack.c.l.b16 %v86
  %v231 = vunpack.c.l.b16 %v87
  %v232 = vunpack.c.l.b16 %v88
  %v233 = vunpack.c.l.b16 %v89
  %v234 = vunpack.c.l.b16 %v90
  %v235 = vunpack.c.l.b16 %v91
  %v236 = vunpack.c.l.b16 %v92
  %v237 = vunpack.c.l.b16 %v93
  %v238 = vunpack.c.l.b16 %v94
  %v239 = vunpack.c.l.b16 %v95
  %v240 = vunpack.c.l.b16 %v96
  %v241 = vunpack.c.l.b16 %v97
  %v242 = vpack.c.b16 %v211, %v210
  %v243 = vpack.c.b16 %v213, %v212
  %v244 = vpack.c.b16 %v215, %v214
  %v245 = vpack.c.b16 %v217, %v216
  %v246 = vpack.c.b16 %v219, %v218
  %v247 = vpack.c.b16 %v221, %v220
  %v248 = vpack.c.b16 %v223, %v222
  %v249 = vpack.c.b16 %v225, %v224
  %v250 = vpack.c.b16 %v227, %v226
  %v251 = vpack.c.b16 %v229, %v228
  %v252 = vpack.c.b16 %v231, %v230
  %v253 = vpack.c.b16 %v233, %v232
  %v254 = vpack.c.b16 %v235, %v234
  %v255 = vpack.c.b16 %v237, %v236
  %v256 = vpack.c.b16 %v239, %v238
  %v257 = vpack.c.b16 %v241, %v240
  %274 = vmatpush.bf16.msra.mxu0 %v249
  %275 = vmatpush.bf16.msra.mxu0 %v248
  %276 = vmatpush.bf16.msra.mxu0 %v247
  %277 = vmatpush.bf16.msra.mxu0 %v246
  %278 = vmatpush.bf16.msra.mxu0 %v245
  %279 = vmatpush.bf16.msra.mxu0 %v244
  %280 = vmatpush.bf16.msra.mxu0 %v243
  %281 = vmatpush.bf16.msra.mxu0 %v242
  %282 = vmatmul.bf16.gmra.mxu0 %v146
  %v283 = vpop.f32.mrf.mxu0
  %v284 = vadd.f32 0.0, %v283
  %v285 = vpop.f32.mrf.mxu0
  %v286 = vadd.f32 0.0, %v285
  %287 = vmatmul.bf16.gmra.mxu0 %v148
  %v288 = vpop.f32.mrf.mxu0
  %v289 = vadd.f32 0.0, %v288
  %v290 = vpop.f32.mrf.mxu0
  %v291 = vadd.f32 0.0, %v290
  %292 = vmatmul.bf16.gmra.mxu0 %v150
  %v293 = vpop.f32.mrf.mxu0
  %v294 = vadd.f32 0.0, %v293
  %v295 = vpop.f32.mrf.mxu0
  %v296 = vadd.f32 0.0, %v295
  %297 = vmatmul.bf16.gmra.mxu0 %v152
  %v298 = vpop.f32.mrf.mxu0
  %v299 = vadd.f32 0.0, %v298
  %v300 = vpop.f32.mrf.mxu0
  %v301 = vadd.f32 0.0, %v300
  %302 = vmatmul.bf16.gmra.mxu0 %v154
  %v303 = vpop.f32.mrf.mxu0
  %v304 = vadd.f32 0.0, %v303
  %v305 = vpop.f32.mrf.mxu0
  %v306 = vadd.f32 0.0, %v305
  %307 = vmatmul.bf16.gmra.mxu0 %v156
  %v308 = vpop.f32.mrf.mxu0
  %v309 = vadd.f32 0.0, %v308
  %v310 = vpop.f32.mrf.mxu0
  %v311 = vadd.f32 0.0, %v310
  %312 = vmatmul.bf16.gmra.mxu0 %v158
  %v313 = vpop.f32.mrf.mxu0
  %v314 = vadd.f32 0.0, %v313
  %v315 = vpop.f32.mrf.mxu0
  %v316 = vadd.f32 0.0, %v315
  %317 = vmatmul.bf16.gmra.mxu0 %v160
  %v318 = vpop.f32.mrf.mxu0
  %v319 = vadd.f32 0.0, %v318
  %v320 = vpop.f32.mrf.mxu0
  %v321 = vadd.f32 0.0, %v320
  %322 = vdwg.mxu0
  %323 = vmatpush.bf16.msra.mxu0 %v257
  %324 = vmatpush.bf16.msra.mxu0 %v256
  %325 = vmatpush.bf16.msra.mxu0 %v255
  %326 = vmatpush.bf16.msra.mxu0 %v254
  %327 = vmatpush.bf16.msra.mxu0 %v253
  %328 = vmatpush.bf16.msra.mxu0 %v252
  %329 = vmatpush.bf16.msra.mxu0 %v251
  %330 = vmatpush.bf16.msra.mxu0 %v250
  %331 = vmatmul.bf16.gmra.mxu0 %v147
  %v332 = vpop.f32.mrf.mxu0
  %v333 = vadd.f32 %v284, %v332
  %v334 = vpop.f32.mrf.mxu0
  %v335 = vadd.f32 %v286, %v334
  %336 = vmatmul.bf16.gmra.mxu0 %v149
  %v337 = vpop.f32.mrf.mxu0
  %v338 = vadd.f32 %v289, %v337
  %v339 = vpop.f32.mrf.mxu0
  %v340 = vadd.f32 %v291, %v339
  %341 = vmatmul.bf16.gmra.mxu0 %v151
  %v342 = vpop.f32.mrf.mxu0
  %v343 = vadd.f32 %v294, %v342
  %v344 = vpop.f32.mrf.mxu0
  %v345 = vadd.f32 %v296, %v344
  %346 = vmatmul.bf16.gmra.mxu0 %v153
  %v347 = vpop.f32.mrf.mxu0
  %v348 = vadd.f32 %v299, %v347
  %v349 = vpop.f32.mrf.mxu0
  %v350 = vadd.f32 %v301, %v349
  %351 = vmatmul.bf16.gmra.mxu0 %v155
  %v352 = vpop.f32.mrf.mxu0
  %v353 = vadd.f32 %v304, %v352
  %v354 = vpop.f32.mrf.mxu0
  %v355 = vadd.f32 %v306, %v354
  %356 = vmatmul.bf16.gmra.mxu0 %v157
  %v357 = vpop.f32.mrf.mxu0
  %v358 = vadd.f32 %v309, %v357
  %v359 = vpop.f32.mrf.mxu0
  %v360 = vadd.f32 %v311, %v359
  %361 = vmatmul.bf16.gmra.mxu0 %v159
  %v362 = vpop.f32.mrf.mxu0
  %v363 = vadd.f32 %v314, %v362
  %v364 = vpop.f32.mrf.mxu0
  %v365 = vadd.f32 %v316, %v364
  %366 = vmatmul.bf16.gmra.mxu0 %v161
  %v367 = vpop.f32.mrf.mxu0
  %v368 = vadd.f32 %v319, %v367
  %v369 = vpop.f32.mrf.mxu0
  %v370 = vadd.f32 %v321, %v369
  %371 = vdwg.mxu0
  %v372 = vadd.f32 %v34, %v333
  %v373 = vadd.f32 %v35, %v335
  %v374 = vadd.f32 %v36, %v338
  %v375 = vadd.f32 %v37, %v340
  %v376 = vadd.f32 %v38, %v343
  %v377 = vadd.f32 %v39, %v345
  %v378 = vadd.f32 %v40, %v348
  %v379 = vadd.f32 %v41, %v350
  %v380 = vadd.f32 %v42, %v353
  %v381 = vadd.f32 %v43, %v355
  %v382 = vadd.f32 %v44, %v358
  %v383 = vadd.f32 %v45, %v360
  %v384 = vadd.f32 %v46, %v363
  %v385 = vadd.f32 %v47, %v365
  %v386 = vadd.f32 %v48, %v368
  %v387 = vadd.f32 %v49, %v370
  %388 = vst [vmem:[#allocation2] sm:$0xff] %v372
  %389 = vst [vmem:[#allocation2 + $0x8] sm:$0xff] %v373
  %390 = vst [vmem:[#allocation2 + $0x10] sm:$0xff] %v374
  %391 = vst [vmem:[#allocation2 + $0x18] sm:$0xff] %v375
  %392 = vst [vmem:[#allocation2 + $0x20] sm:$0xff] %v376
  %393 = vst [vmem:[#allocation2 + $0x28] sm:$0xff] %v377
  %394 = vst [vmem:[#allocation2 + $0x30] sm:$0xff] %v378
  %395 = vst [vmem:[#allocation2 + $0x38] sm:$0xff] %v379
  %396 = vst [vmem:[#allocation2 + $0x40] sm:$0xff] %v380
  %397 = vst [vmem:[#allocation2 + $0x48] sm:$0xff] %v381
  %398 = vst [vmem:[#allocation2 + $0x50] sm:$0xff] %v382
  %399 = vst [vmem:[#allocation2 + $0x58] sm:$0xff] %v383
  %400 = vst [vmem:[#allocation2 + $0x60] sm:$0xff] %v384
  %401 = vst [vmem:[#allocation2 + $0x68] sm:$0xff] %v385
  %402 = vst [vmem:[#allocation2 + $0x70] sm:$0xff] %v386
  %403 = vst [vmem:[#allocation2 + $0x78] sm:$0xff] %v387
  // Predicated region
  $region18: #{_lambda_.24} parent=0 // pred_check
    %p404 = pneg %p14
  $region19: #{_lambda_.24} parent=0 // pred_check_branch
    %406 = sbr.rel (%p404) target = $region21
  $region20: #{_lambda_.24} parent=0 // pred_region
    %v407 = vld [vmem:[#allocation2] sm:$0xff]
    %v408 = vld [vmem:[#allocation2 + $0x8] sm:$0xff]
    %v409 = vld [vmem:[#allocation2 + $0x10] sm:$0xff]
    %v410 = vld [vmem:[#allocation2 + $0x18] sm:$0xff]
    %v411 = vld [vmem:[#allocation2 + $0x20] sm:$0xff]
    %v412 = vld [vmem:[#allocation2 + $0x28] sm:$0xff]
    %v413 = vld [vmem:[#allocation2 + $0x30] sm:$0xff]
    %v414 = vld [vmem:[#allocation2 + $0x38] sm:$0xff]
    %v415 = vld [vmem:[#allocation2 + $0x40] sm:$0xff]
    %v416 = vld [vmem:[#allocation2 + $0x48] sm:$0xff]
    %v417 = vld [vmem:[#allocation2 + $0x50] sm:$0xff]
    %v418 = vld [vmem:[#allocation2 + $0x58] sm:$0xff]
    %v419 = vld [vmem:[#allocation2 + $0x60] sm:$0xff]
    %v420 = vld [vmem:[#allocation2 + $0x68] sm:$0xff]
    %v421 = vld [vmem:[#allocation2 + $0x70] sm:$0xff]
    %v422 = vld [vmem:[#allocation2 + $0x78] sm:$0xff]
    %v423 = vld [vmem:[%s2] sm:$0x1]
    %v425 = vperm.slane %v423, 0
    %v427 = vadd.f32 %v407, %v425
    %v428 = vadd.f32 %v408, %v425
    %v429 = vadd.f32 %v409, %v425
    %v430 = vadd.f32 %v410, %v425
    %v431 = vadd.f32 %v411, %v425
    %v432 = vadd.f32 %v412, %v425
    %v433 = vadd.f32 %v413, %v425
    %v434 = vadd.f32 %v414, %v425
    %v435 = vadd.f32 %v415, %v425
    %v436 = vadd.f32 %v416, %v425
    %v437 = vadd.f32 %v417, %v425
    %v438 = vadd.f32 %v418, %v425
    %v439 = vadd.f32 %v419, %v425
    %v440 = vadd.f32 %v420, %v425
    %v441 = vadd.f32 %v421, %v425
    %v442 = vadd.f32 %v422, %v425
    %v443 = vpack.c.bf16 %v427, %v427
    %v444 = vpack.c.bf16 %v428, %v428
    %v445 = vpack.c.bf16 %v429, %v429
    %v446 = vpack.c.bf16 %v430, %v430
    %v447 = vpack.c.bf16 %v431, %v431
    %v448 = vpack.c.bf16 %v432, %v432
    %v449 = vpack.c.bf16 %v433, %v433
    %v450 = vpack.c.bf16 %v434, %v434
    %v451 = vpack.c.bf16 %v435, %v435
    %v452 = vpack.c.bf16 %v436, %v436
    %v453 = vpack.c.bf16 %v437, %v437
    %v454 = vpack.c.bf16 %v438, %v438
    %v455 = vpack.c.bf16 %v439, %v439
    %v456 = vpack.c.bf16 %v440, %v440
    %v457 = vpack.c.bf16 %v441, %v441
    %v458 = vpack.c.bf16 %v442, %v442
    %459 = vst [vmem:[%s3] sm:$0xf] %v443
    %460 = vst [vmem:[%s3 + $0x4] sm:$0xf] %v444
    %461 = vst [vmem:[%s3 + $0x8] sm:$0xf] %v445
    %462 = vst [vmem:[%s3 + $0xc] sm:$0xf] %v446
    %463 = vst [vmem:[%s3 + $0x10] sm:$0xf] %v447
    %464 = vst [vmem:[%s3 + $0x14] sm:$0xf] %v448
    %465 = vst [vmem:[%s3 + $0x18] sm:$0xf] %v449
    %466 = vst [vmem:[%s3 + $0x1c] sm:$0xf] %v450
    %467 = vst [vmem:[%s3 + $0x20] sm:$0xf] %v451
    %468 = vst [vmem:[%s3 + $0x24] sm:$0xf] %v452
    %469 = vst [vmem:[%s3 + $0x28] sm:$0xf] %v453
    %470 = vst [vmem:[%s3 + $0x2c] sm:$0xf] %v454
    %471 = vst [vmem:[%s3 + $0x30] sm:$0xf] %v455
    %472 = vst [vmem:[%s3 + $0x34] sm:$0xf] %v456
    %473 = vst [vmem:[%s3 + $0x38] sm:$0xf] %v457
    %474 = vst [vmem:[%s3 + $0x3c] sm:$0xf] %v458
  $region21: #{_lambda_.24} parent=0 // pred_fallthru
    _
  // Predicated region
  $region22: #{_lambda_.24} parent=0 // pred_check
    _
  $region23: #{_lambda_.24} parent=0 // pred_check_branch
    %476 = sbr.rel (0) target = $region25
  $region24: #{_lambda_.24} parent=0 // pred_region
    _
  $region25: #{_lambda_.24} parent=0 // pred_fallthru
    _
  // Predicated region
  $region26: #{_lambda_.24} parent=0 // pred_check
    _
  $region27: #{_lambda_.24} parent=0 // pred_check_branch
    %478 = sbr.rel (0) target = $region29
  $region28: #{_lambda_.24} parent=0 // pred_region
    _
  $region29: #{_lambda_.24} parent=0 // pred_fallthru
    _

// kernel: _lambda_.23
$region0: #{_lambda_.23}
  #allocation0 [shape = 'u32[]', space=smem, size = 0x4, offset = 0x4, fixed_abs, tag = 'smem constant byte address 0x4 - core index']
  #allocation1 [shape = 'u32[72,128]{1,0:T(1,128)}', space=vmem, size = 0x9000, scoped, tag = 'internal scratch']
  #allocation2 [shape = 'f32[128,128]{1,0:T(8,128)}', space=vmem, size = 0x10000, scoped, tag = 'scratch operand']
  %s0 = inlined_call_operand.vmem [shape: bf16[128,1408], index: 0, kind: input, shape index: {}]
  %s1 = inlined_call_operand.vmem [shape: bf16[1408,128], index: 1, kind: input, shape index: {}]
  %s2 = inlined_call_operand.vmem [shape: f32[1,128], index: 2, kind: input, shape index: {}]
  %s3 = inlined_call_operand.vmem [shape: bf16[128,128], index: 3, kind: output, shape index: {}]
  %s4 = sld [smem:[#allocation0]]
  $region30: #{_lambda_.23} parent=0
    _
  %s6 = ssub.s32 1, %s4
  %s7 = scalar_select 0, %s6, %s4
  // Predicated region
  $region2: #{_lambda_.23} parent=0 // pred_check
    _
  $region3: #{_lambda_.23} parent=0 // pred_check_branch
    %9 = sbr.rel (0) target = $region5
  $region4: #{_lambda_.23} parent=0 // pred_region
    _
  $region5: #{_lambda_.23} parent=0 // pred_fallthru
    _
  // Predicated region
  $region6: #{_lambda_.23} parent=0 // pred_check
    _
  $region7: #{_lambda_.23} parent=0 // pred_check_branch
    %11 = sbr.rel (0) target = $region9
  $region8: #{_lambda_.23} parent=0 // pred_region
    _
  $region9: #{_lambda_.23} parent=0 // pred_fallthru
    _
  // Predicated region
  $region10: #{_lambda_.23} parent=0 // pred_check
    _
  $region11: #{_lambda_.23} parent=0 // pred_check_branch
    %13 = sbr.rel (0) target = $region13
  $region12: #{_lambda_.23} parent=0 // pred_region
    _
  $region13: #{_lambda_.23} parent=0 // pred_fallthru
    _
  %p14 = scmp.eq.s32.totalorder 0, 0
  // Predicated region
  $region14: #{_lambda_.23} parent=0 // pred_check
    %p15 = pneg %p14
  $region15: #{_lambda_.23} parent=0 // pred_check_branch
    %17 = sbr.rel (%p15) target = $region17
  $region16: #{_lambda_.23} parent=0 // pred_region
    %18 = vst [vmem:[#allocation2] sm:$0xff] 0.0
    %19 = vst [vmem:[#allocation2 + $0x8] sm:$0xff] 0.0
    %20 = vst [vmem:[#allocation2 + $0x10] sm:$0xff] 0.0
    %21 = vst [vmem:[#allocation2 + $0x18] sm:$0xff] 0.0
    %22 = vst [vmem:[#allocation2 + $0x20] sm:$0xff] 0.0
    %23 = vst [vmem:[#allocation2 + $0x28] sm:$0xff] 0.0
    %24 = vst [vmem:[#allocation2 + $0x30] sm:$0xff] 0.0
    %25 = vst [vmem:[#allocation2 + $0x38] sm:$0xff] 0.0
    %26 = vst [vmem:[#allocation2 + $0x40] sm:$0xff] 0.0
    %27 = vst [vmem:[#allocation2 + $0x48] sm:$0xff] 0.0
    %28 = vst [vmem:[#allocation2 + $0x50] sm:$0xff] 0.0
    %29 = vst [vmem:[#allocation2 + $0x58] sm:$0xff] 0.0
    %30 = vst [vmem:[#allocation2 + $0x60] sm:$0xff] 0.0
    %31 = vst [vmem:[#allocation2 + $0x68] sm:$0xff] 0.0
    %32 = vst [vmem:[#allocation2 + $0x70] sm:$0xff] 0.0
    %33 = vst [vmem:[#allocation2 + $0x78] sm:$0xff] 0.0
  $region17: #{_lambda_.23} parent=0 // pred_fallthru
    _
  %v34 = vld [vmem:[#allocation2] sm:$0xff]
  %v35 = vld [vmem:[#allocation2 + $0x8] sm:$0xff]
  %v36 = vld [vmem:[#allocation2 + $0x10] sm:$0xff]
  %v37 = vld [vmem:[#allocation2 + $0x18] sm:$0xff]
  %v38 = vld [vmem:[#allocation2 + $0x20] sm:$0xff]
  %v39 = vld [vmem:[#allocation2 + $0x28] sm:$0xff]
  %v40 = vld [vmem:[#allocation2 + $0x30] sm:$0xff]
  %v41 = vld [vmem:[#allocation2 + $0x38] sm:$0xff]
  %v42 = vld [vmem:[#allocation2 + $0x40] sm:$0xff]
  %v43 = vld [vmem:[#allocation2 + $0x48] sm:$0xff]
  %v44 = vld [vmem:[#allocation2 + $0x50] sm:$0xff]
  %v45 = vld [vmem:[#allocation2 + $0x58] sm:$0xff]
  %v46 = vld [vmem:[#allocation2 + $0x60] sm:$0xff]
  %v47 = vld [vmem:[#allocation2 + $0x68] sm:$0xff]
  %v48 = vld [vmem:[#allocation2 + $0x70] sm:$0xff]
  %v49 = vld [vmem:[#allocation2 + $0x78] sm:$0xff]
  %v50 = vld [vmem:[%s0] sm:$0xff]
  %v51 = vld [vmem:[%s0 + $0x8] sm:$0xff]
  %v52 = vld [vmem:[%s0 + $0x10] sm:$0xff]
  %v53 = vld [vmem:[%s0 + $0x18] sm:$0xff]
  %v54 = vld [vmem:[%s0 + $0x20] sm:$0xff]
  %v55 = vld [vmem:[%s0 + $0x28] sm:$0xf]
  %v56 = vld [vmem:[%s0 + $0x2c] sm:$0xff]
  %v57 = vld [vmem:[%s0 + $0x34] sm:$0xff]
  %v58 = vld [vmem:[%s0 + $0x3c] sm:$0xff]
  %v59 = vld [vmem:[%s0 + $0x44] sm:$0xff]
  %v60 = vld [vmem:[%s0 + $0x4c] sm:$0xff]
  %v61 = vld [vmem:[%s0 + $0x54] sm:$0xf]
  %v62 = vld [vmem:[%s0 + $0x58] sm:$0xff]
  %v63 = vld [vmem:[%s0 + $0x60] sm:$0xff]
  %v64 = vld [vmem:[%s0 + $0x68] sm:$0xff]
  %v65 = vld [vmem:[%s0 + $0x70] sm:$0xff]
  %v66 = vld [vmem:[%s0 + $0x78] sm:$0xff]
  %v67 = vld [vmem:[%s0 + $0x80] sm:$0xf]
  %v68 = vld [vmem:[%s0 + $0x84] sm:$0xff]
  %v69 = vld [vmem:[%s0 + $0x8c] sm:$0xff]
  %v70 = vld [vmem:[%s0 + $0x94] sm:$0xff]
  %v71 = vld [vmem:[%s0 + $0x9c] sm:$0xff]
  %v72 = vld [vmem:[%s0 + $0xa4] sm:$0xff]
  %v73 = vld [vmem:[%s0 + $0xac] sm:$0xf]
  %v74 = vld [vmem:[%s0 + $0xb0] sm:$0xff]
  %v75 = vld [vmem:[%s0 + $0xb8] sm:$0xff]
  %v76 = vld [vmem:[%s0 + $0xc0] sm:$0xff]
  %v77 = vld [vmem:[%s0 + $0xc8] sm:$0xff]
  %v78 = vld [vmem:[%s0 + $0xd0] sm:$0xff]
  %v79 = vld [vmem:[%s0 + $0xd8] sm:$0xf]
  %v80 = vld [vmem:[%s0 + $0xdc] sm:$0xff]
  %v81 = vld [vmem:[%s0 + $0xe4] sm:$0xff]
  %v82 = vld [vmem:[%s0 + $0xec] sm:$0xff]
  %v83 = vld [vmem:[%s0 + $0xf4] sm:$0xff]
  %v84 = vld [vmem:[%s0 + $0xfc] sm:$0xff]
  %v85 = vld [vmem:[%s0 + $0x104] sm:$0xf]
  %v86 = vld [vmem:[%s0 + $0x108] sm:$0xff]
  %v87 = vld [vmem:[%s0 + $0x110] sm:$0xff]
  %v88 = vld [vmem:[%s0 + $0x118] sm:$0xff]
  %v89 = vld [vmem:[%s0 + $0x120] sm:$0xff]
  %v90 = vld [vmem:[%s0 + $0x128] sm:$0xff]
  %v91 = vld [vmem:[%s0 + $0x130] sm:$0xf]
  %v92 = vld [vmem:[%s0 + $0x134] sm:$0xff]
  %v93 = vld [vmem:[%s0 + $0x13c] sm:$0xff]
  %v94 = vld [vmem:[%s0 + $0x144] sm:$0xff]
  %v95 = vld [vmem:[%s0 + $0x14c] sm:$0xff]
  %v96 = vld [vmem:[%s0 + $0x154] sm:$0xff]
  %v97 = vld [vmem:[%s0 + $0x15c] sm:$0xf]
  %v98 = vld [vmem:[%s0 + $0x160] sm:$0xff]
  %v99 = vld [vmem:[%s0 + $0x168] sm:$0xff]
  %v100 = vld [vmem:[%s0 + $0x170] sm:$0xff]
  %v101 = vld [vmem:[%s0 + $0x178] sm:$0xff]
  %v102 = vld [vmem:[%s0 + $0x180] sm:$0xff]
  %v103 = vld [vmem:[%s0 + $0x188] sm:$0xf]
  %v104 = vld [vmem:[%s0 + $0x18c] sm:$0xff]
  %v105 = vld [vmem:[%s0 + $0x194] sm:$0xff]
  %v106 = vld [vmem:[%s0 + $0x19c] sm:$0xff]
  %v107 = vld [vmem:[%s0 + $0x1a4] sm:$0xff]
  %v108 = vld [vmem:[%s0 + $0x1ac] sm:$0xff]
  %v109 = vld [vmem:[%s0 + $0x1b4] sm:$0xf]
  %v110 = vld [vmem:[%s0 + $0x1b8] sm:$0xff]
  %v111 = vld [vmem:[%s0 + $0x1c0] sm:$0xff]
  %v112 = vld [vmem:[%s0 + $0x1c8] sm:$0xff]
  %v113 = vld [vmem:[%s0 + $0x1d0] sm:$0xff]
  %v114 = vld [vmem:[%s0 + $0x1d8] sm:$0xff]
  %v115 = vld [vmem:[%s0 + $0x1e0] sm:$0xf]
  %v116 = vld [vmem:[%s0 + $0x1e4] sm:$0xff]
  %v117 = vld [vmem:[%s0 + $0x1ec] sm:$0xff]
  %v118 = vld [vmem:[%s0 + $0x1f4] sm:$0xff]
  %v119 = vld [vmem:[%s0 + $0x1fc] sm:$0xff]
  %v120 = vld [vmem:[%s0 + $0x204] sm:$0xff]
  %v121 = vld [vmem:[%s0 + $0x20c] sm:$0xf]
  %v122 = vld [vmem:[%s0 + $0x210] sm:$0xff]
  %v123 = vld [vmem:[%s0 + $0x218] sm:$0xff]
  %v124 = vld [vmem:[%s0 + $0x220] sm:$0xff]
  %v125 = vld [vmem:[%s0 + $0x228] sm:$0xff]
  %v126 = vld [vmem:[%s0 + $0x230] sm:$0xff]
  %v127 = vld [vmem:[%s0 + $0x238] sm:$0xf]
  %v128 = vld [vmem:[%s0 + $0x23c] sm:$0xff]
  %v129 = vld [vmem:[%s0 + $0x244] sm:$0xff]
  %v130 = vld [vmem:[%s0 + $0x24c] sm:$0xff]
  %v131 = vld [vmem:[%s0 + $0x254] sm:$0xff]
  %v132 = vld [vmem:[%s0 + $0x25c] sm:$0xff]
  %v133 = vld [vmem:[%s0 + $0x264] sm:$0xf]
  %v134 = vld [vmem:[%s0 + $0x268] sm:$0xff]
  %v135 = vld [vmem:[%s0 + $0x270] sm:$0xff]
  %v136 = vld [vmem:[%s0 + $0x278] sm:$0xff]
  %v137 = vld [vmem:[%s0 + $0x280] sm:$0xff]
  %v138 = vld [vmem:[%s0 + $0x288] sm:$0xff]
  %v139 = vld [vmem:[%s0 + $0x290] sm:$0xf]
  %v140 = vld [vmem:[%s0 + $0x294] sm:$0xff]
  %v141 = vld [vmem:[%s0 + $0x29c] sm:$0xff]
  %v142 = vld [vmem:[%s0 + $0x2a4] sm:$0xff]
  %v143 = vld [vmem:[%s0 + $0x2ac] sm:$0xff]
  %v144 = vld [vmem:[%s0 + $0x2b4] sm:$0xff]
  %v145 = vld [vmem:[%s0 + $0x2bc] sm:$0xf]
  %v146 = vld [vmem:[%s1] sm:$0xf]
  %v147 = vld [vmem:[%s1 + $0x4] sm:$0xf]
  %v148 = vld [vmem:[%s1 + $0x8] sm:$0xf]
  %v149 = vld [vmem:[%s1 + $0xc] sm:$0xf]
  %v150 = vld [vmem:[%s1 + $0x10] sm:$0xf]
  %v151 = vld [vmem:[%s1 + $0x14] sm:$0xf]
  %v152 = vld [vmem:[%s1 + $0x18] sm:$0xf]
  %v153 = vld [vmem:[%s1 + $0x1c] sm:$0xf]
  %v154 = vld [vmem:[%s1 + $0x20] sm:$0xf]
  %v155 = vld [vmem:[%s1 + $0x24] sm:$0xf]
  %v156 = vld [vmem:[%s1 + $0x28] sm:$0xf]
  %v157 = vld [vmem:[%s1 + $0x2c] sm:$0xf]
  %v158 = vld [vmem:[%s1 + $0x30] sm:$0xf]
  %v159 = vld [vmem:[%s1 + $0x34] sm:$0xf]
  %v160 = vld [vmem:[%s1 + $0x38] sm:$0xf]
  %v161 = vld [vmem:[%s1 + $0x3c] sm:$0xf]
  %v162 = vld [vmem:[%s1 + $0x40] sm:$0xf]
  %v163 = vld [vmem:[%s1 + $0x44] sm:$0xf]
  %v164 = vld [vmem:[%s1 + $0x48] sm:$0xf]
  %v165 = vld [vmem:[%s1 + $0x4c] sm:$0xf]
  %v166 = vld [vmem:[%s1 + $0x50] sm:$0xf]
  %v167 = vld [vmem:[%s1 + $0x54] sm:$0xf]
  %v168 = vld [vmem:[%s1 + $0x58] sm:$0xf]
  %v169 = vld [vmem:[%s1 + $0x5c] sm:$0xf]
  %v170 = vld [vmem:[%s1 + $0x60] sm:$0xf]
  %v171 = vld [vmem:[%s1 + $0x64] sm:$0xf]
  %v172 = vld [vmem:[%s1 + $0x68] sm:$0xf]
  %v173 = vld [vmem:[%s1 + $0x6c] sm:$0xf]
  %v174 = vld [vmem:[%s1 + $0x70] sm:$0xf]
  %v175 = vld [vmem:[%s1 + $0x74] sm:$0xf]
  %v176 = vld [vmem:[%s1 + $0x78] sm:$0xf]
  %v177 = vld [vmem:[%s1 + $0x7c] sm:$0xf]
  %v178 = vld [vmem:[%s1 + $0x80] sm:$0xf]
  %v179 = vld [vmem:[%s1 + $0x84] sm:$0xf]
  %v180 = vld [vmem:[%s1 + $0x88] sm:$0xf]
  %v181 = vld [vmem:[%s1 + $0x8c] sm:$0xf]
  %v182 = vld [vmem:[%s1 + $0x90] sm:$0xf]
  %v183 = vld [vmem:[%s1 + $0x94] sm:$0xf]
  %v184 = vld [vmem:[%s1 + $0x98] sm:$0xf]
  %v185 = vld [vmem:[%s1 + $0x9c] sm:$0xf]
  %v186 = vld [vmem:[%s1 + $0xa0] sm:$0xf]
  %v187 = vld [vmem:[%s1 + $0xa4] sm:$0xf]
  %v188 = vld [vmem:[%s1 + $0xa8] sm:$0xf]
  %v189 = vld [vmem:[%s1 + $0xac] sm:$0xf]
  %v190 = vld [vmem:[%s1 + $0xb0] sm:$0xf]
  %v191 = vld [vmem:[%s1 + $0xb4] sm:$0xf]
  %v192 = vld [vmem:[%s1 + $0xb8] sm:$0xf]
  %v193 = vld [vmem:[%s1 + $0xbc] sm:$0xf]
  %v194 = vld [vmem:[%s1 + $0xc0] sm:$0xf]
  %v195 = vld [vmem:[%s1 + $0xc4] sm:$0xf]
  %v196 = vld [vmem:[%s1 + $0xc8] sm:$0xf]
  %v197 = vld [vmem:[%s1 + $0xcc] sm:$0xf]
  %v198 = vld [vmem:[%s1 + $0xd0] sm:$0xf]
  %v199 = vld [vmem:[%s1 + $0xd4] sm:$0xf]
  %v200 = vld [vmem:[%s1 + $0xd8] sm:$0xf]
  %v201 = vld [vmem:[%s1 + $0xdc] sm:$0xf]
  %v202 = vld [vmem:[%s1 + $0xe0] sm:$0xf]
  %v203 = vld [vmem:[%s1 + $0xe4] sm:$0xf]
  %v204 = vld [vmem:[%s1 + $0xe8] sm:$0xf]
  %v205 = vld [vmem:[%s1 + $0xec] sm:$0xf]
  %v206 = vld [vmem:[%s1 + $0xf0] sm:$0xf]
  %v207 = vld [vmem:[%s1 + $0xf4] sm:$0xf]
  %v208 = vld [vmem:[%s1 + $0xf8] sm:$0xf]
  %v209 = vld [vmem:[%s1 + $0xfc] sm:$0xf]
  %v210 = vld [vmem:[%s1 + $0x100] sm:$0xf]
  %v211 = vld [vmem:[%s1 + $0x104] sm:$0xf]
  %v212 = vld [vmem:[%s1 + $0x108] sm:$0xf]
  %v213 = vld [vmem:[%s1 + $0x10c] sm:$0xf]
  %v214 = vld [vmem:[%s1 + $0x110] sm:$0xf]
  %v215 = vld [vmem:[%s1 + $0x114] sm:$0xf]
  %v216 = vld [vmem:[%s1 + $0x118] sm:$0xf]
  %v217 = vld [vmem:[%s1 + $0x11c] sm:$0xf]
  %v218 = vld [vmem:[%s1 + $0x120] sm:$0xf]
  %v219 = vld [vmem:[%s1 + $0x124] sm:$0xf]
  %v220 = vld [vmem:[%s1 + $0x128] sm:$0xf]
  %v221 = vld [vmem:[%s1 + $0x12c] sm:$0xf]
  %v222 = vld [vmem:[%s1 + $0x130] sm:$0xf]
  %v223 = vld [vmem:[%s1 + $0x134] sm:$0xf]
  %v224 = vld [vmem:[%s1 + $0x138] sm:$0xf]
  %v225 = vld [vmem:[%s1 + $0x13c] sm:$0xf]
  %v226 = vld [vmem:[%s1 + $0x140] sm:$0xf]
  %v227 = vld [vmem:[%s1 + $0x144] sm:$0xf]
  %v228 = vld [vmem:[%s1 + $0x148] sm:$0xf]
  %v229 = vld [vmem:[%s1 + $0x14c] sm:$0xf]
  %v230 = vld [vmem:[%s1 + $0x150] sm:$0xf]
  %v231 = vld [vmem:[%s1 + $0x154] sm:$0xf]
  %v232 = vld [vmem:[%s1 + $0x158] sm:$0xf]
  %v233 = vld [vmem:[%s1 + $0x15c] sm:$0xf]
  %v234 = vld [vmem:[%s1 + $0x160] sm:$0xf]
  %v235 = vld [vmem:[%s1 + $0x164] sm:$0xf]
  %v236 = vld [vmem:[%s1 + $0x168] sm:$0xf]
  %v237 = vld [vmem:[%s1 + $0x16c] sm:$0xf]
  %v238 = vld [vmem:[%s1 + $0x170] sm:$0xf]
  %v239 = vld [vmem:[%s1 + $0x174] sm:$0xf]
  %v240 = vld [vmem:[%s1 + $0x178] sm:$0xf]
  %v241 = vld [vmem:[%s1 + $0x17c] sm:$0xf]
  %v242 = vld [vmem:[%s1 + $0x180] sm:$0xf]
  %v243 = vld [vmem:[%s1 + $0x184] sm:$0xf]
  %v244 = vld [vmem:[%s1 + $0x188] sm:$0xf]
  %v245 = vld [vmem:[%s1 + $0x18c] sm:$0xf]
  %v246 = vld [vmem:[%s1 + $0x190] sm:$0xf]
  %v247 = vld [vmem:[%s1 + $0x194] sm:$0xf]
  %v248 = vld [vmem:[%s1 + $0x198] sm:$0xf]
  %v249 = vld [vmem:[%s1 + $0x19c] sm:$0xf]
  %v250 = vld [vmem:[%s1 + $0x1a0] sm:$0xf]
  %v251 = vld [vmem:[%s1 + $0x1a4] sm:$0xf]
  %v252 = vld [vmem:[%s1 + $0x1a8] sm:$0xf]
  %v253 = vld [vmem:[%s1 + $0x1ac] sm:$0xf]
  %v254 = vld [vmem:[%s1 + $0x1b0] sm:$0xf]
  %v255 = vld [vmem:[%s1 + $0x1b4] sm:$0xf]
  %v256 = vld [vmem:[%s1 + $0x1b8] sm:$0xf]
  %v257 = vld [vmem:[%s1 + $0x1bc] sm:$0xf]
  %v258 = vld [vmem:[%s1 + $0x1c0] sm:$0xf]
  %v259 = vld [vmem:[%s1 + $0x1c4] sm:$0xf]
  %v260 = vld [vmem:[%s1 + $0x1c8] sm:$0xf]
  %v261 = vld [vmem:[%s1 + $0x1cc] sm:$0xf]
  %v262 = vld [vmem:[%s1 + $0x1d0] sm:$0xf]
  %v263 = vld [vmem:[%s1 + $0x1d4] sm:$0xf]
  %v264 = vld [vmem:[%s1 + $0x1d8] sm:$0xf]
  %v265 = vld [vmem:[%s1 + $0x1dc] sm:$0xf]
  %v266 = vld [vmem:[%s1 + $0x1e0] sm:$0xf]
  %v267 = vld [vmem:[%s1 + $0x1e4] sm:$0xf]
  %v268 = vld [vmem:[%s1 + $0x1e8] sm:$0xf]
  %v269 = vld [vmem:[%s1 + $0x1ec] sm:$0xf]
  %v270 = vld [vmem:[%s1 + $0x1f0] sm:$0xf]
  %v271 = vld [vmem:[%s1 + $0x1f4] sm:$0xf]
  %v272 = vld [vmem:[%s1 + $0x1f8] sm:$0xf]
  %v273 = vld [vmem:[%s1 + $0x1fc] sm:$0xf]
  %v274 = vld [vmem:[%s1 + $0x200] sm:$0xf]
  %v275 = vld [vmem:[%s1 + $0x204] sm:$0xf]
  %v276 = vld [vmem:[%s1 + $0x208] sm:$0xf]
  %v277 = vld [vmem:[%s1 + $0x20c] sm:$0xf]
  %v278 = vld [vmem:[%s1 + $0x210] sm:$0xf]
  %v279 = vld [vmem:[%s1 + $0x214] sm:$0xf]
  %v280 = vld [vmem:[%s1 + $0x218] sm:$0xf]
  %v281 = vld [vmem:[%s1 + $0x21c] sm:$0xf]
  %v282 = vld [vmem:[%s1 + $0x220] sm:$0xf]
  %v283 = vld [vmem:[%s1 + $0x224] sm:$0xf]
  %v284 = vld [vmem:[%s1 + $0x228] sm:$0xf]
  %v285 = vld [vmem:[%s1 + $0x22c] sm:$0xf]
  %v286 = vld [vmem:[%s1 + $0x230] sm:$0xf]
  %v287 = vld [vmem:[%s1 + $0x234] sm:$0xf]
  %v288 = vld [vmem:[%s1 + $0x238] sm:$0xf]
  %v289 = vld [vmem:[%s1 + $0x23c] sm:$0xf]
  %v290 = vld [vmem:[%s1 + $0x240] sm:$0xf]
  %v291 = vld [vmem:[%s1 + $0x244] sm:$0xf]
  %v292 = vld [vmem:[%s1 + $0x248] sm:$0xf]
  %v293 = vld [vmem:[%s1 + $0x24c] sm:$0xf]
  %v294 = vld [vmem:[%s1 + $0x250] sm:$0xf]
  %v295 = vld [vmem:[%s1 + $0x254] sm:$0xf]
  %v296 = vld [vmem:[%s1 + $0x258] sm:$0xf]
  %v297 = vld [vmem:[%s1 + $0x25c] sm:$0xf]
  %v298 = vld [vmem:[%s1 + $0x260] sm:$0xf]
  %v299 = vld [vmem:[%s1 + $0x264] sm:$0xf]
  %v300 = vld [vmem:[%s1 + $0x268] sm:$0xf]
  %v301 = vld [vmem:[%s1 + $0x26c] sm:$0xf]
  %v302 = vld [vmem:[%s1 + $0x270] sm:$0xf]
  %v303 = vld [vmem:[%s1 + $0x274] sm:$0xf]
  %v304 = vld [vmem:[%s1 + $0x278] sm:$0xf]
  %v305 = vld [vmem:[%s1 + $0x27c] sm:$0xf]
  %v306 = vld [vmem:[%s1 + $0x280] sm:$0xf]
  %v307 = vld [vmem:[%s1 + $0x284] sm:$0xf]
  %v308 = vld [vmem:[%s1 + $0x288] sm:$0xf]
  %v309 = vld [vmem:[%s1 + $0x28c] sm:$0xf]
  %v310 = vld [vmem:[%s1 + $0x290] sm:$0xf]
  %v311 = vld [vmem:[%s1 + $0x294] sm:$0xf]
  %v312 = vld [vmem:[%s1 + $0x298] sm:$0xf]
  %v313 = vld [vmem:[%s1 + $0x29c] sm:$0xf]
  %v314 = vld [vmem:[%s1 + $0x2a0] sm:$0xf]
  %v315 = vld [vmem:[%s1 + $0x2a4] sm:$0xf]
  %v316 = vld [vmem:[%s1 + $0x2a8] sm:$0xf]
  %v317 = vld [vmem:[%s1 + $0x2ac] sm:$0xf]
  %v318 = vld [vmem:[%s1 + $0x2b0] sm:$0xf]
  %v319 = vld [vmem:[%s1 + $0x2b4] sm:$0xf]
  %v320 = vld [vmem:[%s1 + $0x2b8] sm:$0xf]
  %v321 = vld [vmem:[%s1 + $0x2bc] sm:$0xf]
  %v418 = vunpack.c.l.b16 %v50
  %v419 = vunpack.c.h.b16 %v50
  %v420 = vunpack.c.l.b16 %v51
  %v421 = vunpack.c.h.b16 %v51
  %v422 = vunpack.c.l.b16 %v52
  %v423 = vunpack.c.h.b16 %v52
  %v424 = vunpack.c.l.b16 %v53
  %v425 = vunpack.c.h.b16 %v53
  %v426 = vunpack.c.l.b16 %v54
  %v427 = vunpack.c.h.b16 %v54
  %v428 = vunpack.c.l.b16 %v55
  %v429 = vunpack.c.l.b16 %v56
  %v430 = vunpack.c.h.b16 %v56
  %v431 = vunpack.c.l.b16 %v57
  %v432 = vunpack.c.h.b16 %v57
  %v433 = vunpack.c.l.b16 %v58
  %v434 = vunpack.c.h.b16 %v58
  %v435 = vunpack.c.l.b16 %v59
  %v436 = vunpack.c.h.b16 %v59
  %v437 = vunpack.c.l.b16 %v60
  %v438 = vunpack.c.h.b16 %v60
  %v439 = vunpack.c.l.b16 %v61
  %v440 = vunpack.c.l.b16 %v62
  %v441 = vunpack.c.h.b16 %v62
  %v442 = vunpack.c.l.b16 %v63
  %v443 = vunpack.c.h.b16 %v63
  %v444 = vunpack.c.l.b16 %v64
  %v445 = vunpack.c.h.b16 %v64
  %v446 = vunpack.c.l.b16 %v65
  %v447 = vunpack.c.h.b16 %v65
  %v448 = vunpack.c.l.b16 %v66
  %v449 = vunpack.c.h.b16 %v66
  %v450 = vunpack.c.l.b16 %v67
  %v451 = vunpack.c.l.b16 %v68
  %v452 = vunpack.c.h.b16 %v68
  %v453 = vunpack.c.l.b16 %v69
  %v454 = vunpack.c.h.b16 %v69
  %v455 = vunpack.c.l.b16 %v70
  %v456 = vunpack.c.h.b16 %v70
  %v457 = vunpack.c.l.b16 %v71
  %v458 = vunpack.c.h.b16 %v71
  %v459 = vunpack.c.l.b16 %v72
  %v460 = vunpack.c.h.b16 %v72
  %v461 = vunpack.c.l.b16 %v73
  %v462 = vunpack.c.l.b16 %v74
  %v463 = vunpack.c.h.b16 %v74
  %v464 = vunpack.c.l.b16 %v75
  %v465 = vunpack.c.h.b16 %v75
  %v466 = vunpack.c.l.b16 %v76
  %v467 = vunpack.c.h.b16 %v76
  %v468 = vunpack.c.l.b16 %v77
  %v469 = vunpack.c.h.b16 %v77
  %v470 = vunpack.c.l.b16 %v78
  %v471 = vunpack.c.h.b16 %v78
  %v472 = vunpack.c.l.b16 %v79
  %v473 = vunpack.c.l.b16 %v80
  %v474 = vunpack.c.h.b16 %v80
  %v475 = vunpack.c.l.b16 %v81
  %v476 = vunpack.c.h.b16 %v81
  %v477 = vunpack.c.l.b16 %v82
  %v478 = vunpack.c.h.b16 %v82
  %v479 = vunpack.c.l.b16 %v83
  %v480 = vunpack.c.h.b16 %v83
  %v481 = vunpack.c.l.b16 %v84
  %v482 = vunpack.c.h.b16 %v84
  %v483 = vunpack.c.l.b16 %v85
  %v484 = vunpack.c.l.b16 %v86
  %v485 = vunpack.c.h.b16 %v86
  %v486 = vunpack.c.l.b16 %v87
  %v487 = vunpack.c.h.b16 %v87
  %v488 = vunpack.c.l.b16 %v88
  %v489 = vunpack.c.h.b16 %v88
  %v490 = vunpack.c.l.b16 %v89
  %v491 = vunpack.c.h.b16 %v89
  %v492 = vunpack.c.l.b16 %v90
  %v493 = vunpack.c.h.b16 %v90
  %v494 = vunpack.c.l.b16 %v91
  %v495 = vunpack.c.l.b16 %v92
  %v496 = vunpack.c.h.b16 %v92
  %v497 = vunpack.c.l.b16 %v93
  %v498 = vunpack.c.h.b16 %v93
  %v499 = vunpack.c.l.b16 %v94
  %v500 = vunpack.c.h.b16 %v94
  %v501 = vunpack.c.l.b16 %v95
  %v502 = vunpack.c.h.b16 %v95
  %v503 = vunpack.c.l.b16 %v96
  %v504 = vunpack.c.h.b16 %v96
  %v505 = vunpack.c.l.b16 %v97
  %v506 = vunpack.c.l.b16 %v98
  %v507 = vunpack.c.h.b16 %v98
  %v508 = vunpack.c.l.b16 %v99
  %v509 = vunpack.c.h.b16 %v99
  %v510 = vunpack.c.l.b16 %v100
  %v511 = vunpack.c.h.b16 %v100
  %v512 = vunpack.c.l.b16 %v101
  %v513 = vunpack.c.h.b16 %v101
  %v514 = vunpack.c.l.b16 %v102
  %v515 = vunpack.c.h.b16 %v102
  %v516 = vunpack.c.l.b16 %v103
  %v517 = vunpack.c.l.b16 %v104
  %v518 = vunpack.c.h.b16 %v104
  %v519 = vunpack.c.l.b16 %v105
  %v520 = vunpack.c.h.b16 %v105
  %v521 = vunpack.c.l.b16 %v106
  %v522 = vunpack.c.h.b16 %v106
  %v523 = vunpack.c.l.b16 %v107
  %v524 = vunpack.c.h.b16 %v107
  %v525 = vunpack.c.l.b16 %v108
  %v526 = vunpack.c.h.b16 %v108
  %v527 = vunpack.c.l.b16 %v109
  %v528 = vunpack.c.l.b16 %v110
  %v529 = vunpack.c.h.b16 %v110
  %v530 = vunpack.c.l.b16 %v111
  %v531 = vunpack.c.h.b16 %v111
  %v532 = vunpack.c.l.b16 %v112
  %v533 = vunpack.c.h.b16 %v112
  %v534 = vunpack.c.l.b16 %v113
  %v535 = vunpack.c.h.b16 %v113
  %v536 = vunpack.c.l.b16 %v114
  %v537 = vunpack.c.h.b16 %v114
  %v538 = vunpack.c.l.b16 %v115
  %v539 = vunpack.c.l.b16 %v116
  %v540 = vunpack.c.h.b16 %v116
  %v541 = vunpack.c.l.b16 %v117
  %v542 = vunpack.c.h.b16 %v117
  %v543 = vunpack.c.l.b16 %v118
  %v544 = vunpack.c.h.b16 %v118
  %v545 = vunpack.c.l.b16 %v119
  %v546 = vunpack.c.h.b16 %v119
  %v547 = vunpack.c.l.b16 %v120
  %v548 = vunpack.c.h.b16 %v120
  %v549 = vunpack.c.l.b16 %v121
  %v550 = vunpack.c.l.b16 %v122
  %v551 = vunpack.c.h.b16 %v122
  %v552 = vunpack.c.l.b16 %v123
  %v553 = vunpack.c.h.b16 %v123
  %v554 = vunpack.c.l.b16 %v124
  %v555 = vunpack.c.h.b16 %v124
  %v556 = vunpack.c.l.b16 %v125
  %v557 = vunpack.c.h.b16 %v125
  %v558 = vunpack.c.l.b16 %v126
  %v559 = vunpack.c.h.b16 %v126
  %v560 = vunpack.c.l.b16 %v127
  %v561 = vunpack.c.l.b16 %v128
  %v562 = vunpack.c.h.b16 %v128
  %v563 = vunpack.c.l.b16 %v129
  %v564 = vunpack.c.h.b16 %v129
  %v565 = vunpack.c.l.b16 %v130
  %v566 = vunpack.c.h.b16 %v130
  %v567 = vunpack.c.l.b16 %v131
  %v568 = vunpack.c.h.b16 %v131
  %v569 = vunpack.c.l.b16 %v132
  %v570 = vunpack.c.h.b16 %v132
  %v571 = vunpack.c.l.b16 %v133
  %v572 = vunpack.c.l.b16 %v134
  %v573 = vunpack.c.h.b16 %v134
  %v574 = vunpack.c.l.b16 %v135
  %v575 = vunpack.c.h.b16 %v135
  %v576 = vunpack.c.l.b16 %v136
  %v577 = vunpack.c.h.b16 %v136
  %v578 = vunpack.c.l.b16 %v137
  %v579 = vunpack.c.h.b16 %v137
  %v580 = vunpack.c.l.b16 %v138
  %v581 = vunpack.c.h.b16 %v138
  %v582 = vunpack.c.l.b16 %v139
  %v583 = vunpack.c.l.b16 %v140
  %v584 = vunpack.c.h.b16 %v140
  %v585 = vunpack.c.l.b16 %v141
  %v586 = vunpack.c.h.b16 %v141
  %v587 = vunpack.c.l.b16 %v142
  %v588 = vunpack.c.h.b16 %v142
  %v589 = vunpack.c.l.b16 %v143
  %v590 = vunpack.c.h.b16 %v143
  %v591 = vunpack.c.l.b16 %v144
  %v592 = vunpack.c.h.b16 %v144
  %v593 = vunpack.c.l.b16 %v145
  %v594 = vpack.c.b16 %v429, %v418
  %v595 = vpack.c.b16 %v430, %v419
  %v596 = vpack.c.b16 %v431, %v420
  %v597 = vpack.c.b16 %v432, %v421
  %v598 = vpack.c.b16 %v433, %v422
  %v599 = vpack.c.b16 %v434, %v423
  %v600 = vpack.c.b16 %v435, %v424
  %v601 = vpack.c.b16 %v436, %v425
  %v602 = vpack.c.b16 %v437, %v426
  %v603 = vpack.c.b16 %v438, %v427
  %v604 = vpack.c.b16 %v439, %v428
  %v605 = vpack.c.b16 %v451, %v440
  %v606 = vpack.c.b16 %v452, %v441
  %v607 = vpack.c.b16 %v453, %v442
  %v608 = vpack.c.b16 %v454, %v443
  %v609 = vpack.c.b16 %v455, %v444
  %v610 = vpack.c.b16 %v456, %v445
  %v611 = vpack.c.b16 %v457, %v446
  %v612 = vpack.c.b16 %v458, %v447
  %v613 = vpack.c.b16 %v459, %v448
  %v614 = vpack.c.b16 %v460, %v449
  %v615 = vpack.c.b16 %v461, %v450
  %v616 = vpack.c.b16 %v473, %v462
  %v617 = vpack.c.b16 %v474, %v463
  %v618 = vpack.c.b16 %v475, %v464
  %v619 = vpack.c.b16 %v476, %v465
  %v620 = vpack.c.b16 %v477, %v466
  %v621 = vpack.c.b16 %v478, %v467
  %v622 = vpack.c.b16 %v479, %v468
  %v623 = vpack.c.b16 %v480, %v469
  %v624 = vpack.c.b16 %v481, %v470
  %v625 = vpack.c.b16 %v482, %v471
  %v626 = vpack.c.b16 %v483, %v472
  %v627 = vpack.c.b16 %v495, %v484
  %v628 = vpack.c.b16 %v496, %v485
  %v629 = vpack.c.b16 %v497, %v486
  %v630 = vpack.c.b16 %v498, %v487
  %v631 = vpack.c.b16 %v499, %v488
  %v632 = vpack.c.b16 %v500, %v489
  %v633 = vpack.c.b16 %v501, %v490
  %v634 = vpack.c.b16 %v502, %v491
  %v635 = vpack.c.b16 %v503, %v492
  %v636 = vpack.c.b16 %v504, %v493
  %v637 = vpack.c.b16 %v505, %v494
  %v638 = vpack.c.b16 %v517, %v506
  %v639 = vpack.c.b16 %v518, %v507
  %v640 = vpack.c.b16 %v519, %v508
  %v641 = vpack.c.b16 %v520, %v509
  %v642 = vpack.c.b16 %v521, %v510
  %v643 = vpack.c.b16 %v522, %v511
  %v644 = vpack.c.b16 %v523, %v512
  %v645 = vpack.c.b16 %v524, %v513
  %v646 = vpack.c.b16 %v525, %v514
  %v647 = vpack.c.b16 %v526, %v515
  %v648 = vpack.c.b16 %v527, %v516
  %v649 = vpack.c.b16 %v539, %v528
  %v650 = vpack.c.b16 %v540, %v529
  %v651 = vpack.c.b16 %v541, %v530
  %v652 = vpack.c.b16 %v542, %v531
  %v653 = vpack.c.b16 %v543, %v532
  %v654 = vpack.c.b16 %v544, %v533
  %v655 = vpack.c.b16 %v545, %v534
  %v656 = vpack.c.b16 %v546, %v535
  %v657 = vpack.c.b16 %v547, %v536
  %v658 = vpack.c.b16 %v548, %v537
  %v659 = vpack.c.b16 %v549, %v538
  %v660 = vpack.c.b16 %v561, %v550
  %v661 = vpack.c.b16 %v562, %v551
  %v662 = vpack.c.b16 %v563, %v552
  %v663 = vpack.c.b16 %v564, %v553
  %v664 = vpack.c.b16 %v565, %v554
  %v665 = vpack.c.b16 %v566, %v555
  %v666 = vpack.c.b16 %v567, %v556
  %v667 = vpack.c.b16 %v568, %v557
  %v668 = vpack.c.b16 %v569, %v558
  %v669 = vpack.c.b16 %v570, %v559
  %v670 = vpack.c.b16 %v571, %v560
  %v671 = vpack.c.b16 %v583, %v572
  %v672 = vpack.c.b16 %v584, %v573
  %v673 = vpack.c.b16 %v585, %v574
  %v674 = vpack.c.b16 %v586, %v575
  %v675 = vpack.c.b16 %v587, %v576
  %v676 = vpack.c.b16 %v588, %v577
  %v677 = vpack.c.b16 %v589, %v578
  %v678 = vpack.c.b16 %v590, %v579
  %v679 = vpack.c.b16 %v591, %v580
  %v680 = vpack.c.b16 %v592, %v581
  %v681 = vpack.c.b16 %v593, %v582
  %v946 = vunpack.c.l.b16 %v146
  %v947 = vunpack.c.l.b16 %v147
  %v948 = vunpack.c.l.b16 %v148
  %v949 = vunpack.c.l.b16 %v149
  %v950 = vunpack.c.l.b16 %v150
  %v951 = vunpack.c.l.b16 %v151
  %v952 = vunpack.c.l.b16 %v152
  %v953 = vunpack.c.l.b16 %v153
  %v954 = vunpack.c.l.b16 %v154
  %v955 = vunpack.c.l.b16 %v155
  %v956 = vunpack.c.l.b16 %v156
  %v957 = vunpack.c.l.b16 %v157
  %v958 = vunpack.c.l.b16 %v158
  %v959 = vunpack.c.l.b16 %v159
  %v960 = vunpack.c.l.b16 %v160
  %v961 = vunpack.c.l.b16 %v161
  %v962 = vunpack.c.l.b16 %v162
  %v963 = vunpack.c.l.b16 %v163
  %v964 = vunpack.c.l.b16 %v164
  %v965 = vunpack.c.l.b16 %v165
  %v966 = vunpack.c.l.b16 %v166
  %v967 = vunpack.c.l.b16 %v167
  %v968 = vunpack.c.l.b16 %v168
  %v969 = vunpack.c.l.b16 %v169
  %v970 = vunpack.c.l.b16 %v170
  %v971 = vunpack.c.l.b16 %v171
  %v972 = vunpack.c.l.b16 %v172
  %v973 = vunpack.c.l.b16 %v173
  %v974 = vunpack.c.l.b16 %v174
  %v975 = vunpack.c.l.b16 %v175
  %v976 = vunpack.c.l.b16 %v176
  %v977 = vunpack.c.l.b16 %v177
  %v978 = vunpack.c.l.b16 %v178
  %v979 = vunpack.c.l.b16 %v179
  %v980 = vunpack.c.l.b16 %v180
  %v981 = vunpack.c.l.b16 %v181
  %v982 = vunpack.c.l.b16 %v182
  %v983 = vunpack.c.l.b16 %v183
  %v984 = vunpack.c.l.b16 %v184
  %v985 = vunpack.c.l.b16 %v185
  %v986 = vunpack.c.l.b16 %v186
  %v987 = vunpack.c.l.b16 %v187
  %v988 = vunpack.c.l.b16 %v188
  %v989 = vunpack.c.l.b16 %v189
  %v990 = vunpack.c.l.b16 %v190
  %v991 = vunpack.c.l.b16 %v191
  %v992 = vunpack.c.l.b16 %v192
  %v993 = vunpack.c.l.b16 %v193
  %v994 = vunpack.c.l.b16 %v194
  %v995 = vunpack.c.l.b16 %v195
  %v996 = vunpack.c.l.b16 %v196
  %v997 = vunpack.c.l.b16 %v197
  %v998 = vunpack.c.l.b16 %v198
  %v999 = vunpack.c.l.b16 %v199
  %v1000 = vunpack.c.l.b16 %v200
  %v1001 = vunpack.c.l.b16 %v201
  %v1002 = vunpack.c.l.b16 %v202
  %v1003 = vunpack.c.l.b16 %v203
  %v1004 = vunpack.c.l.b16 %v204
  %v1005 = vunpack.c.l.b16 %v205
  %v1006 = vunpack.c.l.b16 %v206
  %v1007 = vunpack.c.l.b16 %v207
  %v1008 = vunpack.c.l.b16 %v208
  %v1009 = vunpack.c.l.b16 %v209
  %v1010 = vunpack.c.l.b16 %v210
  %v1011 = vunpack.c.l.b16 %v211
  %v1012 = vunpack.c.l.b16 %v212
  %v1013 = vunpack.c.l.b16 %v213
  %v1014 = vunpack.c.l.b16 %v214
  %v1015 = vunpack.c.l.b16 %v215
  %v1016 = vunpack.c.l.b16 %v216
  %v1017 = vunpack.c.l.b16 %v217
  %v1018 = vunpack.c.l.b16 %v218
  %v1019 = vunpack.c.l.b16 %v219
  %v1020 = vunpack.c.l.b16 %v220
  %v1021 = vunpack.c.l.b16 %v221
  %v1022 = vunpack.c.l.b16 %v222
  %v1023 = vunpack.c.l.b16 %v223
  %v1024 = vunpack.c.l.b16 %v224
  %v1025 = vunpack.c.l.b16 %v225
  %v1026 = vunpack.c.l.b16 %v226
  %v1027 = vunpack.c.l.b16 %v227
  %v1028 = vunpack.c.l.b16 %v228
  %v1029 = vunpack.c.l.b16 %v229
  %v1030 = vunpack.c.l.b16 %v230
  %v1031 = vunpack.c.l.b16 %v231
  %v1032 = vunpack.c.l.b16 %v232
  %v1033 = vunpack.c.l.b16 %v233
  %v1034 = vunpack.c.l.b16 %v234
  %v1035 = vunpack.c.l.b16 %v235
  %v1036 = vunpack.c.l.b16 %v236
  %v1037 = vunpack.c.l.b16 %v237
  %v1038 = vunpack.c.l.b16 %v238
  %v1039 = vunpack.c.l.b16 %v239
  %v1040 = vunpack.c.l.b16 %v240
  %v1041 = vunpack.c.l.b16 %v241
  %v1042 = vunpack.c.l.b16 %v242
  %v1043 = vunpack.c.l.b16 %v243
  %v1044 = vunpack.c.l.b16 %v244
  %v1045 = vunpack.c.l.b16 %v245
  %v1046 = vunpack.c.l.b16 %v246
  %v1047 = vunpack.c.l.b16 %v247
  %v1048 = vunpack.c.l.b16 %v248
  %v1049 = vunpack.c.l.b16 %v249
  %v1050 = vunpack.c.l.b16 %v250
  %v1051 = vunpack.c.l.b16 %v251
  %v1052 = vunpack.c.l.b16 %v252
  %v1053 = vunpack.c.l.b16 %v253
  %v1054 = vunpack.c.l.b16 %v254
  %v1055 = vunpack.c.l.b16 %v255
  %v1056 = vunpack.c.l.b16 %v256
  %v1057 = vunpack.c.l.b16 %v257
  %v1058 = vunpack.c.l.b16 %v258
  %v1059 = vunpack.c.l.b16 %v259
  %v1060 = vunpack.c.l.b16 %v260
  %v1061 = vunpack.c.l.b16 %v261
  %v1062 = vunpack.c.l.b16 %v262
  %v1063 = vunpack.c.l.b16 %v263
  %v1064 = vunpack.c.l.b16 %v264
  %v1065 = vunpack.c.l.b16 %v265
  %v1066 = vunpack.c.l.b16 %v266
  %v1067 = vunpack.c.l.b16 %v267
  %v1068 = vunpack.c.l.b16 %v268
  %v1069 = vunpack.c.l.b16 %v269
  %v1070 = vunpack.c.l.b16 %v270
  %v1071 = vunpack.c.l.b16 %v271
  %v1072 = vunpack.c.l.b16 %v272
  %v1073 = vunpack.c.l.b16 %v273
  %v1074 = vunpack.c.l.b16 %v274
  %v1075 = vunpack.c.l.b16 %v275
  %v1076 = vunpack.c.l.b16 %v276
  %v1077 = vunpack.c.l.b16 %v277
  %v1078 = vunpack.c.l.b16 %v278
  %v1079 = vunpack.c.l.b16 %v279
  %v1080 = vunpack.c.l.b16 %v280
  %v1081 = vunpack.c.l.b16 %v281
  %v1082 = vunpack.c.l.b16 %v282
  %v1083 = vunpack.c.l.b16 %v283
  %v1084 = vunpack.c.l.b16 %v284
  %v1085 = vunpack.c.l.b16 %v285
  %v1086 = vunpack.c.l.b16 %v286
  %v1087 = vunpack.c.l.b16 %v287
  %v1088 = vunpack.c.l.b16 %v288
  %v1089 = vunpack.c.l.b16 %v289
  %v1090 = vunpack.c.l.b16 %v290
  %v1091 = vunpack.c.l.b16 %v291
  %v1092 = vunpack.c.l.b16 %v292
  %v1093 = vunpack.c.l.b16 %v293
  %v1094 = vunpack.c.l.b16 %v294
  %v1095 = vunpack.c.l.b16 %v295
  %v1096 = vunpack.c.l.b16 %v296
  %v1097 = vunpack.c.l.b16 %v297
  %v1098 = vunpack.c.l.b16 %v298
  %v1099 = vunpack.c.l.b16 %v299
  %v1100 = vunpack.c.l.b16 %v300
  %v1101 = vunpack.c.l.b16 %v301
  %v1102 = vunpack.c.l.b16 %v302
  %v1103 = vunpack.c.l.b16 %v303
  %v1104 = vunpack.c.l.b16 %v304
  %v1105 = vunpack.c.l.b16 %v305
  %v1106 = vunpack.c.l.b16 %v306
  %v1107 = vunpack.c.l.b16 %v307
  %v1108 = vunpack.c.l.b16 %v308
  %v1109 = vunpack.c.l.b16 %v309
  %v1110 = vunpack.c.l.b16 %v310
  %v1111 = vunpack.c.l.b16 %v311
  %v1112 = vunpack.c.l.b16 %v312
  %v1113 = vunpack.c.l.b16 %v313
  %v1114 = vunpack.c.l.b16 %v314
  %v1115 = vunpack.c.l.b16 %v315
  %v1116 = vunpack.c.l.b16 %v316
  %v1117 = vunpack.c.l.b16 %v317
  %v1118 = vunpack.c.l.b16 %v318
  %v1119 = vunpack.c.l.b16 %v319
  %v1120 = vunpack.c.l.b16 %v320
  %v1121 = vunpack.c.l.b16 %v321
  %v1122 = vpack.c.b16 %v947, %v946
  %v1123 = vpack.c.b16 %v949, %v948
  %v1124 = vpack.c.b16 %v951, %v950
  %v1125 = vpack.c.b16 %v953, %v952
  %v1126 = vpack.c.b16 %v955, %v954
  %v1127 = vpack.c.b16 %v957, %v956
  %v1128 = vpack.c.b16 %v959, %v958
  %v1129 = vpack.c.b16 %v961, %v960
  %v1130 = vpack.c.b16 %v963, %v962
  %v1131 = vpack.c.b16 %v965, %v964
  %v1132 = vpack.c.b16 %v967, %v966
  %v1133 = vpack.c.b16 %v969, %v968
  %v1134 = vpack.c.b16 %v971, %v970
  %v1135 = vpack.c.b16 %v973, %v972
  %v1136 = vpack.c.b16 %v975, %v974
  %v1137 = vpack.c.b16 %v977, %v976
  %v1138 = vpack.c.b16 %v979, %v978
  %v1139 = vpack.c.b16 %v981, %v980
  %v1140 = vpack.c.b16 %v983, %v982
  %v1141 = vpack.c.b16 %v985, %v984
  %v1142 = vpack.c.b16 %v987, %v986
  %v1143 = vpack.c.b16 %v989, %v988
  %v1144 = vpack.c.b16 %v991, %v990
  %v1145 = vpack.c.b16 %v993, %v992
  %v1146 = vpack.c.b16 %v995, %v994
  %v1147 = vpack.c.b16 %v997, %v996
  %v1148 = vpack.c.b16 %v999, %v998
  %v1149 = vpack.c.b16 %v1001, %v1000
  %v1150 = vpack.c.b16 %v1003, %v1002
  %v1151 = vpack.c.b16 %v1005, %v1004
  %v1152 = vpack.c.b16 %v1007, %v1006
  %v1153 = vpack.c.b16 %v1009, %v1008
  %v1154 = vpack.c.b16 %v1011, %v1010
  %v1155 = vpack.c.b16 %v1013, %v1012
  %v1156 = vpack.c.b16 %v1015, %v1014
  %v1157 = vpack.c.b16 %v1017, %v1016
  %v1158 = vpack.c.b16 %v1019, %v1018
  %v1159 = vpack.c.b16 %v1021, %v1020
  %v1160 = vpack.c.b16 %v1023, %v1022
  %v1161 = vpack.c.b16 %v1025, %v1024
  %v1162 = vpack.c.b16 %v1027, %v1026
  %v1163 = vpack.c.b16 %v1029, %v1028
  %v1164 = vpack.c.b16 %v1031, %v1030
  %v1165 = vpack.c.b16 %v1033, %v1032
  %v1166 = vpack.c.b16 %v1035, %v1034
  %v1167 = vpack.c.b16 %v1037, %v1036
  %v1168 = vpack.c.b16 %v1039, %v1038
  %v1169 = vpack.c.b16 %v1041, %v1040
  %v1170 = vpack.c.b16 %v1043, %v1042
  %v1171 = vpack.c.b16 %v1045, %v1044
  %v1172 = vpack.c.b16 %v1047, %v1046
  %v1173 = vpack.c.b16 %v1049, %v1048
  %v1174 = vpack.c.b16 %v1051, %v1050
  %v1175 = vpack.c.b16 %v1053, %v1052
  %v1176 = vpack.c.b16 %v1055, %v1054
  %v1177 = vpack.c.b16 %v1057, %v1056
  %v1178 = vpack.c.b16 %v1059, %v1058
  %v1179 = vpack.c.b16 %v1061, %v1060
  %v1180 = vpack.c.b16 %v1063, %v1062
  %v1181 = vpack.c.b16 %v1065, %v1064
  %v1182 = vpack.c.b16 %v1067, %v1066
  %v1183 = vpack.c.b16 %v1069, %v1068
  %v1184 = vpack.c.b16 %v1071, %v1070
  %v1185 = vpack.c.b16 %v1073, %v1072
  %v1186 = vpack.c.b16 %v1075, %v1074
  %v1187 = vpack.c.b16 %v1077, %v1076
  %v1188 = vpack.c.b16 %v1079, %v1078
  %v1189 = vpack.c.b16 %v1081, %v1080
  %v1190 = vpack.c.b16 %v1083, %v1082
  %v1191 = vpack.c.b16 %v1085, %v1084
  %v1192 = vpack.c.b16 %v1087, %v1086
  %v1193 = vpack.c.b16 %v1089, %v1088
  %v1194 = vpack.c.b16 %v1091, %v1090
  %v1195 = vpack.c.b16 %v1093, %v1092
  %v1196 = vpack.c.b16 %v1095, %v1094
  %v1197 = vpack.c.b16 %v1097, %v1096
  %v1198 = vpack.c.b16 %v1099, %v1098
  %v1199 = vpack.c.b16 %v1101, %v1100
  %v1200 = vpack.c.b16 %v1103, %v1102
  %v1201 = vpack.c.b16 %v1105, %v1104
  %v1202 = vpack.c.b16 %v1107, %v1106
  %v1203 = vpack.c.b16 %v1109, %v1108
  %v1204 = vpack.c.b16 %v1111, %v1110
  %v1205 = vpack.c.b16 %v1113, %v1112
  %v1206 = vpack.c.b16 %v1115, %v1114
  %v1207 = vpack.c.b16 %v1117, %v1116
  %v1208 = vpack.c.b16 %v1119, %v1118
  %v1209 = vpack.c.b16 %v1121, %v1120
  %1298 = vmatpush.bf16.msra.mxu0 %v1129
  %1299 = vmatpush.bf16.msra.mxu0 %v1128
  %1300 = vmatpush.bf16.msra.mxu0 %v1127
  %1301 = vmatpush.bf16.msra.mxu0 %v1126
  %1302 = vmatpush.bf16.msra.mxu0 %v1125
  %1303 = vmatpush.bf16.msra.mxu0 %v1124
  %1304 = vmatpush.bf16.msra.mxu0 %v1123
  %1305 = vmatpush.bf16.msra.mxu0 %v1122
  %1306 = vmatmul.bf16.gmra.mxu0 %v594
  %v1307 = vpop.f32.mrf.mxu0
  %v1308 = vadd.f32 0.0, %v1307
  %v1309 = vpop.f32.mrf.mxu0
  %v1310 = vadd.f32 0.0, %v1309
  %1311 = vmatmul.bf16.gmra.mxu0 %v605
  %v1312 = vpop.f32.mrf.mxu0
  %v1313 = vadd.f32 0.0, %v1312
  %v1314 = vpop.f32.mrf.mxu0
  %v1315 = vadd.f32 0.0, %v1314
  %1316 = vmatmul.bf16.gmra.mxu0 %v616
  %v1317 = vpop.f32.mrf.mxu0
  %v1318 = vadd.f32 0.0, %v1317
  %v1319 = vpop.f32.mrf.mxu0
  %v1320 = vadd.f32 0.0, %v1319
  %1321 = vmatmul.bf16.gmra.mxu0 %v627
  %v1322 = vpop.f32.mrf.mxu0
  %v1323 = vadd.f32 0.0, %v1322
  %v1324 = vpop.f32.mrf.mxu0
  %v1325 = vadd.f32 0.0, %v1324
  %1326 = vmatmul.bf16.gmra.mxu0 %v638
  %v1327 = vpop.f32.mrf.mxu0
  %v1328 = vadd.f32 0.0, %v1327
  %v1329 = vpop.f32.mrf.mxu0
  %v1330 = vadd.f32 0.0, %v1329
  %1331 = vmatmul.bf16.gmra.mxu0 %v649
  %v1332 = vpop.f32.mrf.mxu0
  %v1333 = vadd.f32 0.0, %v1332
  %v1334 = vpop.f32.mrf.mxu0
  %v1335 = vadd.f32 0.0, %v1334
  %1336 = vmatmul.bf16.gmra.mxu0 %v660
  %v1337 = vpop.f32.mrf.mxu0
  %v1338 = vadd.f32 0.0, %v1337
  %v1339 = vpop.f32.mrf.mxu0
  %v1340 = vadd.f32 0.0, %v1339
  %1341 = vmatmul.bf16.gmra.mxu0 %v671
  %v1342 = vpop.f32.mrf.mxu0
  %v1343 = vadd.f32 0.0, %v1342
  %v1344 = vpop.f32.mrf.mxu0
  %v1345 = vadd.f32 0.0, %v1344
  %1346 = vdwg.mxu0
  %1347 = vmatpush.bf16.msra.mxu0 %v1137
  %1348 = vmatpush.bf16.msra.mxu0 %v1136
  %1349 = vmatpush.bf16.msra.mxu0 %v1135
  %1350 = vmatpush.bf16.msra.mxu0 %v1134
  %1351 = vmatpush.bf16.msra.mxu0 %v1133
  %1352 = vmatpush.bf16.msra.mxu0 %v1132
  %1353 = vmatpush.bf16.msra.mxu0 %v1131
  %1354 = vmatpush.bf16.msra.mxu0 %v1130
  %1355 = vmatmul.bf16.gmra.mxu0 %v595
  %v1356 = vpop.f32.mrf.mxu0
  %v1357 = vadd.f32 %v1308, %v1356
  %v1358 = vpop.f32.mrf.mxu0
  %v1359 = vadd.f32 %v1310, %v1358
  %1360 = vmatmul.bf16.gmra.mxu0 %v606
  %v1361 = vpop.f32.mrf.mxu0
  %v1362 = vadd.f32 %v1313, %v1361
  %v1363 = vpop.f32.mrf.mxu0
  %v1364 = vadd.f32 %v1315, %v1363
  %1365 = vmatmul.bf16.gmra.mxu0 %v617
  %v1366 = vpop.f32.mrf.mxu0
  %v1367 = vadd.f32 %v1318, %v1366
  %v1368 = vpop.f32.mrf.mxu0
  %v1369 = vadd.f32 %v1320, %v1368
  %1370 = vmatmul.bf16.gmra.mxu0 %v628
  %v1371 = vpop.f32.mrf.mxu0
  %v1372 = vadd.f32 %v1323, %v1371
  %v1373 = vpop.f32.mrf.mxu0
  %v1374 = vadd.f32 %v1325, %v1373
  %1375 = vmatmul.bf16.gmra.mxu0 %v639
  %v1376 = vpop.f32.mrf.mxu0
  %v1377 = vadd.f32 %v1328, %v1376
  %v1378 = vpop.f32.mrf.mxu0
  %v1379 = vadd.f32 %v1330, %v1378
  %1380 = vmatmul.bf16.gmra.mxu0 %v650
  %v1381 = vpop.f32.mrf.mxu0
  %v1382 = vadd.f32 %v1333, %v1381
  %v1383 = vpop.f32.mrf.mxu0
  %v1384 = vadd.f32 %v1335, %v1383
  %1385 = vmatmul.bf16.gmra.mxu0 %v661
  %v1386 = vpop.f32.mrf.mxu0
  %v1387 = vadd.f32 %v1338, %v1386
  %v1388 = vpop.f32.mrf.mxu0
  %v1389 = vadd.f32 %v1340, %v1388
  %1390 = vmatmul.bf16.gmra.mxu0 %v672
  %v1391 = vpop.f32.mrf.mxu0
  %v1392 = vadd.f32 %v1343, %v1391
  %v1393 = vpop.f32.mrf.mxu0
  %v1394 = vadd.f32 %v1345, %v1393
  %1395 = vdwg.mxu0
  %1396 = vmatpush.bf16.msra.mxu0 %v1145
  %1397 = vmatpush.bf16.msra.mxu0 %v1144
  %1398 = vmatpush.bf16.msra.mxu0 %v1143
  %1399 = vmatpush.bf16.msra.mxu0 %v1142
  %1400 = vmatpush.bf16.msra.mxu0 %v1141
  %1401 = vmatpush.bf16.msra.mxu0 %v1140
  %1402 = vmatpush.bf16.msra.mxu0 %v1139
  %1403 = vmatpush.bf16.msra.mxu0 %v1138
  %1404 = vmatmul.bf16.gmra.mxu0 %v596
  %v1405 = vpop.f32.mrf.mxu0
  %v1406 = vadd.f32 %v1357, %v1405
  %v1407 = vpop.f32.mrf.mxu0
  %v1408 = vadd.f32 %v1359, %v1407
  %1409 = vmatmul.bf16.gmra.mxu0 %v607
  %v1410 = vpop.f32.mrf.mxu0
  %v1411 = vadd.f32 %v1362, %v1410
  %v1412 = vpop.f32.mrf.mxu0
  %v1413 = vadd.f32 %v1364, %v1412
  %1414 = vmatmul.bf16.gmra.mxu0 %v618
  %v1415 = vpop.f32.mrf.mxu0
  %v1416 = vadd.f32 %v1367, %v1415
  %v1417 = vpop.f32.mrf.mxu0
  %v1418 = vadd.f32 %v1369, %v1417
  %1419 = vmatmul.bf16.gmra.mxu0 %v629
  %v1420 = vpop.f32.mrf.mxu0
  %v1421 = vadd.f32 %v1372, %v1420
  %v1422 = vpop.f32.mrf.mxu0
  %v1423 = vadd.f32 %v1374, %v1422
  %1424 = vmatmul.bf16.gmra.mxu0 %v640
  %v1425 = vpop.f32.mrf.mxu0
  %v1426 = vadd.f32 %v1377, %v1425
  %v1427 = vpop.f32.mrf.mxu0
  %v1428 = vadd.f32 %v1379, %v1427
  %1429 = vmatmul.bf16.gmra.mxu0 %v651
  %v1430 = vpop.f32.mrf.mxu0
  %v1431 = vadd.f32 %v1382, %v1430
  %v1432 = vpop.f32.mrf.mxu0
  %v1433 = vadd.f32 %v1384, %v1432
  %1434 = vmatmul.bf16.gmra.mxu0 %v662
  %v1435 = vpop.f32.mrf.mxu0
  %v1436 = vadd.f32 %v1387, %v1435
  %v1437 = vpop.f32.mrf.mxu0
  %v1438 = vadd.f32 %v1389, %v1437
  %1439 = vmatmul.bf16.gmra.mxu0 %v673
  %v1440 = vpop.f32.mrf.mxu0
  %v1441 = vadd.f32 %v1392, %v1440
  %v1442 = vpop.f32.mrf.mxu0
  %v1443 = vadd.f32 %v1394, %v1442
  %1444 = vdwg.mxu0
  %1445 = vmatpush.bf16.msra.mxu0 %v1153
  %1446 = vmatpush.bf16.msra.mxu0 %v1152
  %1447 = vmatpush.bf16.msra.mxu0 %v1151
  %1448 = vmatpush.bf16.msra.mxu0 %v1150
  %1449 = vmatpush.bf16.msra.mxu0 %v1149
  %1450 = vmatpush.bf16.msra.mxu0 %v1148
  %1451 = vmatpush.bf16.msra.mxu0 %v1147
  %1452 = vmatpush.bf16.msra.mxu0 %v1146
  %1453 = vmatmul.bf16.gmra.mxu0 %v597
  %v1454 = vpop.f32.mrf.mxu0
  %v1455 = vadd.f32 %v1406, %v1454
  %v1456 = vpop.f32.mrf.mxu0
  %v1457 = vadd.f32 %v1408, %v1456
  %1458 = vmatmul.bf16.gmra.mxu0 %v608
  %v1459 = vpop.f32.mrf.mxu0
  %v1460 = vadd.f32 %v1411, %v1459
  %v1461 = vpop.f32.mrf.mxu0
  %v1462 = vadd.f32 %v1413, %v1461
  %1463 = vmatmul.bf16.gmra.mxu0 %v619
  %v1464 = vpop.f32.mrf.mxu0
  %v1465 = vadd.f32 %v1416, %v1464
  %v1466 = vpop.f32.mrf.mxu0
  %v1467 = vadd.f32 %v1418, %v1466
  %1468 = vmatmul.bf16.gmra.mxu0 %v630
  %v1469 = vpop.f32.mrf.mxu0
  %v1470 = vadd.f32 %v1421, %v1469
  %v1471 = vpop.f32.mrf.mxu0
  %v1472 = vadd.f32 %v1423, %v1471
  %1473 = vmatmul.bf16.gmra.mxu0 %v641
  %v1474 = vpop.f32.mrf.mxu0
  %v1475 = vadd.f32 %v1426, %v1474
  %v1476 = vpop.f32.mrf.mxu0
  %v1477 = vadd.f32 %v1428, %v1476
  %1478 = vmatmul.bf16.gmra.mxu0 %v652
  %v1479 = vpop.f32.mrf.mxu0
  %v1480 = vadd.f32 %v1431, %v1479
  %v1481 = vpop.f32.mrf.mxu0
  %v1482 = vadd.f32 %v1433, %v1481
  %1483 = vmatmul.bf16.gmra.mxu0 %v663
  %v1484 = vpop.f32.mrf.mxu0
  %v1485 = vadd.f32 %v1436, %v1484
  %v1486 = vpop.f32.mrf.mxu0
  %v1487 = vadd.f32 %v1438, %v1486
  %1488 = vmatmul.bf16.gmra.mxu0 %v674
  %v1489 = vpop.f32.mrf.mxu0
  %v1490 = vadd.f32 %v1441, %v1489
  %v1491 = vpop.f32.mrf.mxu0
  %v1492 = vadd.f32 %v1443, %v1491
  %1493 = vdwg.mxu0
  %1494 = vmatpush.bf16.msra.mxu0 %v1161
  %1495 = vmatpush.bf16.msra.mxu0 %v1160
  %1496 = vmatpush.bf16.msra.mxu0 %v1159
  %1497 = vmatpush.bf16.msra.mxu0 %v1158
  %1498 = vmatpush.bf16.msra.mxu0 %v1157
  %1499 = vmatpush.bf16.msra.mxu0 %v1156
  %1500 = vmatpush.bf16.msra.mxu0 %v1155
  %1501 = vmatpush.bf16.msra.mxu0 %v1154
  %1502 = vmatmul.bf16.gmra.mxu0 %v598
  %v1503 = vpop.f32.mrf.mxu0
  %v1504 = vadd.f32 %v1455, %v1503
  %v1505 = vpop.f32.mrf.mxu0
  %v1506 = vadd.f32 %v1457, %v1505
  %1507 = vmatmul.bf16.gmra.mxu0 %v609
  %v1508 = vpop.f32.mrf.mxu0
  %v1509 = vadd.f32 %v1460, %v1508
  %v1510 = vpop.f32.mrf.mxu0
  %v1511 = vadd.f32 %v1462, %v1510
  %1512 = vmatmul.bf16.gmra.mxu0 %v620
  %v1513 = vpop.f32.mrf.mxu0
  %v1514 = vadd.f32 %v1465, %v1513
  %v1515 = vpop.f32.mrf.mxu0
  %v1516 = vadd.f32 %v1467, %v1515
  %1517 = vmatmul.bf16.gmra.mxu0 %v631
  %v1518 = vpop.f32.mrf.mxu0
  %v1519 = vadd.f32 %v1470, %v1518
  %v1520 = vpop.f32.mrf.mxu0
  %v1521 = vadd.f32 %v1472, %v1520
  %1522 = vmatmul.bf16.gmra.mxu0 %v642
  %v1523 = vpop.f32.mrf.mxu0
  %v1524 = vadd.f32 %v1475, %v1523
  %v1525 = vpop.f32.mrf.mxu0
  %v1526 = vadd.f32 %v1477, %v1525
  %1527 = vmatmul.bf16.gmra.mxu0 %v653
  %v1528 = vpop.f32.mrf.mxu0
  %v1529 = vadd.f32 %v1480, %v1528
  %v1530 = vpop.f32.mrf.mxu0
  %v1531 = vadd.f32 %v1482, %v1530
  %1532 = vmatmul.bf16.gmra.mxu0 %v664
  %v1533 = vpop.f32.mrf.mxu0
  %v1534 = vadd.f32 %v1485, %v1533
  %v1535 = vpop.f32.mrf.mxu0
  %v1536 = vadd.f32 %v1487, %v1535
  %1537 = vmatmul.bf16.gmra.mxu0 %v675
  %v1538 = vpop.f32.mrf.mxu0
  %v1539 = vadd.f32 %v1490, %v1538
  %v1540 = vpop.f32.mrf.mxu0
  %v1541 = vadd.f32 %v1492, %v1540
  %1542 = vdwg.mxu0
  %1543 = vmatpush.bf16.msra.mxu0 %v1169
  %1544 = vmatpush.bf16.msra.mxu0 %v1168
  %1545 = vmatpush.bf16.msra.mxu0 %v1167
  %1546 = vmatpush.bf16.msra.mxu0 %v1166
  %1547 = vmatpush.bf16.msra.mxu0 %v1165
  %1548 = vmatpush.bf16.msra.mxu0 %v1164
  %1549 = vmatpush.bf16.msra.mxu0 %v1163
  %1550 = vmatpush.bf16.msra.mxu0 %v1162
  %1551 = vmatmul.bf16.gmra.mxu0 %v599
  %v1552 = vpop.f32.mrf.mxu0
  %v1553 = vadd.f32 %v1504, %v1552
  %v1554 = vpop.f32.mrf.mxu0
  %v1555 = vadd.f32 %v1506, %v1554
  %1556 = vmatmul.bf16.gmra.mxu0 %v610
  %v1557 = vpop.f32.mrf.mxu0
  %v1558 = vadd.f32 %v1509, %v1557
  %v1559 = vpop.f32.mrf.mxu0
  %v1560 = vadd.f32 %v1511, %v1559
  %1561 = vmatmul.bf16.gmra.mxu0 %v621
  %v1562 = vpop.f32.mrf.mxu0
  %v1563 = vadd.f32 %v1514, %v1562
  %v1564 = vpop.f32.mrf.mxu0
  %v1565 = vadd.f32 %v1516, %v1564
  %1566 = vmatmul.bf16.gmra.mxu0 %v632
  %v1567 = vpop.f32.mrf.mxu0
  %v1568 = vadd.f32 %v1519, %v1567
  %v1569 = vpop.f32.mrf.mxu0
  %v1570 = vadd.f32 %v1521, %v1569
  %1571 = vmatmul.bf16.gmra.mxu0 %v643
  %v1572 = vpop.f32.mrf.mxu0
  %v1573 = vadd.f32 %v1524, %v1572
  %v1574 = vpop.f32.mrf.mxu0
  %v1575 = vadd.f32 %v1526, %v1574
  %1576 = vmatmul.bf16.gmra.mxu0 %v654
  %v1577 = vpop.f32.mrf.mxu0
  %v1578 = vadd.f32 %v1529, %v1577
  %v1579 = vpop.f32.mrf.mxu0
  %v1580 = vadd.f32 %v1531, %v1579
  %1581 = vmatmul.bf16.gmra.mxu0 %v665
  %v1582 = vpop.f32.mrf.mxu0
  %v1583 = vadd.f32 %v1534, %v1582
  %v1584 = vpop.f32.mrf.mxu0
  %v1585 = vadd.f32 %v1536, %v1584
  %1586 = vmatmul.bf16.gmra.mxu0 %v676
  %v1587 = vpop.f32.mrf.mxu0
  %v1588 = vadd.f32 %v1539, %v1587
  %v1589 = vpop.f32.mrf.mxu0
  %v1590 = vadd.f32 %v1541, %v1589
  %1591 = vdwg.mxu0
  %1592 = vmatpush.bf16.msra.mxu0 %v1177
  %1593 = vmatpush.bf16.msra.mxu0 %v1176
  %1594 = vmatpush.bf16.msra.mxu0 %v1175
  %1595 = vmatpush.bf16.msra.mxu0 %v1174
  %1596 = vmatpush.bf16.msra.mxu0 %v1173
  %1597 = vmatpush.bf16.msra.mxu0 %v1172
  %1598 = vmatpush.bf16.msra.mxu0 %v1171
  %1599 = vmatpush.bf16.msra.mxu0 %v1170
  %1600 = vmatmul.bf16.gmra.mxu0 %v600
  %v1601 = vpop.f32.mrf.mxu0
  %v1602 = vadd.f32 %v1553, %v1601
  %v1603 = vpop.f32.mrf.mxu0
  %v1604 = vadd.f32 %v1555, %v1603
  %1605 = vmatmul.bf16.gmra.mxu0 %v611
  %v1606 = vpop.f32.mrf.mxu0
  %v1607 = vadd.f32 %v1558, %v1606
  %v1608 = vpop.f32.mrf.mxu0
  %v1609 = vadd.f32 %v1560, %v1608
  %1610 = vmatmul.bf16.gmra.mxu0 %v622
  %v1611 = vpop.f32.mrf.mxu0
  %v1612 = vadd.f32 %v1563, %v1611
  %v1613 = vpop.f32.mrf.mxu0
  %v1614 = vadd.f32 %v1565, %v1613
  %1615 = vmatmul.bf16.gmra.mxu0 %v633
  %v1616 = vpop.f32.mrf.mxu0
  %v1617 = vadd.f32 %v1568, %v1616
  %v1618 = vpop.f32.mrf.mxu0
  %v1619 = vadd.f32 %v1570, %v1618
  %1620 = vmatmul.bf16.gmra.mxu0 %v644
  %v1621 = vpop.f32.mrf.mxu0
  %v1622 = vadd.f32 %v1573, %v1621
  %v1623 = vpop.f32.mrf.mxu0
  %v1624 = vadd.f32 %v1575, %v1623
  %1625 = vmatmul.bf16.gmra.mxu0 %v655
  %v1626 = vpop.f32.mrf.mxu0
  %v1627 = vadd.f32 %v1578, %v1626
  %v1628 = vpop.f32.mrf.mxu0
  %v1629 = vadd.f32 %v1580, %v1628
  %1630 = vmatmul.bf16.gmra.mxu0 %v666
  %v1631 = vpop.f32.mrf.mxu0
  %v1632 = vadd.f32 %v1583, %v1631
  %v1633 = vpop.f32.mrf.mxu0
  %v1634 = vadd.f32 %v1585, %v1633
  %1635 = vmatmul.bf16.gmra.mxu0 %v677
  %v1636 = vpop.f32.mrf.mxu0
  %v1637 = vadd.f32 %v1588, %v1636
  %v1638 = vpop.f32.mrf.mxu0
  %v1639 = vadd.f32 %v1590, %v1638
  %1640 = vdwg.mxu0
  %1641 = vmatpush.bf16.msra.mxu0 %v1185
  %1642 = vmatpush.bf16.msra.mxu0 %v1184
  %1643 = vmatpush.bf16.msra.mxu0 %v1183
  %1644 = vmatpush.bf16.msra.mxu0 %v1182
  %1645 = vmatpush.bf16.msra.mxu0 %v1181
  %1646 = vmatpush.bf16.msra.mxu0 %v1180
  %1647 = vmatpush.bf16.msra.mxu0 %v1179
  %1648 = vmatpush.bf16.msra.mxu0 %v1178
  %1649 = vmatmul.bf16.gmra.mxu0 %v601
  %v1650 = vpop.f32.mrf.mxu0
  %v1651 = vadd.f32 %v1602, %v1650
  %v1652 = vpop.f32.mrf.mxu0
  %v1653 = vadd.f32 %v1604, %v1652
  %1654 = vmatmul.bf16.gmra.mxu0 %v612
  %v1655 = vpop.f32.mrf.mxu0
  %v1656 = vadd.f32 %v1607, %v1655
  %v1657 = vpop.f32.mrf.mxu0
  %v1658 = vadd.f32 %v1609, %v1657
  %1659 = vmatmul.bf16.gmra.mxu0 %v623
  %v1660 = vpop.f32.mrf.mxu0
  %v1661 = vadd.f32 %v1612, %v1660
  %v1662 = vpop.f32.mrf.mxu0
  %v1663 = vadd.f32 %v1614, %v1662
  %1664 = vmatmul.bf16.gmra.mxu0 %v634
  %v1665 = vpop.f32.mrf.mxu0
  %v1666 = vadd.f32 %v1617, %v1665
  %v1667 = vpop.f32.mrf.mxu0
  %v1668 = vadd.f32 %v1619, %v1667
  %1669 = vmatmul.bf16.gmra.mxu0 %v645
  %v1670 = vpop.f32.mrf.mxu0
  %v1671 = vadd.f32 %v1622, %v1670
  %v1672 = vpop.f32.mrf.mxu0
  %v1673 = vadd.f32 %v1624, %v1672
  %1674 = vmatmul.bf16.gmra.mxu0 %v656
  %v1675 = vpop.f32.mrf.mxu0
  %v1676 = vadd.f32 %v1627, %v1675
  %v1677 = vpop.f32.mrf.mxu0
  %v1678 = vadd.f32 %v1629, %v1677
  %1679 = vmatmul.bf16.gmra.mxu0 %v667
  %v1680 = vpop.f32.mrf.mxu0
  %v1681 = vadd.f32 %v1632, %v1680
  %v1682 = vpop.f32.mrf.mxu0
  %v1683 = vadd.f32 %v1634, %v1682
  %1684 = vmatmul.bf16.gmra.mxu0 %v678
  %v1685 = vpop.f32.mrf.mxu0
  %v1686 = vadd.f32 %v1637, %v1685
  %v1687 = vpop.f32.mrf.mxu0
  %v1688 = vadd.f32 %v1639, %v1687
  %1689 = vdwg.mxu0
  %1690 = vmatpush.bf16.msra.mxu0 %v1193
  %1691 = vmatpush.bf16.msra.mxu0 %v1192
  %1692 = vmatpush.bf16.msra.mxu0 %v1191
  %1693 = vmatpush.bf16.msra.mxu0 %v1190
  %1694 = vmatpush.bf16.msra.mxu0 %v1189
  %1695 = vmatpush.bf16.msra.mxu0 %v1188
  %1696 = vmatpush.bf16.msra.mxu0 %v1187
  %1697 = vmatpush.bf16.msra.mxu0 %v1186
  %1698 = vmatmul.bf16.gmra.mxu0 %v602
  %v1699 = vpop.f32.mrf.mxu0
  %v1700 = vadd.f32 %v1651, %v1699
  %v1701 = vpop.f32.mrf.mxu0
  %v1702 = vadd.f32 %v1653, %v1701
  %1703 = vmatmul.bf16.gmra.mxu0 %v613
  %v1704 = vpop.f32.mrf.mxu0
  %v1705 = vadd.f32 %v1656, %v1704
  %v1706 = vpop.f32.mrf.mxu0
  %v1707 = vadd.f32 %v1658, %v1706
  %1708 = vmatmul.bf16.gmra.mxu0 %v624
  %v1709 = vpop.f32.mrf.mxu0
  %v1710 = vadd.f32 %v1661, %v1709
  %v1711 = vpop.f32.mrf.mxu0
  %v1712 = vadd.f32 %v1663, %v1711
  %1713 = vmatmul.bf16.gmra.mxu0 %v635
  %v1714 = vpop.f32.mrf.mxu0
  %v1715 = vadd.f32 %v1666, %v1714
  %v1716 = vpop.f32.mrf.mxu0
  %v1717 = vadd.f32 %v1668, %v1716
  %1718 = vmatmul.bf16.gmra.mxu0 %v646
  %v1719 = vpop.f32.mrf.mxu0
  %v1720 = vadd.f32 %v1671, %v1719
  %v1721 = vpop.f32.mrf.mxu0
  %v1722 = vadd.f32 %v1673, %v1721
  %1723 = vmatmul.bf16.gmra.mxu0 %v657
  %v1724 = vpop.f32.mrf.mxu0
  %v1725 = vadd.f32 %v1676, %v1724
  %v1726 = vpop.f32.mrf.mxu0
  %v1727 = vadd.f32 %v1678, %v1726
  %1728 = vmatmul.bf16.gmra.mxu0 %v668
  %v1729 = vpop.f32.mrf.mxu0
  %v1730 = vadd.f32 %v1681, %v1729
  %v1731 = vpop.f32.mrf.mxu0
  %v1732 = vadd.f32 %v1683, %v1731
  %1733 = vmatmul.bf16.gmra.mxu0 %v679
  %v1734 = vpop.f32.mrf.mxu0
  %v1735 = vadd.f32 %v1686, %v1734
  %v1736 = vpop.f32.mrf.mxu0
  %v1737 = vadd.f32 %v1688, %v1736
  %1738 = vdwg.mxu0
  %1739 = vmatpush.bf16.msra.mxu0 %v1201
  %1740 = vmatpush.bf16.msra.mxu0 %v1200
  %1741 = vmatpush.bf16.msra.mxu0 %v1199
  %1742 = vmatpush.bf16.msra.mxu0 %v1198
  %1743 = vmatpush.bf16.msra.mxu0 %v1197
  %1744 = vmatpush.bf16.msra.mxu0 %v1196
  %1745 = vmatpush.bf16.msra.mxu0 %v1195
  %1746 = vmatpush.bf16.msra.mxu0 %v1194
  %1747 = vmatmul.bf16.gmra.mxu0 %v603
  %v1748 = vpop.f32.mrf.mxu0
  %v1749 = vadd.f32 %v1700, %v1748
  %v1750 = vpop.f32.mrf.mxu0
  %v1751 = vadd.f32 %v1702, %v1750
  %1752 = vmatmul.bf16.gmra.mxu0 %v614
  %v1753 = vpop.f32.mrf.mxu0
  %v1754 = vadd.f32 %v1705, %v1753
  %v1755 = vpop.f32.mrf.mxu0
  %v1756 = vadd.f32 %v1707, %v1755
  %1757 = vmatmul.bf16.gmra.mxu0 %v625
  %v1758 = vpop.f32.mrf.mxu0
  %v1759 = vadd.f32 %v1710, %v1758
  %v1760 = vpop.f32.mrf.mxu0
  %v1761 = vadd.f32 %v1712, %v1760
  %1762 = vmatmul.bf16.gmra.mxu0 %v636
  %v1763 = vpop.f32.mrf.mxu0
  %v1764 = vadd.f32 %v1715, %v1763
  %v1765 = vpop.f32.mrf.mxu0
  %v1766 = vadd.f32 %v1717, %v1765
  %1767 = vmatmul.bf16.gmra.mxu0 %v647
  %v1768 = vpop.f32.mrf.mxu0
  %v1769 = vadd.f32 %v1720, %v1768
  %v1770 = vpop.f32.mrf.mxu0
  %v1771 = vadd.f32 %v1722, %v1770
  %1772 = vmatmul.bf16.gmra.mxu0 %v658
  %v1773 = vpop.f32.mrf.mxu0
  %v1774 = vadd.f32 %v1725, %v1773
  %v1775 = vpop.f32.mrf.mxu0
  %v1776 = vadd.f32 %v1727, %v1775
  %1777 = vmatmul.bf16.gmra.mxu0 %v669
  %v1778 = vpop.f32.mrf.mxu0
  %v1779 = vadd.f32 %v1730, %v1778
  %v1780 = vpop.f32.mrf.mxu0
  %v1781 = vadd.f32 %v1732, %v1780
  %1782 = vmatmul.bf16.gmra.mxu0 %v680
  %v1783 = vpop.f32.mrf.mxu0
  %v1784 = vadd.f32 %v1735, %v1783
  %v1785 = vpop.f32.mrf.mxu0
  %v1786 = vadd.f32 %v1737, %v1785
  %1787 = vdwg.mxu0
  %1788 = vmatpush.bf16.msra.mxu0 %v1209
  %1789 = vmatpush.bf16.msra.mxu0 %v1208
  %1790 = vmatpush.bf16.msra.mxu0 %v1207
  %1791 = vmatpush.bf16.msra.mxu0 %v1206
  %1792 = vmatpush.bf16.msra.mxu0 %v1205
  %1793 = vmatpush.bf16.msra.mxu0 %v1204
  %1794 = vmatpush.bf16.msra.mxu0 %v1203
  %1795 = vmatpush.bf16.msra.mxu0 %v1202
  %1796 = vmatmul.bf16.gmra.mxu0 %v604
  %v1797 = vpop.f32.mrf.mxu0
  %v1798 = vadd.f32 %v1749, %v1797
  %v1799 = vpop.f32.mrf.mxu0
  %v1800 = vadd.f32 %v1751, %v1799
  %1801 = vmatmul.bf16.gmra.mxu0 %v615
  %v1802 = vpop.f32.mrf.mxu0
  %v1803 = vadd.f32 %v1754, %v1802
  %v1804 = vpop.f32.mrf.mxu0
  %v1805 = vadd.f32 %v1756, %v1804
  %1806 = vmatmul.bf16.gmra.mxu0 %v626
  %v1807 = vpop.f32.mrf.mxu0
  %v1808 = vadd.f32 %v1759, %v1807
  %v1809 = vpop.f32.mrf.mxu0
  %v1810 = vadd.f32 %v1761, %v1809
  %1811 = vmatmul.bf16.gmra.mxu0 %v637
  %v1812 = vpop.f32.mrf.mxu0
  %v1813 = vadd.f32 %v1764, %v1812
  %v1814 = vpop.f32.mrf.mxu0
  %v1815 = vadd.f32 %v1766, %v1814
  %1816 = vmatmul.bf16.gmra.mxu0 %v648
  %v1817 = vpop.f32.mrf.mxu0
  %v1818 = vadd.f32 %v1769, %v1817
  %v1819 = vpop.f32.mrf.mxu0
  %v1820 = vadd.f32 %v1771, %v1819
  %1821 = vmatmul.bf16.gmra.mxu0 %v659
  %v1822 = vpop.f32.mrf.mxu0
  %v1823 = vadd.f32 %v1774, %v1822
  %v1824 = vpop.f32.mrf.mxu0
  %v1825 = vadd.f32 %v1776, %v1824
  %1826 = vmatmul.bf16.gmra.mxu0 %v670
  %v1827 = vpop.f32.mrf.mxu0
  %v1828 = vadd.f32 %v1779, %v1827
  %v1829 = vpop.f32.mrf.mxu0
  %v1830 = vadd.f32 %v1781, %v1829
  %1831 = vmatmul.bf16.gmra.mxu0 %v681
  %v1832 = vpop.f32.mrf.mxu0
  %v1833 = vadd.f32 %v1784, %v1832
  %v1834 = vpop.f32.mrf.mxu0
  %v1835 = vadd.f32 %v1786, %v1834
  %1836 = vdwg.mxu0
  %v1837 = vadd.f32 %v34, %v1798
  %v1838 = vadd.f32 %v35, %v1800
  %v1839 = vadd.f32 %v36, %v1803
  %v1840 = vadd.f32 %v37, %v1805
  %v1841 = vadd.f32 %v38, %v1808
  %v1842 = vadd.f32 %v39, %v1810
  %v1843 = vadd.f32 %v40, %v1813
  %v1844 = vadd.f32 %v41, %v1815
  %v1845 = vadd.f32 %v42, %v1818
  %v1846 = vadd.f32 %v43, %v1820
  %v1847 = vadd.f32 %v44, %v1823
  %v1848 = vadd.f32 %v45, %v1825
  %v1849 = vadd.f32 %v46, %v1828
  %v1850 = vadd.f32 %v47, %v1830
  %v1851 = vadd.f32 %v48, %v1833
  %v1852 = vadd.f32 %v49, %v1835
  %1853 = vst [vmem:[#allocation2] sm:$0xff] %v1837
  %1854 = vst [vmem:[#allocation2 + $0x8] sm:$0xff] %v1838
  %1855 = vst [vmem:[#allocation2 + $0x10] sm:$0xff] %v1839
  %1856 = vst [vmem:[#allocation2 + $0x18] sm:$0xff] %v1840
  %1857 = vst [vmem:[#allocation2 + $0x20] sm:$0xff] %v1841
  %1858 = vst [vmem:[#allocation2 + $0x28] sm:$0xff] %v1842
  %1859 = vst [vmem:[#allocation2 + $0x30] sm:$0xff] %v1843
  %1860 = vst [vmem:[#allocation2 + $0x38] sm:$0xff] %v1844
  %1861 = vst [vmem:[#allocation2 + $0x40] sm:$0xff] %v1845
  %1862 = vst [vmem:[#allocation2 + $0x48] sm:$0xff] %v1846
  %1863 = vst [vmem:[#allocation2 + $0x50] sm:$0xff] %v1847
  %1864 = vst [vmem:[#allocation2 + $0x58] sm:$0xff] %v1848
  %1865 = vst [vmem:[#allocation2 + $0x60] sm:$0xff] %v1849
  %1866 = vst [vmem:[#allocation2 + $0x68] sm:$0xff] %v1850
  %1867 = vst [vmem:[#allocation2 + $0x70] sm:$0xff] %v1851
  %1868 = vst [vmem:[#allocation2 + $0x78] sm:$0xff] %v1852
  // Predicated region
  $region18: #{_lambda_.23} parent=0 // pred_check
    %p1869 = pneg %p14
  $region19: #{_lambda_.23} parent=0 // pred_check_branch
    %1871 = sbr.rel (%p1869) target = $region21
  $region20: #{_lambda_.23} parent=0 // pred_region
    %v1872 = vld [vmem:[#allocation2] sm:$0xff]
    %v1873 = vld [vmem:[#allocation2 + $0x8] sm:$0xff]
    %v1874 = vld [vmem:[#allocation2 + $0x10] sm:$0xff]
    %v1875 = vld [vmem:[#allocation2 + $0x18] sm:$0xff]
    %v1876 = vld [vmem:[#allocation2 + $0x20] sm:$0xff]
    %v1877 = vld [vmem:[#allocation2 + $0x28] sm:$0xff]
    %v1878 = vld [vmem:[#allocation2 + $0x30] sm:$0xff]
    %v1879 = vld [vmem:[#allocation2 + $0x38] sm:$0xff]
    %v1880 = vld [vmem:[#allocation2 + $0x40] sm:$0xff]
    %v1881 = vld [vmem:[#allocation2 + $0x48] sm:$0xff]
    %v1882 = vld [vmem:[#allocation2 + $0x50] sm:$0xff]
    %v1883 = vld [vmem:[#allocation2 + $0x58] sm:$0xff]
    %v1884 = vld [vmem:[#allocation2 + $0x60] sm:$0xff]
    %v1885 = vld [vmem:[#allocation2 + $0x68] sm:$0xff]
    %v1886 = vld [vmem:[#allocation2 + $0x70] sm:$0xff]
    %v1887 = vld [vmem:[#allocation2 + $0x78] sm:$0xff]
    %v1888 = vld [vmem:[%s2] sm:$0x1]
    %v1890 = vperm.slane %v1888, 0
    %v1892 = vadd.f32 %v1872, %v1890
    %v1893 = vadd.f32 %v1873, %v1890
    %v1894 = vadd.f32 %v1874, %v1890
    %v1895 = vadd.f32 %v1875, %v1890
    %v1896 = vadd.f32 %v1876, %v1890
    %v1897 = vadd.f32 %v1877, %v1890
    %v1898 = vadd.f32 %v1878, %v1890
    %v1899 = vadd.f32 %v1879, %v1890
    %v1900 = vadd.f32 %v1880, %v1890
    %v1901 = vadd.f32 %v1881, %v1890
    %v1902 = vadd.f32 %v1882, %v1890
    %v1903 = vadd.f32 %v1883, %v1890
    %v1904 = vadd.f32 %v1884, %v1890
    %v1905 = vadd.f32 %v1885, %v1890
    %v1906 = vadd.f32 %v1886, %v1890
    %v1907 = vadd.f32 %v1887, %v1890
    %vm1908 = vcmp.gt.f32.partialorder %v1892, 0.0
    %vm1909 = vcmp.gt.f32.partialorder %v1893, 0.0
    %vm1910 = vcmp.gt.f32.partialorder %v1894, 0.0
    %vm1911 = vcmp.gt.f32.partialorder %v1895, 0.0
    %vm1912 = vcmp.gt.f32.partialorder %v1896, 0.0
    %vm1913 = vcmp.gt.f32.partialorder %v1897, 0.0
    %vm1914 = vcmp.gt.f32.partialorder %v1898, 0.0
    %vm1915 = vcmp.gt.f32.partialorder %v1899, 0.0
    %vm1916 = vcmp.gt.f32.partialorder %v1900, 0.0
    %vm1917 = vcmp.gt.f32.partialorder %v1901, 0.0
    %vm1918 = vcmp.gt.f32.partialorder %v1902, 0.0
    %vm1919 = vcmp.gt.f32.partialorder %v1903, 0.0
    %vm1920 = vcmp.gt.f32.partialorder %v1904, 0.0
    %vm1921 = vcmp.gt.f32.partialorder %v1905, 0.0
    %vm1922 = vcmp.gt.f32.partialorder %v1906, 0.0
    %vm1923 = vcmp.gt.f32.partialorder %v1907, 0.0
    %v1924 = vmul.f32 %v1892, 0.01
    %v1925 = vmul.f32 %v1893, 0.01
    %v1926 = vmul.f32 %v1894, 0.01
    %v1927 = vmul.f32 %v1895, 0.01
    %v1928 = vmul.f32 %v1896, 0.01
    %v1929 = vmul.f32 %v1897, 0.01
    %v1930 = vmul.f32 %v1898, 0.01
    %v1931 = vmul.f32 %v1899, 0.01
    %v1932 = vmul.f32 %v1900, 0.01
    %v1933 = vmul.f32 %v1901, 0.01
    %v1934 = vmul.f32 %v1902, 0.01
    %v1935 = vmul.f32 %v1903, 0.01
    %v1936 = vmul.f32 %v1904, 0.01
    %v1937 = vmul.f32 %v1905, 0.01
    %v1938 = vmul.f32 %v1906, 0.01
    %v1939 = vmul.f32 %v1907, 0.01
    %v1940 = vsel %vm1908, %v1892, %v1924
    %v1941 = vsel %vm1909, %v1893, %v1925
    %v1942 = vsel %vm1910, %v1894, %v1926
    %v1943 = vsel %vm1911, %v1895, %v1927
    %v1944 = vsel %vm1912, %v1896, %v1928
    %v1945 = vsel %vm1913, %v1897, %v1929
    %v1946 = vsel %vm1914, %v1898, %v1930
    %v1947 = vsel %vm1915, %v1899, %v1931
    %v1948 = vsel %vm1916, %v1900, %v1932
    %v1949 = vsel %vm1917, %v1901, %v1933
    %v1950 = vsel %vm1918, %v1902, %v1934
    %v1951 = vsel %vm1919, %v1903, %v1935
    %v1952 = vsel %vm1920, %v1904, %v1936
    %v1953 = vsel %vm1921, %v1905, %v1937
    %v1954 = vsel %vm1922, %v1906, %v1938
    %v1955 = vsel %vm1923, %v1907, %v1939
    %v1956 = vpack.c.bf16 %v1940, %v1940
    %v1957 = vpack.c.bf16 %v1941, %v1941
    %v1958 = vpack.c.bf16 %v1942, %v1942
    %v1959 = vpack.c.bf16 %v1943, %v1943
    %v1960 = vpack.c.bf16 %v1944, %v1944
    %v1961 = vpack.c.bf16 %v1945, %v1945
    %v1962 = vpack.c.bf16 %v1946, %v1946
    %v1963 = vpack.c.bf16 %v1947, %v1947
    %v1964 = vpack.c.bf16 %v1948, %v1948
    %v1965 = vpack.c.bf16 %v1949, %v1949
    %v1966 = vpack.c.bf16 %v1950, %v1950
    %v1967 = vpack.c.bf16 %v1951, %v1951
    %v1968 = vpack.c.bf16 %v1952, %v1952
    %v1969 = vpack.c.bf16 %v1953, %v1953
    %v1970 = vpack.c.bf16 %v1954, %v1954
    %v1971 = vpack.c.bf16 %v1955, %v1955
    %1972 = vst [vmem:[%s3] sm:$0xf] %v1956
    %1973 = vst [vmem:[%s3 + $0x4] sm:$0xf] %v1957
    %1974 = vst [vmem:[%s3 + $0x8] sm:$0xf] %v1958
    %1975 = vst [vmem:[%s3 + $0xc] sm:$0xf] %v1959
    %1976 = vst [vmem:[%s3 + $0x10] sm:$0xf] %v1960
    %1977 = vst [vmem:[%s3 + $0x14] sm:$0xf] %v1961
    %1978 = vst [vmem:[%s3 + $0x18] sm:$0xf] %v1962
    %1979 = vst [vmem:[%s3 + $0x1c] sm:$0xf] %v1963
    %1980 = vst [vmem:[%s3 + $0x20] sm:$0xf] %v1964
    %1981 = vst [vmem:[%s3 + $0x24] sm:$0xf] %v1965
    %1982 = vst [vmem:[%s3 + $0x28] sm:$0xf] %v1966
    %1983 = vst [vmem:[%s3 + $0x2c] sm:$0xf] %v1967
    %1984 = vst [vmem:[%s3 + $0x30] sm:$0xf] %v1968
    %1985 = vst [vmem:[%s3 + $0x34] sm:$0xf] %v1969
    %1986 = vst [vmem:[%s3 + $0x38] sm:$0xf] %v1970
    %1987 = vst [vmem:[%s3 + $0x3c] sm:$0xf] %v1971
  $region21: #{_lambda_.23} parent=0 // pred_fallthru
    _
  // Predicated region
  $region22: #{_lambda_.23} parent=0 // pred_check
    _
  $region23: #{_lambda_.23} parent=0 // pred_check_branch
    %1989 = sbr.rel (0) target = $region25
  $region24: #{_lambda_.23} parent=0 // pred_region
    _
  $region25: #{_lambda_.23} parent=0 // pred_fallthru
    _
  // Predicated region
  $region26: #{_lambda_.23} parent=0 // pred_check
    _
  $region27: #{_lambda_.23} parent=0 // pred_check_branch
    %1991 = sbr.rel (0) target = $region29
  $region28: #{_lambda_.23} parent=0 // pred_region
    _
  $region29: #{_lambda_.23} parent=0 // pred_fallthru
    _

// kernel: _lambda_.28
$region0: #{_lambda_.28}
  #allocation0 [shape = 'u32[]', space=smem, size = 0x4, offset = 0x4, fixed_abs, tag = 'smem constant byte address 0x4 - core index']
  #allocation1 [shape = 'u32[72,128]{1,0:T(1,128)}', space=vmem, size = 0x9000, scoped, tag = 'internal scratch']
  #allocation2 [shape = 'f32[128,128]{1,0:T(8,128)}', space=vmem, size = 0x10000, scoped, tag = 'scratch operand']
  %s0 = inlined_call_operand.vmem [shape: bf16[128,640], index: 0, kind: input, shape index: {}]
  %s1 = inlined_call_operand.vmem [shape: bf16[640,128], index: 1, kind: input, shape index: {}]
  %s2 = inlined_call_operand.vmem [shape: f32[1,128], index: 2, kind: input, shape index: {}]
  %s3 = inlined_call_operand.vmem [shape: bf16[128,128], index: 3, kind: input, shape index: {}]
  %s4 = inlined_call_operand.vmem [shape: bf16[128,128], index: 4, kind: output, shape index: {}]
  %s5 = sld [smem:[#allocation0]]
  $region34: #{_lambda_.28} parent=0
    _
  %s7 = ssub.s32 1, %s5
  %s8 = scalar_select 0, %s7, %s5
  // Predicated region
  $region2: #{_lambda_.28} parent=0 // pred_check
    _
  $region3: #{_lambda_.28} parent=0 // pred_check_branch
    %10 = sbr.rel (0) target = $region5
  $region4: #{_lambda_.28} parent=0 // pred_region
    _
  $region5: #{_lambda_.28} parent=0 // pred_fallthru
    _
  // Predicated region
  $region6: #{_lambda_.28} parent=0 // pred_check
    _
  $region7: #{_lambda_.28} parent=0 // pred_check_branch
    %12 = sbr.rel (0) target = $region9
  $region8: #{_lambda_.28} parent=0 // pred_region
    _
  $region9: #{_lambda_.28} parent=0 // pred_fallthru
    _
  // Predicated region
  $region10: #{_lambda_.28} parent=0 // pred_check
    _
  $region11: #{_lambda_.28} parent=0 // pred_check_branch
    %14 = sbr.rel (0) target = $region13
  $region12: #{_lambda_.28} parent=0 // pred_region
    _
  $region13: #{_lambda_.28} parent=0 // pred_fallthru
    _
  // Predicated region
  $region14: #{_lambda_.28} parent=0 // pred_check
    _
  $region15: #{_lambda_.28} parent=0 // pred_check_branch
    %16 = sbr.rel (0) target = $region17
  $region16: #{_lambda_.28} parent=0 // pred_region
    _
  $region17: #{_lambda_.28} parent=0 // pred_fallthru
    _
  %p17 = scmp.eq.s32.totalorder 0, 0
  // Predicated region
  $region18: #{_lambda_.28} parent=0 // pred_check
    %p18 = pneg %p17
  $region19: #{_lambda_.28} parent=0 // pred_check_branch
    %20 = sbr.rel (%p18) target = $region21
  $region20: #{_lambda_.28} parent=0 // pred_region
    %21 = vst [vmem:[#allocation2] sm:$0xff] 0.0
    %22 = vst [vmem:[#allocation2 + $0x8] sm:$0xff] 0.0
    %23 = vst [vmem:[#allocation2 + $0x10] sm:$0xff] 0.0
    %24 = vst [vmem:[#allocation2 + $0x18] sm:$0xff] 0.0
    %25 = vst [vmem:[#allocation2 + $0x20] sm:$0xff] 0.0
    %26 = vst [vmem:[#allocation2 + $0x28] sm:$0xff] 0.0
    %27 = vst [vmem:[#allocation2 + $0x30] sm:$0xff] 0.0
    %28 = vst [vmem:[#allocation2 + $0x38] sm:$0xff] 0.0
    %29 = vst [vmem:[#allocation2 + $0x40] sm:$0xff] 0.0
    %30 = vst [vmem:[#allocation2 + $0x48] sm:$0xff] 0.0
    %31 = vst [vmem:[#allocation2 + $0x50] sm:$0xff] 0.0
    %32 = vst [vmem:[#allocation2 + $0x58] sm:$0xff] 0.0
    %33 = vst [vmem:[#allocation2 + $0x60] sm:$0xff] 0.0
    %34 = vst [vmem:[#allocation2 + $0x68] sm:$0xff] 0.0
    %35 = vst [vmem:[#allocation2 + $0x70] sm:$0xff] 0.0
    %36 = vst [vmem:[#allocation2 + $0x78] sm:$0xff] 0.0
  $region21: #{_lambda_.28} parent=0 // pred_fallthru
    _
  %v37 = vld [vmem:[#allocation2] sm:$0xff]
  %v38 = vld [vmem:[#allocation2 + $0x8] sm:$0xff]
  %v39 = vld [vmem:[#allocation2 + $0x10] sm:$0xff]
  %v40 = vld [vmem:[#allocation2 + $0x18] sm:$0xff]
  %v41 = vld [vmem:[#allocation2 + $0x20] sm:$0xff]
  %v42 = vld [vmem:[#allocation2 + $0x28] sm:$0xff]
  %v43 = vld [vmem:[#allocation2 + $0x30] sm:$0xff]
  %v44 = vld [vmem:[#allocation2 + $0x38] sm:$0xff]
  %v45 = vld [vmem:[#allocation2 + $0x40] sm:$0xff]
  %v46 = vld [vmem:[#allocation2 + $0x48] sm:$0xff]
  %v47 = vld [vmem:[#allocation2 + $0x50] sm:$0xff]
  %v48 = vld [vmem:[#allocation2 + $0x58] sm:$0xff]
  %v49 = vld [vmem:[#allocation2 + $0x60] sm:$0xff]
  %v50 = vld [vmem:[#allocation2 + $0x68] sm:$0xff]
  %v51 = vld [vmem:[#allocation2 + $0x70] sm:$0xff]
  %v52 = vld [vmem:[#allocation2 + $0x78] sm:$0xff]
  %v53 = vld [vmem:[%s0] sm:$0xff]
  %v54 = vld [vmem:[%s0 + $0x8] sm:$0xff]
  %v55 = vld [vmem:[%s0 + $0x10] sm:$0xf]
  %v56 = vld [vmem:[%s0 + $0x14] sm:$0xff]
  %v57 = vld [vmem:[%s0 + $0x1c] sm:$0xff]
  %v58 = vld [vmem:[%s0 + $0x24] sm:$0xf]
  %v59 = vld [vmem:[%s0 + $0x28] sm:$0xff]
  %v60 = vld [vmem:[%s0 + $0x30] sm:$0xff]
  %v61 = vld [vmem:[%s0 + $0x38] sm:$0xf]
  %v62 = vld [vmem:[%s0 + $0x3c] sm:$0xff]
  %v63 = vld [vmem:[%s0 + $0x44] sm:$0xff]
  %v64 = vld [vmem:[%s0 + $0x4c] sm:$0xf]
  %v65 = vld [vmem:[%s0 + $0x50] sm:$0xff]
  %v66 = vld [vmem:[%s0 + $0x58] sm:$0xff]
  %v67 = vld [vmem:[%s0 + $0x60] sm:$0xf]
  %v68 = vld [vmem:[%s0 + $0x64] sm:$0xff]
  %v69 = vld [vmem:[%s0 + $0x6c] sm:$0xff]
  %v70 = vld [vmem:[%s0 + $0x74] sm:$0xf]
  %v71 = vld [vmem:[%s0 + $0x78] sm:$0xff]
  %v72 = vld [vmem:[%s0 + $0x80] sm:$0xff]
  %v73 = vld [vmem:[%s0 + $0x88] sm:$0xf]
  %v74 = vld [vmem:[%s0 + $0x8c] sm:$0xff]
  %v75 = vld [vmem:[%s0 + $0x94] sm:$0xff]
  %v76 = vld [vmem:[%s0 + $0x9c] sm:$0xf]
  %v77 = vld [vmem:[%s0 + $0xa0] sm:$0xff]
  %v78 = vld [vmem:[%s0 + $0xa8] sm:$0xff]
  %v79 = vld [vmem:[%s0 + $0xb0] sm:$0xf]
  %v80 = vld [vmem:[%s0 + $0xb4] sm:$0xff]
  %v81 = vld [vmem:[%s0 + $0xbc] sm:$0xff]
  %v82 = vld [vmem:[%s0 + $0xc4] sm:$0xf]
  %v83 = vld [vmem:[%s0 + $0xc8] sm:$0xff]
  %v84 = vld [vmem:[%s0 + $0xd0] sm:$0xff]
  %v85 = vld [vmem:[%s0 + $0xd8] sm:$0xf]
  %v86 = vld [vmem:[%s0 + $0xdc] sm:$0xff]
  %v87 = vld [vmem:[%s0 + $0xe4] sm:$0xff]
  %v88 = vld [vmem:[%s0 + $0xec] sm:$0xf]
  %v89 = vld [vmem:[%s0 + $0xf0] sm:$0xff]
  %v90 = vld [vmem:[%s0 + $0xf8] sm:$0xff]
  %v91 = vld [vmem:[%s0 + $0x100] sm:$0xf]
  %v92 = vld [vmem:[%s0 + $0x104] sm:$0xff]
  %v93 = vld [vmem:[%s0 + $0x10c] sm:$0xff]
  %v94 = vld [vmem:[%s0 + $0x114] sm:$0xf]
  %v95 = vld [vmem:[%s0 + $0x118] sm:$0xff]
  %v96 = vld [vmem:[%s0 + $0x120] sm:$0xff]
  %v97 = vld [vmem:[%s0 + $0x128] sm:$0xf]
  %v98 = vld [vmem:[%s0 + $0x12c] sm:$0xff]
  %v99 = vld [vmem:[%s0 + $0x134] sm:$0xff]
  %v100 = vld [vmem:[%s0 + $0x13c] sm:$0xf]
  %v101 = vld [vmem:[%s1] sm:$0xf]
  %v102 = vld [vmem:[%s1 + $0x4] sm:$0xf]
  %v103 = vld [vmem:[%s1 + $0x8] sm:$0xf]
  %v104 = vld [vmem:[%s1 + $0xc] sm:$0xf]
  %v105 = vld [vmem:[%s1 + $0x10] sm:$0xf]
  %v106 = vld [vmem:[%s1 + $0x14] sm:$0xf]
  %v107 = vld [vmem:[%s1 + $0x18] sm:$0xf]
  %v108 = vld [vmem:[%s1 + $0x1c] sm:$0xf]
  %v109 = vld [vmem:[%s1 + $0x20] sm:$0xf]
  %v110 = vld [vmem:[%s1 + $0x24] sm:$0xf]
  %v111 = vld [vmem:[%s1 + $0x28] sm:$0xf]
  %v112 = vld [vmem:[%s1 + $0x2c] sm:$0xf]
  %v113 = vld [vmem:[%s1 + $0x30] sm:$0xf]
  %v114 = vld [vmem:[%s1 + $0x34] sm:$0xf]
  %v115 = vld [vmem:[%s1 + $0x38] sm:$0xf]
  %v116 = vld [vmem:[%s1 + $0x3c] sm:$0xf]
  %v117 = vld [vmem:[%s1 + $0x40] sm:$0xf]
  %v118 = vld [vmem:[%s1 + $0x44] sm:$0xf]
  %v119 = vld [vmem:[%s1 + $0x48] sm:$0xf]
  %v120 = vld [vmem:[%s1 + $0x4c] sm:$0xf]
  %v121 = vld [vmem:[%s1 + $0x50] sm:$0xf]
  %v122 = vld [vmem:[%s1 + $0x54] sm:$0xf]
  %v123 = vld [vmem:[%s1 + $0x58] sm:$0xf]
  %v124 = vld [vmem:[%s1 + $0x5c] sm:$0xf]
  %v125 = vld [vmem:[%s1 + $0x60] sm:$0xf]
  %v126 = vld [vmem:[%s1 + $0x64] sm:$0xf]
  %v127 = vld [vmem:[%s1 + $0x68] sm:$0xf]
  %v128 = vld [vmem:[%s1 + $0x6c] sm:$0xf]
  %v129 = vld [vmem:[%s1 + $0x70] sm:$0xf]
  %v130 = vld [vmem:[%s1 + $0x74] sm:$0xf]
  %v131 = vld [vmem:[%s1 + $0x78] sm:$0xf]
  %v132 = vld [vmem:[%s1 + $0x7c] sm:$0xf]
  %v133 = vld [vmem:[%s1 + $0x80] sm:$0xf]
  %v134 = vld [vmem:[%s1 + $0x84] sm:$0xf]
  %v135 = vld [vmem:[%s1 + $0x88] sm:$0xf]
  %v136 = vld [vmem:[%s1 + $0x8c] sm:$0xf]
  %v137 = vld [vmem:[%s1 + $0x90] sm:$0xf]
  %v138 = vld [vmem:[%s1 + $0x94] sm:$0xf]
  %v139 = vld [vmem:[%s1 + $0x98] sm:$0xf]
  %v140 = vld [vmem:[%s1 + $0x9c] sm:$0xf]
  %v141 = vld [vmem:[%s1 + $0xa0] sm:$0xf]
  %v142 = vld [vmem:[%s1 + $0xa4] sm:$0xf]
  %v143 = vld [vmem:[%s1 + $0xa8] sm:$0xf]
  %v144 = vld [vmem:[%s1 + $0xac] sm:$0xf]
  %v145 = vld [vmem:[%s1 + $0xb0] sm:$0xf]
  %v146 = vld [vmem:[%s1 + $0xb4] sm:$0xf]
  %v147 = vld [vmem:[%s1 + $0xb8] sm:$0xf]
  %v148 = vld [vmem:[%s1 + $0xbc] sm:$0xf]
  %v149 = vld [vmem:[%s1 + $0xc0] sm:$0xf]
  %v150 = vld [vmem:[%s1 + $0xc4] sm:$0xf]
  %v151 = vld [vmem:[%s1 + $0xc8] sm:$0xf]
  %v152 = vld [vmem:[%s1 + $0xcc] sm:$0xf]
  %v153 = vld [vmem:[%s1 + $0xd0] sm:$0xf]
  %v154 = vld [vmem:[%s1 + $0xd4] sm:$0xf]
  %v155 = vld [vmem:[%s1 + $0xd8] sm:$0xf]
  %v156 = vld [vmem:[%s1 + $0xdc] sm:$0xf]
  %v157 = vld [vmem:[%s1 + $0xe0] sm:$0xf]
  %v158 = vld [vmem:[%s1 + $0xe4] sm:$0xf]
  %v159 = vld [vmem:[%s1 + $0xe8] sm:$0xf]
  %v160 = vld [vmem:[%s1 + $0xec] sm:$0xf]
  %v161 = vld [vmem:[%s1 + $0xf0] sm:$0xf]
  %v162 = vld [vmem:[%s1 + $0xf4] sm:$0xf]
  %v163 = vld [vmem:[%s1 + $0xf8] sm:$0xf]
  %v164 = vld [vmem:[%s1 + $0xfc] sm:$0xf]
  %v165 = vld [vmem:[%s1 + $0x100] sm:$0xf]
  %v166 = vld [vmem:[%s1 + $0x104] sm:$0xf]
  %v167 = vld [vmem:[%s1 + $0x108] sm:$0xf]
  %v168 = vld [vmem:[%s1 + $0x10c] sm:$0xf]
  %v169 = vld [vmem:[%s1 + $0x110] sm:$0xf]
  %v170 = vld [vmem:[%s1 + $0x114] sm:$0xf]
  %v171 = vld [vmem:[%s1 + $0x118] sm:$0xf]
  %v172 = vld [vmem:[%s1 + $0x11c] sm:$0xf]
  %v173 = vld [vmem:[%s1 + $0x120] sm:$0xf]
  %v174 = vld [vmem:[%s1 + $0x124] sm:$0xf]
  %v175 = vld [vmem:[%s1 + $0x128] sm:$0xf]
  %v176 = vld [vmem:[%s1 + $0x12c] sm:$0xf]
  %v177 = vld [vmem:[%s1 + $0x130] sm:$0xf]
  %v178 = vld [vmem:[%s1 + $0x134] sm:$0xf]
  %v179 = vld [vmem:[%s1 + $0x138] sm:$0xf]
  %v180 = vld [vmem:[%s1 + $0x13c] sm:$0xf]
  %v229 = vunpack.c.l.b16 %v53
  %v230 = vunpack.c.h.b16 %v53
  %v231 = vunpack.c.l.b16 %v54
  %v232 = vunpack.c.h.b16 %v54
  %v233 = vunpack.c.l.b16 %v55
  %v234 = vunpack.c.l.b16 %v56
  %v235 = vunpack.c.h.b16 %v56
  %v236 = vunpack.c.l.b16 %v57
  %v237 = vunpack.c.h.b16 %v57
  %v238 = vunpack.c.l.b16 %v58
  %v239 = vunpack.c.l.b16 %v59
  %v240 = vunpack.c.h.b16 %v59
  %v241 = vunpack.c.l.b16 %v60
  %v242 = vunpack.c.h.b16 %v60
  %v243 = vunpack.c.l.b16 %v61
  %v244 = vunpack.c.l.b16 %v62
  %v245 = vunpack.c.h.b16 %v62
  %v246 = vunpack.c.l.b16 %v63
  %v247 = vunpack.c.h.b16 %v63
  %v248 = vunpack.c.l.b16 %v64
  %v249 = vunpack.c.l.b16 %v65
  %v250 = vunpack.c.h.b16 %v65
  %v251 = vunpack.c.l.b16 %v66
  %v252 = vunpack.c.h.b16 %v66
  %v253 = vunpack.c.l.b16 %v67
  %v254 = vunpack.c.l.b16 %v68
  %v255 = vunpack.c.h.b16 %v68
  %v256 = vunpack.c.l.b16 %v69
  %v257 = vunpack.c.h.b16 %v69
  %v258 = vunpack.c.l.b16 %v70
  %v259 = vunpack.c.l.b16 %v71
  %v260 = vunpack.c.h.b16 %v71
  %v261 = vunpack.c.l.b16 %v72
  %v262 = vunpack.c.h.b16 %v72
  %v263 = vunpack.c.l.b16 %v73
  %v264 = vunpack.c.l.b16 %v74
  %v265 = vunpack.c.h.b16 %v74
  %v266 = vunpack.c.l.b16 %v75
  %v267 = vunpack.c.h.b16 %v75
  %v268 = vunpack.c.l.b16 %v76
  %v269 = vunpack.c.l.b16 %v77
  %v270 = vunpack.c.h.b16 %v77
  %v271 = vunpack.c.l.b16 %v78
  %v272 = vunpack.c.h.b16 %v78
  %v273 = vunpack.c.l.b16 %v79
  %v274 = vunpack.c.l.b16 %v80
  %v275 = vunpack.c.h.b16 %v80
  %v276 = vunpack.c.l.b16 %v81
  %v277 = vunpack.c.h.b16 %v81
  %v278 = vunpack.c.l.b16 %v82
  %v279 = vunpack.c.l.b16 %v83
  %v280 = vunpack.c.h.b16 %v83
  %v281 = vunpack.c.l.b16 %v84
  %v282 = vunpack.c.h.b16 %v84
  %v283 = vunpack.c.l.b16 %v85
  %v284 = vunpack.c.l.b16 %v86
  %v285 = vunpack.c.h.b16 %v86
  %v286 = vunpack.c.l.b16 %v87
  %v287 = vunpack.c.h.b16 %v87
  %v288 = vunpack.c.l.b16 %v88
  %v289 = vunpack.c.l.b16 %v89
  %v290 = vunpack.c.h.b16 %v89
  %v291 = vunpack.c.l.b16 %v90
  %v292 = vunpack.c.h.b16 %v90
  %v293 = vunpack.c.l.b16 %v91
  %v294 = vunpack.c.l.b16 %v92
  %v295 = vunpack.c.h.b16 %v92
  %v296 = vunpack.c.l.b16 %v93
  %v297 = vunpack.c.h.b16 %v93
  %v298 = vunpack.c.l.b16 %v94
  %v299 = vunpack.c.l.b16 %v95
  %v300 = vunpack.c.h.b16 %v95
  %v301 = vunpack.c.l.b16 %v96
  %v302 = vunpack.c.h.b16 %v96
  %v303 = vunpack.c.l.b16 %v97
  %v304 = vunpack.c.l.b16 %v98
  %v305 = vunpack.c.h.b16 %v98
  %v306 = vunpack.c.l.b16 %v99
  %v307 = vunpack.c.h.b16 %v99
  %v308 = vunpack.c.l.b16 %v100
  %v309 = vpack.c.b16 %v234, %v229
  %v310 = vpack.c.b16 %v235, %v230
  %v311 = vpack.c.b16 %v236, %v231
  %v312 = vpack.c.b16 %v237, %v232
  %v313 = vpack.c.b16 %v238, %v233
  %v314 = vpack.c.b16 %v244, %v239
  %v315 = vpack.c.b16 %v245, %v240
  %v316 = vpack.c.b16 %v246, %v241
  %v317 = vpack.c.b16 %v247, %v242
  %v318 = vpack.c.b16 %v248, %v243
  %v319 = vpack.c.b16 %v254, %v249
  %v320 = vpack.c.b16 %v255, %v250
  %v321 = vpack.c.b16 %v256, %v251
  %v322 = vpack.c.b16 %v257, %v252
  %v323 = vpack.c.b16 %v258, %v253
  %v324 = vpack.c.b16 %v264, %v259
  %v325 = vpack.c.b16 %v265, %v260
  %v326 = vpack.c.b16 %v266, %v261
  %v327 = vpack.c.b16 %v267, %v262
  %v328 = vpack.c.b16 %v268, %v263
  %v329 = vpack.c.b16 %v274, %v269
  %v330 = vpack.c.b16 %v275, %v270
  %v331 = vpack.c.b16 %v276, %v271
  %v332 = vpack.c.b16 %v277, %v272
  %v333 = vpack.c.b16 %v278, %v273
  %v334 = vpack.c.b16 %v284, %v279
  %v335 = vpack.c.b16 %v285, %v280
  %v336 = vpack.c.b16 %v286, %v281
  %v337 = vpack.c.b16 %v287, %v282
  %v338 = vpack.c.b16 %v288, %v283
  %v339 = vpack.c.b16 %v294, %v289
  %v340 = vpack.c.b16 %v295, %v290
  %v341 = vpack.c.b16 %v296, %v291
  %v342 = vpack.c.b16 %v297, %v292
  %v343 = vpack.c.b16 %v298, %v293
  %v344 = vpack.c.b16 %v304, %v299
  %v345 = vpack.c.b16 %v305, %v300
  %v346 = vpack.c.b16 %v306, %v301
  %v347 = vpack.c.b16 %v307, %v302
  %v348 = vpack.c.b16 %v308, %v303
  %v469 = vunpack.c.l.b16 %v101
  %v470 = vunpack.c.l.b16 %v102
  %v471 = vunpack.c.l.b16 %v103
  %v472 = vunpack.c.l.b16 %v104
  %v473 = vunpack.c.l.b16 %v105
  %v474 = vunpack.c.l.b16 %v106
  %v475 = vunpack.c.l.b16 %v107
  %v476 = vunpack.c.l.b16 %v108
  %v477 = vunpack.c.l.b16 %v109
  %v478 = vunpack.c.l.b16 %v110
  %v479 = vunpack.c.l.b16 %v111
  %v480 = vunpack.c.l.b16 %v112
  %v481 = vunpack.c.l.b16 %v113
  %v482 = vunpack.c.l.b16 %v114
  %v483 = vunpack.c.l.b16 %v115
  %v484 = vunpack.c.l.b16 %v116
  %v485 = vunpack.c.l.b16 %v117
  %v486 = vunpack.c.l.b16 %v118
  %v487 = vunpack.c.l.b16 %v119
  %v488 = vunpack.c.l.b16 %v120
  %v489 = vunpack.c.l.b16 %v121
  %v490 = vunpack.c.l.b16 %v122
  %v491 = vunpack.c.l.b16 %v123
  %v492 = vunpack.c.l.b16 %v124
  %v493 = vunpack.c.l.b16 %v125
  %v494 = vunpack.c.l.b16 %v126
  %v495 = vunpack.c.l.b16 %v127
  %v496 = vunpack.c.l.b16 %v128
  %v497 = vunpack.c.l.b16 %v129
  %v498 = vunpack.c.l.b16 %v130
  %v499 = vunpack.c.l.b16 %v131
  %v500 = vunpack.c.l.b16 %v132
  %v501 = vunpack.c.l.b16 %v133
  %v502 = vunpack.c.l.b16 %v134
  %v503 = vunpack.c.l.b16 %v135
  %v504 = vunpack.c.l.b16 %v136
  %v505 = vunpack.c.l.b16 %v137
  %v506 = vunpack.c.l.b16 %v138
  %v507 = vunpack.c.l.b16 %v139
  %v508 = vunpack.c.l.b16 %v140
  %v509 = vunpack.c.l.b16 %v141
  %v510 = vunpack.c.l.b16 %v142
  %v511 = vunpack.c.l.b16 %v143
  %v512 = vunpack.c.l.b16 %v144
  %v513 = vunpack.c.l.b16 %v145
  %v514 = vunpack.c.l.b16 %v146
  %v515 = vunpack.c.l.b16 %v147
  %v516 = vunpack.c.l.b16 %v148
  %v517 = vunpack.c.l.b16 %v149
  %v518 = vunpack.c.l.b16 %v150
  %v519 = vunpack.c.l.b16 %v151
  %v520 = vunpack.c.l.b16 %v152
  %v521 = vunpack.c.l.b16 %v153
  %v522 = vunpack.c.l.b16 %v154
  %v523 = vunpack.c.l.b16 %v155
  %v524 = vunpack.c.l.b16 %v156
  %v525 = vunpack.c.l.b16 %v157
  %v526 = vunpack.c.l.b16 %v158
  %v527 = vunpack.c.l.b16 %v159
  %v528 = vunpack.c.l.b16 %v160
  %v529 = vunpack.c.l.b16 %v161
  %v530 = vunpack.c.l.b16 %v162
  %v531 = vunpack.c.l.b16 %v163
  %v532 = vunpack.c.l.b16 %v164
  %v533 = vunpack.c.l.b16 %v165
  %v534 = vunpack.c.l.b16 %v166
  %v535 = vunpack.c.l.b16 %v167
  %v536 = vunpack.c.l.b16 %v168
  %v537 = vunpack.c.l.b16 %v169
  %v538 = vunpack.c.l.b16 %v170
  %v539 = vunpack.c.l.b16 %v171
  %v540 = vunpack.c.l.b16 %v172
  %v541 = vunpack.c.l.b16 %v173
  %v542 = vunpack.c.l.b16 %v174
  %v543 = vunpack.c.l.b16 %v175
  %v544 = vunpack.c.l.b16 %v176
  %v545 = vunpack.c.l.b16 %v177
  %v546 = vunpack.c.l.b16 %v178
  %v547 = vunpack.c.l.b16 %v179
  %v548 = vunpack.c.l.b16 %v180
  %v549 = vpack.c.b16 %v470, %v469
  %v550 = vpack.c.b16 %v472, %v471
  %v551 = vpack.c.b16 %v474, %v473
  %v552 = vpack.c.b16 %v476, %v475
  %v553 = vpack.c.b16 %v478, %v477
  %v554 = vpack.c.b16 %v480, %v479
  %v555 = vpack.c.b16 %v482, %v481
  %v556 = vpack.c.b16 %v484, %v483
  %v557 = vpack.c.b16 %v486, %v485
  %v558 = vpack.c.b16 %v488, %v487
  %v559 = vpack.c.b16 %v490, %v489
  %v560 = vpack.c.b16 %v492, %v491
  %v561 = vpack.c.b16 %v494, %v493
  %v562 = vpack.c.b16 %v496, %v495
  %v563 = vpack.c.b16 %v498, %v497
  %v564 = vpack.c.b16 %v500, %v499
  %v565 = vpack.c.b16 %v502, %v501
  %v566 = vpack.c.b16 %v504, %v503
  %v567 = vpack.c.b16 %v506, %v505
  %v568 = vpack.c.b16 %v508, %v507
  %v569 = vpack.c.b16 %v510, %v509
  %v570 = vpack.c.b16 %v512, %v511
  %v571 = vpack.c.b16 %v514, %v513
  %v572 = vpack.c.b16 %v516, %v515
  %v573 = vpack.c.b16 %v518, %v517
  %v574 = vpack.c.b16 %v520, %v519
  %v575 = vpack.c.b16 %v522, %v521
  %v576 = vpack.c.b16 %v524, %v523
  %v577 = vpack.c.b16 %v526, %v525
  %v578 = vpack.c.b16 %v528, %v527
  %v579 = vpack.c.b16 %v530, %v529
  %v580 = vpack.c.b16 %v532, %v531
  %v581 = vpack.c.b16 %v534, %v533
  %v582 = vpack.c.b16 %v536, %v535
  %v583 = vpack.c.b16 %v538, %v537
  %v584 = vpack.c.b16 %v540, %v539
  %v585 = vpack.c.b16 %v542, %v541
  %v586 = vpack.c.b16 %v544, %v543
  %v587 = vpack.c.b16 %v546, %v545
  %v588 = vpack.c.b16 %v548, %v547
  %629 = vmatpush.bf16.msra.mxu0 %v556
  %630 = vmatpush.bf16.msra.mxu0 %v555
  %631 = vmatpush.bf16.msra.mxu0 %v554
  %632 = vmatpush.bf16.msra.mxu0 %v553
  %633 = vmatpush.bf16.msra.mxu0 %v552
  %634 = vmatpush.bf16.msra.mxu0 %v551
  %635 = vmatpush.bf16.msra.mxu0 %v550
  %636 = vmatpush.bf16.msra.mxu0 %v549
  %637 = vmatmul.bf16.gmra.mxu0 %v309
  %v638 = vpop.f32.mrf.mxu0
  %v639 = vadd.f32 0.0, %v638
  %v640 = vpop.f32.mrf.mxu0
  %v641 = vadd.f32 0.0, %v640
  %642 = vmatmul.bf16.gmra.mxu0 %v314
  %v643 = vpop.f32.mrf.mxu0
  %v644 = vadd.f32 0.0, %v643
  %v645 = vpop.f32.mrf.mxu0
  %v646 = vadd.f32 0.0, %v645
  %647 = vmatmul.bf16.gmra.mxu0 %v319
  %v648 = vpop.f32.mrf.mxu0
  %v649 = vadd.f32 0.0, %v648
  %v650 = vpop.f32.mrf.mxu0
  %v651 = vadd.f32 0.0, %v650
  %652 = vmatmul.bf16.gmra.mxu0 %v324
  %v653 = vpop.f32.mrf.mxu0
  %v654 = vadd.f32 0.0, %v653
  %v655 = vpop.f32.mrf.mxu0
  %v656 = vadd.f32 0.0, %v655
  %657 = vmatmul.bf16.gmra.mxu0 %v329
  %v658 = vpop.f32.mrf.mxu0
  %v659 = vadd.f32 0.0, %v658
  %v660 = vpop.f32.mrf.mxu0
  %v661 = vadd.f32 0.0, %v660
  %662 = vmatmul.bf16.gmra.mxu0 %v334
  %v663 = vpop.f32.mrf.mxu0
  %v664 = vadd.f32 0.0, %v663
  %v665 = vpop.f32.mrf.mxu0
  %v666 = vadd.f32 0.0, %v665
  %667 = vmatmul.bf16.gmra.mxu0 %v339
  %v668 = vpop.f32.mrf.mxu0
  %v669 = vadd.f32 0.0, %v668
  %v670 = vpop.f32.mrf.mxu0
  %v671 = vadd.f32 0.0, %v670
  %672 = vmatmul.bf16.gmra.mxu0 %v344
  %v673 = vpop.f32.mrf.mxu0
  %v674 = vadd.f32 0.0, %v673
  %v675 = vpop.f32.mrf.mxu0
  %v676 = vadd.f32 0.0, %v675
  %677 = vdwg.mxu0
  %678 = vmatpush.bf16.msra.mxu0 %v564
  %679 = vmatpush.bf16.msra.mxu0 %v563
  %680 = vmatpush.bf16.msra.mxu0 %v562
  %681 = vmatpush.bf16.msra.mxu0 %v561
  %682 = vmatpush.bf16.msra.mxu0 %v560
  %683 = vmatpush.bf16.msra.mxu0 %v559
  %684 = vmatpush.bf16.msra.mxu0 %v558
  %685 = vmatpush.bf16.msra.mxu0 %v557
  %686 = vmatmul.bf16.gmra.mxu0 %v310
  %v687 = vpop.f32.mrf.mxu0
  %v688 = vadd.f32 %v639, %v687
  %v689 = vpop.f32.mrf.mxu0
  %v690 = vadd.f32 %v641, %v689
  %691 = vmatmul.bf16.gmra.mxu0 %v315
  %v692 = vpop.f32.mrf.mxu0
  %v693 = vadd.f32 %v644, %v692
  %v694 = vpop.f32.mrf.mxu0
  %v695 = vadd.f32 %v646, %v694
  %696 = vmatmul.bf16.gmra.mxu0 %v320
  %v697 = vpop.f32.mrf.mxu0
  %v698 = vadd.f32 %v649, %v697
  %v699 = vpop.f32.mrf.mxu0
  %v700 = vadd.f32 %v651, %v699
  %701 = vmatmul.bf16.gmra.mxu0 %v325
  %v702 = vpop.f32.mrf.mxu0
  %v703 = vadd.f32 %v654, %v702
  %v704 = vpop.f32.mrf.mxu0
  %v705 = vadd.f32 %v656, %v704
  %706 = vmatmul.bf16.gmra.mxu0 %v330
  %v707 = vpop.f32.mrf.mxu0
  %v708 = vadd.f32 %v659, %v707
  %v709 = vpop.f32.mrf.mxu0
  %v710 = vadd.f32 %v661, %v709
  %711 = vmatmul.bf16.gmra.mxu0 %v335
  %v712 = vpop.f32.mrf.mxu0
  %v713 = vadd.f32 %v664, %v712
  %v714 = vpop.f32.mrf.mxu0
  %v715 = vadd.f32 %v666, %v714
  %716 = vmatmul.bf16.gmra.mxu0 %v340
  %v717 = vpop.f32.mrf.mxu0
  %v718 = vadd.f32 %v669, %v717
  %v719 = vpop.f32.mrf.mxu0
  %v720 = vadd.f32 %v671, %v719
  %721 = vmatmul.bf16.gmra.mxu0 %v345
  %v722 = vpop.f32.mrf.mxu0
  %v723 = vadd.f32 %v674, %v722
  %v724 = vpop.f32.mrf.mxu0
  %v725 = vadd.f32 %v676, %v724
  %726 = vdwg.mxu0
  %727 = vmatpush.bf16.msra.mxu0 %v572
  %728 = vmatpush.bf16.msra.mxu0 %v571
  %729 = vmatpush.bf16.msra.mxu0 %v570
  %730 = vmatpush.bf16.msra.mxu0 %v569
  %731 = vmatpush.bf16.msra.mxu0 %v568
  %732 = vmatpush.bf16.msra.mxu0 %v567
  %733 = vmatpush.bf16.msra.mxu0 %v566
  %734 = vmatpush.bf16.msra.mxu0 %v565
  %735 = vmatmul.bf16.gmra.mxu0 %v311
  %v736 = vpop.f32.mrf.mxu0
  %v737 = vadd.f32 %v688, %v736
  %v738 = vpop.f32.mrf.mxu0
  %v739 = vadd.f32 %v690, %v738
  %740 = vmatmul.bf16.gmra.mxu0 %v316
  %v741 = vpop.f32.mrf.mxu0
  %v742 = vadd.f32 %v693, %v741
  %v743 = vpop.f32.mrf.mxu0
  %v744 = vadd.f32 %v695, %v743
  %745 = vmatmul.bf16.gmra.mxu0 %v321
  %v746 = vpop.f32.mrf.mxu0
  %v747 = vadd.f32 %v698, %v746
  %v748 = vpop.f32.mrf.mxu0
  %v749 = vadd.f32 %v700, %v748
  %750 = vmatmul.bf16.gmra.mxu0 %v326
  %v751 = vpop.f32.mrf.mxu0
  %v752 = vadd.f32 %v703, %v751
  %v753 = vpop.f32.mrf.mxu0
  %v754 = vadd.f32 %v705, %v753
  %755 = vmatmul.bf16.gmra.mxu0 %v331
  %v756 = vpop.f32.mrf.mxu0
  %v757 = vadd.f32 %v708, %v756
  %v758 = vpop.f32.mrf.mxu0
  %v759 = vadd.f32 %v710, %v758
  %760 = vmatmul.bf16.gmra.mxu0 %v336
  %v761 = vpop.f32.mrf.mxu0
  %v762 = vadd.f32 %v713, %v761
  %v763 = vpop.f32.mrf.mxu0
  %v764 = vadd.f32 %v715, %v763
  %765 = vmatmul.bf16.gmra.mxu0 %v341
  %v766 = vpop.f32.mrf.mxu0
  %v767 = vadd.f32 %v718, %v766
  %v768 = vpop.f32.mrf.mxu0
  %v769 = vadd.f32 %v720, %v768
  %770 = vmatmul.bf16.gmra.mxu0 %v346
  %v771 = vpop.f32.mrf.mxu0
  %v772 = vadd.f32 %v723, %v771
  %v773 = vpop.f32.mrf.mxu0
  %v774 = vadd.f32 %v725, %v773
  %775 = vdwg.mxu0
  %776 = vmatpush.bf16.msra.mxu0 %v580
  %777 = vmatpush.bf16.msra.mxu0 %v579
  %778 = vmatpush.bf16.msra.mxu0 %v578
  %779 = vmatpush.bf16.msra.mxu0 %v577
  %780 = vmatpush.bf16.msra.mxu0 %v576
  %781 = vmatpush.bf16.msra.mxu0 %v575
  %782 = vmatpush.bf16.msra.mxu0 %v574
  %783 = vmatpush.bf16.msra.mxu0 %v573
  %784 = vmatmul.bf16.gmra.mxu0 %v312
  %v785 = vpop.f32.mrf.mxu0
  %v786 = vadd.f32 %v737, %v785
  %v787 = vpop.f32.mrf.mxu0
  %v788 = vadd.f32 %v739, %v787
  %789 = vmatmul.bf16.gmra.mxu0 %v317
  %v790 = vpop.f32.mrf.mxu0
  %v791 = vadd.f32 %v742, %v790
  %v792 = vpop.f32.mrf.mxu0
  %v793 = vadd.f32 %v744, %v792
  %794 = vmatmul.bf16.gmra.mxu0 %v322
  %v795 = vpop.f32.mrf.mxu0
  %v796 = vadd.f32 %v747, %v795
  %v797 = vpop.f32.mrf.mxu0
  %v798 = vadd.f32 %v749, %v797
  %799 = vmatmul.bf16.gmra.mxu0 %v327
  %v800 = vpop.f32.mrf.mxu0
  %v801 = vadd.f32 %v752, %v800
  %v802 = vpop.f32.mrf.mxu0
  %v803 = vadd.f32 %v754, %v802
  %804 = vmatmul.bf16.gmra.mxu0 %v332
  %v805 = vpop.f32.mrf.mxu0
  %v806 = vadd.f32 %v757, %v805
  %v807 = vpop.f32.mrf.mxu0
  %v808 = vadd.f32 %v759, %v807
  %809 = vmatmul.bf16.gmra.mxu0 %v337
  %v810 = vpop.f32.mrf.mxu0
  %v811 = vadd.f32 %v762, %v810
  %v812 = vpop.f32.mrf.mxu0
  %v813 = vadd.f32 %v764, %v812
  %814 = vmatmul.bf16.gmra.mxu0 %v342
  %v815 = vpop.f32.mrf.mxu0
  %v816 = vadd.f32 %v767, %v815
  %v817 = vpop.f32.mrf.mxu0
  %v818 = vadd.f32 %v769, %v817
  %819 = vmatmul.bf16.gmra.mxu0 %v347
  %v820 = vpop.f32.mrf.mxu0
  %v821 = vadd.f32 %v772, %v820
  %v822 = vpop.f32.mrf.mxu0
  %v823 = vadd.f32 %v774, %v822
  %824 = vdwg.mxu0
  %825 = vmatpush.bf16.msra.mxu0 %v588
  %826 = vmatpush.bf16.msra.mxu0 %v587
  %827 = vmatpush.bf16.msra.mxu0 %v586
  %828 = vmatpush.bf16.msra.mxu0 %v585
  %829 = vmatpush.bf16.msra.mxu0 %v584
  %830 = vmatpush.bf16.msra.mxu0 %v583
  %831 = vmatpush.bf16.msra.mxu0 %v582
  %832 = vmatpush.bf16.msra.mxu0 %v581
  %833 = vmatmul.bf16.gmra.mxu0 %v313
  %v834 = vpop.f32.mrf.mxu0
  %v835 = vadd.f32 %v786, %v834
  %v836 = vpop.f32.mrf.mxu0
  %v837 = vadd.f32 %v788, %v836
  %838 = vmatmul.bf16.gmra.mxu0 %v318
  %v839 = vpop.f32.mrf.mxu0
  %v840 = vadd.f32 %v791, %v839
  %v841 = vpop.f32.mrf.mxu0
  %v842 = vadd.f32 %v793, %v841
  %843 = vmatmul.bf16.gmra.mxu0 %v323
  %v844 = vpop.f32.mrf.mxu0
  %v845 = vadd.f32 %v796, %v844
  %v846 = vpop.f32.mrf.mxu0
  %v847 = vadd.f32 %v798, %v846
  %848 = vmatmul.bf16.gmra.mxu0 %v328
  %v849 = vpop.f32.mrf.mxu0
  %v850 = vadd.f32 %v801, %v849
  %v851 = vpop.f32.mrf.mxu0
  %v852 = vadd.f32 %v803, %v851
  %853 = vmatmul.bf16.gmra.mxu0 %v333
  %v854 = vpop.f32.mrf.mxu0
  %v855 = vadd.f32 %v806, %v854
  %v856 = vpop.f32.mrf.mxu0
  %v857 = vadd.f32 %v808, %v856
  %858 = vmatmul.bf16.gmra.mxu0 %v338
  %v859 = vpop.f32.mrf.mxu0
  %v860 = vadd.f32 %v811, %v859
  %v861 = vpop.f32.mrf.mxu0
  %v862 = vadd.f32 %v813, %v861
  %863 = vmatmul.bf16.gmra.mxu0 %v343
  %v864 = vpop.f32.mrf.mxu0
  %v865 = vadd.f32 %v816, %v864
  %v866 = vpop.f32.mrf.mxu0
  %v867 = vadd.f32 %v818, %v866
  %868 = vmatmul.bf16.gmra.mxu0 %v348
  %v869 = vpop.f32.mrf.mxu0
  %v870 = vadd.f32 %v821, %v869
  %v871 = vpop.f32.mrf.mxu0
  %v872 = vadd.f32 %v823, %v871
  %873 = vdwg.mxu0
  %v874 = vadd.f32 %v37, %v835
  %v875 = vadd.f32 %v38, %v837
  %v876 = vadd.f32 %v39, %v840
  %v877 = vadd.f32 %v40, %v842
  %v878 = vadd.f32 %v41, %v845
  %v879 = vadd.f32 %v42, %v847
  %v880 = vadd.f32 %v43, %v850
  %v881 = vadd.f32 %v44, %v852
  %v882 = vadd.f32 %v45, %v855
  %v883 = vadd.f32 %v46, %v857
  %v884 = vadd.f32 %v47, %v860
  %v885 = vadd.f32 %v48, %v862
  %v886 = vadd.f32 %v49, %v865
  %v887 = vadd.f32 %v50, %v867
  %v888 = vadd.f32 %v51, %v870
  %v889 = vadd.f32 %v52, %v872
  %890 = vst [vmem:[#allocation2] sm:$0xff] %v874
  %891 = vst [vmem:[#allocation2 + $0x8] sm:$0xff] %v875
  %892 = vst [vmem:[#allocation2 + $0x10] sm:$0xff] %v876
  %893 = vst [vmem:[#allocation2 + $0x18] sm:$0xff] %v877
  %894 = vst [vmem:[#allocation2 + $0x20] sm:$0xff] %v878
  %895 = vst [vmem:[#allocation2 + $0x28] sm:$0xff] %v879
  %896 = vst [vmem:[#allocation2 + $0x30] sm:$0xff] %v880
  %897 = vst [vmem:[#allocation2 + $0x38] sm:$0xff] %v881
  %898 = vst [vmem:[#allocation2 + $0x40] sm:$0xff] %v882
  %899 = vst [vmem:[#allocation2 + $0x48] sm:$0xff] %v883
  %900 = vst [vmem:[#allocation2 + $0x50] sm:$0xff] %v884
  %901 = vst [vmem:[#allocation2 + $0x58] sm:$0xff] %v885
  %902 = vst [vmem:[#allocation2 + $0x60] sm:$0xff] %v886
  %903 = vst [vmem:[#allocation2 + $0x68] sm:$0xff] %v887
  %904 = vst [vmem:[#allocation2 + $0x70] sm:$0xff] %v888
  %905 = vst [vmem:[#allocation2 + $0x78] sm:$0xff] %v889
  // Predicated region
  $region22: #{_lambda_.28} parent=0 // pred_check
    %p906 = pneg %p17
  $region23: #{_lambda_.28} parent=0 // pred_check_branch
    %908 = sbr.rel (%p906) target = $region25
  $region24: #{_lambda_.28} parent=0 // pred_region
    %v909 = vld [vmem:[#allocation2] sm:$0xff]
    %v910 = vld [vmem:[#allocation2 + $0x8] sm:$0xff]
    %v911 = vld [vmem:[#allocation2 + $0x10] sm:$0xff]
    %v912 = vld [vmem:[#allocation2 + $0x18] sm:$0xff]
    %v913 = vld [vmem:[#allocation2 + $0x20] sm:$0xff]
    %v914 = vld [vmem:[#allocation2 + $0x28] sm:$0xff]
    %v915 = vld [vmem:[#allocation2 + $0x30] sm:$0xff]
    %v916 = vld [vmem:[#allocation2 + $0x38] sm:$0xff]
    %v917 = vld [vmem:[#allocation2 + $0x40] sm:$0xff]
    %v918 = vld [vmem:[#allocation2 + $0x48] sm:$0xff]
    %v919 = vld [vmem:[#allocation2 + $0x50] sm:$0xff]
    %v920 = vld [vmem:[#allocation2 + $0x58] sm:$0xff]
    %v921 = vld [vmem:[#allocation2 + $0x60] sm:$0xff]
    %v922 = vld [vmem:[#allocation2 + $0x68] sm:$0xff]
    %v923 = vld [vmem:[#allocation2 + $0x70] sm:$0xff]
    %v924 = vld [vmem:[#allocation2 + $0x78] sm:$0xff]
    %v925 = vld [vmem:[%s2] sm:$0x1]
    %v927 = vperm.slane %v925, 0
    %v929 = vadd.f32 %v909, %v927
    %v930 = vadd.f32 %v910, %v927
    %v931 = vadd.f32 %v911, %v927
    %v932 = vadd.f32 %v912, %v927
    %v933 = vadd.f32 %v913, %v927
    %v934 = vadd.f32 %v914, %v927
    %v935 = vadd.f32 %v915, %v927
    %v936 = vadd.f32 %v916, %v927
    %v937 = vadd.f32 %v917, %v927
    %v938 = vadd.f32 %v918, %v927
    %v939 = vadd.f32 %v919, %v927
    %v940 = vadd.f32 %v920, %v927
    %v941 = vadd.f32 %v921, %v927
    %v942 = vadd.f32 %v922, %v927
    %v943 = vadd.f32 %v923, %v927
    %v944 = vadd.f32 %v924, %v927
    %v945 = vld [vmem:[%s3] sm:$0xf]
    %v946 = vld [vmem:[%s3 + $0x4] sm:$0xf]
    %v947 = vld [vmem:[%s3 + $0x8] sm:$0xf]
    %v948 = vld [vmem:[%s3 + $0xc] sm:$0xf]
    %v949 = vld [vmem:[%s3 + $0x10] sm:$0xf]
    %v950 = vld [vmem:[%s3 + $0x14] sm:$0xf]
    %v951 = vld [vmem:[%s3 + $0x18] sm:$0xf]
    %v952 = vld [vmem:[%s3 + $0x1c] sm:$0xf]
    %v953 = vld [vmem:[%s3 + $0x20] sm:$0xf]
    %v954 = vld [vmem:[%s3 + $0x24] sm:$0xf]
    %v955 = vld [vmem:[%s3 + $0x28] sm:$0xf]
    %v956 = vld [vmem:[%s3 + $0x2c] sm:$0xf]
    %v957 = vld [vmem:[%s3 + $0x30] sm:$0xf]
    %v958 = vld [vmem:[%s3 + $0x34] sm:$0xf]
    %v959 = vld [vmem:[%s3 + $0x38] sm:$0xf]
    %v960 = vld [vmem:[%s3 + $0x3c] sm:$0xf]
    %v961 = vunpack.c.l.bf16 %v945
    %v962 = vunpack.c.l.bf16 %v946
    %v963 = vunpack.c.l.bf16 %v947
    %v964 = vunpack.c.l.bf16 %v948
    %v965 = vunpack.c.l.bf16 %v949
    %v966 = vunpack.c.l.bf16 %v950
    %v967 = vunpack.c.l.bf16 %v951
    %v968 = vunpack.c.l.bf16 %v952
    %v969 = vunpack.c.l.bf16 %v953
    %v970 = vunpack.c.l.bf16 %v954
    %v971 = vunpack.c.l.bf16 %v955
    %v972 = vunpack.c.l.bf16 %v956
    %v973 = vunpack.c.l.bf16 %v957
    %v974 = vunpack.c.l.bf16 %v958
    %v975 = vunpack.c.l.bf16 %v959
    %v976 = vunpack.c.l.bf16 %v960
    %v977 = vadd.f32 %v929, %v961
    %v978 = vadd.f32 %v930, %v962
    %v979 = vadd.f32 %v931, %v963
    %v980 = vadd.f32 %v932, %v964
    %v981 = vadd.f32 %v933, %v965
    %v982 = vadd.f32 %v934, %v966
    %v983 = vadd.f32 %v935, %v967
    %v984 = vadd.f32 %v936, %v968
    %v985 = vadd.f32 %v937, %v969
    %v986 = vadd.f32 %v938, %v970
    %v987 = vadd.f32 %v939, %v971
    %v988 = vadd.f32 %v940, %v972
    %v989 = vadd.f32 %v941, %v973
    %v990 = vadd.f32 %v942, %v974
    %v991 = vadd.f32 %v943, %v975
    %v992 = vadd.f32 %v944, %v976
    %vm993 = vcmp.gt.f32.partialorder %v977, 0.0
    %vm994 = vcmp.gt.f32.partialorder %v978, 0.0
    %vm995 = vcmp.gt.f32.partialorder %v979, 0.0
    %vm996 = vcmp.gt.f32.partialorder %v980, 0.0
    %vm997 = vcmp.gt.f32.partialorder %v981, 0.0
    %vm998 = vcmp.gt.f32.partialorder %v982, 0.0
    %vm999 = vcmp.gt.f32.partialorder %v983, 0.0
    %vm1000 = vcmp.gt.f32.partialorder %v984, 0.0
    %vm1001 = vcmp.gt.f32.partialorder %v985, 0.0
    %vm1002 = vcmp.gt.f32.partialorder %v986, 0.0
    %vm1003 = vcmp.gt.f32.partialorder %v987, 0.0
    %vm1004 = vcmp.gt.f32.partialorder %v988, 0.0
    %vm1005 = vcmp.gt.f32.partialorder %v989, 0.0
    %vm1006 = vcmp.gt.f32.partialorder %v990, 0.0
    %vm1007 = vcmp.gt.f32.partialorder %v991, 0.0
    %vm1008 = vcmp.gt.f32.partialorder %v992, 0.0
    %v1009 = vmul.f32 %v977, 0.01
    %v1010 = vmul.f32 %v978, 0.01
    %v1011 = vmul.f32 %v979, 0.01
    %v1012 = vmul.f32 %v980, 0.01
    %v1013 = vmul.f32 %v981, 0.01
    %v1014 = vmul.f32 %v982, 0.01
    %v1015 = vmul.f32 %v983, 0.01
    %v1016 = vmul.f32 %v984, 0.01
    %v1017 = vmul.f32 %v985, 0.01
    %v1018 = vmul.f32 %v986, 0.01
    %v1019 = vmul.f32 %v987, 0.01
    %v1020 = vmul.f32 %v988, 0.01
    %v1021 = vmul.f32 %v989, 0.01
    %v1022 = vmul.f32 %v990, 0.01
    %v1023 = vmul.f32 %v991, 0.01
    %v1024 = vmul.f32 %v992, 0.01
    %v1025 = vsel %vm993, %v977, %v1009
    %v1026 = vsel %vm994, %v978, %v1010
    %v1027 = vsel %vm995, %v979, %v1011
    %v1028 = vsel %vm996, %v980, %v1012
    %v1029 = vsel %vm997, %v981, %v1013
    %v1030 = vsel %vm998, %v982, %v1014
    %v1031 = vsel %vm999, %v983, %v1015
    %v1032 = vsel %vm1000, %v984, %v1016
    %v1033 = vsel %vm1001, %v985, %v1017
    %v1034 = vsel %vm1002, %v986, %v1018
    %v1035 = vsel %vm1003, %v987, %v1019
    %v1036 = vsel %vm1004, %v988, %v1020
    %v1037 = vsel %vm1005, %v989, %v1021
    %v1038 = vsel %vm1006, %v990, %v1022
    %v1039 = vsel %vm1007, %v991, %v1023
    %v1040 = vsel %vm1008, %v992, %v1024
    %v1041 = vpack.c.bf16 %v1025, %v1025
    %v1042 = vpack.c.bf16 %v1026, %v1026
    %v1043 = vpack.c.bf16 %v1027, %v1027
    %v1044 = vpack.c.bf16 %v1028, %v1028
    %v1045 = vpack.c.bf16 %v1029, %v1029
    %v1046 = vpack.c.bf16 %v1030, %v1030
    %v1047 = vpack.c.bf16 %v1031, %v1031
    %v1048 = vpack.c.bf16 %v1032, %v1032
    %v1049 = vpack.c.bf16 %v1033, %v1033
    %v1050 = vpack.c.bf16 %v1034, %v1034
    %v1051 = vpack.c.bf16 %v1035, %v1035
    %v1052 = vpack.c.bf16 %v1036, %v1036
    %v1053 = vpack.c.bf16 %v1037, %v1037
    %v1054 = vpack.c.bf16 %v1038, %v1038
    %v1055 = vpack.c.bf16 %v1039, %v1039
    %v1056 = vpack.c.bf16 %v1040, %v1040
    %1057 = vst [vmem:[%s4] sm:$0xf] %v1041
    %1058 = vst [vmem:[%s4 + $0x4] sm:$0xf] %v1042
    %1059 = vst [vmem:[%s4 + $0x8] sm:$0xf] %v1043
    %1060 = vst [vmem:[%s4 + $0xc] sm:$0xf] %v1044
    %1061 = vst [vmem:[%s4 + $0x10] sm:$0xf] %v1045
    %1062 = vst [vmem:[%s4 + $0x14] sm:$0xf] %v1046
    %1063 = vst [vmem:[%s4 + $0x18] sm:$0xf] %v1047
    %1064 = vst [vmem:[%s4 + $0x1c] sm:$0xf] %v1048
    %1065 = vst [vmem:[%s4 + $0x20] sm:$0xf] %v1049
    %1066 = vst [vmem:[%s4 + $0x24] sm:$0xf] %v1050
    %1067 = vst [vmem:[%s4 + $0x28] sm:$0xf] %v1051
    %1068 = vst [vmem:[%s4 + $0x2c] sm:$0xf] %v1052
    %1069 = vst [vmem:[%s4 + $0x30] sm:$0xf] %v1053
    %1070 = vst [vmem:[%s4 + $0x34] sm:$0xf] %v1054
    %1071 = vst [vmem:[%s4 + $0x38] sm:$0xf] %v1055
    %1072 = vst [vmem:[%s4 + $0x3c] sm:$0xf] %v1056
  $region25: #{_lambda_.28} parent=0 // pred_fallthru
    _
  // Predicated region
  $region26: #{_lambda_.28} parent=0 // pred_check
    _
  $region27: #{_lambda_.28} parent=0 // pred_check_branch
    %1074 = sbr.rel (0) target = $region29
  $region28: #{_lambda_.28} parent=0 // pred_region
    _
  $region29: #{_lambda_.28} parent=0 // pred_fallthru
    _
  // Predicated region
  $region30: #{_lambda_.28} parent=0 // pred_check
    _
  $region31: #{_lambda_.28} parent=0 // pred_check_branch
    %1076 = sbr.rel (0) target = $region33
  $region32: #{_lambda_.28} parent=0 // pred_region
    _
  $region33: #{_lambda_.28} parent=0 // pred_fallthru
    _

// kernel: _lambda_.29
$region0: #{_lambda_.29}
  #allocation0 [shape = 'u32[]', space=smem, size = 0x4, offset = 0x4, fixed_abs, tag = 'smem constant byte address 0x4 - core index']
  #allocation1 [shape = 'u32[72,128]{1,0:T(1,128)}', space=vmem, size = 0x9000, scoped, tag = 'internal scratch']
  #allocation2 [shape = 'f32[128,128]{1,0:T(8,128)}', space=vmem, size = 0x10000, scoped, tag = 'scratch operand']
  %s0 = inlined_call_operand.vmem [shape: bf16[128,128], index: 0, kind: input, shape index: {}]
  %s1 = inlined_call_operand.vmem [shape: bf16[128,128], index: 1, kind: input, shape index: {}]
  %s2 = inlined_call_operand.vmem [shape: f32[1,128], index: 2, kind: input, shape index: {}]
  %s3 = inlined_call_operand.vmem [shape: f32[128,128], index: 3, kind: output, shape index: {}]
  %s4 = sld [smem:[#allocation0]]
  $region30: #{_lambda_.29} parent=0
    _
  %s6 = ssub.s32 1, %s4
  %s7 = scalar_select 0, %s6, %s4
  // Predicated region
  $region2: #{_lambda_.29} parent=0 // pred_check
    _
  $region3: #{_lambda_.29} parent=0 // pred_check_branch
    %9 = sbr.rel (0) target = $region5
  $region4: #{_lambda_.29} parent=0 // pred_region
    _
  $region5: #{_lambda_.29} parent=0 // pred_fallthru
    _
  // Predicated region
  $region6: #{_lambda_.29} parent=0 // pred_check
    _
  $region7: #{_lambda_.29} parent=0 // pred_check_branch
    %11 = sbr.rel (0) target = $region9
  $region8: #{_lambda_.29} parent=0 // pred_region
    _
  $region9: #{_lambda_.29} parent=0 // pred_fallthru
    _
  // Predicated region
  $region10: #{_lambda_.29} parent=0 // pred_check
    _
  $region11: #{_lambda_.29} parent=0 // pred_check_branch
    %13 = sbr.rel (0) target = $region13
  $region12: #{_lambda_.29} parent=0 // pred_region
    _
  $region13: #{_lambda_.29} parent=0 // pred_fallthru
    _
  %p14 = scmp.eq.s32.totalorder 0, 0
  // Predicated region
  $region14: #{_lambda_.29} parent=0 // pred_check
    %p15 = pneg %p14
  $region15: #{_lambda_.29} parent=0 // pred_check_branch
    %17 = sbr.rel (%p15) target = $region17
  $region16: #{_lambda_.29} parent=0 // pred_region
    %18 = vst [vmem:[#allocation2] sm:$0xff] 0.0
    %19 = vst [vmem:[#allocation2 + $0x8] sm:$0xff] 0.0
    %20 = vst [vmem:[#allocation2 + $0x10] sm:$0xff] 0.0
    %21 = vst [vmem:[#allocation2 + $0x18] sm:$0xff] 0.0
    %22 = vst [vmem:[#allocation2 + $0x20] sm:$0xff] 0.0
    %23 = vst [vmem:[#allocation2 + $0x28] sm:$0xff] 0.0
    %24 = vst [vmem:[#allocation2 + $0x30] sm:$0xff] 0.0
    %25 = vst [vmem:[#allocation2 + $0x38] sm:$0xff] 0.0
    %26 = vst [vmem:[#allocation2 + $0x40] sm:$0xff] 0.0
    %27 = vst [vmem:[#allocation2 + $0x48] sm:$0xff] 0.0
    %28 = vst [vmem:[#allocation2 + $0x50] sm:$0xff] 0.0
    %29 = vst [vmem:[#allocation2 + $0x58] sm:$0xff] 0.0
    %30 = vst [vmem:[#allocation2 + $0x60] sm:$0xff] 0.0
    %31 = vst [vmem:[#allocation2 + $0x68] sm:$0xff] 0.0
    %32 = vst [vmem:[#allocation2 + $0x70] sm:$0xff] 0.0
    %33 = vst [vmem:[#allocation2 + $0x78] sm:$0xff] 0.0
  $region17: #{_lambda_.29} parent=0 // pred_fallthru
    _
  %v34 = vld [vmem:[#allocation2] sm:$0xff]
  %v35 = vld [vmem:[#allocation2 + $0x8] sm:$0xff]
  %v36 = vld [vmem:[#allocation2 + $0x10] sm:$0xff]
  %v37 = vld [vmem:[#allocation2 + $0x18] sm:$0xff]
  %v38 = vld [vmem:[#allocation2 + $0x20] sm:$0xff]
  %v39 = vld [vmem:[#allocation2 + $0x28] sm:$0xff]
  %v40 = vld [vmem:[#allocation2 + $0x30] sm:$0xff]
  %v41 = vld [vmem:[#allocation2 + $0x38] sm:$0xff]
  %v42 = vld [vmem:[#allocation2 + $0x40] sm:$0xff]
  %v43 = vld [vmem:[#allocation2 + $0x48] sm:$0xff]
  %v44 = vld [vmem:[#allocation2 + $0x50] sm:$0xff]
  %v45 = vld [vmem:[#allocation2 + $0x58] sm:$0xff]
  %v46 = vld [vmem:[#allocation2 + $0x60] sm:$0xff]
  %v47 = vld [vmem:[#allocation2 + $0x68] sm:$0xff]
  %v48 = vld [vmem:[#allocation2 + $0x70] sm:$0xff]
  %v49 = vld [vmem:[#allocation2 + $0x78] sm:$0xff]
  %v50 = vld [vmem:[%s0] sm:$0xf]
  %v51 = vld [vmem:[%s0 + $0x4] sm:$0xf]
  %v52 = vld [vmem:[%s0 + $0x8] sm:$0xf]
  %v53 = vld [vmem:[%s0 + $0xc] sm:$0xf]
  %v54 = vld [vmem:[%s0 + $0x10] sm:$0xf]
  %v55 = vld [vmem:[%s0 + $0x14] sm:$0xf]
  %v56 = vld [vmem:[%s0 + $0x18] sm:$0xf]
  %v57 = vld [vmem:[%s0 + $0x1c] sm:$0xf]
  %v58 = vld [vmem:[%s0 + $0x20] sm:$0xf]
  %v59 = vld [vmem:[%s0 + $0x24] sm:$0xf]
  %v60 = vld [vmem:[%s0 + $0x28] sm:$0xf]
  %v61 = vld [vmem:[%s0 + $0x2c] sm:$0xf]
  %v62 = vld [vmem:[%s0 + $0x30] sm:$0xf]
  %v63 = vld [vmem:[%s0 + $0x34] sm:$0xf]
  %v64 = vld [vmem:[%s0 + $0x38] sm:$0xf]
  %v65 = vld [vmem:[%s0 + $0x3c] sm:$0xf]
  %v66 = vld [vmem:[%s1] sm:$0xf]
  %v67 = vld [vmem:[%s1 + $0x4] sm:$0xf]
  %v68 = vld [vmem:[%s1 + $0x8] sm:$0xf]
  %v69 = vld [vmem:[%s1 + $0xc] sm:$0xf]
  %v70 = vld [vmem:[%s1 + $0x10] sm:$0xf]
  %v71 = vld [vmem:[%s1 + $0x14] sm:$0xf]
  %v72 = vld [vmem:[%s1 + $0x18] sm:$0xf]
  %v73 = vld [vmem:[%s1 + $0x1c] sm:$0xf]
  %v74 = vld [vmem:[%s1 + $0x20] sm:$0xf]
  %v75 = vld [vmem:[%s1 + $0x24] sm:$0xf]
  %v76 = vld [vmem:[%s1 + $0x28] sm:$0xf]
  %v77 = vld [vmem:[%s1 + $0x2c] sm:$0xf]
  %v78 = vld [vmem:[%s1 + $0x30] sm:$0xf]
  %v79 = vld [vmem:[%s1 + $0x34] sm:$0xf]
  %v80 = vld [vmem:[%s1 + $0x38] sm:$0xf]
  %v81 = vld [vmem:[%s1 + $0x3c] sm:$0xf]
  %v98 = vunpack.c.l.b16 %v50
  %v99 = vunpack.c.l.b16 %v51
  %v100 = vunpack.c.l.b16 %v52
  %v101 = vunpack.c.l.b16 %v53
  %v102 = vunpack.c.l.b16 %v54
  %v103 = vunpack.c.l.b16 %v55
  %v104 = vunpack.c.l.b16 %v56
  %v105 = vunpack.c.l.b16 %v57
  %v106 = vunpack.c.l.b16 %v58
  %v107 = vunpack.c.l.b16 %v59
  %v108 = vunpack.c.l.b16 %v60
  %v109 = vunpack.c.l.b16 %v61
  %v110 = vunpack.c.l.b16 %v62
  %v111 = vunpack.c.l.b16 %v63
  %v112 = vunpack.c.l.b16 %v64
  %v113 = vunpack.c.l.b16 %v65
  %v114 = vpack.c.b16 %v99, %v98
  %v115 = vpack.c.b16 %v101, %v100
  %v116 = vpack.c.b16 %v103, %v102
  %v117 = vpack.c.b16 %v105, %v104
  %v118 = vpack.c.b16 %v107, %v106
  %v119 = vpack.c.b16 %v109, %v108
  %v120 = vpack.c.b16 %v111, %v110
  %v121 = vpack.c.b16 %v113, %v112
  %v146 = vunpack.c.l.b16 %v66
  %v147 = vunpack.c.l.b16 %v67
  %v148 = vunpack.c.l.b16 %v68
  %v149 = vunpack.c.l.b16 %v69
  %v150 = vunpack.c.l.b16 %v70
  %v151 = vunpack.c.l.b16 %v71
  %v152 = vunpack.c.l.b16 %v72
  %v153 = vunpack.c.l.b16 %v73
  %v154 = vunpack.c.l.b16 %v74
  %v155 = vunpack.c.l.b16 %v75
  %v156 = vunpack.c.l.b16 %v76
  %v157 = vunpack.c.l.b16 %v77
  %v158 = vunpack.c.l.b16 %v78
  %v159 = vunpack.c.l.b16 %v79
  %v160 = vunpack.c.l.b16 %v80
  %v161 = vunpack.c.l.b16 %v81
  %v162 = vpack.c.b16 %v147, %v146
  %v163 = vpack.c.b16 %v149, %v148
  %v164 = vpack.c.b16 %v151, %v150
  %v165 = vpack.c.b16 %v153, %v152
  %v166 = vpack.c.b16 %v155, %v154
  %v167 = vpack.c.b16 %v157, %v156
  %v168 = vpack.c.b16 %v159, %v158
  %v169 = vpack.c.b16 %v161, %v160
  %178 = vmatpush.bf16.msra.mxu0 %v169
  %179 = vmatpush.bf16.msra.mxu0 %v168
  %180 = vmatpush.bf16.msra.mxu0 %v167
  %181 = vmatpush.bf16.msra.mxu0 %v166
  %182 = vmatpush.bf16.msra.mxu0 %v165
  %183 = vmatpush.bf16.msra.mxu0 %v164
  %184 = vmatpush.bf16.msra.mxu0 %v163
  %185 = vmatpush.bf16.msra.mxu0 %v162
  %186 = vmatmul.bf16.gmra.mxu0 %v114
  %v187 = vpop.f32.mrf.mxu0
  %v188 = vadd.f32 0.0, %v187
  %v189 = vpop.f32.mrf.mxu0
  %v190 = vadd.f32 0.0, %v189
  %191 = vmatmul.bf16.gmra.mxu0 %v115
  %v192 = vpop.f32.mrf.mxu0
  %v193 = vadd.f32 0.0, %v192
  %v194 = vpop.f32.mrf.mxu0
  %v195 = vadd.f32 0.0, %v194
  %196 = vmatmul.bf16.gmra.mxu0 %v116
  %v197 = vpop.f32.mrf.mxu0
  %v198 = vadd.f32 0.0, %v197
  %v199 = vpop.f32.mrf.mxu0
  %v200 = vadd.f32 0.0, %v199
  %201 = vmatmul.bf16.gmra.mxu0 %v117
  %v202 = vpop.f32.mrf.mxu0
  %v203 = vadd.f32 0.0, %v202
  %v204 = vpop.f32.mrf.mxu0
  %v205 = vadd.f32 0.0, %v204
  %206 = vmatmul.bf16.gmra.mxu0 %v118
  %v207 = vpop.f32.mrf.mxu0
  %v208 = vadd.f32 0.0, %v207
  %v209 = vpop.f32.mrf.mxu0
  %v210 = vadd.f32 0.0, %v209
  %211 = vmatmul.bf16.gmra.mxu0 %v119
  %v212 = vpop.f32.mrf.mxu0
  %v213 = vadd.f32 0.0, %v212
  %v214 = vpop.f32.mrf.mxu0
  %v215 = vadd.f32 0.0, %v214
  %216 = vmatmul.bf16.gmra.mxu0 %v120
  %v217 = vpop.f32.mrf.mxu0
  %v218 = vadd.f32 0.0, %v217
  %v219 = vpop.f32.mrf.mxu0
  %v220 = vadd.f32 0.0, %v219
  %221 = vmatmul.bf16.gmra.mxu0 %v121
  %v222 = vpop.f32.mrf.mxu0
  %v223 = vadd.f32 0.0, %v222
  %v224 = vpop.f32.mrf.mxu0
  %v225 = vadd.f32 0.0, %v224
  %226 = vdwg.mxu0
  %v227 = vadd.f32 %v34, %v188
  %v228 = vadd.f32 %v35, %v190
  %v229 = vadd.f32 %v36, %v193
  %v230 = vadd.f32 %v37, %v195
  %v231 = vadd.f32 %v38, %v198
  %v232 = vadd.f32 %v39, %v200
  %v233 = vadd.f32 %v40, %v203
  %v234 = vadd.f32 %v41, %v205
  %v235 = vadd.f32 %v42, %v208
  %v236 = vadd.f32 %v43, %v210
  %v237 = vadd.f32 %v44, %v213
  %v238 = vadd.f32 %v45, %v215
  %v239 = vadd.f32 %v46, %v218
  %v240 = vadd.f32 %v47, %v220
  %v241 = vadd.f32 %v48, %v223
  %v242 = vadd.f32 %v49, %v225
  %243 = vst [vmem:[#allocation2] sm:$0xff] %v227
  %244 = vst [vmem:[#allocation2 + $0x8] sm:$0xff] %v228
  %245 = vst [vmem:[#allocation2 + $0x10] sm:$0xff] %v229
  %246 = vst [vmem:[#allocation2 + $0x18] sm:$0xff] %v230
  %247 = vst [vmem:[#allocation2 + $0x20] sm:$0xff] %v231
  %248 = vst [vmem:[#allocation2 + $0x28] sm:$0xff] %v232
  %249 = vst [vmem:[#allocation2 + $0x30] sm:$0xff] %v233
  %250 = vst [vmem:[#allocation2 + $0x38] sm:$0xff] %v234
  %251 = vst [vmem:[#allocation2 + $0x40] sm:$0xff] %v235
  %252 = vst [vmem:[#allocation2 + $0x48] sm:$0xff] %v236
  %253 = vst [vmem:[#allocation2 + $0x50] sm:$0xff] %v237
  %254 = vst [vmem:[#allocation2 + $0x58] sm:$0xff] %v238
  %255 = vst [vmem:[#allocation2 + $0x60] sm:$0xff] %v239
  %256 = vst [vmem:[#allocation2 + $0x68] sm:$0xff] %v240
  %257 = vst [vmem:[#allocation2 + $0x70] sm:$0xff] %v241
  %258 = vst [vmem:[#allocation2 + $0x78] sm:$0xff] %v242
  // Predicated region
  $region18: #{_lambda_.29} parent=0 // pred_check
    %p259 = pneg %p14
  $region19: #{_lambda_.29} parent=0 // pred_check_branch
    %261 = sbr.rel (%p259) target = $region21
  $region20: #{_lambda_.29} parent=0 // pred_region
    %v262 = vld [vmem:[#allocation2] sm:$0xff]
    %v263 = vld [vmem:[#allocation2 + $0x8] sm:$0xff]
    %v264 = vld [vmem:[#allocation2 + $0x10] sm:$0xff]
    %v265 = vld [vmem:[#allocation2 + $0x18] sm:$0xff]
    %v266 = vld [vmem:[#allocation2 + $0x20] sm:$0xff]
    %v267 = vld [vmem:[#allocation2 + $0x28] sm:$0xff]
    %v268 = vld [vmem:[#allocation2 + $0x30] sm:$0xff]
    %v269 = vld [vmem:[#allocation2 + $0x38] sm:$0xff]
    %v270 = vld [vmem:[#allocation2 + $0x40] sm:$0xff]
    %v271 = vld [vmem:[#allocation2 + $0x48] sm:$0xff]
    %v272 = vld [vmem:[#allocation2 + $0x50] sm:$0xff]
    %v273 = vld [vmem:[#allocation2 + $0x58] sm:$0xff]
    %v274 = vld [vmem:[#allocation2 + $0x60] sm:$0xff]
    %v275 = vld [vmem:[#allocation2 + $0x68] sm:$0xff]
    %v276 = vld [vmem:[#allocation2 + $0x70] sm:$0xff]
    %v277 = vld [vmem:[#allocation2 + $0x78] sm:$0xff]
    %v278 = vld [vmem:[%s2] sm:$0x1]
    %v280 = vperm.slane %v278, 0
    %v282 = vadd.f32 %v262, %v280
    %v283 = vadd.f32 %v263, %v280
    %v284 = vadd.f32 %v264, %v280
    %v285 = vadd.f32 %v265, %v280
    %v286 = vadd.f32 %v266, %v280
    %v287 = vadd.f32 %v267, %v280
    %v288 = vadd.f32 %v268, %v280
    %v289 = vadd.f32 %v269, %v280
    %v290 = vadd.f32 %v270, %v280
    %v291 = vadd.f32 %v271, %v280
    %v292 = vadd.f32 %v272, %v280
    %v293 = vadd.f32 %v273, %v280
    %v294 = vadd.f32 %v274, %v280
    %v295 = vadd.f32 %v275, %v280
    %v296 = vadd.f32 %v276, %v280
    %v297 = vadd.f32 %v277, %v280
    %vm298 = vcmp.gt.f32.partialorder %v282, 0.0
    %vm299 = vcmp.gt.f32.partialorder %v283, 0.0
    %vm300 = vcmp.gt.f32.partialorder %v284, 0.0
    %vm301 = vcmp.gt.f32.partialorder %v285, 0.0
    %vm302 = vcmp.gt.f32.partialorder %v286, 0.0
    %vm303 = vcmp.gt.f32.partialorder %v287, 0.0
    %vm304 = vcmp.gt.f32.partialorder %v288, 0.0
    %vm305 = vcmp.gt.f32.partialorder %v289, 0.0
    %vm306 = vcmp.gt.f32.partialorder %v290, 0.0
    %vm307 = vcmp.gt.f32.partialorder %v291, 0.0
    %vm308 = vcmp.gt.f32.partialorder %v292, 0.0
    %vm309 = vcmp.gt.f32.partialorder %v293, 0.0
    %vm310 = vcmp.gt.f32.partialorder %v294, 0.0
    %vm311 = vcmp.gt.f32.partialorder %v295, 0.0
    %vm312 = vcmp.gt.f32.partialorder %v296, 0.0
    %vm313 = vcmp.gt.f32.partialorder %v297, 0.0
    %v314 = vmul.f32 %v282, 0.01
    %v315 = vmul.f32 %v283, 0.01
    %v316 = vmul.f32 %v284, 0.01
    %v317 = vmul.f32 %v285, 0.01
    %v318 = vmul.f32 %v286, 0.01
    %v319 = vmul.f32 %v287, 0.01
    %v320 = vmul.f32 %v288, 0.01
    %v321 = vmul.f32 %v289, 0.01
    %v322 = vmul.f32 %v290, 0.01
    %v323 = vmul.f32 %v291, 0.01
    %v324 = vmul.f32 %v292, 0.01
    %v325 = vmul.f32 %v293, 0.01
    %v326 = vmul.f32 %v294, 0.01
    %v327 = vmul.f32 %v295, 0.01
    %v328 = vmul.f32 %v296, 0.01
    %v329 = vmul.f32 %v297, 0.01
    %v330 = vsel %vm298, %v282, %v314
    %v331 = vsel %vm299, %v283, %v315
    %v332 = vsel %vm300, %v284, %v316
    %v333 = vsel %vm301, %v285, %v317
    %v334 = vsel %vm302, %v286, %v318
    %v335 = vsel %vm303, %v287, %v319
    %v336 = vsel %vm304, %v288, %v320
    %v337 = vsel %vm305, %v289, %v321
    %v338 = vsel %vm306, %v290, %v322
    %v339 = vsel %vm307, %v291, %v323
    %v340 = vsel %vm308, %v292, %v324
    %v341 = vsel %vm309, %v293, %v325
    %v342 = vsel %vm310, %v294, %v326
    %v343 = vsel %vm311, %v295, %v327
    %v344 = vsel %vm312, %v296, %v328
    %v345 = vsel %vm313, %v297, %v329
    %346 = vst [vmem:[%s3] sm:$0xff] %v330
    %347 = vst [vmem:[%s3 + $0x8] sm:$0xff] %v331
    %348 = vst [vmem:[%s3 + $0x10] sm:$0xff] %v332
    %349 = vst [vmem:[%s3 + $0x18] sm:$0xff] %v333
    %350 = vst [vmem:[%s3 + $0x20] sm:$0xff] %v334
    %351 = vst [vmem:[%s3 + $0x28] sm:$0xff] %v335
    %352 = vst [vmem:[%s3 + $0x30] sm:$0xff] %v336
    %353 = vst [vmem:[%s3 + $0x38] sm:$0xff] %v337
    %354 = vst [vmem:[%s3 + $0x40] sm:$0xff] %v338
    %355 = vst [vmem:[%s3 + $0x48] sm:$0xff] %v339
    %356 = vst [vmem:[%s3 + $0x50] sm:$0xff] %v340
    %357 = vst [vmem:[%s3 + $0x58] sm:$0xff] %v341
    %358 = vst [vmem:[%s3 + $0x60] sm:$0xff] %v342
    %359 = vst [vmem:[%s3 + $0x68] sm:$0xff] %v343
    %360 = vst [vmem:[%s3 + $0x70] sm:$0xff] %v344
    %361 = vst [vmem:[%s3 + $0x78] sm:$0xff] %v345
  $region21: #{_lambda_.29} parent=0 // pred_fallthru
    _
  // Predicated region
  $region22: #{_lambda_.29} parent=0 // pred_check
    _
  $region23: #{_lambda_.29} parent=0 // pred_check_branch
    %363 = sbr.rel (0) target = $region25
  $region24: #{_lambda_.29} parent=0 // pred_region
    _
  $region25: #{_lambda_.29} parent=0 // pred_fallthru
    _
  // Predicated region
  $region26: #{_lambda_.29} parent=0 // pred_check
    _
  $region27: #{_lambda_.29} parent=0 // pred_check_branch
    %365 = sbr.rel (0) target = $region29
  $region28: #{_lambda_.29} parent=0 // pred_region
    _
  $region29: #{_lambda_.29} parent=0 // pred_fallthru
    _

</llo_original>
